<compile_context>
chip_gen: v6e
topology: v6e:2x2x1
jax: 0.10.0
libtpu: 0.0.40
codegen_flags: <defaults>
</compile_context>

<pallas_src>
import functools

import jax
import jax.numpy as jnp
from jax import lax
from jax.experimental import pallas as pl
from jax.experimental.pallas import tpu as pltpu

# ----------------------------- model config ---------------------------------
DIM = 32
HEADS = 4
HEAD_DIM = DIM // HEADS
FF_MULT = 4
DEPTH = 1
NUM_TOKENS = 64
MAX_SEQ_LEN = 8
PAD_VALUE = 0          # ignore_index defaults to pad_value


# ----------------------------- in-kernel helpers ------------------------------
def _layernorm(x, g_ref, b_ref, eps=1e-5):
    g = g_ref[...]                       # (1, D)
    b = b_ref[...]                       # (1, D)
    m = jnp.mean(x, axis=-1, keepdims=True)
    c = x - m
    v = jnp.mean(c * c, axis=-1, keepdims=True)
    return c * lax.rsqrt(v + eps) * g + b


def _softmax_last(s):
    m = jnp.max(s, axis=-1, keepdims=True)
    e = jnp.exp(s - m)
    # approx reciprocal -> EUP slot, essentially free inside the fused kernel
    return e * pl.reciprocal(jnp.sum(e, axis=-1, keepdims=True), approx=True)


def _multihead_attention(q2d, k2d, v2d, wo, B, Sq, Sk, causal):
    """q2d: (B*Sq, DIM), k2d/v2d: (B*Sk, DIM), wo: (DIM, DIM) value.

    All heads processed in a short unrolled loop with batched (over B) einsums;
    the output projection is accumulated per head, so no concatenation and no
    4-D transposes are needed.  Returns (B*Sq, DIM) = attn(...) @ wo.
    """
    scale = 1.0 / (HEAD_DIM ** 0.5)
    out = jnp.zeros((B * Sq, DIM), jnp.float32)
    if causal:
        qi = lax.broadcasted_iota(jnp.int32, (B, Sq, Sk), 1)
        ki = lax.broadcasted_iota(jnp.int32, (B, Sq, Sk), 2)
        neg = jnp.where(ki <= qi, 0.0, jnp.float32(-1e30))     # additive mask
    for h in range(HEADS):
        lo, hi = h * HEAD_DIM, (h + 1) * HEAD_DIM
        qh = q2d[:, lo:hi].reshape(B, Sq, HEAD_DIM)
        kh = k2d[:, lo:hi].reshape(B, Sk, HEAD_DIM)
        vh = v2d[:, lo:hi].reshape(B, Sk, HEAD_DIM)
        s = jnp.einsum('bqd,bkd->bqk', qh, kh,
                       preferred_element_type=jnp.float32) * scale
        if causal:
            s = s + neg
        p = _softmax_last(s)
        oh = jnp.einsum('bqk,bkd->bqd', p, vh,
                        preferred_element_type=jnp.float32)
        out = out + jnp.dot(oh.reshape(B * Sq, HEAD_DIM), wo[lo:hi, :],
                            preferred_element_type=jnp.float32)
    return out


def _embed(tok, pos_ids, p_lm, B, S):
    """tok / pos_ids: (B*S, 1) int32 values -> (B*S, DIM) f32 embeddings."""
    n = B * S
    n_tok = p_lm["tok_emb"].shape[0]
    n_pos = p_lm["pos_emb"].shape[0]
    tok_oh = (lax.broadcasted_iota(jnp.int32, (n, n_tok), 1) == tok
              ).astype(jnp.float32)
    x = jnp.dot(tok_oh, p_lm["tok_emb"][...],
                preferred_element_type=jnp.float32)
    pos_oh = (lax.broadcasted_iota(jnp.int32, (n, n_pos), 1) == pos_ids
              ).astype(jnp.float32)
    x = x + jnp.dot(pos_oh, p_lm["pos_emb"][...],
                    preferred_element_type=jnp.float32)
    return x


def _layer(x, layer, B, S, causal, context=None, S_ctx=None):
    # self attention (fused QKV projection)
    h = _layernorm(x, layer["ln1_g"], layer["ln1_b"])
    qkv = jnp.dot(h, layer["self_attn"]["wqkv"][...],
                  preferred_element_type=jnp.float32)
    x = x + _multihead_attention(qkv[:, :DIM], qkv[:, DIM:2 * DIM],
                                 qkv[:, 2 * DIM:],
                                 layer["self_attn"]["wo"][...],
                                 B, S, S, causal)
    # cross attention (fused KV projection)
    if context is not None:
        h = _layernorm(x, layer["lnc_g"], layer["lnc_b"])
        q = jnp.dot(h, layer["cross_attn"]["wq"][...],
                    preferred_element_type=jnp.float32)
        kv = jnp.dot(context, layer["cross_attn"]["wkv"][...],
                     preferred_element_type=jnp.float32)
        x = x + _multihead_attention(q, kv[:, :DIM], kv[:, DIM:],
                                     layer["cross_attn"]["wo"][...],
                                     B, S, S_ctx, causal=False)
    # feed forward
    h = _layernorm(x, layer["ln2_g"], layer["ln2_b"])
    h1 = jnp.dot(h, layer["ff"]["w1"][...],
                 preferred_element_type=jnp.float32) + layer["ff"]["b1"][...]
    # TODO(synk): PyTorch nn.GELU defaults to exact erf; tanh approximation here.
    h1 = jax.nn.gelu(h1, approximate=True)
    x = x + jnp.dot(h1, layer["ff"]["w2"][...],
                    preferred_element_type=jnp.float32) + layer["ff"]["b2"][...]
    return x


def _lm(tok, pos_ids, p_lm, B, S, causal, context=None, S_ctx=None):
    """RoutingTransformerLM forward (routing attention realized as dense attn)."""
    x = _embed(tok, pos_ids, p_lm, B, S)
    for layer in p_lm["layers"]:
        x = _layer(x, layer, B, S, causal, context=context, S_ctx=S_ctx)
    return _layernorm(x, p_lm["norm_g"], p_lm["norm_b"])


def _forward_logits(si, pe, xi, pd, p, B, S_enc, S_dec):
    # encoder: return_embeddings=True, non-causal
    context = _lm(si, pe, p["enc"], B, S_enc, causal=False)
    # decoder: causal=True, receives_context=True
    x = _lm(xi, pd, p["dec"], B, S_dec, causal=True,
            context=context, S_ctx=S_enc)
    logits = jnp.dot(x, p["dec"]["to_logits_w"][...],
                     preferred_element_type=jnp.float32)
    return logits + p["dec"]["to_logits_b"][...]            # (B*S_dec, NUM_TOKENS)


# ----------------------------- Pallas kernels -------------------------------
def _loss_kernel(si_ref, pe_ref, xi_ref, pd_ref, xo_ref, *refs,
                 treedef, B, S_enc, S_dec):
    param_refs, loss_ref = refs[:-1], refs[-1]
    p = jax.tree_util.tree_unflatten(treedef, list(param_refs))

    logits = _forward_logits(si_ref[...], pe_ref[...], xi_ref[...], pd_ref[...],
                             p, B, S_enc, S_dec)
    xo = xo_ref[...]                                          # (B*S_dec, 1) int32

    # masked cross entropy (ignore_index = PAD_VALUE), fully in-kernel
    m = jnp.max(logits, axis=-1, keepdims=True)
    lse = m + jnp.log(jnp.sum(jnp.exp(logits - m), axis=-1, keepdims=True))
    iota = lax.broadcasted_iota(jnp.int32, logits.shape, 1)
    tgt = jnp.sum(jnp.where(iota == xo, logits, 0.0), axis=-1, keepdims=True)
    nll = lse - tgt                                           # (N, 1)
    mask = (xo != PAD_VALUE).astype(jnp.float32)              # (N, 1)
    num = jnp.sum(nll * mask, axis=0, keepdims=True)          # (1, 1)
    den = jnp.sum(mask, axis=0, keepdims=True)                # (1, 1)
    loss = num / jnp.maximum(den, 1.0)

    # TODO(synk): kmeans commitment aux losses (enc_aux/dec_aux) taken as 0.0.
    loss_ref[...] = jnp.broadcast_to(loss, loss_ref.shape)    # lane-dense store


def _logits_kernel(si_ref, pe_ref, tok_ref, pd_ref, *refs,
                   treedef, B, S_enc, S_dec):
    param_refs, out_ref = refs[:-1], refs[-1]
    p = jax.tree_util.tree_unflatten(treedef, list(param_refs))
    out_ref[...] = _forward_logits(si_ref[...], pe_ref[...], tok_ref[...],
                                   pd_ref[...], p, B, S_enc, S_dec)


def _full_spec(shape):
    nd = len(shape)
    return pl.BlockSpec(shape, lambda i, nd=nd: (0,) * nd)


# ----------------------------- wrapper ---------------------------------------
def enc_dec_forward(params, seq_in, seq_out, return_loss=True):
    """RoutingTransformerEncDec.forward as one fused pallas_call."""
    B, S_enc = seq_in.shape
    assert S_enc <= MAX_SEQ_LEN and S_enc % 8 == 0, "encoder seq must be 8-aligned"
    leaves, treedef = jax.tree_util.tree_flatten(params)

    si = seq_in.reshape(B * S_enc, 1).astype(jnp.int32)
    pe = jnp.tile(jnp.arange(S_enc, dtype=jnp.int32), B).reshape(B * S_enc, 1)

    if return_loss:
        xi_raw, xo_raw = seq_out[:, :-1], seq_out[:, 1:]      # AutoregressiveWrapper
    else:
        xi_raw, xo_raw = seq_out, None
    S_dec = xi_raw.shape[1]

    # Pad decoder rows up to a multiple of 8 so every in-kernel reshape/slice
    # stays (8,128)-tile aligned.  Padded positions sit at the end, are never
    # attended to by real rows (causal mask) and are masked out of the loss,
    # so the result is numerically identical.
    S_pad = max(8, ((S_dec + 7) // 8) * 8)
    assert S_pad <= MAX_SEQ_LEN
    pad = S_pad - S_dec
    xi = jnp.pad(xi_raw, ((0, 0), (0, pad)), constant_values=PAD_VALUE)
    xi = xi.reshape(B * S_pad, 1).astype(jnp.int32)
    pd = jnp.tile(jnp.arange(S_pad, dtype=jnp.int32), B).reshape(B * S_pad, 1)

    if return_loss:
        xo = jnp.pad(xo_raw, ((0, 0), (0, pad)), constant_values=PAD_VALUE)
        xo = xo.reshape(B * S_pad, 1).astype(jnp.int32)
        inputs = [si, pe, xi, pd, xo] + leaves
        kernel = functools.partial(_loss_kernel, treedef=treedef,
                                   B=B, S_enc=S_enc, S_dec=S_pad)
        out = pl.pallas_call(
            kernel,
            grid=(1,),
            out_shape=jax.ShapeDtypeStruct((8, 128), jnp.float32),
            in_specs=[_full_spec(a.shape) for a in inputs],
            out_specs=_full_spec((8, 128)),
            compiler_params=pltpu.CompilerParams(
                dimension_semantics=("arbitrary",)),
        )(*inputs)
        loss = out[0, 0]
        aux_loss = jnp.array(0.0, jnp.float32)                # TODO(synk): kmeans aux
        return loss, aux_loss

    inputs = [si, pe, xi, pd] + leaves
    kernel = functools.partial(_logits_kernel, treedef=treedef,
                               B=B, S_enc=S_enc, S_dec=S_pad)
    logits = pl.pallas_call(
        kernel,
        grid=(1,),
        out_shape=jax.ShapeDtypeStruct((B * S_pad, NUM_TOKENS), jnp.float32),
        in_specs=[_full_spec(a.shape) for a in inputs],
        out_specs=_full_spec((B * S_pad, NUM_TOKENS)),
        compiler_params=pltpu.CompilerParams(
            dimension_semantics=("arbitrary",)),
    )(*inputs)
    logits = logits.reshape(B, S_pad, NUM_TOKENS)[:, :S_dec]
    return logits, jnp.array(0.0, jnp.float32)


# ----------------------------- parameter init --------------------------------
def _normal(key, shape, scale=0.02):
    return (scale * jax.random.normal(key, shape)).astype(jnp.float32)


def init_self_attn(key):
    k1, k2 = jax.random.split(key)
    # wq|wk|wv fused into one (DIM, 3*DIM) projection
    return {"wqkv": _normal(k1, (DIM, 3 * DIM)), "wo": _normal(k2, (DIM, DIM))}


def init_cross_attn(key):
    k1, k2, k3 = jax.random.split(key, 3)
    # wk|wv fused into one (DIM, 2*DIM) projection
    return {"wq": _normal(k1, (DIM, DIM)), "wkv": _normal(k2, (DIM, 2 * DIM)),
            "wo": _normal(k3, (DIM, DIM))}


def init_ff(key):
    k1, k2 = jax.random.split(key)
    hid = DIM * FF_MULT
    return {"w1": _normal(k1, (DIM, hid)), "b1": jnp.zeros((1, hid), jnp.float32),
            "w2": _normal(k2, (hid, DIM)), "b2": jnp.zeros((1, DIM), jnp.float32)}


def init_layer(key, has_cross):
    k1, k2, k3 = jax.random.split(key, 3)
    layer = {
        "ln1_g": jnp.ones((1, DIM), jnp.float32), "ln1_b": jnp.zeros((1, DIM), jnp.float32),
        "ln2_g": jnp.ones((1, DIM), jnp.float32), "ln2_b": jnp.zeros((1, DIM), jnp.float32),
        "self_attn": init_self_attn(k1),
        "ff": init_ff(k2),
    }
    if has_cross:
        layer["lnc_g"] = jnp.ones((1, DIM), jnp.float32)
        layer["lnc_b"] = jnp.zeros((1, DIM), jnp.float32)
        layer["cross_attn"] = init_cross_attn(k3)
    return layer


def init_lm(key, has_cross, has_logits):
    keys = jax.random.split(key, DEPTH + 3)
    params = {
        "tok_emb": _normal(keys[0], (NUM_TOKENS, DIM)),
        "pos_emb": _normal(keys[1], (MAX_SEQ_LEN, DIM)),
        "layers": [init_layer(keys[2 + i], has_cross) for i in range(DEPTH)],
        "norm_g": jnp.ones((1, DIM), jnp.float32),
        "norm_b": jnp.zeros((1, DIM), jnp.float32),
    }
    if has_logits:
        params["to_logits_w"] = _normal(keys[-1], (DIM, NUM_TOKENS))
        params["to_logits_b"] = jnp.zeros((1, NUM_TOKENS), jnp.float32)
    return params


def init_enc_dec(key):
    k_enc, k_dec = jax.random.split(key)
    return {
        "enc": init_lm(k_enc, has_cross=False, has_logits=False),  # return_embeddings=True
        "dec": init_lm(k_dec, has_cross=True, has_logits=True),    # causal, receives_context
    }


# ----------------------------- main ------------------------------------------
if __name__ == "__main__":
    key = jax.random.PRNGKey(0)
    k_params, k_in, k_out = jax.random.split(key, 3)

    params = init_enc_dec(k_params)
    B, S = 2, MAX_SEQ_LEN
    # token ids in [1, NUM_TOKENS) so nothing collides with pad/ignore index 0
    seq_in = jax.random.randint(k_in, (B, S), 1, NUM_TOKENS, dtype=jnp.int32)
    seq_out = jax.random.randint(k_out, (B, S), 1, NUM_TOKENS, dtype=jnp.int32)

    fwd = jax.jit(lambda p, a, b: enc_dec_forward(p, a, b, return_loss=True))
    loss, aux_loss = fwd(params, seq_in, seq_out)
    loss = jax.block_until_ready(loss)
    aux_loss = jax.block_until_ready(aux_loss)

    assert loss.shape == () and aux_loss.shape == ()
    assert bool(jnp.isfinite(loss))
    print("KERNEL_OK")
</pallas_src>

<mosaic_0001>
module attributes {stable_mosaic.version = 11 : i64} {
  func.func @_loss_kernel(%arg0: i32, %arg1: memref<16x1xi32, #tpu.memory_space<vmem>>, %arg2: memref<16x1xi32, #tpu.memory_space<vmem>>, %arg3: memref<16x1xi32, #tpu.memory_space<vmem>>, %arg4: memref<16x1xi32, #tpu.memory_space<vmem>>, %arg5: memref<16x1xi32, #tpu.memory_space<vmem>>, %arg6: memref<32x64xf32, #tpu.memory_space<vmem>>, %arg7: memref<32x32xf32, #tpu.memory_space<vmem>>, %arg8: memref<32x32xf32, #tpu.memory_space<vmem>>, %arg9: memref<1x128xf32, #tpu.memory_space<vmem>>, %arg10: memref<1x32xf32, #tpu.memory_space<vmem>>, %arg11: memref<32x128xf32, #tpu.memory_space<vmem>>, %arg12: memref<128x32xf32, #tpu.memory_space<vmem>>, %arg13: memref<1x32xf32, #tpu.memory_space<vmem>>, %arg14: memref<1x32xf32, #tpu.memory_space<vmem>>, %arg15: memref<1x32xf32, #tpu.memory_space<vmem>>, %arg16: memref<1x32xf32, #tpu.memory_space<vmem>>, %arg17: memref<1x32xf32, #tpu.memory_space<vmem>>, %arg18: memref<1x32xf32, #tpu.memory_space<vmem>>, %arg19: memref<32x32xf32, #tpu.memory_space<vmem>>, %arg20: memref<32x96xf32, #tpu.memory_space<vmem>>, %arg21: memref<1x32xf32, #tpu.memory_space<vmem>>, %arg22: memref<1x32xf32, #tpu.memory_space<vmem>>, %arg23: memref<8x32xf32, #tpu.memory_space<vmem>>, %arg24: memref<1x64xf32, #tpu.memory_space<vmem>>, %arg25: memref<32x64xf32, #tpu.memory_space<vmem>>, %arg26: memref<64x32xf32, #tpu.memory_space<vmem>>, %arg27: memref<1x128xf32, #tpu.memory_space<vmem>>, %arg28: memref<1x32xf32, #tpu.memory_space<vmem>>, %arg29: memref<32x128xf32, #tpu.memory_space<vmem>>, %arg30: memref<128x32xf32, #tpu.memory_space<vmem>>, %arg31: memref<1x32xf32, #tpu.memory_space<vmem>>, %arg32: memref<1x32xf32, #tpu.memory_space<vmem>>, %arg33: memref<1x32xf32, #tpu.memory_space<vmem>>, %arg34: memref<1x32xf32, #tpu.memory_space<vmem>>, %arg35: memref<32x32xf32, #tpu.memory_space<vmem>>, %arg36: memref<32x96xf32, #tpu.memory_space<vmem>>, %arg37: memref<1x32xf32, #tpu.memory_space<vmem>>, %arg38: memref<1x32xf32, #tpu.memory_space<vmem>>, %arg39: memref<8x32xf32, #tpu.memory_space<vmem>>, %arg40: memref<64x32xf32, #tpu.memory_space<vmem>>, %arg41: memref<8x128xf32, #tpu.memory_space<vmem>>) attributes {dimension_semantics = [#tpu.dimension_semantics<arbitrary>], iteration_bounds = array<i64: 1>, scalar_prefetch = 0 : i64, scratch_operands = 0 : i64, tpu.core_type = #tpu.core_type<tc>, window_params = [{pipeline_mode = #tpu.pipeline_mode<synchronous>, transform_indices = @transform_0, window_bounds = array<i64: 16, 1>}, {pipeline_mode = #tpu.pipeline_mode<synchronous>, transform_indices = @transform_1, window_bounds = array<i64: 16, 1>}, {pipeline_mode = #tpu.pipeline_mode<synchronous>, transform_indices = @transform_2, window_bounds = array<i64: 16, 1>}, {pipeline_mode = #tpu.pipeline_mode<synchronous>, transform_indices = @transform_3, window_bounds = array<i64: 16, 1>}, {pipeline_mode = #tpu.pipeline_mode<synchronous>, transform_indices = @transform_4, window_bounds = array<i64: 16, 1>}, {pipeline_mode = #tpu.pipeline_mode<synchronous>, transform_indices = @transform_5, window_bounds = array<i64: 32, 64>}, {pipeline_mode = #tpu.pipeline_mode<synchronous>, transform_indices = @transform_6, window_bounds = array<i64: 32, 32>}, {pipeline_mode = #tpu.pipeline_mode<synchronous>, transform_indices = @transform_7, window_bounds = array<i64: 32, 32>}, {pipeline_mode = #tpu.pipeline_mode<synchronous>, transform_indices = @transform_8, window_bounds = array<i64: 1, 128>}, {pipeline_mode = #tpu.pipeline_mode<synchronous>, transform_indices = @transform_9, window_bounds = array<i64: 1, 32>}, {pipeline_mode = #tpu.pipeline_mode<synchronous>, transform_indices = @transform_10, window_bounds = array<i64: 32, 128>}, {pipeline_mode = #tpu.pipeline_mode<synchronous>, transform_indices = @transform_11, window_bounds = array<i64: 128, 32>}, {pipeline_mode = #tpu.pipeline_mode<synchronous>, transform_indices = @transform_12, window_bounds = array<i64: 1, 32>}, {pipeline_mode = #tpu.pipeline_mode<synchronous>, transform_indices = @transform_13, window_bounds = array<i64: 1, 32>}, {pipeline_mode = #tpu.pipeline_mode<synchronous>, transform_indices = @transform_14, window_bounds = array<i64: 1, 32>}, {pipeline_mode = #tpu.pipeline_mode<synchronous>, transform_indices = @transform_15, window_bounds = array<i64: 1, 32>}, {pipeline_mode = #tpu.pipeline_mode<synchronous>, transform_indices = @transform_16, window_bounds = array<i64: 1, 32>}, {pipeline_mode = #tpu.pipeline_mode<synchronous>, transform_indices = @transform_17, window_bounds = array<i64: 1, 32>}, {pipeline_mode = #tpu.pipeline_mode<synchronous>, transform_indices = @transform_18, window_bounds = array<i64: 32, 32>}, {pipeline_mode = #tpu.pipeline_mode<synchronous>, transform_indices = @transform_19, window_bounds = array<i64: 32, 96>}, {pipeline_mode = #tpu.pipeline_mode<synchronous>, transform_indices = @transform_20, window_bounds = array<i64: 1, 32>}, {pipeline_mode = #tpu.pipeline_mode<synchronous>, transform_indices = @transform_21, window_bounds = array<i64: 1, 32>}, {pipeline_mode = #tpu.pipeline_mode<synchronous>, transform_indices = @transform_22, window_bounds = array<i64: 8, 32>}, {pipeline_mode = #tpu.pipeline_mode<synchronous>, transform_indices = @transform_23, window_bounds = array<i64: 1, 64>}, {pipeline_mode = #tpu.pipeline_mode<synchronous>, transform_indices = @transform_24, window_bounds = array<i64: 32, 64>}, {pipeline_mode = #tpu.pipeline_mode<synchronous>, transform_indices = @transform_25, window_bounds = array<i64: 64, 32>}, {pipeline_mode = #tpu.pipeline_mode<synchronous>, transform_indices = @transform_26, window_bounds = array<i64: 1, 128>}, {pipeline_mode = #tpu.pipeline_mode<synchronous>, transform_indices = @transform_27, window_bounds = array<i64: 1, 32>}, {pipeline_mode = #tpu.pipeline_mode<synchronous>, transform_indices = @transform_28, window_bounds = array<i64: 32, 128>}, {pipeline_mode = #tpu.pipeline_mode<synchronous>, transform_indices = @transform_29, window_bounds = array<i64: 128, 32>}, {pipeline_mode = #tpu.pipeline_mode<synchronous>, transform_indices = @transform_30, window_bounds = array<i64: 1, 32>}, {pipeline_mode = #tpu.pipeline_mode<synchronous>, transform_indices = @transform_31, window_bounds = array<i64: 1, 32>}, {pipeline_mode = #tpu.pipeline_mode<synchronous>, transform_indices = @transform_32, window_bounds = array<i64: 1, 32>}, {pipeline_mode = #tpu.pipeline_mode<synchronous>, transform_indices = @transform_33, window_bounds = array<i64: 1, 32>}, {pipeline_mode = #tpu.pipeline_mode<synchronous>, transform_indices = @transform_34, window_bounds = array<i64: 32, 32>}, {pipeline_mode = #tpu.pipeline_mode<synchronous>, transform_indices = @transform_35, window_bounds = array<i64: 32, 96>}, {pipeline_mode = #tpu.pipeline_mode<synchronous>, transform_indices = @transform_36, window_bounds = array<i64: 1, 32>}, {pipeline_mode = #tpu.pipeline_mode<synchronous>, transform_indices = @transform_37, window_bounds = array<i64: 1, 32>}, {pipeline_mode = #tpu.pipeline_mode<synchronous>, transform_indices = @transform_38, window_bounds = array<i64: 8, 32>}, {pipeline_mode = #tpu.pipeline_mode<synchronous>, transform_indices = @transform_39, window_bounds = array<i64: 64, 32>}, {pipeline_mode = #tpu.pipeline_mode<synchronous>, transform_indices = @transform_40, window_bounds = array<i64: 8, 128>}]} {
    %c0 = arith.constant 0 : index
    %c0_0 = arith.constant 0 : index
    %0 = vector.load %arg1[%c0, %c0_0] : memref<16x1xi32, #tpu.memory_space<vmem>>, vector<16x1xi32>
    %c0_1 = arith.constant 0 : index
    %c0_2 = arith.constant 0 : index
    %1 = vector.load %arg2[%c0_1, %c0_2] : memref<16x1xi32, #tpu.memory_space<vmem>>, vector<16x1xi32>
    %c0_3 = arith.constant 0 : index
    %c0_4 = arith.constant 0 : index
    %2 = vector.load %arg3[%c0_3, %c0_4] : memref<16x1xi32, #tpu.memory_space<vmem>>, vector<16x1xi32>
    %c0_5 = arith.constant 0 : index
    %c0_6 = arith.constant 0 : index
    %3 = vector.load %arg4[%c0_5, %c0_6] : memref<16x1xi32, #tpu.memory_space<vmem>>, vector<16x1xi32>
    %4 = tpu.iota {dimensions = array<i32: 1>} : vector<16x64xi32>
    %5 = vector.broadcast %0 : vector<16x1xi32> to vector<16x64xi32>
    %6 = arith.cmpi eq, %4, %5 : vector<16x64xi32>
    %7 = arith.extui %6 : vector<16x64xi1> to vector<16x64xi32>
    %8 = arith.sitofp %7 : vector<16x64xi32> to vector<16x64xf32>
    %c0_7 = arith.constant 0 : index
    %c0_8 = arith.constant 0 : index
    %9 = vector.load %arg40[%c0_7, %c0_8] : memref<64x32xf32, #tpu.memory_space<vmem>>, vector<64x32xf32>
    %cst = arith.constant dense<0.000000e+00> : vector<16x32xf32>
    %10 = tpu.matmul %8, %9, %cst {dimension_numbers = #tpu.dot_dimension_numbers<[1], [0], [0], [1], [0, 0, 1, 1], [], []>} : vector<16x64xf32>, vector<64x32xf32>, vector<16x32xf32> -> vector<16x32xf32>
    %11 = tpu.iota {dimensions = array<i32: 1>} : vector<16x8xi32>
    %12 = vector.broadcast %1 : vector<16x1xi32> to vector<16x8xi32>
    %13 = arith.cmpi eq, %11, %12 : vector<16x8xi32>
    %14 = arith.extui %13 : vector<16x8xi1> to vector<16x8xi32>
    %15 = arith.sitofp %14 : vector<16x8xi32> to vector<16x8xf32>
    %c0_9 = arith.constant 0 : index
    %c0_10 = arith.constant 0 : index
    %16 = vector.load %arg39[%c0_9, %c0_10] : memref<8x32xf32, #tpu.memory_space<vmem>>, vector<8x32xf32>
    %cst_11 = arith.constant dense<0.000000e+00> : vector<16x32xf32>
    %17 = tpu.matmul %15, %16, %cst_11 {dimension_numbers = #tpu.dot_dimension_numbers<[1], [0], [0], [1], [0, 0, 1, 1], [], []>} : vector<16x8xf32>, vector<8x32xf32>, vector<16x32xf32> -> vector<16x32xf32>
    %18 = arith.addf %10, %17 : vector<16x32xf32>
    %c0_12 = arith.constant 0 : index
    %c0_13 = arith.constant 0 : index
    %19 = vector.load %arg32[%c0_12, %c0_13] : memref<1x32xf32, #tpu.memory_space<vmem>>, vector<1x32xf32>
    %c0_14 = arith.constant 0 : index
    %c0_15 = arith.constant 0 : index
    %20 = vector.load %arg31[%c0_14, %c0_15] : memref<1x32xf32, #tpu.memory_space<vmem>>, vector<1x32xf32>
    %cst_16 = arith.constant dense<0.000000e+00> : vector<16xf32>
    %21 = vector.multi_reduction <add>, %18, %cst_16 [1] : vector<16x32xf32> to vector<16xf32>
    %22 = vector.shape_cast %21 : vector<16xf32> to vector<16x1xf32>
    %cst_17 = arith.constant 3.200000e+01 : f32
    %23 = vector.broadcast %cst_17 : f32 to vector<16x1xf32>
    %24 = arith.divf %22, %23 : vector<16x1xf32>
    %25 = vector.broadcast %24 : vector<16x1xf32> to vector<16x32xf32>
    %26 = arith.subf %18, %25 : vector<16x32xf32>
    %27 = arith.mulf %26, %26 : vector<16x32xf32>
    %cst_18 = arith.constant dense<0.000000e+00> : vector<16xf32>
    %28 = vector.multi_reduction <add>, %27, %cst_18 [1] : vector<16x32xf32> to vector<16xf32>
    %29 = vector.shape_cast %28 : vector<16xf32> to vector<16x1xf32>
    %cst_19 = arith.constant 3.200000e+01 : f32
    %30 = vector.broadcast %cst_19 : f32 to vector<16x1xf32>
    %31 = arith.divf %29, %30 : vector<16x1xf32>
    %cst_20 = arith.constant 9.99999974E-6 : f32
    %32 = vector.broadcast %cst_20 : f32 to vector<16x1xf32>
    %33 = arith.addf %31, %32 : vector<16x1xf32>
    %34 = math.rsqrt %33 : vector<16x1xf32>
    %35 = vector.broadcast %34 : vector<16x1xf32> to vector<16x32xf32>
    %36 = arith.mulf %26, %35 : vector<16x32xf32>
    %37 = vector.broadcast %19 : vector<1x32xf32> to vector<16x32xf32>
    %38 = arith.mulf %36, %37 : vector<16x32xf32>
    %39 = vector.broadcast %20 : vector<1x32xf32> to vector<16x32xf32>
    %40 = arith.addf %38, %39 : vector<16x32xf32>
    %c0_21 = arith.constant 0 : index
    %c0_22 = arith.constant 0 : index
    %41 = vector.load %arg36[%c0_21, %c0_22] : memref<32x96xf32, #tpu.memory_space<vmem>>, vector<32x96xf32>
    %cst_23 = arith.constant dense<0.000000e+00> : vector<16x96xf32>
    %42 = tpu.matmul %40, %41, %cst_23 {dimension_numbers = #tpu.dot_dimension_numbers<[1], [0], [0], [1], [0, 0, 1, 1], [], []>} : vector<16x32xf32>, vector<32x96xf32>, vector<16x96xf32> -> vector<16x96xf32>
    %43 = vector.extract_strided_slice %42 {offsets = [0, 0], sizes = [16, 32], strides = [1, 1]} : vector<16x96xf32> to vector<16x32xf32>
    %44 = vector.extract_strided_slice %42 {offsets = [0, 32], sizes = [16, 32], strides = [1, 1]} : vector<16x96xf32> to vector<16x32xf32>
    %45 = vector.extract_strided_slice %42 {offsets = [0, 64], sizes = [16, 32], strides = [1, 1]} : vector<16x96xf32> to vector<16x32xf32>
    %c0_24 = arith.constant 0 : index
    %c0_25 = arith.constant 0 : index
    %46 = vector.load %arg35[%c0_24, %c0_25] : memref<32x32xf32, #tpu.memory_space<vmem>>, vector<32x32xf32>
    %cst_26 = arith.constant 0.000000e+00 : f32
    %47 = vector.broadcast %cst_26 : f32 to vector<16x32xf32>
    %48 = vector.extract_strided_slice %43 {offsets = [0, 0], sizes = [16, 8], strides = [1, 1]} : vector<16x32xf32> to vector<16x8xf32>
    %49 = vector.shape_cast %48 : vector<16x8xf32> to vector<2x8x8xf32>
    %50 = vector.extract_strided_slice %44 {offsets = [0, 0], sizes = [16, 8], strides = [1, 1]} : vector<16x32xf32> to vector<16x8xf32>
    %51 = vector.shape_cast %50 : vector<16x8xf32> to vector<2x8x8xf32>
    %52 = vector.extract_strided_slice %45 {offsets = [0, 0], sizes = [16, 8], strides = [1, 1]} : vector<16x32xf32> to vector<16x8xf32>
    %53 = vector.shape_cast %52 : vector<16x8xf32> to vector<2x8x8xf32>
    "tpu.trace_start"() <{level = 10 : i32, message = "bqd,bkd->bqk"}> : () -> ()
    %cst_27 = arith.constant dense<0.000000e+00> : vector<2x8x8xf32>
    %54 = tpu.matmul %49, %51, %cst_27 {dimension_numbers = #tpu.dot_dimension_numbers<[2], [2], [1], [1], [0, 0, 0, 1, 1, 1], [0], [0]>} : vector<2x8x8xf32>, vector<2x8x8xf32>, vector<2x8x8xf32> -> vector<2x8x8xf32>
    "tpu.trace_stop"() : () -> ()
    %cst_28 = arith.constant 0.353553385 : f32
    %55 = vector.broadcast %cst_28 : f32 to vector<2x8x8xf32>
    %56 = arith.mulf %54, %55 : vector<2x8x8xf32>
    %cst_29 = arith.constant dense<0xFF800000> : vector<2x8xf32>
    %57 = vector.multi_reduction <maximumf>, %56, %cst_29 [2] : vector<2x8x8xf32> to vector<2x8xf32>
    %58 = vector.shape_cast %57 : vector<2x8xf32> to vector<2x8x1xf32>
    %59 = vector.broadcast %58 : vector<2x8x1xf32> to vector<2x8x8xf32>
    %60 = arith.subf %56, %59 : vector<2x8x8xf32>
    %61 = math.exp %60 : vector<2x8x8xf32>
    %cst_30 = arith.constant dense<0.000000e+00> : vector<2x8xf32>
    %62 = vector.multi_reduction <add>, %61, %cst_30 [2] : vector<2x8x8xf32> to vector<2x8xf32>
    %63 = vector.shape_cast %62 : vector<2x8xf32> to vector<2x8x1xf32>
    %64 = tpu.reciprocal %63 {approx = true} : vector<2x8x1xf32> -> vector<2x8x1xf32>
    %65 = vector.broadcast %64 : vector<2x8x1xf32> to vector<2x8x8xf32>
    %66 = arith.mulf %61, %65 : vector<2x8x8xf32>
    "tpu.trace_start"() <{level = 10 : i32, message = "bqk,bkd->bqd"}> : () -> ()
    %cst_31 = arith.constant dense<0.000000e+00> : vector<2x8x8xf32>
    %67 = tpu.matmul %66, %53, %cst_31 {dimension_numbers = #tpu.dot_dimension_numbers<[2], [1], [1], [2], [0, 0, 0, 1, 1, 2], [0], [0]>} : vector<2x8x8xf32>, vector<2x8x8xf32>, vector<2x8x8xf32> -> vector<2x8x8xf32>
    "tpu.trace_stop"() : () -> ()
    %68 = vector.shape_cast %67 : vector<2x8x8xf32> to vector<16x8xf32>
    %69 = vector.extract_strided_slice %46 {offsets = [0, 0], sizes = [8, 32], strides = [1, 1]} : vector<32x32xf32> to vector<8x32xf32>
    %cst_32 = arith.constant dense<0.000000e+00> : vector<16x32xf32>
    %70 = tpu.matmul %68, %69, %cst_32 {dimension_numbers = #tpu.dot_dimension_numbers<[1], [0], [0], [1], [0, 0, 1, 1], [], []>} : vector<16x8xf32>, vector<8x32xf32>, vector<16x32xf32> -> vector<16x32xf32>
    %71 = arith.addf %47, %70 : vector<16x32xf32>
    %72 = vector.extract_strided_slice %43 {offsets = [0, 8], sizes = [16, 8], strides = [1, 1]} : vector<16x32xf32> to vector<16x8xf32>
    %73 = vector.shape_cast %72 : vector<16x8xf32> to vector<2x8x8xf32>
    %74 = vector.extract_strided_slice %44 {offsets = [0, 8], sizes = [16, 8], strides = [1, 1]} : vector<16x32xf32> to vector<16x8xf32>
    %75 = vector.shape_cast %74 : vector<16x8xf32> to vector<2x8x8xf32>
    %76 = vector.extract_strided_slice %45 {offsets = [0, 8], sizes = [16, 8], strides = [1, 1]} : vector<16x32xf32> to vector<16x8xf32>
    %77 = vector.shape_cast %76 : vector<16x8xf32> to vector<2x8x8xf32>
    "tpu.trace_start"() <{level = 10 : i32, message = "bqd,bkd->bqk"}> : () -> ()
    %cst_33 = arith.constant dense<0.000000e+00> : vector<2x8x8xf32>
    %78 = tpu.matmul %73, %75, %cst_33 {dimension_numbers = #tpu.dot_dimension_numbers<[2], [2], [1], [1], [0, 0, 0, 1, 1, 1], [0], [0]>} : vector<2x8x8xf32>, vector<2x8x8xf32>, vector<2x8x8xf32> -> vector<2x8x8xf32>
    "tpu.trace_stop"() : () -> ()
    %cst_34 = arith.constant 0.353553385 : f32
    %79 = vector.broadcast %cst_34 : f32 to vector<2x8x8xf32>
    %80 = arith.mulf %78, %79 : vector<2x8x8xf32>
    %cst_35 = arith.constant dense<0xFF800000> : vector<2x8xf32>
    %81 = vector.multi_reduction <maximumf>, %80, %cst_35 [2] : vector<2x8x8xf32> to vector<2x8xf32>
    %82 = vector.shape_cast %81 : vector<2x8xf32> to vector<2x8x1xf32>
    %83 = vector.broadcast %82 : vector<2x8x1xf32> to vector<2x8x8xf32>
    %84 = arith.subf %80, %83 : vector<2x8x8xf32>
    %85 = math.exp %84 : vector<2x8x8xf32>
    %cst_36 = arith.constant dense<0.000000e+00> : vector<2x8xf32>
    %86 = vector.multi_reduction <add>, %85, %cst_36 [2] : vector<2x8x8xf32> to vector<2x8xf32>
    %87 = vector.shape_cast %86 : vector<2x8xf32> to vector<2x8x1xf32>
    %88 = tpu.reciprocal %87 {approx = true} : vector<2x8x1xf32> -> vector<2x8x1xf32>
    %89 = vector.broadcast %88 : vector<2x8x1xf32> to vector<2x8x8xf32>
    %90 = arith.mulf %85, %89 : vector<2x8x8xf32>
    "tpu.trace_start"() <{level = 10 : i32, message = "bqk,bkd->bqd"}> : () -> ()
    %cst_37 = arith.constant dense<0.000000e+00> : vector<2x8x8xf32>
    %91 = tpu.matmul %90, %77, %cst_37 {dimension_numbers = #tpu.dot_dimension_numbers<[2], [1], [1], [2], [0, 0, 0, 1, 1, 2], [0], [0]>} : vector<2x8x8xf32>, vector<2x8x8xf32>, vector<2x8x8xf32> -> vector<2x8x8xf32>
    "tpu.trace_stop"() : () -> ()
    %92 = vector.shape_cast %91 : vector<2x8x8xf32> to vector<16x8xf32>
    %93 = vector.extract_strided_slice %46 {offsets = [8, 0], sizes = [8, 32], strides = [1, 1]} : vector<32x32xf32> to vector<8x32xf32>
    %cst_38 = arith.constant dense<0.000000e+00> : vector<16x32xf32>
    %94 = tpu.matmul %92, %93, %cst_38 {dimension_numbers = #tpu.dot_dimension_numbers<[1], [0], [0], [1], [0, 0, 1, 1], [], []>} : vector<16x8xf32>, vector<8x32xf32>, vector<16x32xf32> -> vector<16x32xf32>
    %95 = arith.addf %71, %94 : vector<16x32xf32>
    %96 = vector.extract_strided_slice %43 {offsets = [0, 16], sizes = [16, 8], strides = [1, 1]} : vector<16x32xf32> to vector<16x8xf32>
    %97 = vector.shape_cast %96 : vector<16x8xf32> to vector<2x8x8xf32>
    %98 = vector.extract_strided_slice %44 {offsets = [0, 16], sizes = [16, 8], strides = [1, 1]} : vector<16x32xf32> to vector<16x8xf32>
    %99 = vector.shape_cast %98 : vector<16x8xf32> to vector<2x8x8xf32>
    %100 = vector.extract_strided_slice %45 {offsets = [0, 16], sizes = [16, 8], strides = [1, 1]} : vector<16x32xf32> to vector<16x8xf32>
    %101 = vector.shape_cast %100 : vector<16x8xf32> to vector<2x8x8xf32>
    "tpu.trace_start"() <{level = 10 : i32, message = "bqd,bkd->bqk"}> : () -> ()
    %cst_39 = arith.constant dense<0.000000e+00> : vector<2x8x8xf32>
    %102 = tpu.matmul %97, %99, %cst_39 {dimension_numbers = #tpu.dot_dimension_numbers<[2], [2], [1], [1], [0, 0, 0, 1, 1, 1], [0], [0]>} : vector<2x8x8xf32>, vector<2x8x8xf32>, vector<2x8x8xf32> -> vector<2x8x8xf32>
    "tpu.trace_stop"() : () -> ()
    %cst_40 = arith.constant 0.353553385 : f32
    %103 = vector.broadcast %cst_40 : f32 to vector<2x8x8xf32>
    %104 = arith.mulf %102, %103 : vector<2x8x8xf32>
    %cst_41 = arith.constant dense<0xFF800000> : vector<2x8xf32>
    %105 = vector.multi_reduction <maximumf>, %104, %cst_41 [2] : vector<2x8x8xf32> to vector<2x8xf32>
    %106 = vector.shape_cast %105 : vector<2x8xf32> to vector<2x8x1xf32>
    %107 = vector.broadcast %106 : vector<2x8x1xf32> to vector<2x8x8xf32>
    %108 = arith.subf %104, %107 : vector<2x8x8xf32>
    %109 = math.exp %108 : vector<2x8x8xf32>
    %cst_42 = arith.constant dense<0.000000e+00> : vector<2x8xf32>
    %110 = vector.multi_reduction <add>, %109, %cst_42 [2] : vector<2x8x8xf32> to vector<2x8xf32>
    %111 = vector.shape_cast %110 : vector<2x8xf32> to vector<2x8x1xf32>
    %112 = tpu.reciprocal %111 {approx = true} : vector<2x8x1xf32> -> vector<2x8x1xf32>
    %113 = vector.broadcast %112 : vector<2x8x1xf32> to vector<2x8x8xf32>
    %114 = arith.mulf %109, %113 : vector<2x8x8xf32>
    "tpu.trace_start"() <{level = 10 : i32, message = "bqk,bkd->bqd"}> : () -> ()
    %cst_43 = arith.constant dense<0.000000e+00> : vector<2x8x8xf32>
    %115 = tpu.matmul %114, %101, %cst_43 {dimension_numbers = #tpu.dot_dimension_numbers<[2], [1], [1], [2], [0, 0, 0, 1, 1, 2], [0], [0]>} : vector<2x8x8xf32>, vector<2x8x8xf32>, vector<2x8x8xf32> -> vector<2x8x8xf32>
    "tpu.trace_stop"() : () -> ()
    %116 = vector.shape_cast %115 : vector<2x8x8xf32> to vector<16x8xf32>
    %117 = vector.extract_strided_slice %46 {offsets = [16, 0], sizes = [8, 32], strides = [1, 1]} : vector<32x32xf32> to vector<8x32xf32>
    %cst_44 = arith.constant dense<0.000000e+00> : vector<16x32xf32>
    %118 = tpu.matmul %116, %117, %cst_44 {dimension_numbers = #tpu.dot_dimension_numbers<[1], [0], [0], [1], [0, 0, 1, 1], [], []>} : vector<16x8xf32>, vector<8x32xf32>, vector<16x32xf32> -> vector<16x32xf32>
    %119 = arith.addf %95, %118 : vector<16x32xf32>
    %120 = vector.extract_strided_slice %43 {offsets = [0, 24], sizes = [16, 8], strides = [1, 1]} : vector<16x32xf32> to vector<16x8xf32>
    %121 = vector.shape_cast %120 : vector<16x8xf32> to vector<2x8x8xf32>
    %122 = vector.extract_strided_slice %44 {offsets = [0, 24], sizes = [16, 8], strides = [1, 1]} : vector<16x32xf32> to vector<16x8xf32>
    %123 = vector.shape_cast %122 : vector<16x8xf32> to vector<2x8x8xf32>
    %124 = vector.extract_strided_slice %45 {offsets = [0, 24], sizes = [16, 8], strides = [1, 1]} : vector<16x32xf32> to vector<16x8xf32>
    %125 = vector.shape_cast %124 : vector<16x8xf32> to vector<2x8x8xf32>
    "tpu.trace_start"() <{level = 10 : i32, message = "bqd,bkd->bqk"}> : () -> ()
    %cst_45 = arith.constant dense<0.000000e+00> : vector<2x8x8xf32>
    %126 = tpu.matmul %121, %123, %cst_45 {dimension_numbers = #tpu.dot_dimension_numbers<[2], [2], [1], [1], [0, 0, 0, 1, 1, 1], [0], [0]>} : vector<2x8x8xf32>, vector<2x8x8xf32>, vector<2x8x8xf32> -> vector<2x8x8xf32>
    "tpu.trace_stop"() : () -> ()
    %cst_46 = arith.constant 0.353553385 : f32
    %127 = vector.broadcast %cst_46 : f32 to vector<2x8x8xf32>
    %128 = arith.mulf %126, %127 : vector<2x8x8xf32>
    %cst_47 = arith.constant dense<0xFF800000> : vector<2x8xf32>
    %129 = vector.multi_reduction <maximumf>, %128, %cst_47 [2] : vector<2x8x8xf32> to vector<2x8xf32>
    %130 = vector.shape_cast %129 : vector<2x8xf32> to vector<2x8x1xf32>
    %131 = vector.broadcast %130 : vector<2x8x1xf32> to vector<2x8x8xf32>
    %132 = arith.subf %128, %131 : vector<2x8x8xf32>
    %133 = math.exp %132 : vector<2x8x8xf32>
    %cst_48 = arith.constant dense<0.000000e+00> : vector<2x8xf32>
    %134 = vector.multi_reduction <add>, %133, %cst_48 [2] : vector<2x8x8xf32> to vector<2x8xf32>
    %135 = vector.shape_cast %134 : vector<2x8xf32> to vector<2x8x1xf32>
    %136 = tpu.reciprocal %135 {approx = true} : vector<2x8x1xf32> -> vector<2x8x1xf32>
    %137 = vector.broadcast %136 : vector<2x8x1xf32> to vector<2x8x8xf32>
    %138 = arith.mulf %133, %137 : vector<2x8x8xf32>
    "tpu.trace_start"() <{level = 10 : i32, message = "bqk,bkd->bqd"}> : () -> ()
    %cst_49 = arith.constant dense<0.000000e+00> : vector<2x8x8xf32>
    %139 = tpu.matmul %138, %125, %cst_49 {dimension_numbers = #tpu.dot_dimension_numbers<[2], [1], [1], [2], [0, 0, 0, 1, 1, 2], [0], [0]>} : vector<2x8x8xf32>, vector<2x8x8xf32>, vector<2x8x8xf32> -> vector<2x8x8xf32>
    "tpu.trace_stop"() : () -> ()
    %140 = vector.shape_cast %139 : vector<2x8x8xf32> to vector<16x8xf32>
    %141 = vector.extract_strided_slice %46 {offsets = [24, 0], sizes = [8, 32], strides = [1, 1]} : vector<32x32xf32> to vector<8x32xf32>
    %cst_50 = arith.constant dense<0.000000e+00> : vector<16x32xf32>
    %142 = tpu.matmul %140, %141, %cst_50 {dimension_numbers = #tpu.dot_dimension_numbers<[1], [0], [0], [1], [0, 0, 1, 1], [], []>} : vector<16x8xf32>, vector<8x32xf32>, vector<16x32xf32> -> vector<16x32xf32>
    %143 = arith.addf %119, %142 : vector<16x32xf32>
    %144 = arith.addf %18, %143 : vector<16x32xf32>
    %c0_51 = arith.constant 0 : index
    %c0_52 = arith.constant 0 : index
    %145 = vector.load %arg34[%c0_51, %c0_52] : memref<1x32xf32, #tpu.memory_space<vmem>>, vector<1x32xf32>
    %c0_53 = arith.constant 0 : index
    %c0_54 = arith.constant 0 : index
    %146 = vector.load %arg33[%c0_53, %c0_54] : memref<1x32xf32, #tpu.memory_space<vmem>>, vector<1x32xf32>
    %cst_55 = arith.constant dense<0.000000e+00> : vector<16xf32>
    %147 = vector.multi_reduction <add>, %144, %cst_55 [1] : vector<16x32xf32> to vector<16xf32>
    %148 = vector.shape_cast %147 : vector<16xf32> to vector<16x1xf32>
    %cst_56 = arith.constant 3.200000e+01 : f32
    %149 = vector.broadcast %cst_56 : f32 to vector<16x1xf32>
    %150 = arith.divf %148, %149 : vector<16x1xf32>
    %151 = vector.broadcast %150 : vector<16x1xf32> to vector<16x32xf32>
    %152 = arith.subf %144, %151 : vector<16x32xf32>
    %153 = arith.mulf %152, %152 : vector<16x32xf32>
    %cst_57 = arith.constant dense<0.000000e+00> : vector<16xf32>
    %154 = vector.multi_reduction <add>, %153, %cst_57 [1] : vector<16x32xf32> to vector<16xf32>
    %155 = vector.shape_cast %154 : vector<16xf32> to vector<16x1xf32>
    %cst_58 = arith.constant 3.200000e+01 : f32
    %156 = vector.broadcast %cst_58 : f32 to vector<16x1xf32>
    %157 = arith.divf %155, %156 : vector<16x1xf32>
    %cst_59 = arith.constant 9.99999974E-6 : f32
    %158 = vector.broadcast %cst_59 : f32 to vector<16x1xf32>
    %159 = arith.addf %157, %158 : vector<16x1xf32>
    %160 = math.rsqrt %159 : vector<16x1xf32>
    %161 = vector.broadcast %160 : vector<16x1xf32> to vector<16x32xf32>
    %162 = arith.mulf %152, %161 : vector<16x32xf32>
    %163 = vector.broadcast %145 : vector<1x32xf32> to vector<16x32xf32>
    %164 = arith.mulf %162, %163 : vector<16x32xf32>
    %165 = vector.broadcast %146 : vector<1x32xf32> to vector<16x32xf32>
    %166 = arith.addf %164, %165 : vector<16x32xf32>
    %c0_60 = arith.constant 0 : index
    %c0_61 = arith.constant 0 : index
    %167 = vector.load %arg29[%c0_60, %c0_61] : memref<32x128xf32, #tpu.memory_space<vmem>>, vector<32x128xf32>
    %cst_62 = arith.constant dense<0.000000e+00> : vector<16x128xf32>
    %168 = tpu.matmul %166, %167, %cst_62 {dimension_numbers = #tpu.dot_dimension_numbers<[1], [0], [0], [1], [0, 0, 1, 1], [], []>} : vector<16x32xf32>, vector<32x128xf32>, vector<16x128xf32> -> vector<16x128xf32>
    %c0_63 = arith.constant 0 : index
    %c0_64 = arith.constant 0 : index
    %169 = vector.load %arg27[%c0_63, %c0_64] : memref<1x128xf32, #tpu.memory_space<vmem>>, vector<1x128xf32>
    %170 = vector.broadcast %169 : vector<1x128xf32> to vector<16x128xf32>
    %171 = arith.addf %168, %170 : vector<16x128xf32>
    %172 = arith.mulf %171, %171 : vector<16x128xf32>
    %173 = arith.mulf %171, %172 : vector<16x128xf32>
    %cst_65 = arith.constant 4.471500e-02 : f32
    %174 = vector.broadcast %cst_65 : f32 to vector<16x128xf32>
    %175 = arith.mulf %174, %173 : vector<16x128xf32>
    %176 = arith.addf %171, %175 : vector<16x128xf32>
    %cst_66 = arith.constant 0.797884583 : f32
    %177 = vector.broadcast %cst_66 : f32 to vector<16x128xf32>
    %178 = arith.mulf %177, %176 : vector<16x128xf32>
    %179 = math.tanh %178 : vector<16x128xf32>
    %cst_67 = arith.constant 1.000000e+00 : f32
    %180 = vector.broadcast %cst_67 : f32 to vector<16x128xf32>
    %181 = arith.addf %180, %179 : vector<16x128xf32>
    %cst_68 = arith.constant 5.000000e-01 : f32
    %182 = vector.broadcast %cst_68 : f32 to vector<16x128xf32>
    %183 = arith.mulf %182, %181 : vector<16x128xf32>
    %184 = arith.mulf %171, %183 : vector<16x128xf32>
    %c0_69 = arith.constant 0 : index
    %c0_70 = arith.constant 0 : index
    %185 = vector.load %arg30[%c0_69, %c0_70] : memref<128x32xf32, #tpu.memory_space<vmem>>, vector<128x32xf32>
    %cst_71 = arith.constant dense<0.000000e+00> : vector<16x32xf32>
    %186 = tpu.matmul %184, %185, %cst_71 {dimension_numbers = #tpu.dot_dimension_numbers<[1], [0], [0], [1], [0, 0, 1, 1], [], []>} : vector<16x128xf32>, vector<128x32xf32>, vector<16x32xf32> -> vector<16x32xf32>
    %187 = arith.addf %144, %186 : vector<16x32xf32>
    %c0_72 = arith.constant 0 : index
    %c0_73 = arith.constant 0 : index
    %188 = vector.load %arg28[%c0_72, %c0_73] : memref<1x32xf32, #tpu.memory_space<vmem>>, vector<1x32xf32>
    %189 = vector.broadcast %188 : vector<1x32xf32> to vector<16x32xf32>
    %190 = arith.addf %187, %189 : vector<16x32xf32>
    %c0_74 = arith.constant 0 : index
    %c0_75 = arith.constant 0 : index
    %191 = vector.load %arg38[%c0_74, %c0_75] : memref<1x32xf32, #tpu.memory_space<vmem>>, vector<1x32xf32>
    %c0_76 = arith.constant 0 : index
    %c0_77 = arith.constant 0 : index
    %192 = vector.load %arg37[%c0_76, %c0_77] : memref<1x32xf32, #tpu.memory_space<vmem>>, vector<1x32xf32>
    %cst_78 = arith.constant dense<0.000000e+00> : vector<16xf32>
    %193 = vector.multi_reduction <add>, %190, %cst_78 [1] : vector<16x32xf32> to vector<16xf32>
    %194 = vector.shape_cast %193 : vector<16xf32> to vector<16x1xf32>
    %cst_79 = arith.constant 3.200000e+01 : f32
    %195 = vector.broadcast %cst_79 : f32 to vector<16x1xf32>
    %196 = arith.divf %194, %195 : vector<16x1xf32>
    %197 = vector.broadcast %196 : vector<16x1xf32> to vector<16x32xf32>
    %198 = arith.subf %190, %197 : vector<16x32xf32>
    %199 = arith.mulf %198, %198 : vector<16x32xf32>
    %cst_80 = arith.constant dense<0.000000e+00> : vector<16xf32>
    %200 = vector.multi_reduction <add>, %199, %cst_80 [1] : vector<16x32xf32> to vector<16xf32>
    %201 = vector.shape_cast %200 : vector<16xf32> to vector<16x1xf32>
    %cst_81 = arith.constant 3.200000e+01 : f32
    %202 = vector.broadcast %cst_81 : f32 to vector<16x1xf32>
    %203 = arith.divf %201, %202 : vector<16x1xf32>
    %cst_82 = arith.constant 9.99999974E-6 : f32
    %204 = vector.broadcast %cst_82 : f32 to vector<16x1xf32>
    %205 = arith.addf %203, %204 : vector<16x1xf32>
    %206 = math.rsqrt %205 : vector<16x1xf32>
    %207 = vector.broadcast %206 : vector<16x1xf32> to vector<16x32xf32>
    %208 = arith.mulf %198, %207 : vector<16x32xf32>
    %209 = vector.broadcast %191 : vector<1x32xf32> to vector<16x32xf32>
    %210 = arith.mulf %208, %209 : vector<16x32xf32>
    %211 = vector.broadcast %192 : vector<1x32xf32> to vector<16x32xf32>
    %212 = arith.addf %210, %211 : vector<16x32xf32>
    %213 = tpu.iota {dimensions = array<i32: 1>} : vector<16x64xi32>
    %214 = vector.broadcast %2 : vector<16x1xi32> to vector<16x64xi32>
    %215 = arith.cmpi eq, %213, %214 : vector<16x64xi32>
    %216 = arith.extui %215 : vector<16x64xi1> to vector<16x64xi32>
    %217 = arith.sitofp %216 : vector<16x64xi32> to vector<16x64xf32>
    %c0_83 = arith.constant 0 : index
    %c0_84 = arith.constant 0 : index
    %218 = vector.load %arg26[%c0_83, %c0_84] : memref<64x32xf32, #tpu.memory_space<vmem>>, vector<64x32xf32>
    %cst_85 = arith.constant dense<0.000000e+00> : vector<16x32xf32>
    %219 = tpu.matmul %217, %218, %cst_85 {dimension_numbers = #tpu.dot_dimension_numbers<[1], [0], [0], [1], [0, 0, 1, 1], [], []>} : vector<16x64xf32>, vector<64x32xf32>, vector<16x32xf32> -> vector<16x32xf32>
    %220 = tpu.iota {dimensions = array<i32: 1>} : vector<16x8xi32>
    %221 = vector.broadcast %3 : vector<16x1xi32> to vector<16x8xi32>
    %222 = arith.cmpi eq, %220, %221 : vector<16x8xi32>
    %223 = arith.extui %222 : vector<16x8xi1> to vector<16x8xi32>
    %224 = arith.sitofp %223 : vector<16x8xi32> to vector<16x8xf32>
    %c0_86 = arith.constant 0 : index
    %c0_87 = arith.constant 0 : index
    %225 = vector.load %arg23[%c0_86, %c0_87] : memref<8x32xf32, #tpu.memory_space<vmem>>, vector<8x32xf32>
    %cst_88 = arith.constant dense<0.000000e+00> : vector<16x32xf32>
    %226 = tpu.matmul %224, %225, %cst_88 {dimension_numbers = #tpu.dot_dimension_numbers<[1], [0], [0], [1], [0, 0, 1, 1], [], []>} : vector<16x8xf32>, vector<8x32xf32>, vector<16x32xf32> -> vector<16x32xf32>
    %227 = arith.addf %219, %226 : vector<16x32xf32>
    %c0_89 = arith.constant 0 : index
    %c0_90 = arith.constant 0 : index
    %228 = vector.load %arg14[%c0_89, %c0_90] : memref<1x32xf32, #tpu.memory_space<vmem>>, vector<1x32xf32>
    %c0_91 = arith.constant 0 : index
    %c0_92 = arith.constant 0 : index
    %229 = vector.load %arg13[%c0_91, %c0_92] : memref<1x32xf32, #tpu.memory_space<vmem>>, vector<1x32xf32>
    %cst_93 = arith.constant dense<0.000000e+00> : vector<16xf32>
    %230 = vector.multi_reduction <add>, %227, %cst_93 [1] : vector<16x32xf32> to vector<16xf32>
    %231 = vector.shape_cast %230 : vector<16xf32> to vector<16x1xf32>
    %cst_94 = arith.constant 3.200000e+01 : f32
    %232 = vector.broadcast %cst_94 : f32 to vector<16x1xf32>
    %233 = arith.divf %231, %232 : vector<16x1xf32>
    %234 = vector.broadcast %233 : vector<16x1xf32> to vector<16x32xf32>
    %235 = arith.subf %227, %234 : vector<16x32xf32>
    %236 = arith.mulf %235, %235 : vector<16x32xf32>
    %cst_95 = arith.constant dense<0.000000e+00> : vector<16xf32>
    %237 = vector.multi_reduction <add>, %236, %cst_95 [1] : vector<16x32xf32> to vector<16xf32>
    %238 = vector.shape_cast %237 : vector<16xf32> to vector<16x1xf32>
    %cst_96 = arith.constant 3.200000e+01 : f32
    %239 = vector.broadcast %cst_96 : f32 to vector<16x1xf32>
    %240 = arith.divf %238, %239 : vector<16x1xf32>
    %cst_97 = arith.constant 9.99999974E-6 : f32
    %241 = vector.broadcast %cst_97 : f32 to vector<16x1xf32>
    %242 = arith.addf %240, %241 : vector<16x1xf32>
    %243 = math.rsqrt %242 : vector<16x1xf32>
    %244 = vector.broadcast %243 : vector<16x1xf32> to vector<16x32xf32>
    %245 = arith.mulf %235, %244 : vector<16x32xf32>
    %246 = vector.broadcast %228 : vector<1x32xf32> to vector<16x32xf32>
    %247 = arith.mulf %245, %246 : vector<16x32xf32>
    %248 = vector.broadcast %229 : vector<1x32xf32> to vector<16x32xf32>
    %249 = arith.addf %247, %248 : vector<16x32xf32>
    %c0_98 = arith.constant 0 : index
    %c0_99 = arith.constant 0 : index
    %250 = vector.load %arg20[%c0_98, %c0_99] : memref<32x96xf32, #tpu.memory_space<vmem>>, vector<32x96xf32>
    %cst_100 = arith.constant dense<0.000000e+00> : vector<16x96xf32>
    %251 = tpu.matmul %249, %250, %cst_100 {dimension_numbers = #tpu.dot_dimension_numbers<[1], [0], [0], [1], [0, 0, 1, 1], [], []>} : vector<16x32xf32>, vector<32x96xf32>, vector<16x96xf32> -> vector<16x96xf32>
    %252 = vector.extract_strided_slice %251 {offsets = [0, 0], sizes = [16, 32], strides = [1, 1]} : vector<16x96xf32> to vector<16x32xf32>
    %253 = vector.extract_strided_slice %251 {offsets = [0, 32], sizes = [16, 32], strides = [1, 1]} : vector<16x96xf32> to vector<16x32xf32>
    %254 = vector.extract_strided_slice %251 {offsets = [0, 64], sizes = [16, 32], strides = [1, 1]} : vector<16x96xf32> to vector<16x32xf32>
    %c0_101 = arith.constant 0 : index
    %c0_102 = arith.constant 0 : index
    %255 = vector.load %arg19[%c0_101, %c0_102] : memref<32x32xf32, #tpu.memory_space<vmem>>, vector<32x32xf32>
    %cst_103 = arith.constant 0.000000e+00 : f32
    %256 = vector.broadcast %cst_103 : f32 to vector<16x32xf32>
    %257 = tpu.iota {dimensions = array<i32: 1>} : vector<2x8x8xi32>
    %258 = tpu.iota {dimensions = array<i32: 2>} : vector<2x8x8xi32>
    %259 = arith.cmpi sle, %258, %257 : vector<2x8x8xi32>
    %cst_104 = arith.constant 0.000000e+00 : f32
    %cst_105 = arith.constant -1.000000e+30 : f32
    %260 = vector.broadcast %cst_104 : f32 to vector<2x8x8xf32>
    %261 = vector.broadcast %cst_105 : f32 to vector<2x8x8xf32>
    %262 = arith.select %259, %260, %261 : vector<2x8x8xi1>, vector<2x8x8xf32>
    %263 = vector.extract_strided_slice %252 {offsets = [0, 0], sizes = [16, 8], strides = [1, 1]} : vector<16x32xf32> to vector<16x8xf32>
    %264 = vector.shape_cast %263 : vector<16x8xf32> to vector<2x8x8xf32>
    %265 = vector.extract_strided_slice %253 {offsets = [0, 0], sizes = [16, 8], strides = [1, 1]} : vector<16x32xf32> to vector<16x8xf32>
    %266 = vector.shape_cast %265 : vector<16x8xf32> to vector<2x8x8xf32>
    %267 = vector.extract_strided_slice %254 {offsets = [0, 0], sizes = [16, 8], strides = [1, 1]} : vector<16x32xf32> to vector<16x8xf32>
    %268 = vector.shape_cast %267 : vector<16x8xf32> to vector<2x8x8xf32>
    "tpu.trace_start"() <{level = 10 : i32, message = "bqd,bkd->bqk"}> : () -> ()
    %cst_106 = arith.constant dense<0.000000e+00> : vector<2x8x8xf32>
    %269 = tpu.matmul %264, %266, %cst_106 {dimension_numbers = #tpu.dot_dimension_numbers<[2], [2], [1], [1], [0, 0, 0, 1, 1, 1], [0], [0]>} : vector<2x8x8xf32>, vector<2x8x8xf32>, vector<2x8x8xf32> -> vector<2x8x8xf32>
    "tpu.trace_stop"() : () -> ()
    %cst_107 = arith.constant 0.353553385 : f32
    %270 = vector.broadcast %cst_107 : f32 to vector<2x8x8xf32>
    %271 = arith.mulf %269, %270 : vector<2x8x8xf32>
    %272 = arith.addf %271, %262 : vector<2x8x8xf32>
    %cst_108 = arith.constant dense<0xFF800000> : vector<2x8xf32>
    %273 = vector.multi_reduction <maximumf>, %272, %cst_108 [2] : vector<2x8x8xf32> to vector<2x8xf32>
    %274 = vector.shape_cast %273 : vector<2x8xf32> to vector<2x8x1xf32>
    %275 = vector.broadcast %274 : vector<2x8x1xf32> to vector<2x8x8xf32>
    %276 = arith.subf %272, %275 : vector<2x8x8xf32>
    %277 = math.exp %276 : vector<2x8x8xf32>
    %cst_109 = arith.constant dense<0.000000e+00> : vector<2x8xf32>
    %278 = vector.multi_reduction <add>, %277, %cst_109 [2] : vector<2x8x8xf32> to vector<2x8xf32>
    %279 = vector.shape_cast %278 : vector<2x8xf32> to vector<2x8x1xf32>
    %280 = tpu.reciprocal %279 {approx = true} : vector<2x8x1xf32> -> vector<2x8x1xf32>
    %281 = vector.broadcast %280 : vector<2x8x1xf32> to vector<2x8x8xf32>
    %282 = arith.mulf %277, %281 : vector<2x8x8xf32>
    "tpu.trace_start"() <{level = 10 : i32, message = "bqk,bkd->bqd"}> : () -> ()
    %cst_110 = arith.constant dense<0.000000e+00> : vector<2x8x8xf32>
    %283 = tpu.matmul %282, %268, %cst_110 {dimension_numbers = #tpu.dot_dimension_numbers<[2], [1], [1], [2], [0, 0, 0, 1, 1, 2], [0], [0]>} : vector<2x8x8xf32>, vector<2x8x8xf32>, vector<2x8x8xf32> -> vector<2x8x8xf32>
    "tpu.trace_stop"() : () -> ()
    %284 = vector.shape_cast %283 : vector<2x8x8xf32> to vector<16x8xf32>
    %285 = vector.extract_strided_slice %255 {offsets = [0, 0], sizes = [8, 32], strides = [1, 1]} : vector<32x32xf32> to vector<8x32xf32>
    %cst_111 = arith.constant dense<0.000000e+00> : vector<16x32xf32>
    %286 = tpu.matmul %284, %285, %cst_111 {dimension_numbers = #tpu.dot_dimension_numbers<[1], [0], [0], [1], [0, 0, 1, 1], [], []>} : vector<16x8xf32>, vector<8x32xf32>, vector<16x32xf32> -> vector<16x32xf32>
    %287 = arith.addf %256, %286 : vector<16x32xf32>
    %288 = vector.extract_strided_slice %252 {offsets = [0, 8], sizes = [16, 8], strides = [1, 1]} : vector<16x32xf32> to vector<16x8xf32>
    %289 = vector.shape_cast %288 : vector<16x8xf32> to vector<2x8x8xf32>
    %290 = vector.extract_strided_slice %253 {offsets = [0, 8], sizes = [16, 8], strides = [1, 1]} : vector<16x32xf32> to vector<16x8xf32>
    %291 = vector.shape_cast %290 : vector<16x8xf32> to vector<2x8x8xf32>
    %292 = vector.extract_strided_slice %254 {offsets = [0, 8], sizes = [16, 8], strides = [1, 1]} : vector<16x32xf32> to vector<16x8xf32>
    %293 = vector.shape_cast %292 : vector<16x8xf32> to vector<2x8x8xf32>
    "tpu.trace_start"() <{level = 10 : i32, message = "bqd,bkd->bqk"}> : () -> ()
    %cst_112 = arith.constant dense<0.000000e+00> : vector<2x8x8xf32>
    %294 = tpu.matmul %289, %291, %cst_112 {dimension_numbers = #tpu.dot_dimension_numbers<[2], [2], [1], [1], [0, 0, 0, 1, 1, 1], [0], [0]>} : vector<2x8x8xf32>, vector<2x8x8xf32>, vector<2x8x8xf32> -> vector<2x8x8xf32>
    "tpu.trace_stop"() : () -> ()
    %cst_113 = arith.constant 0.353553385 : f32
    %295 = vector.broadcast %cst_113 : f32 to vector<2x8x8xf32>
    %296 = arith.mulf %294, %295 : vector<2x8x8xf32>
    %297 = arith.addf %296, %262 : vector<2x8x8xf32>
    %cst_114 = arith.constant dense<0xFF800000> : vector<2x8xf32>
    %298 = vector.multi_reduction <maximumf>, %297, %cst_114 [2] : vector<2x8x8xf32> to vector<2x8xf32>
    %299 = vector.shape_cast %298 : vector<2x8xf32> to vector<2x8x1xf32>
    %300 = vector.broadcast %299 : vector<2x8x1xf32> to vector<2x8x8xf32>
    %301 = arith.subf %297, %300 : vector<2x8x8xf32>
    %302 = math.exp %301 : vector<2x8x8xf32>
    %cst_115 = arith.constant dense<0.000000e+00> : vector<2x8xf32>
    %303 = vector.multi_reduction <add>, %302, %cst_115 [2] : vector<2x8x8xf32> to vector<2x8xf32>
    %304 = vector.shape_cast %303 : vector<2x8xf32> to vector<2x8x1xf32>
    %305 = tpu.reciprocal %304 {approx = true} : vector<2x8x1xf32> -> vector<2x8x1xf32>
    %306 = vector.broadcast %305 : vector<2x8x1xf32> to vector<2x8x8xf32>
    %307 = arith.mulf %302, %306 : vector<2x8x8xf32>
    "tpu.trace_start"() <{level = 10 : i32, message = "bqk,bkd->bqd"}> : () -> ()
    %cst_116 = arith.constant dense<0.000000e+00> : vector<2x8x8xf32>
    %308 = tpu.matmul %307, %293, %cst_116 {dimension_numbers = #tpu.dot_dimension_numbers<[2], [1], [1], [2], [0, 0, 0, 1, 1, 2], [0], [0]>} : vector<2x8x8xf32>, vector<2x8x8xf32>, vector<2x8x8xf32> -> vector<2x8x8xf32>
    "tpu.trace_stop"() : () -> ()
    %309 = vector.shape_cast %308 : vector<2x8x8xf32> to vector<16x8xf32>
    %310 = vector.extract_strided_slice %255 {offsets = [8, 0], sizes = [8, 32], strides = [1, 1]} : vector<32x32xf32> to vector<8x32xf32>
    %cst_117 = arith.constant dense<0.000000e+00> : vector<16x32xf32>
    %311 = tpu.matmul %309, %310, %cst_117 {dimension_numbers = #tpu.dot_dimension_numbers<[1], [0], [0], [1], [0, 0, 1, 1], [], []>} : vector<16x8xf32>, vector<8x32xf32>, vector<16x32xf32> -> vector<16x32xf32>
    %312 = arith.addf %287, %311 : vector<16x32xf32>
    %313 = vector.extract_strided_slice %252 {offsets = [0, 16], sizes = [16, 8], strides = [1, 1]} : vector<16x32xf32> to vector<16x8xf32>
    %314 = vector.shape_cast %313 : vector<16x8xf32> to vector<2x8x8xf32>
    %315 = vector.extract_strided_slice %253 {offsets = [0, 16], sizes = [16, 8], strides = [1, 1]} : vector<16x32xf32> to vector<16x8xf32>
    %316 = vector.shape_cast %315 : vector<16x8xf32> to vector<2x8x8xf32>
    %317 = vector.extract_strided_slice %254 {offsets = [0, 16], sizes = [16, 8], strides = [1, 1]} : vector<16x32xf32> to vector<16x8xf32>
    %318 = vector.shape_cast %317 : vector<16x8xf32> to vector<2x8x8xf32>
    "tpu.trace_start"() <{level = 10 : i32, message = "bqd,bkd->bqk"}> : () -> ()
    %cst_118 = arith.constant dense<0.000000e+00> : vector<2x8x8xf32>
    %319 = tpu.matmul %314, %316, %cst_118 {dimension_numbers = #tpu.dot_dimension_numbers<[2], [2], [1], [1], [0, 0, 0, 1, 1, 1], [0], [0]>} : vector<2x8x8xf32>, vector<2x8x8xf32>, vector<2x8x8xf32> -> vector<2x8x8xf32>
    "tpu.trace_stop"() : () -> ()
    %cst_119 = arith.constant 0.353553385 : f32
    %320 = vector.broadcast %cst_119 : f32 to vector<2x8x8xf32>
    %321 = arith.mulf %319, %320 : vector<2x8x8xf32>
    %322 = arith.addf %321, %262 : vector<2x8x8xf32>
    %cst_120 = arith.constant dense<0xFF800000> : vector<2x8xf32>
    %323 = vector.multi_reduction <maximumf>, %322, %cst_120 [2] : vector<2x8x8xf32> to vector<2x8xf32>
    %324 = vector.shape_cast %323 : vector<2x8xf32> to vector<2x8x1xf32>
    %325 = vector.broadcast %324 : vector<2x8x1xf32> to vector<2x8x8xf32>
    %326 = arith.subf %322, %325 : vector<2x8x8xf32>
    %327 = math.exp %326 : vector<2x8x8xf32>
    %cst_121 = arith.constant dense<0.000000e+00> : vector<2x8xf32>
    %328 = vector.multi_reduction <add>, %327, %cst_121 [2] : vector<2x8x8xf32> to vector<2x8xf32>
    %329 = vector.shape_cast %328 : vector<2x8xf32> to vector<2x8x1xf32>
    %330 = tpu.reciprocal %329 {approx = true} : vector<2x8x1xf32> -> vector<2x8x1xf32>
    %331 = vector.broadcast %330 : vector<2x8x1xf32> to vector<2x8x8xf32>
    %332 = arith.mulf %327, %331 : vector<2x8x8xf32>
    "tpu.trace_start"() <{level = 10 : i32, message = "bqk,bkd->bqd"}> : () -> ()
    %cst_122 = arith.constant dense<0.000000e+00> : vector<2x8x8xf32>
    %333 = tpu.matmul %332, %318, %cst_122 {dimension_numbers = #tpu.dot_dimension_numbers<[2], [1], [1], [2], [0, 0, 0, 1, 1, 2], [0], [0]>} : vector<2x8x8xf32>, vector<2x8x8xf32>, vector<2x8x8xf32> -> vector<2x8x8xf32>
    "tpu.trace_stop"() : () -> ()
    %334 = vector.shape_cast %333 : vector<2x8x8xf32> to vector<16x8xf32>
    %335 = vector.extract_strided_slice %255 {offsets = [16, 0], sizes = [8, 32], strides = [1, 1]} : vector<32x32xf32> to vector<8x32xf32>
    %cst_123 = arith.constant dense<0.000000e+00> : vector<16x32xf32>
    %336 = tpu.matmul %334, %335, %cst_123 {dimension_numbers = #tpu.dot_dimension_numbers<[1], [0], [0], [1], [0, 0, 1, 1], [], []>} : vector<16x8xf32>, vector<8x32xf32>, vector<16x32xf32> -> vector<16x32xf32>
    %337 = arith.addf %312, %336 : vector<16x32xf32>
    %338 = vector.extract_strided_slice %252 {offsets = [0, 24], sizes = [16, 8], strides = [1, 1]} : vector<16x32xf32> to vector<16x8xf32>
    %339 = vector.shape_cast %338 : vector<16x8xf32> to vector<2x8x8xf32>
    %340 = vector.extract_strided_slice %253 {offsets = [0, 24], sizes = [16, 8], strides = [1, 1]} : vector<16x32xf32> to vector<16x8xf32>
    %341 = vector.shape_cast %340 : vector<16x8xf32> to vector<2x8x8xf32>
    %342 = vector.extract_strided_slice %254 {offsets = [0, 24], sizes = [16, 8], strides = [1, 1]} : vector<16x32xf32> to vector<16x8xf32>
    %343 = vector.shape_cast %342 : vector<16x8xf32> to vector<2x8x8xf32>
    "tpu.trace_start"() <{level = 10 : i32, message = "bqd,bkd->bqk"}> : () -> ()
    %cst_124 = arith.constant dense<0.000000e+00> : vector<2x8x8xf32>
    %344 = tpu.matmul %339, %341, %cst_124 {dimension_numbers = #tpu.dot_dimension_numbers<[2], [2], [1], [1], [0, 0, 0, 1, 1, 1], [0], [0]>} : vector<2x8x8xf32>, vector<2x8x8xf32>, vector<2x8x8xf32> -> vector<2x8x8xf32>
    "tpu.trace_stop"() : () -> ()
    %cst_125 = arith.constant 0.353553385 : f32
    %345 = vector.broadcast %cst_125 : f32 to vector<2x8x8xf32>
    %346 = arith.mulf %344, %345 : vector<2x8x8xf32>
    %347 = arith.addf %346, %262 : vector<2x8x8xf32>
    %cst_126 = arith.constant dense<0xFF800000> : vector<2x8xf32>
    %348 = vector.multi_reduction <maximumf>, %347, %cst_126 [2] : vector<2x8x8xf32> to vector<2x8xf32>
    %349 = vector.shape_cast %348 : vector<2x8xf32> to vector<2x8x1xf32>
    %350 = vector.broadcast %349 : vector<2x8x1xf32> to vector<2x8x8xf32>
    %351 = arith.subf %347, %350 : vector<2x8x8xf32>
    %352 = math.exp %351 : vector<2x8x8xf32>
    %cst_127 = arith.constant dense<0.000000e+00> : vector<2x8xf32>
    %353 = vector.multi_reduction <add>, %352, %cst_127 [2] : vector<2x8x8xf32> to vector<2x8xf32>
    %354 = vector.shape_cast %353 : vector<2x8xf32> to vector<2x8x1xf32>
    %355 = tpu.reciprocal %354 {approx = true} : vector<2x8x1xf32> -> vector<2x8x1xf32>
    %356 = vector.broadcast %355 : vector<2x8x1xf32> to vector<2x8x8xf32>
    %357 = arith.mulf %352, %356 : vector<2x8x8xf32>
    "tpu.trace_start"() <{level = 10 : i32, message = "bqk,bkd->bqd"}> : () -> ()
    %cst_128 = arith.constant dense<0.000000e+00> : vector<2x8x8xf32>
    %358 = tpu.matmul %357, %343, %cst_128 {dimension_numbers = #tpu.dot_dimension_numbers<[2], [1], [1], [2], [0, 0, 0, 1, 1, 2], [0], [0]>} : vector<2x8x8xf32>, vector<2x8x8xf32>, vector<2x8x8xf32> -> vector<2x8x8xf32>
    "tpu.trace_stop"() : () -> ()
    %359 = vector.shape_cast %358 : vector<2x8x8xf32> to vector<16x8xf32>
    %360 = vector.extract_strided_slice %255 {offsets = [24, 0], sizes = [8, 32], strides = [1, 1]} : vector<32x32xf32> to vector<8x32xf32>
    %cst_129 = arith.constant dense<0.000000e+00> : vector<16x32xf32>
    %361 = tpu.matmul %359, %360, %cst_129 {dimension_numbers = #tpu.dot_dimension_numbers<[1], [0], [0], [1], [0, 0, 1, 1], [], []>} : vector<16x8xf32>, vector<8x32xf32>, vector<16x32xf32> -> vector<16x32xf32>
    %362 = arith.addf %337, %361 : vector<16x32xf32>
    %363 = arith.addf %227, %362 : vector<16x32xf32>
    %c0_130 = arith.constant 0 : index
    %c0_131 = arith.constant 0 : index
    %364 = vector.load %arg18[%c0_130, %c0_131] : memref<1x32xf32, #tpu.memory_space<vmem>>, vector<1x32xf32>
    %c0_132 = arith.constant 0 : index
    %c0_133 = arith.constant 0 : index
    %365 = vector.load %arg17[%c0_132, %c0_133] : memref<1x32xf32, #tpu.memory_space<vmem>>, vector<1x32xf32>
    %cst_134 = arith.constant dense<0.000000e+00> : vector<16xf32>
    %366 = vector.multi_reduction <add>, %363, %cst_134 [1] : vector<16x32xf32> to vector<16xf32>
    %367 = vector.shape_cast %366 : vector<16xf32> to vector<16x1xf32>
    %cst_135 = arith.constant 3.200000e+01 : f32
    %368 = vector.broadcast %cst_135 : f32 to vector<16x1xf32>
    %369 = arith.divf %367, %368 : vector<16x1xf32>
    %370 = vector.broadcast %369 : vector<16x1xf32> to vector<16x32xf32>
    %371 = arith.subf %363, %370 : vector<16x32xf32>
    %372 = arith.mulf %371, %371 : vector<16x32xf32>
    %cst_136 = arith.constant dense<0.000000e+00> : vector<16xf32>
    %373 = vector.multi_reduction <add>, %372, %cst_136 [1] : vector<16x32xf32> to vector<16xf32>
    %374 = vector.shape_cast %373 : vector<16xf32> to vector<16x1xf32>
    %cst_137 = arith.constant 3.200000e+01 : f32
    %375 = vector.broadcast %cst_137 : f32 to vector<16x1xf32>
    %376 = arith.divf %374, %375 : vector<16x1xf32>
    %cst_138 = arith.constant 9.99999974E-6 : f32
    %377 = vector.broadcast %cst_138 : f32 to vector<16x1xf32>
    %378 = arith.addf %376, %377 : vector<16x1xf32>
    %379 = math.rsqrt %378 : vector<16x1xf32>
    %380 = vector.broadcast %379 : vector<16x1xf32> to vector<16x32xf32>
    %381 = arith.mulf %371, %380 : vector<16x32xf32>
    %382 = vector.broadcast %364 : vector<1x32xf32> to vector<16x32xf32>
    %383 = arith.mulf %381, %382 : vector<16x32xf32>
    %384 = vector.broadcast %365 : vector<1x32xf32> to vector<16x32xf32>
    %385 = arith.addf %383, %384 : vector<16x32xf32>
    %c0_139 = arith.constant 0 : index
    %c0_140 = arith.constant 0 : index
    %386 = vector.load %arg8[%c0_139, %c0_140] : memref<32x32xf32, #tpu.memory_space<vmem>>, vector<32x32xf32>
    %cst_141 = arith.constant dense<0.000000e+00> : vector<16x32xf32>
    %387 = tpu.matmul %385, %386, %cst_141 {dimension_numbers = #tpu.dot_dimension_numbers<[1], [0], [0], [1], [0, 0, 1, 1], [], []>} : vector<16x32xf32>, vector<32x32xf32>, vector<16x32xf32> -> vector<16x32xf32>
    %c0_142 = arith.constant 0 : index
    %c0_143 = arith.constant 0 : index
    %388 = vector.load %arg6[%c0_142, %c0_143] : memref<32x64xf32, #tpu.memory_space<vmem>>, vector<32x64xf32>
    %cst_144 = arith.constant dense<0.000000e+00> : vector<16x64xf32>
    %389 = tpu.matmul %212, %388, %cst_144 {dimension_numbers = #tpu.dot_dimension_numbers<[1], [0], [0], [1], [0, 0, 1, 1], [], []>} : vector<16x32xf32>, vector<32x64xf32>, vector<16x64xf32> -> vector<16x64xf32>
    %390 = vector.extract_strided_slice %389 {offsets = [0, 0], sizes = [16, 32], strides = [1, 1]} : vector<16x64xf32> to vector<16x32xf32>
    %391 = vector.extract_strided_slice %389 {offsets = [0, 32], sizes = [16, 32], strides = [1, 1]} : vector<16x64xf32> to vector<16x32xf32>
    %c0_145 = arith.constant 0 : index
    %c0_146 = arith.constant 0 : index
    %392 = vector.load %arg7[%c0_145, %c0_146] : memref<32x32xf32, #tpu.memory_space<vmem>>, vector<32x32xf32>
    %cst_147 = arith.constant 0.000000e+00 : f32
    %393 = vector.broadcast %cst_147 : f32 to vector<16x32xf32>
    %394 = vector.extract_strided_slice %387 {offsets = [0, 0], sizes = [16, 8], strides = [1, 1]} : vector<16x32xf32> to vector<16x8xf32>
    %395 = vector.shape_cast %394 : vector<16x8xf32> to vector<2x8x8xf32>
    %396 = vector.extract_strided_slice %390 {offsets = [0, 0], sizes = [16, 8], strides = [1, 1]} : vector<16x32xf32> to vector<16x8xf32>
    %397 = vector.shape_cast %396 : vector<16x8xf32> to vector<2x8x8xf32>
    %398 = vector.extract_strided_slice %391 {offsets = [0, 0], sizes = [16, 8], strides = [1, 1]} : vector<16x32xf32> to vector<16x8xf32>
    %399 = vector.shape_cast %398 : vector<16x8xf32> to vector<2x8x8xf32>
    "tpu.trace_start"() <{level = 10 : i32, message = "bqd,bkd->bqk"}> : () -> ()
    %cst_148 = arith.constant dense<0.000000e+00> : vector<2x8x8xf32>
    %400 = tpu.matmul %395, %397, %cst_148 {dimension_numbers = #tpu.dot_dimension_numbers<[2], [2], [1], [1], [0, 0, 0, 1, 1, 1], [0], [0]>} : vector<2x8x8xf32>, vector<2x8x8xf32>, vector<2x8x8xf32> -> vector<2x8x8xf32>
    "tpu.trace_stop"() : () -> ()
    %cst_149 = arith.constant 0.353553385 : f32
    %401 = vector.broadcast %cst_149 : f32 to vector<2x8x8xf32>
    %402 = arith.mulf %400, %401 : vector<2x8x8xf32>
    %cst_150 = arith.constant dense<0xFF800000> : vector<2x8xf32>
    %403 = vector.multi_reduction <maximumf>, %402, %cst_150 [2] : vector<2x8x8xf32> to vector<2x8xf32>
    %404 = vector.shape_cast %403 : vector<2x8xf32> to vector<2x8x1xf32>
    %405 = vector.broadcast %404 : vector<2x8x1xf32> to vector<2x8x8xf32>
    %406 = arith.subf %402, %405 : vector<2x8x8xf32>
    %407 = math.exp %406 : vector<2x8x8xf32>
    %cst_151 = arith.constant dense<0.000000e+00> : vector<2x8xf32>
    %408 = vector.multi_reduction <add>, %407, %cst_151 [2] : vector<2x8x8xf32> to vector<2x8xf32>
    %409 = vector.shape_cast %408 : vector<2x8xf32> to vector<2x8x1xf32>
    %410 = tpu.reciprocal %409 {approx = true} : vector<2x8x1xf32> -> vector<2x8x1xf32>
    %411 = vector.broadcast %410 : vector<2x8x1xf32> to vector<2x8x8xf32>
    %412 = arith.mulf %407, %411 : vector<2x8x8xf32>
    "tpu.trace_start"() <{level = 10 : i32, message = "bqk,bkd->bqd"}> : () -> ()
    %cst_152 = arith.constant dense<0.000000e+00> : vector<2x8x8xf32>
    %413 = tpu.matmul %412, %399, %cst_152 {dimension_numbers = #tpu.dot_dimension_numbers<[2], [1], [1], [2], [0, 0, 0, 1, 1, 2], [0], [0]>} : vector<2x8x8xf32>, vector<2x8x8xf32>, vector<2x8x8xf32> -> vector<2x8x8xf32>
    "tpu.trace_stop"() : () -> ()
    %414 = vector.shape_cast %413 : vector<2x8x8xf32> to vector<16x8xf32>
    %415 = vector.extract_strided_slice %392 {offsets = [0, 0], sizes = [8, 32], strides = [1, 1]} : vector<32x32xf32> to vector<8x32xf32>
    %cst_153 = arith.constant dense<0.000000e+00> : vector<16x32xf32>
    %416 = tpu.matmul %414, %415, %cst_153 {dimension_numbers = #tpu.dot_dimension_numbers<[1], [0], [0], [1], [0, 0, 1, 1], [], []>} : vector<16x8xf32>, vector<8x32xf32>, vector<16x32xf32> -> vector<16x32xf32>
    %417 = arith.addf %393, %416 : vector<16x32xf32>
    %418 = vector.extract_strided_slice %387 {offsets = [0, 8], sizes = [16, 8], strides = [1, 1]} : vector<16x32xf32> to vector<16x8xf32>
    %419 = vector.shape_cast %418 : vector<16x8xf32> to vector<2x8x8xf32>
    %420 = vector.extract_strided_slice %390 {offsets = [0, 8], sizes = [16, 8], strides = [1, 1]} : vector<16x32xf32> to vector<16x8xf32>
    %421 = vector.shape_cast %420 : vector<16x8xf32> to vector<2x8x8xf32>
    %422 = vector.extract_strided_slice %391 {offsets = [0, 8], sizes = [16, 8], strides = [1, 1]} : vector<16x32xf32> to vector<16x8xf32>
    %423 = vector.shape_cast %422 : vector<16x8xf32> to vector<2x8x8xf32>
    "tpu.trace_start"() <{level = 10 : i32, message = "bqd,bkd->bqk"}> : () -> ()
    %cst_154 = arith.constant dense<0.000000e+00> : vector<2x8x8xf32>
    %424 = tpu.matmul %419, %421, %cst_154 {dimension_numbers = #tpu.dot_dimension_numbers<[2], [2], [1], [1], [0, 0, 0, 1, 1, 1], [0], [0]>} : vector<2x8x8xf32>, vector<2x8x8xf32>, vector<2x8x8xf32> -> vector<2x8x8xf32>
    "tpu.trace_stop"() : () -> ()
    %cst_155 = arith.constant 0.353553385 : f32
    %425 = vector.broadcast %cst_155 : f32 to vector<2x8x8xf32>
    %426 = arith.mulf %424, %425 : vector<2x8x8xf32>
    %cst_156 = arith.constant dense<0xFF800000> : vector<2x8xf32>
    %427 = vector.multi_reduction <maximumf>, %426, %cst_156 [2] : vector<2x8x8xf32> to vector<2x8xf32>
    %428 = vector.shape_cast %427 : vector<2x8xf32> to vector<2x8x1xf32>
    %429 = vector.broadcast %428 : vector<2x8x1xf32> to vector<2x8x8xf32>
    %430 = arith.subf %426, %429 : vector<2x8x8xf32>
    %431 = math.exp %430 : vector<2x8x8xf32>
    %cst_157 = arith.constant dense<0.000000e+00> : vector<2x8xf32>
    %432 = vector.multi_reduction <add>, %431, %cst_157 [2] : vector<2x8x8xf32> to vector<2x8xf32>
    %433 = vector.shape_cast %432 : vector<2x8xf32> to vector<2x8x1xf32>
    %434 = tpu.reciprocal %433 {approx = true} : vector<2x8x1xf32> -> vector<2x8x1xf32>
    %435 = vector.broadcast %434 : vector<2x8x1xf32> to vector<2x8x8xf32>
    %436 = arith.mulf %431, %435 : vector<2x8x8xf32>
    "tpu.trace_start"() <{level = 10 : i32, message = "bqk,bkd->bqd"}> : () -> ()
    %cst_158 = arith.constant dense<0.000000e+00> : vector<2x8x8xf32>
    %437 = tpu.matmul %436, %423, %cst_158 {dimension_numbers = #tpu.dot_dimension_numbers<[2], [1], [1], [2], [0, 0, 0, 1, 1, 2], [0], [0]>} : vector<2x8x8xf32>, vector<2x8x8xf32>, vector<2x8x8xf32> -> vector<2x8x8xf32>
    "tpu.trace_stop"() : () -> ()
    %438 = vector.shape_cast %437 : vector<2x8x8xf32> to vector<16x8xf32>
    %439 = vector.extract_strided_slice %392 {offsets = [8, 0], sizes = [8, 32], strides = [1, 1]} : vector<32x32xf32> to vector<8x32xf32>
    %cst_159 = arith.constant dense<0.000000e+00> : vector<16x32xf32>
    %440 = tpu.matmul %438, %439, %cst_159 {dimension_numbers = #tpu.dot_dimension_numbers<[1], [0], [0], [1], [0, 0, 1, 1], [], []>} : vector<16x8xf32>, vector<8x32xf32>, vector<16x32xf32> -> vector<16x32xf32>
    %441 = arith.addf %417, %440 : vector<16x32xf32>
    %442 = vector.extract_strided_slice %387 {offsets = [0, 16], sizes = [16, 8], strides = [1, 1]} : vector<16x32xf32> to vector<16x8xf32>
    %443 = vector.shape_cast %442 : vector<16x8xf32> to vector<2x8x8xf32>
    %444 = vector.extract_strided_slice %390 {offsets = [0, 16], sizes = [16, 8], strides = [1, 1]} : vector<16x32xf32> to vector<16x8xf32>
    %445 = vector.shape_cast %444 : vector<16x8xf32> to vector<2x8x8xf32>
    %446 = vector.extract_strided_slice %391 {offsets = [0, 16], sizes = [16, 8], strides = [1, 1]} : vector<16x32xf32> to vector<16x8xf32>
    %447 = vector.shape_cast %446 : vector<16x8xf32> to vector<2x8x8xf32>
    "tpu.trace_start"() <{level = 10 : i32, message = "bqd,bkd->bqk"}> : () -> ()
    %cst_160 = arith.constant dense<0.000000e+00> : vector<2x8x8xf32>
    %448 = tpu.matmul %443, %445, %cst_160 {dimension_numbers = #tpu.dot_dimension_numbers<[2], [2], [1], [1], [0, 0, 0, 1, 1, 1], [0], [0]>} : vector<2x8x8xf32>, vector<2x8x8xf32>, vector<2x8x8xf32> -> vector<2x8x8xf32>
    "tpu.trace_stop"() : () -> ()
    %cst_161 = arith.constant 0.353553385 : f32
    %449 = vector.broadcast %cst_161 : f32 to vector<2x8x8xf32>
    %450 = arith.mulf %448, %449 : vector<2x8x8xf32>
    %cst_162 = arith.constant dense<0xFF800000> : vector<2x8xf32>
    %451 = vector.multi_reduction <maximumf>, %450, %cst_162 [2] : vector<2x8x8xf32> to vector<2x8xf32>
    %452 = vector.shape_cast %451 : vector<2x8xf32> to vector<2x8x1xf32>
    %453 = vector.broadcast %452 : vector<2x8x1xf32> to vector<2x8x8xf32>
    %454 = arith.subf %450, %453 : vector<2x8x8xf32>
    %455 = math.exp %454 : vector<2x8x8xf32>
    %cst_163 = arith.constant dense<0.000000e+00> : vector<2x8xf32>
    %456 = vector.multi_reduction <add>, %455, %cst_163 [2] : vector<2x8x8xf32> to vector<2x8xf32>
    %457 = vector.shape_cast %456 : vector<2x8xf32> to vector<2x8x1xf32>
    %458 = tpu.reciprocal %457 {approx = true} : vector<2x8x1xf32> -> vector<2x8x1xf32>
    %459 = vector.broadcast %458 : vector<2x8x1xf32> to vector<2x8x8xf32>
    %460 = arith.mulf %455, %459 : vector<2x8x8xf32>
    "tpu.trace_start"() <{level = 10 : i32, message = "bqk,bkd->bqd"}> : () -> ()
    %cst_164 = arith.constant dense<0.000000e+00> : vector<2x8x8xf32>
    %461 = tpu.matmul %460, %447, %cst_164 {dimension_numbers = #tpu.dot_dimension_numbers<[2], [1], [1], [2], [0, 0, 0, 1, 1, 2], [0], [0]>} : vector<2x8x8xf32>, vector<2x8x8xf32>, vector<2x8x8xf32> -> vector<2x8x8xf32>
    "tpu.trace_stop"() : () -> ()
    %462 = vector.shape_cast %461 : vector<2x8x8xf32> to vector<16x8xf32>
    %463 = vector.extract_strided_slice %392 {offsets = [16, 0], sizes = [8, 32], strides = [1, 1]} : vector<32x32xf32> to vector<8x32xf32>
    %cst_165 = arith.constant dense<0.000000e+00> : vector<16x32xf32>
    %464 = tpu.matmul %462, %463, %cst_165 {dimension_numbers = #tpu.dot_dimension_numbers<[1], [0], [0], [1], [0, 0, 1, 1], [], []>} : vector<16x8xf32>, vector<8x32xf32>, vector<16x32xf32> -> vector<16x32xf32>
    %465 = arith.addf %441, %464 : vector<16x32xf32>
    %466 = vector.extract_strided_slice %387 {offsets = [0, 24], sizes = [16, 8], strides = [1, 1]} : vector<16x32xf32> to vector<16x8xf32>
    %467 = vector.shape_cast %466 : vector<16x8xf32> to vector<2x8x8xf32>
    %468 = vector.extract_strided_slice %390 {offsets = [0, 24], sizes = [16, 8], strides = [1, 1]} : vector<16x32xf32> to vector<16x8xf32>
    %469 = vector.shape_cast %468 : vector<16x8xf32> to vector<2x8x8xf32>
    %470 = vector.extract_strided_slice %391 {offsets = [0, 24], sizes = [16, 8], strides = [1, 1]} : vector<16x32xf32> to vector<16x8xf32>
    %471 = vector.shape_cast %470 : vector<16x8xf32> to vector<2x8x8xf32>
    "tpu.trace_start"() <{level = 10 : i32, message = "bqd,bkd->bqk"}> : () -> ()
    %cst_166 = arith.constant dense<0.000000e+00> : vector<2x8x8xf32>
    %472 = tpu.matmul %467, %469, %cst_166 {dimension_numbers = #tpu.dot_dimension_numbers<[2], [2], [1], [1], [0, 0, 0, 1, 1, 1], [0], [0]>} : vector<2x8x8xf32>, vector<2x8x8xf32>, vector<2x8x8xf32> -> vector<2x8x8xf32>
    "tpu.trace_stop"() : () -> ()
    %cst_167 = arith.constant 0.353553385 : f32
    %473 = vector.broadcast %cst_167 : f32 to vector<2x8x8xf32>
    %474 = arith.mulf %472, %473 : vector<2x8x8xf32>
    %cst_168 = arith.constant dense<0xFF800000> : vector<2x8xf32>
    %475 = vector.multi_reduction <maximumf>, %474, %cst_168 [2] : vector<2x8x8xf32> to vector<2x8xf32>
    %476 = vector.shape_cast %475 : vector<2x8xf32> to vector<2x8x1xf32>
    %477 = vector.broadcast %476 : vector<2x8x1xf32> to vector<2x8x8xf32>
    %478 = arith.subf %474, %477 : vector<2x8x8xf32>
    %479 = math.exp %478 : vector<2x8x8xf32>
    %cst_169 = arith.constant dense<0.000000e+00> : vector<2x8xf32>
    %480 = vector.multi_reduction <add>, %479, %cst_169 [2] : vector<2x8x8xf32> to vector<2x8xf32>
    %481 = vector.shape_cast %480 : vector<2x8xf32> to vector<2x8x1xf32>
    %482 = tpu.reciprocal %481 {approx = true} : vector<2x8x1xf32> -> vector<2x8x1xf32>
    %483 = vector.broadcast %482 : vector<2x8x1xf32> to vector<2x8x8xf32>
    %484 = arith.mulf %479, %483 : vector<2x8x8xf32>
    "tpu.trace_start"() <{level = 10 : i32, message = "bqk,bkd->bqd"}> : () -> ()
    %cst_170 = arith.constant dense<0.000000e+00> : vector<2x8x8xf32>
    %485 = tpu.matmul %484, %471, %cst_170 {dimension_numbers = #tpu.dot_dimension_numbers<[2], [1], [1], [2], [0, 0, 0, 1, 1, 2], [0], [0]>} : vector<2x8x8xf32>, vector<2x8x8xf32>, vector<2x8x8xf32> -> vector<2x8x8xf32>
    "tpu.trace_stop"() : () -> ()
    %486 = vector.shape_cast %485 : vector<2x8x8xf32> to vector<16x8xf32>
    %487 = vector.extract_strided_slice %392 {offsets = [24, 0], sizes = [8, 32], strides = [1, 1]} : vector<32x32xf32> to vector<8x32xf32>
    %cst_171 = arith.constant dense<0.000000e+00> : vector<16x32xf32>
    %488 = tpu.matmul %486, %487, %cst_171 {dimension_numbers = #tpu.dot_dimension_numbers<[1], [0], [0], [1], [0, 0, 1, 1], [], []>} : vector<16x8xf32>, vector<8x32xf32>, vector<16x32xf32> -> vector<16x32xf32>
    %489 = arith.addf %465, %488 : vector<16x32xf32>
    %490 = arith.addf %363, %489 : vector<16x32xf32>
    %c0_172 = arith.constant 0 : index
    %c0_173 = arith.constant 0 : index
    %491 = vector.load %arg16[%c0_172, %c0_173] : memref<1x32xf32, #tpu.memory_space<vmem>>, vector<1x32xf32>
    %c0_174 = arith.constant 0 : index
    %c0_175 = arith.constant 0 : index
    %492 = vector.load %arg15[%c0_174, %c0_175] : memref<1x32xf32, #tpu.memory_space<vmem>>, vector<1x32xf32>
    %cst_176 = arith.constant dense<0.000000e+00> : vector<16xf32>
    %493 = vector.multi_reduction <add>, %490, %cst_176 [1] : vector<16x32xf32> to vector<16xf32>
    %494 = vector.shape_cast %493 : vector<16xf32> to vector<16x1xf32>
    %cst_177 = arith.constant 3.200000e+01 : f32
    %495 = vector.broadcast %cst_177 : f32 to vector<16x1xf32>
    %496 = arith.divf %494, %495 : vector<16x1xf32>
    %497 = vector.broadcast %496 : vector<16x1xf32> to vector<16x32xf32>
    %498 = arith.subf %490, %497 : vector<16x32xf32>
    %499 = arith.mulf %498, %498 : vector<16x32xf32>
    %cst_178 = arith.constant dense<0.000000e+00> : vector<16xf32>
    %500 = vector.multi_reduction <add>, %499, %cst_178 [1] : vector<16x32xf32> to vector<16xf32>
    %501 = vector.shape_cast %500 : vector<16xf32> to vector<16x1xf32>
    %cst_179 = arith.constant 3.200000e+01 : f32
    %502 = vector.broadcast %cst_179 : f32 to vector<16x1xf32>
    %503 = arith.divf %501, %502 : vector<16x1xf32>
    %cst_180 = arith.constant 9.99999974E-6 : f32
    %504 = vector.broadcast %cst_180 : f32 to vector<16x1xf32>
    %505 = arith.addf %503, %504 : vector<16x1xf32>
    %506 = math.rsqrt %505 : vector<16x1xf32>
    %507 = vector.broadcast %506 : vector<16x1xf32> to vector<16x32xf32>
    %508 = arith.mulf %498, %507 : vector<16x32xf32>
    %509 = vector.broadcast %491 : vector<1x32xf32> to vector<16x32xf32>
    %510 = arith.mulf %508, %509 : vector<16x32xf32>
    %511 = vector.broadcast %492 : vector<1x32xf32> to vector<16x32xf32>
    %512 = arith.addf %510, %511 : vector<16x32xf32>
    %c0_181 = arith.constant 0 : index
    %c0_182 = arith.constant 0 : index
    %513 = vector.load %arg11[%c0_181, %c0_182] : memref<32x128xf32, #tpu.memory_space<vmem>>, vector<32x128xf32>
    %cst_183 = arith.constant dense<0.000000e+00> : vector<16x128xf32>
    %514 = tpu.matmul %512, %513, %cst_183 {dimension_numbers = #tpu.dot_dimension_numbers<[1], [0], [0], [1], [0, 0, 1, 1], [], []>} : vector<16x32xf32>, vector<32x128xf32>, vector<16x128xf32> -> vector<16x128xf32>
    %c0_184 = arith.constant 0 : index
    %c0_185 = arith.constant 0 : index
    %515 = vector.load %arg9[%c0_184, %c0_185] : memref<1x128xf32, #tpu.memory_space<vmem>>, vector<1x128xf32>
    %516 = vector.broadcast %515 : vector<1x128xf32> to vector<16x128xf32>
    %517 = arith.addf %514, %516 : vector<16x128xf32>
    %518 = arith.mulf %517, %517 : vector<16x128xf32>
    %519 = arith.mulf %517, %518 : vector<16x128xf32>
    %cst_186 = arith.constant 4.471500e-02 : f32
    %520 = vector.broadcast %cst_186 : f32 to vector<16x128xf32>
    %521 = arith.mulf %520, %519 : vector<16x128xf32>
    %522 = arith.addf %517, %521 : vector<16x128xf32>
    %cst_187 = arith.constant 0.797884583 : f32
    %523 = vector.broadcast %cst_187 : f32 to vector<16x128xf32>
    %524 = arith.mulf %523, %522 : vector<16x128xf32>
    %525 = math.tanh %524 : vector<16x128xf32>
    %cst_188 = arith.constant 1.000000e+00 : f32
    %526 = vector.broadcast %cst_188 : f32 to vector<16x128xf32>
    %527 = arith.addf %526, %525 : vector<16x128xf32>
    %cst_189 = arith.constant 5.000000e-01 : f32
    %528 = vector.broadcast %cst_189 : f32 to vector<16x128xf32>
    %529 = arith.mulf %528, %527 : vector<16x128xf32>
    %530 = arith.mulf %517, %529 : vector<16x128xf32>
    %c0_190 = arith.constant 0 : index
    %c0_191 = arith.constant 0 : index
    %531 = vector.load %arg12[%c0_190, %c0_191] : memref<128x32xf32, #tpu.memory_space<vmem>>, vector<128x32xf32>
    %cst_192 = arith.constant dense<0.000000e+00> : vector<16x32xf32>
    %532 = tpu.matmul %530, %531, %cst_192 {dimension_numbers = #tpu.dot_dimension_numbers<[1], [0], [0], [1], [0, 0, 1, 1], [], []>} : vector<16x128xf32>, vector<128x32xf32>, vector<16x32xf32> -> vector<16x32xf32>
    %533 = arith.addf %490, %532 : vector<16x32xf32>
    %c0_193 = arith.constant 0 : index
    %c0_194 = arith.constant 0 : index
    %534 = vector.load %arg10[%c0_193, %c0_194] : memref<1x32xf32, #tpu.memory_space<vmem>>, vector<1x32xf32>
    %535 = vector.broadcast %534 : vector<1x32xf32> to vector<16x32xf32>
    %536 = arith.addf %533, %535 : vector<16x32xf32>
    %c0_195 = arith.constant 0 : index
    %c0_196 = arith.constant 0 : index
    %537 = vector.load %arg22[%c0_195, %c0_196] : memref<1x32xf32, #tpu.memory_space<vmem>>, vector<1x32xf32>
    %c0_197 = arith.constant 0 : index
    %c0_198 = arith.constant 0 : index
    %538 = vector.load %arg21[%c0_197, %c0_198] : memref<1x32xf32, #tpu.memory_space<vmem>>, vector<1x32xf32>
    %cst_199 = arith.constant dense<0.000000e+00> : vector<16xf32>
    %539 = vector.multi_reduction <add>, %536, %cst_199 [1] : vector<16x32xf32> to vector<16xf32>
    %540 = vector.shape_cast %539 : vector<16xf32> to vector<16x1xf32>
    %cst_200 = arith.constant 3.200000e+01 : f32
    %541 = vector.broadcast %cst_200 : f32 to vector<16x1xf32>
    %542 = arith.divf %540, %541 : vector<16x1xf32>
    %543 = vector.broadcast %542 : vector<16x1xf32> to vector<16x32xf32>
    %544 = arith.subf %536, %543 : vector<16x32xf32>
    %545 = arith.mulf %544, %544 : vector<16x32xf32>
    %cst_201 = arith.constant dense<0.000000e+00> : vector<16xf32>
    %546 = vector.multi_reduction <add>, %545, %cst_201 [1] : vector<16x32xf32> to vector<16xf32>
    %547 = vector.shape_cast %546 : vector<16xf32> to vector<16x1xf32>
    %cst_202 = arith.constant 3.200000e+01 : f32
    %548 = vector.broadcast %cst_202 : f32 to vector<16x1xf32>
    %549 = arith.divf %547, %548 : vector<16x1xf32>
    %cst_203 = arith.constant 9.99999974E-6 : f32
    %550 = vector.broadcast %cst_203 : f32 to vector<16x1xf32>
    %551 = arith.addf %549, %550 : vector<16x1xf32>
    %552 = math.rsqrt %551 : vector<16x1xf32>
    %553 = vector.broadcast %552 : vector<16x1xf32> to vector<16x32xf32>
    %554 = arith.mulf %544, %553 : vector<16x32xf32>
    %555 = vector.broadcast %537 : vector<1x32xf32> to vector<16x32xf32>
    %556 = arith.mulf %554, %555 : vector<16x32xf32>
    %557 = vector.broadcast %538 : vector<1x32xf32> to vector<16x32xf32>
    %558 = arith.addf %556, %557 : vector<16x32xf32>
    %c0_204 = arith.constant 0 : index
    %c0_205 = arith.constant 0 : index
    %559 = vector.load %arg25[%c0_204, %c0_205] : memref<32x64xf32, #tpu.memory_space<vmem>>, vector<32x64xf32>
    %cst_206 = arith.constant dense<0.000000e+00> : vector<16x64xf32>
    %560 = tpu.matmul %558, %559, %cst_206 {dimension_numbers = #tpu.dot_dimension_numbers<[1], [0], [0], [1], [0, 0, 1, 1], [], []>} : vector<16x32xf32>, vector<32x64xf32>, vector<16x64xf32> -> vector<16x64xf32>
    %c0_207 = arith.constant 0 : index
    %c0_208 = arith.constant 0 : index
    %561 = vector.load %arg24[%c0_207, %c0_208] : memref<1x64xf32, #tpu.memory_space<vmem>>, vector<1x64xf32>
    %562 = vector.broadcast %561 : vector<1x64xf32> to vector<16x64xf32>
    %563 = arith.addf %560, %562 : vector<16x64xf32>
    %c0_209 = arith.constant 0 : index
    %c0_210 = arith.constant 0 : index
    %564 = vector.load %arg5[%c0_209, %c0_210] : memref<16x1xi32, #tpu.memory_space<vmem>>, vector<16x1xi32>
    %cst_211 = arith.constant dense<0xFF800000> : vector<16xf32>
    %565 = vector.multi_reduction <maximumf>, %563, %cst_211 [1] : vector<16x64xf32> to vector<16xf32>
    %566 = vector.shape_cast %565 : vector<16xf32> to vector<16x1xf32>
    %567 = vector.broadcast %566 : vector<16x1xf32> to vector<16x64xf32>
    %568 = arith.subf %563, %567 : vector<16x64xf32>
    %569 = math.exp %568 : vector<16x64xf32>
    %cst_212 = arith.constant dense<0.000000e+00> : vector<16xf32>
    %570 = vector.multi_reduction <add>, %569, %cst_212 [1] : vector<16x64xf32> to vector<16xf32>
    %571 = vector.shape_cast %570 : vector<16xf32> to vector<16x1xf32>
    %572 = math.log %571 : vector<16x1xf32>
    %573 = arith.addf %566, %572 : vector<16x1xf32>
    %574 = tpu.iota {dimensions = array<i32: 1>} : vector<16x64xi32>
    %575 = vector.broadcast %564 : vector<16x1xi32> to vector<16x64xi32>
    %576 = arith.cmpi eq, %574, %575 : vector<16x64xi32>
    %cst_213 = arith.constant 0.000000e+00 : f32
    %577 = vector.broadcast %cst_213 : f32 to vector<16x64xf32>
    %578 = arith.select %576, %563, %577 : vector<16x64xi1>, vector<16x64xf32>
    %cst_214 = arith.constant dense<0.000000e+00> : vector<16xf32>
    %579 = vector.multi_reduction <add>, %578, %cst_214 [1] : vector<16x64xf32> to vector<16xf32>
    %580 = vector.shape_cast %579 : vector<16xf32> to vector<16x1xf32>
    %581 = arith.subf %573, %580 : vector<16x1xf32>
    %c0_i32 = arith.constant 0 : i32
    %582 = vector.broadcast %c0_i32 : i32 to vector<16x1xi32>
    %583 = arith.cmpi ne, %564, %582 : vector<16x1xi32>
    %584 = arith.extui %583 : vector<16x1xi1> to vector<16x1xi32>
    %585 = arith.sitofp %584 : vector<16x1xi32> to vector<16x1xf32>
    %586 = arith.mulf %581, %585 : vector<16x1xf32>
    %cst_215 = arith.constant dense<0.000000e+00> : vector<1xf32>
    %587 = vector.multi_reduction <add>, %586, %cst_215 [0] : vector<16x1xf32> to vector<1xf32>
    %588 = vector.shape_cast %587 : vector<1xf32> to vector<1x1xf32>
    %cst_216 = arith.constant dense<0.000000e+00> : vector<1xf32>
    %589 = vector.multi_reduction <add>, %585, %cst_216 [0] : vector<16x1xf32> to vector<1xf32>
    %590 = vector.shape_cast %589 : vector<1xf32> to vector<1x1xf32>
    %cst_217 = arith.constant 1.000000e+00 : f32
    %591 = vector.broadcast %cst_217 : f32 to vector<1x1xf32>
    %592 = arith.maximumf %590, %591 : vector<1x1xf32>
    %593 = arith.divf %588, %592 : vector<1x1xf32>
    %594 = vector.shape_cast %593 : vector<1x1xf32> to vector<1x1xf32>
    %595 = vector.broadcast %594 : vector<1x1xf32> to vector<8x128xf32>
    %c0_218 = arith.constant 0 : index
    %c0_219 = arith.constant 0 : index
    %596 = vector.load %arg41[%c0_218, %c0_219] : memref<8x128xf32, #tpu.memory_space<vmem>>, vector<8x128xf32>
    tpu.vector_store %arg41[%c0_218, %c0_219], %595 {strides = array<i32>} : memref<8x128xf32, #tpu.memory_space<vmem>>, vector<8x128xf32>,
    return
  }
  func.func @transform_0(%arg0: i32) -> (i32, i32) {
    %c0_i32 = arith.constant 0 : i32
    %c0_i32_0 = arith.constant 0 : i32
    %c0_i32_1 = arith.constant 0 : i32
    return %c0_i32, %c0_i32_0 : i32, i32
  }
  func.func @transform_1(%arg0: i32) -> (i32, i32) {
    %c0_i32 = arith.constant 0 : i32
    %c0_i32_0 = arith.constant 0 : i32
    %c0_i32_1 = arith.constant 0 : i32
    return %c0_i32, %c0_i32_0 : i32, i32
  }
  func.func @transform_2(%arg0: i32) -> (i32, i32) {
    %c0_i32 = arith.constant 0 : i32
    %c0_i32_0 = arith.constant 0 : i32
    %c0_i32_1 = arith.constant 0 : i32
    return %c0_i32, %c0_i32_0 : i32, i32
  }
  func.func @transform_3(%arg0: i32) -> (i32, i32) {
    %c0_i32 = arith.constant 0 : i32
    %c0_i32_0 = arith.constant 0 : i32
    %c0_i32_1 = arith.constant 0 : i32
    return %c0_i32, %c0_i32_0 : i32, i32
  }
  func.func @transform_4(%arg0: i32) -> (i32, i32) {
    %c0_i32 = arith.constant 0 : i32
    %c0_i32_0 = arith.constant 0 : i32
    %c0_i32_1 = arith.constant 0 : i32
    return %c0_i32, %c0_i32_0 : i32, i32
  }
  func.func @transform_5(%arg0: i32) -> (i32, i32) {
    %c0_i32 = arith.constant 0 : i32
    %c0_i32_0 = arith.constant 0 : i32
    %c0_i32_1 = arith.constant 0 : i32
    return %c0_i32, %c0_i32_0 : i32, i32
  }
  func.func @transform_6(%arg0: i32) -> (i32, i32) {
    %c0_i32 = arith.constant 0 : i32
    %c0_i32_0 = arith.constant 0 : i32
    %c0_i32_1 = arith.constant 0 : i32
    return %c0_i32, %c0_i32_0 : i32, i32
  }
  func.func @transform_7(%arg0: i32) -> (i32, i32) {
    %c0_i32 = arith.constant 0 : i32
    %c0_i32_0 = arith.constant 0 : i32
    %c0_i32_1 = arith.constant 0 : i32
    return %c0_i32, %c0_i32_0 : i32, i32
  }
  func.func @transform_8(%arg0: i32) -> (i32, i32) {
    %c0_i32 = arith.constant 0 : i32
    %c0_i32_0 = arith.constant 0 : i32
    %c0_i32_1 = arith.constant 0 : i32
    return %c0_i32, %c0_i32_0 : i32, i32
  }
  func.func @transform_9(%arg0: i32) -> (i32, i32) {
    %c0_i32 = arith.constant 0 : i32
    %c0_i32_0 = arith.constant 0 : i32
    %c0_i32_1 = arith.constant 0 : i32
    return %c0_i32, %c0_i32_0 : i32, i32
  }
  func.func @transform_10(%arg0: i32) -> (i32, i32) {
    %c0_i32 = arith.constant 0 : i32
    %c0_i32_0 = arith.constant 0 : i32
    %c0_i32_1 = arith.constant 0 : i32
    return %c0_i32, %c0_i32_0 : i32, i32
  }
  func.func @transform_11(%arg0: i32) -> (i32, i32) {
    %c0_i32 = arith.constant 0 : i32
    %c0_i32_0 = arith.constant 0 : i32
    %c0_i32_1 = arith.constant 0 : i32
    return %c0_i32, %c0_i32_0 : i32, i32
  }
  func.func @transform_12(%arg0: i32) -> (i32, i32) {
    %c0_i32 = arith.constant 0 : i32
    %c0_i32_0 = arith.constant 0 : i32
    %c0_i32_1 = arith.constant 0 : i32
    return %c0_i32, %c0_i32_0 : i32, i32
  }
  func.func @transform_13(%arg0: i32) -> (i32, i32) {
    %c0_i32 = arith.constant 0 : i32
    %c0_i32_0 = arith.constant 0 : i32
    %c0_i32_1 = arith.constant 0 : i32
    return %c0_i32, %c0_i32_0 : i32, i32
  }
  func.func @transform_14(%arg0: i32) -> (i32, i32) {
    %c0_i32 = arith.constant 0 : i32
    %c0_i32_0 = arith.constant 0 : i32
    %c0_i32_1 = arith.constant 0 : i32
    return %c0_i32, %c0_i32_0 : i32, i32
  }
  func.func @transform_15(%arg0: i32) -> (i32, i32) {
    %c0_i32 = arith.constant 0 : i32
    %c0_i32_0 = arith.constant 0 : i32
    %c0_i32_1 = arith.constant 0 : i32
    return %c0_i32, %c0_i32_0 : i32, i32
  }
  func.func @transform_16(%arg0: i32) -> (i32, i32) {
    %c0_i32 = arith.constant 0 : i32
    %c0_i32_0 = arith.constant 0 : i32
    %c0_i32_1 = arith.constant 0 : i32
    return %c0_i32, %c0_i32_0 : i32, i32
  }
  func.func @transform_17(%arg0: i32) -> (i32, i32) {
    %c0_i32 = arith.constant 0 : i32
    %c0_i32_0 = arith.constant 0 : i32
    %c0_i32_1 = arith.constant 0 : i32
    return %c0_i32, %c0_i32_0 : i32, i32
  }
  func.func @transform_18(%arg0: i32) -> (i32, i32) {
    %c0_i32 = arith.constant 0 : i32
    %c0_i32_0 = arith.constant 0 : i32
    %c0_i32_1 = arith.constant 0 : i32
    return %c0_i32, %c0_i32_0 : i32, i32
  }
  func.func @transform_19(%arg0: i32) -> (i32, i32) {
    %c0_i32 = arith.constant 0 : i32
    %c0_i32_0 = arith.constant 0 : i32
    %c0_i32_1 = arith.constant 0 : i32
    return %c0_i32, %c0_i32_0 : i32, i32
  }
  func.func @transform_20(%arg0: i32) -> (i32, i32) {
    %c0_i32 = arith.constant 0 : i32
    %c0_i32_0 = arith.constant 0 : i32
    %c0_i32_1 = arith.constant 0 : i32
    return %c0_i32, %c0_i32_0 : i32, i32
  }
  func.func @transform_21(%arg0: i32) -> (i32, i32) {
    %c0_i32 = arith.constant 0 : i32
    %c0_i32_0 = arith.constant 0 : i32
    %c0_i32_1 = arith.constant 0 : i32
    return %c0_i32, %c0_i32_0 : i32, i32
  }
  func.func @transform_22(%arg0: i32) -> (i32, i32) {
    %c0_i32 = arith.constant 0 : i32
    %c0_i32_0 = arith.constant 0 : i32
    %c0_i32_1 = arith.constant 0 : i32
    return %c0_i32, %c0_i32_0 : i32, i32
  }
  func.func @transform_23(%arg0: i32) -> (i32, i32) {
    %c0_i32 = arith.constant 0 : i32
    %c0_i32_0 = arith.constant 0 : i32
    %c0_i32_1 = arith.constant 0 : i32
    return %c0_i32, %c0_i32_0 : i32, i32
  }
  func.func @transform_24(%arg0: i32) -> (i32, i32) {
    %c0_i32 = arith.constant 0 : i32
    %c0_i32_0 = arith.constant 0 : i32
    %c0_i32_1 = arith.constant 0 : i32
    return %c0_i32, %c0_i32_0 : i32, i32
  }
  func.func @transform_25(%arg0: i32) -> (i32, i32) {
    %c0_i32 = arith.constant 0 : i32
    %c0_i32_0 = arith.constant 0 : i32
    %c0_i32_1 = arith.constant 0 : i32
    return %c0_i32, %c0_i32_0 : i32, i32
  }
  func.func @transform_26(%arg0: i32) -> (i32, i32) {
    %c0_i32 = arith.constant 0 : i32
    %c0_i32_0 = arith.constant 0 : i32
    %c0_i32_1 = arith.constant 0 : i32
    return %c0_i32, %c0_i32_0 : i32, i32
  }
  func.func @transform_27(%arg0: i32) -> (i32, i32) {
    %c0_i32 = arith.constant 0 : i32
    %c0_i32_0 = arith.constant 0 : i32
    %c0_i32_1 = arith.constant 0 : i32
    return %c0_i32, %c0_i32_0 : i32, i32
  }
  func.func @transform_28(%arg0: i32) -> (i32, i32) {
    %c0_i32 = arith.constant 0 : i32
    %c0_i32_0 = arith.constant 0 : i32
    %c0_i32_1 = arith.constant 0 : i32
    return %c0_i32, %c0_i32_0 : i32, i32
  }
  func.func @transform_29(%arg0: i32) -> (i32, i32) {
    %c0_i32 = arith.constant 0 : i32
    %c0_i32_0 = arith.constant 0 : i32
    %c0_i32_1 = arith.constant 0 : i32
    return %c0_i32, %c0_i32_0 : i32, i32
  }
  func.func @transform_30(%arg0: i32) -> (i32, i32) {
    %c0_i32 = arith.constant 0 : i32
    %c0_i32_0 = arith.constant 0 : i32
    %c0_i32_1 = arith.constant 0 : i32
    return %c0_i32, %c0_i32_0 : i32, i32
  }
  func.func @transform_31(%arg0: i32) -> (i32, i32) {
    %c0_i32 = arith.constant 0 : i32
    %c0_i32_0 = arith.constant 0 : i32
    %c0_i32_1 = arith.constant 0 : i32
    return %c0_i32, %c0_i32_0 : i32, i32
  }
  func.func @transform_32(%arg0: i32) -> (i32, i32) {
    %c0_i32 = arith.constant 0 : i32
    %c0_i32_0 = arith.constant 0 : i32
    %c0_i32_1 = arith.constant 0 : i32
    return %c0_i32, %c0_i32_0 : i32, i32
  }
  func.func @transform_33(%arg0: i32) -> (i32, i32) {
    %c0_i32 = arith.constant 0 : i32
    %c0_i32_0 = arith.constant 0 : i32
    %c0_i32_1 = arith.constant 0 : i32
    return %c0_i32, %c0_i32_0 : i32, i32
  }
  func.func @transform_34(%arg0: i32) -> (i32, i32) {
    %c0_i32 = arith.constant 0 : i32
    %c0_i32_0 = arith.constant 0 : i32
    %c0_i32_1 = arith.constant 0 : i32
    return %c0_i32, %c0_i32_0 : i32, i32
  }
  func.func @transform_35(%arg0: i32) -> (i32, i32) {
    %c0_i32 = arith.constant 0 : i32
    %c0_i32_0 = arith.constant 0 : i32
    %c0_i32_1 = arith.constant 0 : i32
    return %c0_i32, %c0_i32_0 : i32, i32
  }
  func.func @transform_36(%arg0: i32) -> (i32, i32) {
    %c0_i32 = arith.constant 0 : i32
    %c0_i32_0 = arith.constant 0 : i32
    %c0_i32_1 = arith.constant 0 : i32
    return %c0_i32, %c0_i32_0 : i32, i32
  }
  func.func @transform_37(%arg0: i32) -> (i32, i32) {
    %c0_i32 = arith.constant 0 : i32
    %c0_i32_0 = arith.constant 0 : i32
    %c0_i32_1 = arith.constant 0 : i32
    return %c0_i32, %c0_i32_0 : i32, i32
  }
  func.func @transform_38(%arg0: i32) -> (i32, i32) {
    %c0_i32 = arith.constant 0 : i32
    %c0_i32_0 = arith.constant 0 : i32
    %c0_i32_1 = arith.constant 0 : i32
    return %c0_i32, %c0_i32_0 : i32, i32
  }
  func.func @transform_39(%arg0: i32) -> (i32, i32) {
    %c0_i32 = arith.constant 0 : i32
    %c0_i32_0 = arith.constant 0 : i32
    %c0_i32_1 = arith.constant 0 : i32
    return %c0_i32, %c0_i32_0 : i32, i32
  }
  func.func @transform_40(%arg0: i32) -> (i32, i32) {
    %c0_i32 = arith.constant 0 : i32
    %c0_i32_0 = arith.constant 0 : i32
    %c0_i32_1 = arith.constant 0 : i32
    return %c0_i32, %c0_i32_0 : i32, i32
  }
}

</mosaic_0001>

<llo_original>
// kernel: _lambda_.1
$region0: #{_lambda_.1}
  #allocation0 [shape = 'u32[]', space=smem, size = 0x4, offset = 0x4, fixed_abs, tag = 'smem constant byte address 0x4 - core index']
  #allocation1 [shape = 'u32[144,128]{1,0:T(1,128)}', space=vmem, size = 0x12000, scoped, tag = 'internal scratch']
  %s0 = inlined_call_operand.smem [shape: u32[41], index: -1, kind: input, shape index: {}]
  %s1 = sld [smem:[%s0]]
  %s2 = scalar_lea.smem %s0, 1
  %s3 = sld [smem:[%s2]]
  %s4 = scalar_lea.smem %s0, 2
  %s5 = sld [smem:[%s4]]
  %s6 = scalar_lea.smem %s0, 3
  %s7 = sld [smem:[%s6]]
  %s8 = scalar_lea.smem %s0, 4
  %s9 = sld [smem:[%s8]]
  %s10 = scalar_lea.smem %s0, 5
  %s11 = sld [smem:[%s10]]
  %s12 = scalar_lea.smem %s0, 6
  %s13 = sld [smem:[%s12]]
  %s14 = scalar_lea.smem %s0, 7
  %s15 = sld [smem:[%s14]]
  %s16 = scalar_lea.smem %s0, 8
  %s17 = sld [smem:[%s16]]
  %s18 = scalar_lea.smem %s0, 9
  %s19 = sld [smem:[%s18]]
  %s20 = scalar_lea.smem %s0, 10
  %s21 = sld [smem:[%s20]]
  %s22 = scalar_lea.smem %s0, 11
  %s23 = sld [smem:[%s22]]
  %s24 = scalar_lea.smem %s0, 12
  %s25 = sld [smem:[%s24]]
  %s26 = scalar_lea.smem %s0, 13
  %s27 = sld [smem:[%s26]]
  %s28 = scalar_lea.smem %s0, 14
  %s29 = sld [smem:[%s28]]
  %s30 = scalar_lea.smem %s0, 15
  %s31 = sld [smem:[%s30]]
  %s32 = scalar_lea.smem %s0, 16
  %s33 = sld [smem:[%s32]]
  %s34 = scalar_lea.smem %s0, 17
  %s35 = sld [smem:[%s34]]
  %s36 = scalar_lea.smem %s0, 18
  %s37 = sld [smem:[%s36]]
  %s38 = scalar_lea.smem %s0, 19
  %s39 = sld [smem:[%s38]]
  %s40 = scalar_lea.smem %s0, 20
  %s41 = sld [smem:[%s40]]
  %s42 = scalar_lea.smem %s0, 21
  %s43 = sld [smem:[%s42]]
  %s44 = scalar_lea.smem %s0, 22
  %s45 = sld [smem:[%s44]]
  %s46 = scalar_lea.smem %s0, 23
  %s47 = sld [smem:[%s46]]
  %s48 = scalar_lea.smem %s0, 24
  %s49 = sld [smem:[%s48]]
  %s50 = scalar_lea.smem %s0, 25
  %s51 = sld [smem:[%s50]]
  %s52 = scalar_lea.smem %s0, 26
  %s53 = sld [smem:[%s52]]
  %s54 = scalar_lea.smem %s0, 27
  %s55 = sld [smem:[%s54]]
  %s56 = scalar_lea.smem %s0, 28
  %s57 = sld [smem:[%s56]]
  %s58 = scalar_lea.smem %s0, 29
  %s59 = sld [smem:[%s58]]
  %s60 = scalar_lea.smem %s0, 30
  %s61 = sld [smem:[%s60]]
  %s62 = scalar_lea.smem %s0, 31
  %s63 = sld [smem:[%s62]]
  %s64 = scalar_lea.smem %s0, 32
  %s65 = sld [smem:[%s64]]
  %s66 = scalar_lea.smem %s0, 33
  %s67 = sld [smem:[%s66]]
  %s68 = scalar_lea.smem %s0, 34
  %s69 = sld [smem:[%s68]]
  %s70 = scalar_lea.smem %s0, 35
  %s71 = sld [smem:[%s70]]
  %s72 = scalar_lea.smem %s0, 36
  %s73 = sld [smem:[%s72]]
  %s74 = scalar_lea.smem %s0, 37
  %s75 = sld [smem:[%s74]]
  %s76 = scalar_lea.smem %s0, 38
  %s77 = sld [smem:[%s76]]
  %s78 = scalar_lea.smem %s0, 39
  %s79 = sld [smem:[%s78]]
  %s80 = scalar_lea.smem %s0, 40
  %s81 = sld [smem:[%s80]]
  %s82 = sld [smem:[#allocation0]]
  $region170: #{_lambda_.1} parent=0
    _
  %s84 = ssub.s32 1, %s82
  %s85 = scalar_select 0, %s84, %s82
  // Predicated region
  $region2: #{_lambda_.1} parent=0 // pred_check
    _
  $region3: #{_lambda_.1} parent=0 // pred_check_branch
    %87 = sbr.rel (0) target = $region5
  $region4: #{_lambda_.1} parent=0 // pred_region
    _
  $region5: #{_lambda_.1} parent=0 // pred_fallthru
    _
  // Predicated region
  $region6: #{_lambda_.1} parent=0 // pred_check
    _
  $region7: #{_lambda_.1} parent=0 // pred_check_branch
    %89 = sbr.rel (0) target = $region9
  $region8: #{_lambda_.1} parent=0 // pred_region
    _
  $region9: #{_lambda_.1} parent=0 // pred_fallthru
    _
  // Predicated region
  $region10: #{_lambda_.1} parent=0 // pred_check
    _
  $region11: #{_lambda_.1} parent=0 // pred_check_branch
    %91 = sbr.rel (0) target = $region13
  $region12: #{_lambda_.1} parent=0 // pred_region
    _
  $region13: #{_lambda_.1} parent=0 // pred_fallthru
    _
  // Predicated region
  $region14: #{_lambda_.1} parent=0 // pred_check
    _
  $region15: #{_lambda_.1} parent=0 // pred_check_branch
    %93 = sbr.rel (0) target = $region17
  $region16: #{_lambda_.1} parent=0 // pred_region
    _
  $region17: #{_lambda_.1} parent=0 // pred_fallthru
    _
  // Predicated region
  $region18: #{_lambda_.1} parent=0 // pred_check
    _
  $region19: #{_lambda_.1} parent=0 // pred_check_branch
    %95 = sbr.rel (0) target = $region21
  $region20: #{_lambda_.1} parent=0 // pred_region
    _
  $region21: #{_lambda_.1} parent=0 // pred_fallthru
    _
  // Predicated region
  $region22: #{_lambda_.1} parent=0 // pred_check
    _
  $region23: #{_lambda_.1} parent=0 // pred_check_branch
    %97 = sbr.rel (0) target = $region25
  $region24: #{_lambda_.1} parent=0 // pred_region
    _
  $region25: #{_lambda_.1} parent=0 // pred_fallthru
    _
  // Predicated region
  $region26: #{_lambda_.1} parent=0 // pred_check
    _
  $region27: #{_lambda_.1} parent=0 // pred_check_branch
    %99 = sbr.rel (0) target = $region29
  $region28: #{_lambda_.1} parent=0 // pred_region
    _
  $region29: #{_lambda_.1} parent=0 // pred_fallthru
    _
  // Predicated region
  $region30: #{_lambda_.1} parent=0 // pred_check
    _
  $region31: #{_lambda_.1} parent=0 // pred_check_branch
    %101 = sbr.rel (0) target = $region33
  $region32: #{_lambda_.1} parent=0 // pred_region
    _
  $region33: #{_lambda_.1} parent=0 // pred_fallthru
    _
  // Predicated region
  $region34: #{_lambda_.1} parent=0 // pred_check
    _
  $region35: #{_lambda_.1} parent=0 // pred_check_branch
    %103 = sbr.rel (0) target = $region37
  $region36: #{_lambda_.1} parent=0 // pred_region
    _
  $region37: #{_lambda_.1} parent=0 // pred_fallthru
    _
  // Predicated region
  $region38: #{_lambda_.1} parent=0 // pred_check
    _
  $region39: #{_lambda_.1} parent=0 // pred_check_branch
    %105 = sbr.rel (0) target = $region41
  $region40: #{_lambda_.1} parent=0 // pred_region
    _
  $region41: #{_lambda_.1} parent=0 // pred_fallthru
    _
  // Predicated region
  $region42: #{_lambda_.1} parent=0 // pred_check
    _
  $region43: #{_lambda_.1} parent=0 // pred_check_branch
    %107 = sbr.rel (0) target = $region45
  $region44: #{_lambda_.1} parent=0 // pred_region
    _
  $region45: #{_lambda_.1} parent=0 // pred_fallthru
    _
  // Predicated region
  $region46: #{_lambda_.1} parent=0 // pred_check
    _
  $region47: #{_lambda_.1} parent=0 // pred_check_branch
    %109 = sbr.rel (0) target = $region49
  $region48: #{_lambda_.1} parent=0 // pred_region
    _
  $region49: #{_lambda_.1} parent=0 // pred_fallthru
    _
  // Predicated region
  $region50: #{_lambda_.1} parent=0 // pred_check
    _
  $region51: #{_lambda_.1} parent=0 // pred_check_branch
    %111 = sbr.rel (0) target = $region53
  $region52: #{_lambda_.1} parent=0 // pred_region
    _
  $region53: #{_lambda_.1} parent=0 // pred_fallthru
    _
  // Predicated region
  $region54: #{_lambda_.1} parent=0 // pred_check
    _
  $region55: #{_lambda_.1} parent=0 // pred_check_branch
    %113 = sbr.rel (0) target = $region57
  $region56: #{_lambda_.1} parent=0 // pred_region
    _
  $region57: #{_lambda_.1} parent=0 // pred_fallthru
    _
  // Predicated region
  $region58: #{_lambda_.1} parent=0 // pred_check
    _
  $region59: #{_lambda_.1} parent=0 // pred_check_branch
    %115 = sbr.rel (0) target = $region61
  $region60: #{_lambda_.1} parent=0 // pred_region
    _
  $region61: #{_lambda_.1} parent=0 // pred_fallthru
    _
  // Predicated region
  $region62: #{_lambda_.1} parent=0 // pred_check
    _
  $region63: #{_lambda_.1} parent=0 // pred_check_branch
    %117 = sbr.rel (0) target = $region65
  $region64: #{_lambda_.1} parent=0 // pred_region
    _
  $region65: #{_lambda_.1} parent=0 // pred_fallthru
    _
  // Predicated region
  $region66: #{_lambda_.1} parent=0 // pred_check
    _
  $region67: #{_lambda_.1} parent=0 // pred_check_branch
    %119 = sbr.rel (0) target = $region69
  $region68: #{_lambda_.1} parent=0 // pred_region
    _
  $region69: #{_lambda_.1} parent=0 // pred_fallthru
    _
  // Predicated region
  $region70: #{_lambda_.1} parent=0 // pred_check
    _
  $region71: #{_lambda_.1} parent=0 // pred_check_branch
    %121 = sbr.rel (0) target = $region73
  $region72: #{_lambda_.1} parent=0 // pred_region
    _
  $region73: #{_lambda_.1} parent=0 // pred_fallthru
    _
  // Predicated region
  $region74: #{_lambda_.1} parent=0 // pred_check
    _
  $region75: #{_lambda_.1} parent=0 // pred_check_branch
    %123 = sbr.rel (0) target = $region77
  $region76: #{_lambda_.1} parent=0 // pred_region
    _
  $region77: #{_lambda_.1} parent=0 // pred_fallthru
    _
  // Predicated region
  $region78: #{_lambda_.1} parent=0 // pred_check
    _
  $region79: #{_lambda_.1} parent=0 // pred_check_branch
    %125 = sbr.rel (0) target = $region81
  $region80: #{_lambda_.1} parent=0 // pred_region
    _
  $region81: #{_lambda_.1} parent=0 // pred_fallthru
    _
  // Predicated region
  $region82: #{_lambda_.1} parent=0 // pred_check
    _
  $region83: #{_lambda_.1} parent=0 // pred_check_branch
    %127 = sbr.rel (0) target = $region85
  $region84: #{_lambda_.1} parent=0 // pred_region
    _
  $region85: #{_lambda_.1} parent=0 // pred_fallthru
    _
  // Predicated region
  $region86: #{_lambda_.1} parent=0 // pred_check
    _
  $region87: #{_lambda_.1} parent=0 // pred_check_branch
    %129 = sbr.rel (0) target = $region89
  $region88: #{_lambda_.1} parent=0 // pred_region
    _
  $region89: #{_lambda_.1} parent=0 // pred_fallthru
    _
  // Predicated region
  $region90: #{_lambda_.1} parent=0 // pred_check
    _
  $region91: #{_lambda_.1} parent=0 // pred_check_branch
    %131 = sbr.rel (0) target = $region93
  $region92: #{_lambda_.1} parent=0 // pred_region
    _
  $region93: #{_lambda_.1} parent=0 // pred_fallthru
    _
  // Predicated region
  $region94: #{_lambda_.1} parent=0 // pred_check
    _
  $region95: #{_lambda_.1} parent=0 // pred_check_branch
    %133 = sbr.rel (0) target = $region97
  $region96: #{_lambda_.1} parent=0 // pred_region
    _
  $region97: #{_lambda_.1} parent=0 // pred_fallthru
    _
  // Predicated region
  $region98: #{_lambda_.1} parent=0 // pred_check
    _
  $region99: #{_lambda_.1} parent=0 // pred_check_branch
    %135 = sbr.rel (0) target = $region101
  $region100: #{_lambda_.1} parent=0 // pred_region
    _
  $region101: #{_lambda_.1} parent=0 // pred_fallthru
    _
  // Predicated region
  $region102: #{_lambda_.1} parent=0 // pred_check
    _
  $region103: #{_lambda_.1} parent=0 // pred_check_branch
    %137 = sbr.rel (0) target = $region105
  $region104: #{_lambda_.1} parent=0 // pred_region
    _
  $region105: #{_lambda_.1} parent=0 // pred_fallthru
    _
  // Predicated region
  $region106: #{_lambda_.1} parent=0 // pred_check
    _
  $region107: #{_lambda_.1} parent=0 // pred_check_branch
    %139 = sbr.rel (0) target = $region109
  $region108: #{_lambda_.1} parent=0 // pred_region
    _
  $region109: #{_lambda_.1} parent=0 // pred_fallthru
    _
  // Predicated region
  $region110: #{_lambda_.1} parent=0 // pred_check
    _
  $region111: #{_lambda_.1} parent=0 // pred_check_branch
    %141 = sbr.rel (0) target = $region113
  $region112: #{_lambda_.1} parent=0 // pred_region
    _
  $region113: #{_lambda_.1} parent=0 // pred_fallthru
    _
  // Predicated region
  $region114: #{_lambda_.1} parent=0 // pred_check
    _
  $region115: #{_lambda_.1} parent=0 // pred_check_branch
    %143 = sbr.rel (0) target = $region117
  $region116: #{_lambda_.1} parent=0 // pred_region
    _
  $region117: #{_lambda_.1} parent=0 // pred_fallthru
    _
  // Predicated region
  $region118: #{_lambda_.1} parent=0 // pred_check
    _
  $region119: #{_lambda_.1} parent=0 // pred_check_branch
    %145 = sbr.rel (0) target = $region121
  $region120: #{_lambda_.1} parent=0 // pred_region
    _
  $region121: #{_lambda_.1} parent=0 // pred_fallthru
    _
  // Predicated region
  $region122: #{_lambda_.1} parent=0 // pred_check
    _
  $region123: #{_lambda_.1} parent=0 // pred_check_branch
    %147 = sbr.rel (0) target = $region125
  $region124: #{_lambda_.1} parent=0 // pred_region
    _
  $region125: #{_lambda_.1} parent=0 // pred_fallthru
    _
  // Predicated region
  $region126: #{_lambda_.1} parent=0 // pred_check
    _
  $region127: #{_lambda_.1} parent=0 // pred_check_branch
    %149 = sbr.rel (0) target = $region129
  $region128: #{_lambda_.1} parent=0 // pred_region
    _
  $region129: #{_lambda_.1} parent=0 // pred_fallthru
    _
  // Predicated region
  $region130: #{_lambda_.1} parent=0 // pred_check
    _
  $region131: #{_lambda_.1} parent=0 // pred_check_branch
    %151 = sbr.rel (0) target = $region133
  $region132: #{_lambda_.1} parent=0 // pred_region
    _
  $region133: #{_lambda_.1} parent=0 // pred_fallthru
    _
  // Predicated region
  $region134: #{_lambda_.1} parent=0 // pred_check
    _
  $region135: #{_lambda_.1} parent=0 // pred_check_branch
    %153 = sbr.rel (0) target = $region137
  $region136: #{_lambda_.1} parent=0 // pred_region
    _
  $region137: #{_lambda_.1} parent=0 // pred_fallthru
    _
  // Predicated region
  $region138: #{_lambda_.1} parent=0 // pred_check
    _
  $region139: #{_lambda_.1} parent=0 // pred_check_branch
    %155 = sbr.rel (0) target = $region141
  $region140: #{_lambda_.1} parent=0 // pred_region
    _
  $region141: #{_lambda_.1} parent=0 // pred_fallthru
    _
  // Predicated region
  $region142: #{_lambda_.1} parent=0 // pred_check
    _
  $region143: #{_lambda_.1} parent=0 // pred_check_branch
    %157 = sbr.rel (0) target = $region145
  $region144: #{_lambda_.1} parent=0 // pred_region
    _
  $region145: #{_lambda_.1} parent=0 // pred_fallthru
    _
  // Predicated region
  $region146: #{_lambda_.1} parent=0 // pred_check
    _
  $region147: #{_lambda_.1} parent=0 // pred_check_branch
    %159 = sbr.rel (0) target = $region149
  $region148: #{_lambda_.1} parent=0 // pred_region
    _
  $region149: #{_lambda_.1} parent=0 // pred_fallthru
    _
  // Predicated region
  $region150: #{_lambda_.1} parent=0 // pred_check
    _
  $region151: #{_lambda_.1} parent=0 // pred_check_branch
    %161 = sbr.rel (0) target = $region153
  $region152: #{_lambda_.1} parent=0 // pred_region
    _
  $region153: #{_lambda_.1} parent=0 // pred_fallthru
    _
  // Predicated region
  $region154: #{_lambda_.1} parent=0 // pred_check
    _
  $region155: #{_lambda_.1} parent=0 // pred_check_branch
    %163 = sbr.rel (0) target = $region157
  $region156: #{_lambda_.1} parent=0 // pred_region
    _
  $region157: #{_lambda_.1} parent=0 // pred_fallthru
    _
  // Predicated region
  $region158: #{_lambda_.1} parent=0 // pred_check
    _
  $region159: #{_lambda_.1} parent=0 // pred_check_branch
    %165 = sbr.rel (0) target = $region161
  $region160: #{_lambda_.1} parent=0 // pred_region
    _
  $region161: #{_lambda_.1} parent=0 // pred_fallthru
    _
  %v166 = vld [vmem:[%s1] sm:$0xff]
  %v167 = vld [vmem:[%s1 + $0x8] sm:$0xff]
  %v168 = vld [vmem:[%s3] sm:$0xff]
  %v169 = vld [vmem:[%s3 + $0x8] sm:$0xff]
  %v170 = vld [vmem:[%s5] sm:$0xff]
  %v171 = vld [vmem:[%s5 + $0x8] sm:$0xff]
  %v172 = vld [vmem:[%s7] sm:$0xff]
  %v173 = vld [vmem:[%s7 + $0x8] sm:$0xff]
  %v174 = vlaneseq
  %v175 = vand.u32 %v174, 127
  %176 = vset.pattern.permute.xlu0 0
  %177 = vperm.xlu0 %176, %v166
  %v178 = vpop.permute.xlu0 %177
  %179 = vset.pattern.permute.xlu0 0
  %180 = vperm.xlu0 %179, %v167
  %v181 = vpop.permute.xlu0 %180
  %vm182 = vcmp.eq.s32.totalorder %v175, %v178
  %vm183 = vcmp.eq.s32.totalorder %v175, %v181
  %v184 = vsel %vm182, 1, 0
  %v185 = vsel %vm183, 1, 0
  %v186 = vcvt.s32.f32 %v184
  %v187 = vcvt.s32.f32 %v185
  %v188 = vld [vmem:[%s79] sm:$0xff]
  %v189 = vld [vmem:[%s79 + $0x8] sm:$0xff]
  %v190 = vld [vmem:[%s79 + $0x10] sm:$0xff]
  %v191 = vld [vmem:[%s79 + $0x18] sm:$0xff]
  %v192 = vld [vmem:[%s79 + $0x20] sm:$0xff]
  %v193 = vld [vmem:[%s79 + $0x28] sm:$0xff]
  %v194 = vld [vmem:[%s79 + $0x30] sm:$0xff]
  %v195 = vld [vmem:[%s79 + $0x38] sm:$0xff]
  %196 = vset.pattern.permute.xlu0 0
  %197 = vperm.xlu0 %196, %v168
  %v198 = vpop.permute.xlu0 %197
  %199 = vset.pattern.permute.xlu0 0
  %200 = vperm.xlu0 %199, %v169
  %v201 = vpop.permute.xlu0 %200
  %vm202 = vcmp.eq.s32.totalorder %v175, %v198
  %vm203 = vcmp.eq.s32.totalorder %v175, %v201
  %v204 = vsel %vm202, 1, 0
  %v205 = vsel %vm203, 1, 0
  %v206 = vcvt.s32.f32 %v204
  %v207 = vcvt.s32.f32 %v205
  %v208 = vld [vmem:[%s77] sm:$0xff]
  %vm209 = vcmask 64512
  %v211 = vsel %vm209, %v206, 0
  %v214 = vsel %vm209, %v207, 0
  %216 = vmatprep.subr.mxu0 0.0
  %217 = vmatpush1.msra.mxu0 0.0
  %218 = vmatprep.subr.mxu0 0.0
  %219 = vmatpush1.msra.mxu0 0.0
  %220 = vmatprep.subr.mxu0 0.0
  %221 = vmatpush1.msra.mxu0 0.0
  %222 = vmatprep.subr.mxu0 0.0
  %223 = vmatpush1.msra.mxu0 0.0
  %224 = vmatprep.subr.mxu0 0.0
  %225 = vmatpush1.msra.mxu0 0.0
  %226 = vmatprep.subr.mxu0 0.0
  %227 = vmatpush1.msra.mxu0 0.0
  %228 = vmatprep.subr.mxu0 0.0
  %229 = vmatpush1.msra.mxu0 0.0
  %230 = vmatprep.subr.mxu0 0.0
  %231 = vmatpush1.msra.mxu0 0.0
  %232 = vmatprep.subr.mxu0 0.0
  %233 = vmatpush1.msra.mxu0 0.0
  %234 = vmatprep.subr.mxu0 0.0
  %235 = vmatpush1.msra.mxu0 0.0
  %236 = vmatprep.subr.mxu0 0.0
  %237 = vmatpush1.msra.mxu0 0.0
  %238 = vmatprep.subr.mxu0 0.0
  %239 = vmatpush1.msra.mxu0 0.0
  %240 = vmatprep.subr.mxu0 0.0
  %241 = vmatpush1.msra.mxu0 0.0
  %242 = vmatprep.subr.mxu0 0.0
  %243 = vmatpush1.msra.mxu0 0.0
  %244 = vmatprep.subr.mxu0 0.0
  %245 = vmatpush1.msra.mxu0 0.0
  %246 = vmatprep.subr.mxu0 0.0
  %247 = vmatpush1.msra.mxu0 %v208
  %248 = vmatprep.subr.mxu0 0.0
  %249 = vmatpush2.msra.mxu0 0.0
  %250 = vmatprep.subr.mxu0 0.0
  %251 = vmatpush2.msra.mxu0 0.0
  %252 = vmatprep.subr.mxu0 0.0
  %253 = vmatpush2.msra.mxu0 0.0
  %254 = vmatprep.subr.mxu0 0.0
  %255 = vmatpush2.msra.mxu0 0.0
  %256 = vmatprep.subr.mxu0 0.0
  %257 = vmatpush2.msra.mxu0 0.0
  %258 = vmatprep.subr.mxu0 0.0
  %259 = vmatpush2.msra.mxu0 0.0
  %260 = vmatprep.subr.mxu0 0.0
  %261 = vmatpush2.msra.mxu0 0.0
  %262 = vmatprep.subr.mxu0 0.0
  %263 = vmatpush2.msra.mxu0 0.0
  %264 = vmatprep.subr.mxu0 0.0
  %265 = vmatpush2.msra.mxu0 0.0
  %266 = vmatprep.subr.mxu0 0.0
  %267 = vmatpush2.msra.mxu0 0.0
  %268 = vmatprep.subr.mxu0 0.0
  %269 = vmatpush2.msra.mxu0 0.0
  %270 = vmatprep.subr.mxu0 0.0
  %271 = vmatpush2.msra.mxu0 0.0
  %272 = vmatprep.subr.mxu0 0.0
  %273 = vmatpush2.msra.mxu0 0.0
  %274 = vmatprep.subr.mxu0 0.0
  %275 = vmatpush2.msra.mxu0 0.0
  %276 = vmatprep.subr.mxu0 0.0
  %277 = vmatpush2.msra.mxu0 0.0
  %278 = vmatprep.subr.mxu0 0.0
  %279 = vmatpush2.msra.mxu0 0.0
  %280 = vmatprep.mubr.f32.mxu0 0.0
  %281 = vmatmul.mubr.f32.gmra.mxu0 %v211
  %v282 = vpop.f32.mrf.mxu0
  %v283 = vadd.f32 0.0, %v282
  %v284 = vpop.f32.mrf.mxu0
  %285 = vmatprep.mubr.f32.mxu0 0.0
  %286 = vmatmul.mubr.f32.gmra.mxu0 %v214
  %v287 = vpop.f32.mrf.mxu0
  %v288 = vadd.f32 0.0, %v287
  %v289 = vpop.f32.mrf.mxu0
  %290 = vdwg.mxu0
  %vm291 = vcmask 523264
  %v293 = vsel %vm291, %v186, 0
  %v296 = vsel %vm291, %v187, 0
  %298 = vmatprep.subr.mxu0 0.0
  %299 = vmatpush1.msra.mxu0 0.0
  %300 = vmatprep.subr.mxu0 0.0
  %301 = vmatpush1.msra.mxu0 0.0
  %302 = vmatprep.subr.mxu0 0.0
  %303 = vmatpush1.msra.mxu0 0.0
  %304 = vmatprep.subr.mxu0 0.0
  %305 = vmatpush1.msra.mxu0 0.0
  %306 = vmatprep.subr.mxu0 0.0
  %307 = vmatpush1.msra.mxu0 0.0
  %308 = vmatprep.subr.mxu0 0.0
  %309 = vmatpush1.msra.mxu0 0.0
  %310 = vmatprep.subr.mxu0 0.0
  %311 = vmatpush1.msra.mxu0 0.0
  %312 = vmatprep.subr.mxu0 0.0
  %313 = vmatpush1.msra.mxu0 0.0
  %314 = vmatprep.subr.mxu0 0.0
  %315 = vmatpush1.msra.mxu0 %v195
  %316 = vmatprep.subr.mxu0 0.0
  %317 = vmatpush1.msra.mxu0 %v194
  %318 = vmatprep.subr.mxu0 0.0
  %319 = vmatpush1.msra.mxu0 %v193
  %320 = vmatprep.subr.mxu0 0.0
  %321 = vmatpush1.msra.mxu0 %v192
  %322 = vmatprep.subr.mxu0 0.0
  %323 = vmatpush1.msra.mxu0 %v191
  %324 = vmatprep.subr.mxu0 0.0
  %325 = vmatpush1.msra.mxu0 %v190
  %326 = vmatprep.subr.mxu0 0.0
  %327 = vmatpush1.msra.mxu0 %v189
  %328 = vmatprep.subr.mxu0 0.0
  %329 = vmatpush1.msra.mxu0 %v188
  %330 = vmatprep.subr.mxu0 0.0
  %331 = vmatpush2.msra.mxu0 0.0
  %332 = vmatprep.subr.mxu0 0.0
  %333 = vmatpush2.msra.mxu0 0.0
  %334 = vmatprep.subr.mxu0 0.0
  %335 = vmatpush2.msra.mxu0 0.0
  %336 = vmatprep.subr.mxu0 0.0
  %337 = vmatpush2.msra.mxu0 0.0
  %338 = vmatprep.subr.mxu0 0.0
  %339 = vmatpush2.msra.mxu0 0.0
  %340 = vmatprep.subr.mxu0 0.0
  %341 = vmatpush2.msra.mxu0 0.0
  %342 = vmatprep.subr.mxu0 0.0
  %343 = vmatpush2.msra.mxu0 0.0
  %344 = vmatprep.subr.mxu0 0.0
  %345 = vmatpush2.msra.mxu0 0.0
  %346 = vmatprep.subr.mxu0 0.0
  %347 = vmatpush2.msra.mxu0 0.0
  %348 = vmatprep.subr.mxu0 0.0
  %349 = vmatpush2.msra.mxu0 0.0
  %350 = vmatprep.subr.mxu0 0.0
  %351 = vmatpush2.msra.mxu0 0.0
  %352 = vmatprep.subr.mxu0 0.0
  %353 = vmatpush2.msra.mxu0 0.0
  %354 = vmatprep.subr.mxu0 0.0
  %355 = vmatpush2.msra.mxu0 0.0
  %356 = vmatprep.subr.mxu0 0.0
  %357 = vmatpush2.msra.mxu0 0.0
  %358 = vmatprep.subr.mxu0 0.0
  %359 = vmatpush2.msra.mxu0 0.0
  %360 = vmatprep.subr.mxu0 0.0
  %361 = vmatpush2.msra.mxu0 0.0
  %362 = vmatprep.mubr.f32.mxu0 0.0
  %363 = vmatmul.mubr.f32.gmra.mxu0 %v293
  %v364 = vpop.f32.mrf.mxu0
  %v365 = vadd.f32 %v283, %v364
  %v366 = vpop.f32.mrf.mxu0
  %367 = vmatprep.mubr.f32.mxu0 0.0
  %368 = vmatmul.mubr.f32.gmra.mxu0 %v296
  %v369 = vpop.f32.mrf.mxu0
  %v370 = vadd.f32 %v288, %v369
  %v371 = vpop.f32.mrf.mxu0
  %372 = vdwg.mxu0
  %v373 = vld [vmem:[%s63] sm:$0x1]
  %v374 = vld [vmem:[%s61] sm:$0x1]
  %vm375 = vcmask 261120
  %v376 = vsel %vm375, %v365, 0.0
  %377 = vadd.xlane.f32.xlu0 %v376
  %v378 = vpop.xlane.xlu0 %377
  %v379 = vsel %vm375, %v370, 0.0
  %380 = vadd.xlane.f32.xlu0 %v379
  %v381 = vpop.xlane.xlu0 %380
  %v382 = vrcp.pop 32.0
  %v383 = vmul.f32 %v378, %v382
  %v384 = vmul.f32 %v381, %v382
  %v385 = vsub.f32 %v365, %v383
  %v386 = vsub.f32 %v370, %v384
  %v387 = vmul.f32 %v385, %v385
  %v388 = vmul.f32 %v386, %v386
  %v389 = vsel %vm375, %v387, 0.0
  %390 = vadd.xlane.f32.xlu0 %v389
  %v391 = vpop.xlane.xlu0 %390
  %v392 = vsel %vm375, %v388, 0.0
  %393 = vadd.xlane.f32.xlu0 %v392
  %v394 = vpop.xlane.xlu0 %393
  %v395 = vmul.f32 %v391, %v382
  %v396 = vmul.f32 %v394, %v382
  %v397 = vadd.f32 %v395, 1e-05
  %v398 = vadd.f32 %v396, 1e-05
  %v399 = vrsqrt.pop %v397
  %v400 = vrsqrt.pop %v398
  %v401 = vmul.f32 %v385, %v399
  %v402 = vmul.f32 %v386, %v400
  %v404 = vlaneseq
  %v405 = vshrl.u32 %v404, 7
  %v406 = vsub.s32 0, %v405
  %v407 = vrot.slane %v373, %v406
  %v409 = vmul.f32 %v401, %v407
  %v410 = vmul.f32 %v402, %v407
  %v412 = vlaneseq
  %v413 = vshrl.u32 %v412, 7
  %v414 = vsub.s32 0, %v413
  %v415 = vrot.slane %v374, %v414
  %v417 = vadd.f32 %v409, %v415
  %v418 = vadd.f32 %v410, %v415
  %v419 = vld [vmem:[%s71] sm:$0xff]
  %v420 = vld [vmem:[%s71 + $0x8] sm:$0xff]
  %v421 = vld [vmem:[%s71 + $0x10] sm:$0xff]
  %v422 = vld [vmem:[%s71 + $0x18] sm:$0xff]
  %v424 = vsel %vm375, %v417, 0
  %v427 = vsel %vm375, %v418, 0
  %429 = vmatprep.subr.mxu0 0.0
  %430 = vmatpush1.msra.mxu0 0.0
  %431 = vmatprep.subr.mxu0 0.0
  %432 = vmatpush1.msra.mxu0 0.0
  %433 = vmatprep.subr.mxu0 0.0
  %434 = vmatpush1.msra.mxu0 0.0
  %435 = vmatprep.subr.mxu0 0.0
  %436 = vmatpush1.msra.mxu0 0.0
  %437 = vmatprep.subr.mxu0 0.0
  %438 = vmatpush1.msra.mxu0 0.0
  %439 = vmatprep.subr.mxu0 0.0
  %440 = vmatpush1.msra.mxu0 0.0
  %441 = vmatprep.subr.mxu0 0.0
  %442 = vmatpush1.msra.mxu0 0.0
  %443 = vmatprep.subr.mxu0 0.0
  %444 = vmatpush1.msra.mxu0 0.0
  %445 = vmatprep.subr.mxu0 0.0
  %446 = vmatpush1.msra.mxu0 0.0
  %447 = vmatprep.subr.mxu0 0.0
  %448 = vmatpush1.msra.mxu0 0.0
  %449 = vmatprep.subr.mxu0 0.0
  %450 = vmatpush1.msra.mxu0 0.0
  %451 = vmatprep.subr.mxu0 0.0
  %452 = vmatpush1.msra.mxu0 0.0
  %453 = vmatprep.subr.mxu0 0.0
  %454 = vmatpush1.msra.mxu0 %v422
  %455 = vmatprep.subr.mxu0 0.0
  %456 = vmatpush1.msra.mxu0 %v421
  %457 = vmatprep.subr.mxu0 0.0
  %458 = vmatpush1.msra.mxu0 %v420
  %459 = vmatprep.subr.mxu0 0.0
  %460 = vmatpush1.msra.mxu0 %v419
  %461 = vmatprep.subr.mxu0 0.0
  %462 = vmatpush2.msra.mxu0 0.0
  %463 = vmatprep.subr.mxu0 0.0
  %464 = vmatpush2.msra.mxu0 0.0
  %465 = vmatprep.subr.mxu0 0.0
  %466 = vmatpush2.msra.mxu0 0.0
  %467 = vmatprep.subr.mxu0 0.0
  %468 = vmatpush2.msra.mxu0 0.0
  %469 = vmatprep.subr.mxu0 0.0
  %470 = vmatpush2.msra.mxu0 0.0
  %471 = vmatprep.subr.mxu0 0.0
  %472 = vmatpush2.msra.mxu0 0.0
  %473 = vmatprep.subr.mxu0 0.0
  %474 = vmatpush2.msra.mxu0 0.0
  %475 = vmatprep.subr.mxu0 0.0
  %476 = vmatpush2.msra.mxu0 0.0
  %477 = vmatprep.subr.mxu0 0.0
  %478 = vmatpush2.msra.mxu0 0.0
  %479 = vmatprep.subr.mxu0 0.0
  %480 = vmatpush2.msra.mxu0 0.0
  %481 = vmatprep.subr.mxu0 0.0
  %482 = vmatpush2.msra.mxu0 0.0
  %483 = vmatprep.subr.mxu0 0.0
  %484 = vmatpush2.msra.mxu0 0.0
  %485 = vmatprep.subr.mxu0 0.0
  %486 = vmatpush2.msra.mxu0 0.0
  %487 = vmatprep.subr.mxu0 0.0
  %488 = vmatpush2.msra.mxu0 0.0
  %489 = vmatprep.subr.mxu0 0.0
  %490 = vmatpush2.msra.mxu0 0.0
  %491 = vmatprep.subr.mxu0 0.0
  %492 = vmatpush2.msra.mxu0 0.0
  %493 = vmatprep.mubr.f32.mxu0 0.0
  %494 = vmatmul.mubr.f32.gmra.mxu0 %v424
  %v495 = vpop.f32.mrf.mxu0
  %v496 = vadd.f32 0.0, %v495
  %v497 = vpop.f32.mrf.mxu0
  %498 = vmatprep.mubr.f32.mxu0 0.0
  %499 = vmatmul.mubr.f32.gmra.mxu0 %v427
  %v500 = vpop.f32.mrf.mxu0
  %v501 = vadd.f32 0.0, %v500
  %v502 = vpop.f32.mrf.mxu0
  %503 = vdwg.mxu0
  %v504 = vld [vmem:[%s69] sm:$0xff]
  %v505 = vld [vmem:[%s69 + $0x8] sm:$0xff]
  %v506 = vld [vmem:[%s69 + $0x10] sm:$0xff]
  %v507 = vld [vmem:[%s69 + $0x18] sm:$0xff]
  %509 = vrot.lane.b32.xlu0 %v496, 96
  %v510 = vpop.permute.xlu0 %509
  %v511 = vsel %vm209, %v496, 0
  %v513 = vsel %vm209, %v510, 0
  %515 = vmatprep.subr.mxu0 0.0
  %516 = vmatpush1.xpose.msra.mxu0 0.0
  %517 = vmatprep.subr.mxu0 0.0
  %518 = vmatpush1.xpose.msra.mxu0 0.0
  %519 = vmatprep.subr.mxu0 0.0
  %520 = vmatpush1.xpose.msra.mxu0 0.0
  %521 = vmatprep.subr.mxu0 0.0
  %522 = vmatpush1.xpose.msra.mxu0 0.0
  %523 = vmatprep.subr.mxu0 0.0
  %524 = vmatpush1.xpose.msra.mxu0 0.0
  %525 = vmatprep.subr.mxu0 0.0
  %526 = vmatpush1.xpose.msra.mxu0 0.0
  %527 = vmatprep.subr.mxu0 0.0
  %528 = vmatpush1.xpose.msra.mxu0 0.0
  %529 = vmatprep.subr.mxu0 0.0
  %530 = vmatpush1.xpose.msra.mxu0 0.0
  %531 = vmatprep.subr.mxu0 0.0
  %532 = vmatpush1.xpose.msra.mxu0 0.0
  %533 = vmatprep.subr.mxu0 0.0
  %534 = vmatpush1.xpose.msra.mxu0 0.0
  %535 = vmatprep.subr.mxu0 0.0
  %536 = vmatpush1.xpose.msra.mxu0 0.0
  %537 = vmatprep.subr.mxu0 0.0
  %538 = vmatpush1.xpose.msra.mxu0 0.0
  %539 = vmatprep.subr.mxu0 0.0
  %540 = vmatpush1.xpose.msra.mxu0 0.0
  %541 = vmatprep.subr.mxu0 0.0
  %542 = vmatpush1.xpose.msra.mxu0 0.0
  %543 = vmatprep.subr.mxu0 0.0
  %544 = vmatpush1.xpose.msra.mxu0 0.0
  %545 = vmatprep.subr.mxu0 0.0
  %546 = vmatpush1.xpose.msra.mxu0 %v513
  %547 = vmatprep.subr.mxu0 0.0
  %548 = vmatpush2.xpose.msra.mxu0 0.0
  %549 = vmatprep.subr.mxu0 0.0
  %550 = vmatpush2.xpose.msra.mxu0 0.0
  %551 = vmatprep.subr.mxu0 0.0
  %552 = vmatpush2.xpose.msra.mxu0 0.0
  %553 = vmatprep.subr.mxu0 0.0
  %554 = vmatpush2.xpose.msra.mxu0 0.0
  %555 = vmatprep.subr.mxu0 0.0
  %556 = vmatpush2.xpose.msra.mxu0 0.0
  %557 = vmatprep.subr.mxu0 0.0
  %558 = vmatpush2.xpose.msra.mxu0 0.0
  %559 = vmatprep.subr.mxu0 0.0
  %560 = vmatpush2.xpose.msra.mxu0 0.0
  %561 = vmatprep.subr.mxu0 0.0
  %562 = vmatpush2.xpose.msra.mxu0 0.0
  %563 = vmatprep.subr.mxu0 0.0
  %564 = vmatpush2.xpose.msra.mxu0 0.0
  %565 = vmatprep.subr.mxu0 0.0
  %566 = vmatpush2.xpose.msra.mxu0 0.0
  %567 = vmatprep.subr.mxu0 0.0
  %568 = vmatpush2.xpose.msra.mxu0 0.0
  %569 = vmatprep.subr.mxu0 0.0
  %570 = vmatpush2.xpose.msra.mxu0 0.0
  %571 = vmatprep.subr.mxu0 0.0
  %572 = vmatpush2.xpose.msra.mxu0 0.0
  %573 = vmatprep.subr.mxu0 0.0
  %574 = vmatpush2.xpose.msra.mxu0 0.0
  %575 = vmatprep.subr.mxu0 0.0
  %576 = vmatpush2.xpose.msra.mxu0 0.0
  %577 = vmatprep.subr.mxu0 0.0
  %578 = vmatpush2.xpose.msra.mxu0 0.0
  %579 = vmatprep.mubr.f32.mxu0 0.0
  %580 = vmatmul.mubr.f32.gmra.mxu0 %v511
  %v581 = vpop.f32.mrf.mxu0
  %v582 = vadd.f32 0.0, %v581
  %v583 = vpop.f32.mrf.mxu0
  %584 = vdwg.mxu0
  %586 = vrot.lane.b32.xlu0 %v501, 96
  %v587 = vpop.permute.xlu0 %586
  %v588 = vsel %vm209, %v501, 0
  %v590 = vsel %vm209, %v587, 0
  %592 = vmatprep.subr.mxu0 0.0
  %593 = vmatpush1.xpose.msra.mxu0 0.0
  %594 = vmatprep.subr.mxu0 0.0
  %595 = vmatpush1.xpose.msra.mxu0 0.0
  %596 = vmatprep.subr.mxu0 0.0
  %597 = vmatpush1.xpose.msra.mxu0 0.0
  %598 = vmatprep.subr.mxu0 0.0
  %599 = vmatpush1.xpose.msra.mxu0 0.0
  %600 = vmatprep.subr.mxu0 0.0
  %601 = vmatpush1.xpose.msra.mxu0 0.0
  %602 = vmatprep.subr.mxu0 0.0
  %603 = vmatpush1.xpose.msra.mxu0 0.0
  %604 = vmatprep.subr.mxu0 0.0
  %605 = vmatpush1.xpose.msra.mxu0 0.0
  %606 = vmatprep.subr.mxu0 0.0
  %607 = vmatpush1.xpose.msra.mxu0 0.0
  %608 = vmatprep.subr.mxu0 0.0
  %609 = vmatpush1.xpose.msra.mxu0 0.0
  %610 = vmatprep.subr.mxu0 0.0
  %611 = vmatpush1.xpose.msra.mxu0 0.0
  %612 = vmatprep.subr.mxu0 0.0
  %613 = vmatpush1.xpose.msra.mxu0 0.0
  %614 = vmatprep.subr.mxu0 0.0
  %615 = vmatpush1.xpose.msra.mxu0 0.0
  %616 = vmatprep.subr.mxu0 0.0
  %617 = vmatpush1.xpose.msra.mxu0 0.0
  %618 = vmatprep.subr.mxu0 0.0
  %619 = vmatpush1.xpose.msra.mxu0 0.0
  %620 = vmatprep.subr.mxu0 0.0
  %621 = vmatpush1.xpose.msra.mxu0 0.0
  %622 = vmatprep.subr.mxu0 0.0
  %623 = vmatpush1.xpose.msra.mxu0 %v590
  %624 = vmatprep.subr.mxu0 0.0
  %625 = vmatpush2.xpose.msra.mxu0 0.0
  %626 = vmatprep.subr.mxu0 0.0
  %627 = vmatpush2.xpose.msra.mxu0 0.0
  %628 = vmatprep.subr.mxu0 0.0
  %629 = vmatpush2.xpose.msra.mxu0 0.0
  %630 = vmatprep.subr.mxu0 0.0
  %631 = vmatpush2.xpose.msra.mxu0 0.0
  %632 = vmatprep.subr.mxu0 0.0
  %633 = vmatpush2.xpose.msra.mxu0 0.0
  %634 = vmatprep.subr.mxu0 0.0
  %635 = vmatpush2.xpose.msra.mxu0 0.0
  %636 = vmatprep.subr.mxu0 0.0
  %637 = vmatpush2.xpose.msra.mxu0 0.0
  %638 = vmatprep.subr.mxu0 0.0
  %639 = vmatpush2.xpose.msra.mxu0 0.0
  %640 = vmatprep.subr.mxu0 0.0
  %641 = vmatpush2.xpose.msra.mxu0 0.0
  %642 = vmatprep.subr.mxu0 0.0
  %643 = vmatpush2.xpose.msra.mxu0 0.0
  %644 = vmatprep.subr.mxu0 0.0
  %645 = vmatpush2.xpose.msra.mxu0 0.0
  %646 = vmatprep.subr.mxu0 0.0
  %647 = vmatpush2.xpose.msra.mxu0 0.0
  %648 = vmatprep.subr.mxu0 0.0
  %649 = vmatpush2.xpose.msra.mxu0 0.0
  %650 = vmatprep.subr.mxu0 0.0
  %651 = vmatpush2.xpose.msra.mxu0 0.0
  %652 = vmatprep.subr.mxu0 0.0
  %653 = vmatpush2.xpose.msra.mxu0 0.0
  %654 = vmatprep.subr.mxu0 0.0
  %655 = vmatpush2.xpose.msra.mxu0 0.0
  %656 = vmatprep.mubr.f32.mxu0 0.0
  %657 = vmatmul.mubr.f32.gmra.mxu0 %v588
  %v658 = vpop.f32.mrf.mxu0
  %v659 = vadd.f32 0.0, %v658
  %v660 = vpop.f32.mrf.mxu0
  %661 = vdwg.mxu0
  %v662 = vmul.f32 %v582, 0.35355338
  %v663 = vmul.f32 %v659, 0.35355338
  %v664 = vsel %vm209, %v662, -inf
  %665 = vmax.xlane.f32.xlu0 %v664
  %v666 = vpop.xlane.xlu0 %665
  %v667 = vsel %vm209, %v663, -inf
  %668 = vmax.xlane.f32.xlu0 %v667
  %v669 = vpop.xlane.xlu0 %668
  %v670 = vsub.f32 %v662, %v666
  %v671 = vsub.f32 %v663, %v669
  %v672 = vmul.f32 %v670, 1.442695
  %v673 = vpow.pop %v672
  %v674 = vmul.f32 %v671, 1.442695
  %v675 = vpow.pop %v674
  %v676 = vsel %vm209, %v673, 0.0
  %677 = vadd.xlane.f32.xlu0 %v676
  %v678 = vpop.xlane.xlu0 %677
  %v679 = vsel %vm209, %v675, 0.0
  %680 = vadd.xlane.f32.xlu0 %v679
  %v681 = vpop.xlane.xlu0 %680
  %v682 = vrcp.pop %v678
  %v683 = vrcp.pop %v681
  %v684 = vmul.f32 %v673, %v682
  %v685 = vmul.f32 %v675, %v683
  %686 = vrot.lane.b32.xlu0 %v496, 64
  %v687 = vpop.permute.xlu0 %686
  %v690 = vsel %vm209, %v684, 0
  %692 = vmatprep.subr.mxu0 0.0
  %693 = vmatpush1.msra.mxu0 0.0
  %694 = vmatprep.subr.mxu0 0.0
  %695 = vmatpush1.msra.mxu0 0.0
  %696 = vmatprep.subr.mxu0 0.0
  %697 = vmatpush1.msra.mxu0 0.0
  %698 = vmatprep.subr.mxu0 0.0
  %699 = vmatpush1.msra.mxu0 0.0
  %700 = vmatprep.subr.mxu0 0.0
  %701 = vmatpush1.msra.mxu0 0.0
  %702 = vmatprep.subr.mxu0 0.0
  %703 = vmatpush1.msra.mxu0 0.0
  %704 = vmatprep.subr.mxu0 0.0
  %705 = vmatpush1.msra.mxu0 0.0
  %706 = vmatprep.subr.mxu0 0.0
  %707 = vmatpush1.msra.mxu0 0.0
  %708 = vmatprep.subr.mxu0 0.0
  %709 = vmatpush1.msra.mxu0 0.0
  %710 = vmatprep.subr.mxu0 0.0
  %711 = vmatpush1.msra.mxu0 0.0
  %712 = vmatprep.subr.mxu0 0.0
  %713 = vmatpush1.msra.mxu0 0.0
  %714 = vmatprep.subr.mxu0 0.0
  %715 = vmatpush1.msra.mxu0 0.0
  %716 = vmatprep.subr.mxu0 0.0
  %717 = vmatpush1.msra.mxu0 0.0
  %718 = vmatprep.subr.mxu0 0.0
  %719 = vmatpush1.msra.mxu0 0.0
  %720 = vmatprep.subr.mxu0 0.0
  %721 = vmatpush1.msra.mxu0 0.0
  %722 = vmatprep.subr.mxu0 0.0
  %723 = vmatpush1.msra.mxu0 %v687
  %724 = vmatprep.subr.mxu0 0.0
  %725 = vmatpush2.msra.mxu0 0.0
  %726 = vmatprep.subr.mxu0 0.0
  %727 = vmatpush2.msra.mxu0 0.0
  %728 = vmatprep.subr.mxu0 0.0
  %729 = vmatpush2.msra.mxu0 0.0
  %730 = vmatprep.subr.mxu0 0.0
  %731 = vmatpush2.msra.mxu0 0.0
  %732 = vmatprep.subr.mxu0 0.0
  %733 = vmatpush2.msra.mxu0 0.0
  %734 = vmatprep.subr.mxu0 0.0
  %735 = vmatpush2.msra.mxu0 0.0
  %736 = vmatprep.subr.mxu0 0.0
  %737 = vmatpush2.msra.mxu0 0.0
  %738 = vmatprep.subr.mxu0 0.0
  %739 = vmatpush2.msra.mxu0 0.0
  %740 = vmatprep.subr.mxu0 0.0
  %741 = vmatpush2.msra.mxu0 0.0
  %742 = vmatprep.subr.mxu0 0.0
  %743 = vmatpush2.msra.mxu0 0.0
  %744 = vmatprep.subr.mxu0 0.0
  %745 = vmatpush2.msra.mxu0 0.0
  %746 = vmatprep.subr.mxu0 0.0
  %747 = vmatpush2.msra.mxu0 0.0
  %748 = vmatprep.subr.mxu0 0.0
  %749 = vmatpush2.msra.mxu0 0.0
  %750 = vmatprep.subr.mxu0 0.0
  %751 = vmatpush2.msra.mxu0 0.0
  %752 = vmatprep.subr.mxu0 0.0
  %753 = vmatpush2.msra.mxu0 0.0
  %754 = vmatprep.subr.mxu0 0.0
  %755 = vmatpush2.msra.mxu0 0.0
  %756 = vmatprep.mubr.f32.mxu0 0.0
  %757 = vmatmul.mubr.f32.gmra.mxu0 %v690
  %v758 = vpop.f32.mrf.mxu0
  %v759 = vadd.f32 0.0, %v758
  %v760 = vpop.f32.mrf.mxu0
  %761 = vdwg.mxu0
  %762 = vrot.lane.b32.xlu0 %v501, 64
  %v763 = vpop.permute.xlu0 %762
  %v766 = vsel %vm209, %v685, 0
  %768 = vmatprep.subr.mxu0 0.0
  %769 = vmatpush1.msra.mxu0 0.0
  %770 = vmatprep.subr.mxu0 0.0
  %771 = vmatpush1.msra.mxu0 0.0
  %772 = vmatprep.subr.mxu0 0.0
  %773 = vmatpush1.msra.mxu0 0.0
  %774 = vmatprep.subr.mxu0 0.0
  %775 = vmatpush1.msra.mxu0 0.0
  %776 = vmatprep.subr.mxu0 0.0
  %777 = vmatpush1.msra.mxu0 0.0
  %778 = vmatprep.subr.mxu0 0.0
  %779 = vmatpush1.msra.mxu0 0.0
  %780 = vmatprep.subr.mxu0 0.0
  %781 = vmatpush1.msra.mxu0 0.0
  %782 = vmatprep.subr.mxu0 0.0
  %783 = vmatpush1.msra.mxu0 0.0
  %784 = vmatprep.subr.mxu0 0.0
  %785 = vmatpush1.msra.mxu0 0.0
  %786 = vmatprep.subr.mxu0 0.0
  %787 = vmatpush1.msra.mxu0 0.0
  %788 = vmatprep.subr.mxu0 0.0
  %789 = vmatpush1.msra.mxu0 0.0
  %790 = vmatprep.subr.mxu0 0.0
  %791 = vmatpush1.msra.mxu0 0.0
  %792 = vmatprep.subr.mxu0 0.0
  %793 = vmatpush1.msra.mxu0 0.0
  %794 = vmatprep.subr.mxu0 0.0
  %795 = vmatpush1.msra.mxu0 0.0
  %796 = vmatprep.subr.mxu0 0.0
  %797 = vmatpush1.msra.mxu0 0.0
  %798 = vmatprep.subr.mxu0 0.0
  %799 = vmatpush1.msra.mxu0 %v763
  %800 = vmatprep.subr.mxu0 0.0
  %801 = vmatpush2.msra.mxu0 0.0
  %802 = vmatprep.subr.mxu0 0.0
  %803 = vmatpush2.msra.mxu0 0.0
  %804 = vmatprep.subr.mxu0 0.0
  %805 = vmatpush2.msra.mxu0 0.0
  %806 = vmatprep.subr.mxu0 0.0
  %807 = vmatpush2.msra.mxu0 0.0
  %808 = vmatprep.subr.mxu0 0.0
  %809 = vmatpush2.msra.mxu0 0.0
  %810 = vmatprep.subr.mxu0 0.0
  %811 = vmatpush2.msra.mxu0 0.0
  %812 = vmatprep.subr.mxu0 0.0
  %813 = vmatpush2.msra.mxu0 0.0
  %814 = vmatprep.subr.mxu0 0.0
  %815 = vmatpush2.msra.mxu0 0.0
  %816 = vmatprep.subr.mxu0 0.0
  %817 = vmatpush2.msra.mxu0 0.0
  %818 = vmatprep.subr.mxu0 0.0
  %819 = vmatpush2.msra.mxu0 0.0
  %820 = vmatprep.subr.mxu0 0.0
  %821 = vmatpush2.msra.mxu0 0.0
  %822 = vmatprep.subr.mxu0 0.0
  %823 = vmatpush2.msra.mxu0 0.0
  %824 = vmatprep.subr.mxu0 0.0
  %825 = vmatpush2.msra.mxu0 0.0
  %826 = vmatprep.subr.mxu0 0.0
  %827 = vmatpush2.msra.mxu0 0.0
  %828 = vmatprep.subr.mxu0 0.0
  %829 = vmatpush2.msra.mxu0 0.0
  %830 = vmatprep.subr.mxu0 0.0
  %831 = vmatpush2.msra.mxu0 0.0
  %832 = vmatprep.mubr.f32.mxu0 0.0
  %833 = vmatmul.mubr.f32.gmra.mxu0 %v766
  %v834 = vpop.f32.mrf.mxu0
  %v835 = vadd.f32 0.0, %v834
  %v836 = vpop.f32.mrf.mxu0
  %837 = vdwg.mxu0
  %838 = vrot.lane.b32.xlu0 %v496, 120
  %v839 = vpop.permute.xlu0 %838
  %840 = vrot.lane.b32.xlu0 %v496, 88
  %v841 = vpop.permute.xlu0 %840
  %v842 = vsel %vm209, %v839, 0
  %v844 = vsel %vm209, %v841, 0
  %846 = vmatprep.subr.mxu0 0.0
  %847 = vmatpush1.xpose.msra.mxu0 0.0
  %848 = vmatprep.subr.mxu0 0.0
  %849 = vmatpush1.xpose.msra.mxu0 0.0
  %850 = vmatprep.subr.mxu0 0.0
  %851 = vmatpush1.xpose.msra.mxu0 0.0
  %852 = vmatprep.subr.mxu0 0.0
  %853 = vmatpush1.xpose.msra.mxu0 0.0
  %854 = vmatprep.subr.mxu0 0.0
  %855 = vmatpush1.xpose.msra.mxu0 0.0
  %856 = vmatprep.subr.mxu0 0.0
  %857 = vmatpush1.xpose.msra.mxu0 0.0
  %858 = vmatprep.subr.mxu0 0.0
  %859 = vmatpush1.xpose.msra.mxu0 0.0
  %860 = vmatprep.subr.mxu0 0.0
  %861 = vmatpush1.xpose.msra.mxu0 0.0
  %862 = vmatprep.subr.mxu0 0.0
  %863 = vmatpush1.xpose.msra.mxu0 0.0
  %864 = vmatprep.subr.mxu0 0.0
  %865 = vmatpush1.xpose.msra.mxu0 0.0
  %866 = vmatprep.subr.mxu0 0.0
  %867 = vmatpush1.xpose.msra.mxu0 0.0
  %868 = vmatprep.subr.mxu0 0.0
  %869 = vmatpush1.xpose.msra.mxu0 0.0
  %870 = vmatprep.subr.mxu0 0.0
  %871 = vmatpush1.xpose.msra.mxu0 0.0
  %872 = vmatprep.subr.mxu0 0.0
  %873 = vmatpush1.xpose.msra.mxu0 0.0
  %874 = vmatprep.subr.mxu0 0.0
  %875 = vmatpush1.xpose.msra.mxu0 0.0
  %876 = vmatprep.subr.mxu0 0.0
  %877 = vmatpush1.xpose.msra.mxu0 %v844
  %878 = vmatprep.subr.mxu0 0.0
  %879 = vmatpush2.xpose.msra.mxu0 0.0
  %880 = vmatprep.subr.mxu0 0.0
  %881 = vmatpush2.xpose.msra.mxu0 0.0
  %882 = vmatprep.subr.mxu0 0.0
  %883 = vmatpush2.xpose.msra.mxu0 0.0
  %884 = vmatprep.subr.mxu0 0.0
  %885 = vmatpush2.xpose.msra.mxu0 0.0
  %886 = vmatprep.subr.mxu0 0.0
  %887 = vmatpush2.xpose.msra.mxu0 0.0
  %888 = vmatprep.subr.mxu0 0.0
  %889 = vmatpush2.xpose.msra.mxu0 0.0
  %890 = vmatprep.subr.mxu0 0.0
  %891 = vmatpush2.xpose.msra.mxu0 0.0
  %892 = vmatprep.subr.mxu0 0.0
  %893 = vmatpush2.xpose.msra.mxu0 0.0
  %894 = vmatprep.subr.mxu0 0.0
  %895 = vmatpush2.xpose.msra.mxu0 0.0
  %896 = vmatprep.subr.mxu0 0.0
  %897 = vmatpush2.xpose.msra.mxu0 0.0
  %898 = vmatprep.subr.mxu0 0.0
  %899 = vmatpush2.xpose.msra.mxu0 0.0
  %900 = vmatprep.subr.mxu0 0.0
  %901 = vmatpush2.xpose.msra.mxu0 0.0
  %902 = vmatprep.subr.mxu0 0.0
  %903 = vmatpush2.xpose.msra.mxu0 0.0
  %904 = vmatprep.subr.mxu0 0.0
  %905 = vmatpush2.xpose.msra.mxu0 0.0
  %906 = vmatprep.subr.mxu0 0.0
  %907 = vmatpush2.xpose.msra.mxu0 0.0
  %908 = vmatprep.subr.mxu0 0.0
  %909 = vmatpush2.xpose.msra.mxu0 0.0
  %910 = vmatprep.mubr.f32.mxu0 0.0
  %911 = vmatmul.mubr.f32.gmra.mxu0 %v842
  %v912 = vpop.f32.mrf.mxu0
  %v913 = vadd.f32 0.0, %v912
  %v914 = vpop.f32.mrf.mxu0
  %915 = vdwg.mxu0
  %916 = vrot.lane.b32.xlu0 %v501, 120
  %v917 = vpop.permute.xlu0 %916
  %918 = vrot.lane.b32.xlu0 %v501, 88
  %v919 = vpop.permute.xlu0 %918
  %v920 = vsel %vm209, %v917, 0
  %v922 = vsel %vm209, %v919, 0
  %924 = vmatprep.subr.mxu0 0.0
  %925 = vmatpush1.xpose.msra.mxu0 0.0
  %926 = vmatprep.subr.mxu0 0.0
  %927 = vmatpush1.xpose.msra.mxu0 0.0
  %928 = vmatprep.subr.mxu0 0.0
  %929 = vmatpush1.xpose.msra.mxu0 0.0
  %930 = vmatprep.subr.mxu0 0.0
  %931 = vmatpush1.xpose.msra.mxu0 0.0
  %932 = vmatprep.subr.mxu0 0.0
  %933 = vmatpush1.xpose.msra.mxu0 0.0
  %934 = vmatprep.subr.mxu0 0.0
  %935 = vmatpush1.xpose.msra.mxu0 0.0
  %936 = vmatprep.subr.mxu0 0.0
  %937 = vmatpush1.xpose.msra.mxu0 0.0
  %938 = vmatprep.subr.mxu0 0.0
  %939 = vmatpush1.xpose.msra.mxu0 0.0
  %940 = vmatprep.subr.mxu0 0.0
  %941 = vmatpush1.xpose.msra.mxu0 0.0
  %942 = vmatprep.subr.mxu0 0.0
  %943 = vmatpush1.xpose.msra.mxu0 0.0
  %944 = vmatprep.subr.mxu0 0.0
  %945 = vmatpush1.xpose.msra.mxu0 0.0
  %946 = vmatprep.subr.mxu0 0.0
  %947 = vmatpush1.xpose.msra.mxu0 0.0
  %948 = vmatprep.subr.mxu0 0.0
  %949 = vmatpush1.xpose.msra.mxu0 0.0
  %950 = vmatprep.subr.mxu0 0.0
  %951 = vmatpush1.xpose.msra.mxu0 0.0
  %952 = vmatprep.subr.mxu0 0.0
  %953 = vmatpush1.xpose.msra.mxu0 0.0
  %954 = vmatprep.subr.mxu0 0.0
  %955 = vmatpush1.xpose.msra.mxu0 %v922
  %956 = vmatprep.subr.mxu0 0.0
  %957 = vmatpush2.xpose.msra.mxu0 0.0
  %958 = vmatprep.subr.mxu0 0.0
  %959 = vmatpush2.xpose.msra.mxu0 0.0
  %960 = vmatprep.subr.mxu0 0.0
  %961 = vmatpush2.xpose.msra.mxu0 0.0
  %962 = vmatprep.subr.mxu0 0.0
  %963 = vmatpush2.xpose.msra.mxu0 0.0
  %964 = vmatprep.subr.mxu0 0.0
  %965 = vmatpush2.xpose.msra.mxu0 0.0
  %966 = vmatprep.subr.mxu0 0.0
  %967 = vmatpush2.xpose.msra.mxu0 0.0
  %968 = vmatprep.subr.mxu0 0.0
  %969 = vmatpush2.xpose.msra.mxu0 0.0
  %970 = vmatprep.subr.mxu0 0.0
  %971 = vmatpush2.xpose.msra.mxu0 0.0
  %972 = vmatprep.subr.mxu0 0.0
  %973 = vmatpush2.xpose.msra.mxu0 0.0
  %974 = vmatprep.subr.mxu0 0.0
  %975 = vmatpush2.xpose.msra.mxu0 0.0
  %976 = vmatprep.subr.mxu0 0.0
  %977 = vmatpush2.xpose.msra.mxu0 0.0
  %978 = vmatprep.subr.mxu0 0.0
  %979 = vmatpush2.xpose.msra.mxu0 0.0
  %980 = vmatprep.subr.mxu0 0.0
  %981 = vmatpush2.xpose.msra.mxu0 0.0
  %982 = vmatprep.subr.mxu0 0.0
  %983 = vmatpush2.xpose.msra.mxu0 0.0
  %984 = vmatprep.subr.mxu0 0.0
  %985 = vmatpush2.xpose.msra.mxu0 0.0
  %986 = vmatprep.subr.mxu0 0.0
  %987 = vmatpush2.xpose.msra.mxu0 0.0
  %988 = vmatprep.mubr.f32.mxu0 0.0
  %989 = vmatmul.mubr.f32.gmra.mxu0 %v920
  %v990 = vpop.f32.mrf.mxu0
  %v991 = vadd.f32 0.0, %v990
  %v992 = vpop.f32.mrf.mxu0
  %993 = vdwg.mxu0
  %v994 = vmul.f32 %v913, 0.35355338
  %v995 = vmul.f32 %v991, 0.35355338
  %v996 = vsel %vm209, %v994, -inf
  %997 = vmax.xlane.f32.xlu0 %v996
  %v998 = vpop.xlane.xlu0 %997
  %v999 = vsel %vm209, %v995, -inf
  %1000 = vmax.xlane.f32.xlu0 %v999
  %v1001 = vpop.xlane.xlu0 %1000
  %v1002 = vsub.f32 %v994, %v998
  %v1003 = vsub.f32 %v995, %v1001
  %v1004 = vmul.f32 %v1002, 1.442695
  %v1005 = vpow.pop %v1004
  %v1006 = vmul.f32 %v1003, 1.442695
  %v1007 = vpow.pop %v1006
  %v1008 = vsel %vm209, %v1005, 0.0
  %1009 = vadd.xlane.f32.xlu0 %v1008
  %v1010 = vpop.xlane.xlu0 %1009
  %v1011 = vsel %vm209, %v1007, 0.0
  %1012 = vadd.xlane.f32.xlu0 %v1011
  %v1013 = vpop.xlane.xlu0 %1012
  %v1014 = vrcp.pop %v1010
  %v1015 = vrcp.pop %v1013
  %v1016 = vmul.f32 %v1005, %v1014
  %v1017 = vmul.f32 %v1007, %v1015
  %1018 = vrot.lane.b32.xlu0 %v496, 56
  %v1019 = vpop.permute.xlu0 %1018
  %v1022 = vsel %vm209, %v1016, 0
  %1024 = vmatprep.subr.mxu0 0.0
  %1025 = vmatpush1.msra.mxu0 0.0
  %1026 = vmatprep.subr.mxu0 0.0
  %1027 = vmatpush1.msra.mxu0 0.0
  %1028 = vmatprep.subr.mxu0 0.0
  %1029 = vmatpush1.msra.mxu0 0.0
  %1030 = vmatprep.subr.mxu0 0.0
  %1031 = vmatpush1.msra.mxu0 0.0
  %1032 = vmatprep.subr.mxu0 0.0
  %1033 = vmatpush1.msra.mxu0 0.0
  %1034 = vmatprep.subr.mxu0 0.0
  %1035 = vmatpush1.msra.mxu0 0.0
  %1036 = vmatprep.subr.mxu0 0.0
  %1037 = vmatpush1.msra.mxu0 0.0
  %1038 = vmatprep.subr.mxu0 0.0
  %1039 = vmatpush1.msra.mxu0 0.0
  %1040 = vmatprep.subr.mxu0 0.0
  %1041 = vmatpush1.msra.mxu0 0.0
  %1042 = vmatprep.subr.mxu0 0.0
  %1043 = vmatpush1.msra.mxu0 0.0
  %1044 = vmatprep.subr.mxu0 0.0
  %1045 = vmatpush1.msra.mxu0 0.0
  %1046 = vmatprep.subr.mxu0 0.0
  %1047 = vmatpush1.msra.mxu0 0.0
  %1048 = vmatprep.subr.mxu0 0.0
  %1049 = vmatpush1.msra.mxu0 0.0
  %1050 = vmatprep.subr.mxu0 0.0
  %1051 = vmatpush1.msra.mxu0 0.0
  %1052 = vmatprep.subr.mxu0 0.0
  %1053 = vmatpush1.msra.mxu0 0.0
  %1054 = vmatprep.subr.mxu0 0.0
  %1055 = vmatpush1.msra.mxu0 %v1019
  %1056 = vmatprep.subr.mxu0 0.0
  %1057 = vmatpush2.msra.mxu0 0.0
  %1058 = vmatprep.subr.mxu0 0.0
  %1059 = vmatpush2.msra.mxu0 0.0
  %1060 = vmatprep.subr.mxu0 0.0
  %1061 = vmatpush2.msra.mxu0 0.0
  %1062 = vmatprep.subr.mxu0 0.0
  %1063 = vmatpush2.msra.mxu0 0.0
  %1064 = vmatprep.subr.mxu0 0.0
  %1065 = vmatpush2.msra.mxu0 0.0
  %1066 = vmatprep.subr.mxu0 0.0
  %1067 = vmatpush2.msra.mxu0 0.0
  %1068 = vmatprep.subr.mxu0 0.0
  %1069 = vmatpush2.msra.mxu0 0.0
  %1070 = vmatprep.subr.mxu0 0.0
  %1071 = vmatpush2.msra.mxu0 0.0
  %1072 = vmatprep.subr.mxu0 0.0
  %1073 = vmatpush2.msra.mxu0 0.0
  %1074 = vmatprep.subr.mxu0 0.0
  %1075 = vmatpush2.msra.mxu0 0.0
  %1076 = vmatprep.subr.mxu0 0.0
  %1077 = vmatpush2.msra.mxu0 0.0
  %1078 = vmatprep.subr.mxu0 0.0
  %1079 = vmatpush2.msra.mxu0 0.0
  %1080 = vmatprep.subr.mxu0 0.0
  %1081 = vmatpush2.msra.mxu0 0.0
  %1082 = vmatprep.subr.mxu0 0.0
  %1083 = vmatpush2.msra.mxu0 0.0
  %1084 = vmatprep.subr.mxu0 0.0
  %1085 = vmatpush2.msra.mxu0 0.0
  %1086 = vmatprep.subr.mxu0 0.0
  %1087 = vmatpush2.msra.mxu0 0.0
  %1088 = vmatprep.mubr.f32.mxu0 0.0
  %1089 = vmatmul.mubr.f32.gmra.mxu0 %v1022
  %v1090 = vpop.f32.mrf.mxu0
  %v1091 = vadd.f32 0.0, %v1090
  %v1092 = vpop.f32.mrf.mxu0
  %1093 = vdwg.mxu0
  %1094 = vrot.lane.b32.xlu0 %v501, 56
  %v1095 = vpop.permute.xlu0 %1094
  %v1098 = vsel %vm209, %v1017, 0
  %1100 = vmatprep.subr.mxu0 0.0
  %1101 = vmatpush1.msra.mxu0 0.0
  %1102 = vmatprep.subr.mxu0 0.0
  %1103 = vmatpush1.msra.mxu0 0.0
  %1104 = vmatprep.subr.mxu0 0.0
  %1105 = vmatpush1.msra.mxu0 0.0
  %1106 = vmatprep.subr.mxu0 0.0
  %1107 = vmatpush1.msra.mxu0 0.0
  %1108 = vmatprep.subr.mxu0 0.0
  %1109 = vmatpush1.msra.mxu0 0.0
  %1110 = vmatprep.subr.mxu0 0.0
  %1111 = vmatpush1.msra.mxu0 0.0
  %1112 = vmatprep.subr.mxu0 0.0
  %1113 = vmatpush1.msra.mxu0 0.0
  %1114 = vmatprep.subr.mxu0 0.0
  %1115 = vmatpush1.msra.mxu0 0.0
  %1116 = vmatprep.subr.mxu0 0.0
  %1117 = vmatpush1.msra.mxu0 0.0
  %1118 = vmatprep.subr.mxu0 0.0
  %1119 = vmatpush1.msra.mxu0 0.0
  %1120 = vmatprep.subr.mxu0 0.0
  %1121 = vmatpush1.msra.mxu0 0.0
  %1122 = vmatprep.subr.mxu0 0.0
  %1123 = vmatpush1.msra.mxu0 0.0
  %1124 = vmatprep.subr.mxu0 0.0
  %1125 = vmatpush1.msra.mxu0 0.0
  %1126 = vmatprep.subr.mxu0 0.0
  %1127 = vmatpush1.msra.mxu0 0.0
  %1128 = vmatprep.subr.mxu0 0.0
  %1129 = vmatpush1.msra.mxu0 0.0
  %1130 = vmatprep.subr.mxu0 0.0
  %1131 = vmatpush1.msra.mxu0 %v1095
  %1132 = vmatprep.subr.mxu0 0.0
  %1133 = vmatpush2.msra.mxu0 0.0
  %1134 = vmatprep.subr.mxu0 0.0
  %1135 = vmatpush2.msra.mxu0 0.0
  %1136 = vmatprep.subr.mxu0 0.0
  %1137 = vmatpush2.msra.mxu0 0.0
  %1138 = vmatprep.subr.mxu0 0.0
  %1139 = vmatpush2.msra.mxu0 0.0
  %1140 = vmatprep.subr.mxu0 0.0
  %1141 = vmatpush2.msra.mxu0 0.0
  %1142 = vmatprep.subr.mxu0 0.0
  %1143 = vmatpush2.msra.mxu0 0.0
  %1144 = vmatprep.subr.mxu0 0.0
  %1145 = vmatpush2.msra.mxu0 0.0
  %1146 = vmatprep.subr.mxu0 0.0
  %1147 = vmatpush2.msra.mxu0 0.0
  %1148 = vmatprep.subr.mxu0 0.0
  %1149 = vmatpush2.msra.mxu0 0.0
  %1150 = vmatprep.subr.mxu0 0.0
  %1151 = vmatpush2.msra.mxu0 0.0
  %1152 = vmatprep.subr.mxu0 0.0
  %1153 = vmatpush2.msra.mxu0 0.0
  %1154 = vmatprep.subr.mxu0 0.0
  %1155 = vmatpush2.msra.mxu0 0.0
  %1156 = vmatprep.subr.mxu0 0.0
  %1157 = vmatpush2.msra.mxu0 0.0
  %1158 = vmatprep.subr.mxu0 0.0
  %1159 = vmatpush2.msra.mxu0 0.0
  %1160 = vmatprep.subr.mxu0 0.0
  %1161 = vmatpush2.msra.mxu0 0.0
  %1162 = vmatprep.subr.mxu0 0.0
  %1163 = vmatpush2.msra.mxu0 0.0
  %1164 = vmatprep.mubr.f32.mxu0 0.0
  %1165 = vmatmul.mubr.f32.gmra.mxu0 %v1098
  %v1166 = vpop.f32.mrf.mxu0
  %v1167 = vadd.f32 0.0, %v1166
  %v1168 = vpop.f32.mrf.mxu0
  %1169 = vdwg.mxu0
  %v1171 = vsel %vm209, %v1091, 0
  %v1174 = vsel %vm209, %v1167, 0
  %1176 = vmatprep.subr.mxu0 0.0
  %1177 = vmatpush1.msra.mxu0 0.0
  %1178 = vmatprep.subr.mxu0 0.0
  %1179 = vmatpush1.msra.mxu0 0.0
  %1180 = vmatprep.subr.mxu0 0.0
  %1181 = vmatpush1.msra.mxu0 0.0
  %1182 = vmatprep.subr.mxu0 0.0
  %1183 = vmatpush1.msra.mxu0 0.0
  %1184 = vmatprep.subr.mxu0 0.0
  %1185 = vmatpush1.msra.mxu0 0.0
  %1186 = vmatprep.subr.mxu0 0.0
  %1187 = vmatpush1.msra.mxu0 0.0
  %1188 = vmatprep.subr.mxu0 0.0
  %1189 = vmatpush1.msra.mxu0 0.0
  %1190 = vmatprep.subr.mxu0 0.0
  %1191 = vmatpush1.msra.mxu0 0.0
  %1192 = vmatprep.subr.mxu0 0.0
  %1193 = vmatpush1.msra.mxu0 0.0
  %1194 = vmatprep.subr.mxu0 0.0
  %1195 = vmatpush1.msra.mxu0 0.0
  %1196 = vmatprep.subr.mxu0 0.0
  %1197 = vmatpush1.msra.mxu0 0.0
  %1198 = vmatprep.subr.mxu0 0.0
  %1199 = vmatpush1.msra.mxu0 0.0
  %1200 = vmatprep.subr.mxu0 0.0
  %1201 = vmatpush1.msra.mxu0 0.0
  %1202 = vmatprep.subr.mxu0 0.0
  %1203 = vmatpush1.msra.mxu0 0.0
  %1204 = vmatprep.subr.mxu0 0.0
  %1205 = vmatpush1.msra.mxu0 0.0
  %1206 = vmatprep.subr.mxu0 0.0
  %1207 = vmatpush1.msra.mxu0 %v505
  %1208 = vmatprep.subr.mxu0 0.0
  %1209 = vmatpush2.msra.mxu0 0.0
  %1210 = vmatprep.subr.mxu0 0.0
  %1211 = vmatpush2.msra.mxu0 0.0
  %1212 = vmatprep.subr.mxu0 0.0
  %1213 = vmatpush2.msra.mxu0 0.0
  %1214 = vmatprep.subr.mxu0 0.0
  %1215 = vmatpush2.msra.mxu0 0.0
  %1216 = vmatprep.subr.mxu0 0.0
  %1217 = vmatpush2.msra.mxu0 0.0
  %1218 = vmatprep.subr.mxu0 0.0
  %1219 = vmatpush2.msra.mxu0 0.0
  %1220 = vmatprep.subr.mxu0 0.0
  %1221 = vmatpush2.msra.mxu0 0.0
  %1222 = vmatprep.subr.mxu0 0.0
  %1223 = vmatpush2.msra.mxu0 0.0
  %1224 = vmatprep.subr.mxu0 0.0
  %1225 = vmatpush2.msra.mxu0 0.0
  %1226 = vmatprep.subr.mxu0 0.0
  %1227 = vmatpush2.msra.mxu0 0.0
  %1228 = vmatprep.subr.mxu0 0.0
  %1229 = vmatpush2.msra.mxu0 0.0
  %1230 = vmatprep.subr.mxu0 0.0
  %1231 = vmatpush2.msra.mxu0 0.0
  %1232 = vmatprep.subr.mxu0 0.0
  %1233 = vmatpush2.msra.mxu0 0.0
  %1234 = vmatprep.subr.mxu0 0.0
  %1235 = vmatpush2.msra.mxu0 0.0
  %1236 = vmatprep.subr.mxu0 0.0
  %1237 = vmatpush2.msra.mxu0 0.0
  %1238 = vmatprep.subr.mxu0 0.0
  %1239 = vmatpush2.msra.mxu0 0.0
  %1240 = vmatprep.mubr.f32.mxu0 0.0
  %1241 = vmatmul.mubr.f32.gmra.mxu0 %v1171
  %v1242 = vpop.f32.mrf.mxu0
  %v1243 = vadd.f32 0.0, %v1242
  %v1244 = vpop.f32.mrf.mxu0
  %1245 = vmatprep.mubr.f32.mxu0 0.0
  %1246 = vmatmul.mubr.f32.gmra.mxu0 %v1174
  %v1247 = vpop.f32.mrf.mxu0
  %v1248 = vadd.f32 0.0, %v1247
  %v1249 = vpop.f32.mrf.mxu0
  %1250 = vdwg.mxu0
  %v1252 = vsel %vm209, %v759, 0
  %v1255 = vsel %vm209, %v835, 0
  %1257 = vmatprep.subr.mxu0 0.0
  %1258 = vmatpush1.msra.mxu0 0.0
  %1259 = vmatprep.subr.mxu0 0.0
  %1260 = vmatpush1.msra.mxu0 0.0
  %1261 = vmatprep.subr.mxu0 0.0
  %1262 = vmatpush1.msra.mxu0 0.0
  %1263 = vmatprep.subr.mxu0 0.0
  %1264 = vmatpush1.msra.mxu0 0.0
  %1265 = vmatprep.subr.mxu0 0.0
  %1266 = vmatpush1.msra.mxu0 0.0
  %1267 = vmatprep.subr.mxu0 0.0
  %1268 = vmatpush1.msra.mxu0 0.0
  %1269 = vmatprep.subr.mxu0 0.0
  %1270 = vmatpush1.msra.mxu0 0.0
  %1271 = vmatprep.subr.mxu0 0.0
  %1272 = vmatpush1.msra.mxu0 0.0
  %1273 = vmatprep.subr.mxu0 0.0
  %1274 = vmatpush1.msra.mxu0 0.0
  %1275 = vmatprep.subr.mxu0 0.0
  %1276 = vmatpush1.msra.mxu0 0.0
  %1277 = vmatprep.subr.mxu0 0.0
  %1278 = vmatpush1.msra.mxu0 0.0
  %1279 = vmatprep.subr.mxu0 0.0
  %1280 = vmatpush1.msra.mxu0 0.0
  %1281 = vmatprep.subr.mxu0 0.0
  %1282 = vmatpush1.msra.mxu0 0.0
  %1283 = vmatprep.subr.mxu0 0.0
  %1284 = vmatpush1.msra.mxu0 0.0
  %1285 = vmatprep.subr.mxu0 0.0
  %1286 = vmatpush1.msra.mxu0 0.0
  %1287 = vmatprep.subr.mxu0 0.0
  %1288 = vmatpush1.msra.mxu0 %v504
  %1289 = vmatprep.subr.mxu0 0.0
  %1290 = vmatpush2.msra.mxu0 0.0
  %1291 = vmatprep.subr.mxu0 0.0
  %1292 = vmatpush2.msra.mxu0 0.0
  %1293 = vmatprep.subr.mxu0 0.0
  %1294 = vmatpush2.msra.mxu0 0.0
  %1295 = vmatprep.subr.mxu0 0.0
  %1296 = vmatpush2.msra.mxu0 0.0
  %1297 = vmatprep.subr.mxu0 0.0
  %1298 = vmatpush2.msra.mxu0 0.0
  %1299 = vmatprep.subr.mxu0 0.0
  %1300 = vmatpush2.msra.mxu0 0.0
  %1301 = vmatprep.subr.mxu0 0.0
  %1302 = vmatpush2.msra.mxu0 0.0
  %1303 = vmatprep.subr.mxu0 0.0
  %1304 = vmatpush2.msra.mxu0 0.0
  %1305 = vmatprep.subr.mxu0 0.0
  %1306 = vmatpush2.msra.mxu0 0.0
  %1307 = vmatprep.subr.mxu0 0.0
  %1308 = vmatpush2.msra.mxu0 0.0
  %1309 = vmatprep.subr.mxu0 0.0
  %1310 = vmatpush2.msra.mxu0 0.0
  %1311 = vmatprep.subr.mxu0 0.0
  %1312 = vmatpush2.msra.mxu0 0.0
  %1313 = vmatprep.subr.mxu0 0.0
  %1314 = vmatpush2.msra.mxu0 0.0
  %1315 = vmatprep.subr.mxu0 0.0
  %1316 = vmatpush2.msra.mxu0 0.0
  %1317 = vmatprep.subr.mxu0 0.0
  %1318 = vmatpush2.msra.mxu0 0.0
  %1319 = vmatprep.subr.mxu0 0.0
  %1320 = vmatpush2.msra.mxu0 0.0
  %1321 = vmatprep.mubr.f32.mxu0 0.0
  %1322 = vmatmul.mubr.f32.gmra.mxu0 %v1252
  %v1323 = vpop.f32.mrf.mxu0
  %v1324 = vadd.f32 %v1243, %v1323
  %v1325 = vpop.f32.mrf.mxu0
  %1326 = vmatprep.mubr.f32.mxu0 0.0
  %1327 = vmatmul.mubr.f32.gmra.mxu0 %v1255
  %v1328 = vpop.f32.mrf.mxu0
  %v1329 = vadd.f32 %v1248, %v1328
  %v1330 = vpop.f32.mrf.mxu0
  %1331 = vdwg.mxu0
  %1332 = vrot.lane.b32.xlu0 %v496, 112
  %v1333 = vpop.permute.xlu0 %1332
  %1334 = vrot.lane.b32.xlu0 %v496, 80
  %v1335 = vpop.permute.xlu0 %1334
  %v1336 = vsel %vm209, %v1333, 0
  %v1338 = vsel %vm209, %v1335, 0
  %1340 = vmatprep.subr.mxu0 0.0
  %1341 = vmatpush1.xpose.msra.mxu0 0.0
  %1342 = vmatprep.subr.mxu0 0.0
  %1343 = vmatpush1.xpose.msra.mxu0 0.0
  %1344 = vmatprep.subr.mxu0 0.0
  %1345 = vmatpush1.xpose.msra.mxu0 0.0
  %1346 = vmatprep.subr.mxu0 0.0
  %1347 = vmatpush1.xpose.msra.mxu0 0.0
  %1348 = vmatprep.subr.mxu0 0.0
  %1349 = vmatpush1.xpose.msra.mxu0 0.0
  %1350 = vmatprep.subr.mxu0 0.0
  %1351 = vmatpush1.xpose.msra.mxu0 0.0
  %1352 = vmatprep.subr.mxu0 0.0
  %1353 = vmatpush1.xpose.msra.mxu0 0.0
  %1354 = vmatprep.subr.mxu0 0.0
  %1355 = vmatpush1.xpose.msra.mxu0 0.0
  %1356 = vmatprep.subr.mxu0 0.0
  %1357 = vmatpush1.xpose.msra.mxu0 0.0
  %1358 = vmatprep.subr.mxu0 0.0
  %1359 = vmatpush1.xpose.msra.mxu0 0.0
  %1360 = vmatprep.subr.mxu0 0.0
  %1361 = vmatpush1.xpose.msra.mxu0 0.0
  %1362 = vmatprep.subr.mxu0 0.0
  %1363 = vmatpush1.xpose.msra.mxu0 0.0
  %1364 = vmatprep.subr.mxu0 0.0
  %1365 = vmatpush1.xpose.msra.mxu0 0.0
  %1366 = vmatprep.subr.mxu0 0.0
  %1367 = vmatpush1.xpose.msra.mxu0 0.0
  %1368 = vmatprep.subr.mxu0 0.0
  %1369 = vmatpush1.xpose.msra.mxu0 0.0
  %1370 = vmatprep.subr.mxu0 0.0
  %1371 = vmatpush1.xpose.msra.mxu0 %v1338
  %1372 = vmatprep.subr.mxu0 0.0
  %1373 = vmatpush2.xpose.msra.mxu0 0.0
  %1374 = vmatprep.subr.mxu0 0.0
  %1375 = vmatpush2.xpose.msra.mxu0 0.0
  %1376 = vmatprep.subr.mxu0 0.0
  %1377 = vmatpush2.xpose.msra.mxu0 0.0
  %1378 = vmatprep.subr.mxu0 0.0
  %1379 = vmatpush2.xpose.msra.mxu0 0.0
  %1380 = vmatprep.subr.mxu0 0.0
  %1381 = vmatpush2.xpose.msra.mxu0 0.0
  %1382 = vmatprep.subr.mxu0 0.0
  %1383 = vmatpush2.xpose.msra.mxu0 0.0
  %1384 = vmatprep.subr.mxu0 0.0
  %1385 = vmatpush2.xpose.msra.mxu0 0.0
  %1386 = vmatprep.subr.mxu0 0.0
  %1387 = vmatpush2.xpose.msra.mxu0 0.0
  %1388 = vmatprep.subr.mxu0 0.0
  %1389 = vmatpush2.xpose.msra.mxu0 0.0
  %1390 = vmatprep.subr.mxu0 0.0
  %1391 = vmatpush2.xpose.msra.mxu0 0.0
  %1392 = vmatprep.subr.mxu0 0.0
  %1393 = vmatpush2.xpose.msra.mxu0 0.0
  %1394 = vmatprep.subr.mxu0 0.0
  %1395 = vmatpush2.xpose.msra.mxu0 0.0
  %1396 = vmatprep.subr.mxu0 0.0
  %1397 = vmatpush2.xpose.msra.mxu0 0.0
  %1398 = vmatprep.subr.mxu0 0.0
  %1399 = vmatpush2.xpose.msra.mxu0 0.0
  %1400 = vmatprep.subr.mxu0 0.0
  %1401 = vmatpush2.xpose.msra.mxu0 0.0
  %1402 = vmatprep.subr.mxu0 0.0
  %1403 = vmatpush2.xpose.msra.mxu0 0.0
  %1404 = vmatprep.mubr.f32.mxu0 0.0
  %1405 = vmatmul.mubr.f32.gmra.mxu0 %v1336
  %v1406 = vpop.f32.mrf.mxu0
  %v1407 = vadd.f32 0.0, %v1406
  %v1408 = vpop.f32.mrf.mxu0
  %1409 = vdwg.mxu0
  %1410 = vrot.lane.b32.xlu0 %v501, 112
  %v1411 = vpop.permute.xlu0 %1410
  %1412 = vrot.lane.b32.xlu0 %v501, 80
  %v1413 = vpop.permute.xlu0 %1412
  %v1414 = vsel %vm209, %v1411, 0
  %v1416 = vsel %vm209, %v1413, 0
  %1418 = vmatprep.subr.mxu0 0.0
  %1419 = vmatpush1.xpose.msra.mxu0 0.0
  %1420 = vmatprep.subr.mxu0 0.0
  %1421 = vmatpush1.xpose.msra.mxu0 0.0
  %1422 = vmatprep.subr.mxu0 0.0
  %1423 = vmatpush1.xpose.msra.mxu0 0.0
  %1424 = vmatprep.subr.mxu0 0.0
  %1425 = vmatpush1.xpose.msra.mxu0 0.0
  %1426 = vmatprep.subr.mxu0 0.0
  %1427 = vmatpush1.xpose.msra.mxu0 0.0
  %1428 = vmatprep.subr.mxu0 0.0
  %1429 = vmatpush1.xpose.msra.mxu0 0.0
  %1430 = vmatprep.subr.mxu0 0.0
  %1431 = vmatpush1.xpose.msra.mxu0 0.0
  %1432 = vmatprep.subr.mxu0 0.0
  %1433 = vmatpush1.xpose.msra.mxu0 0.0
  %1434 = vmatprep.subr.mxu0 0.0
  %1435 = vmatpush1.xpose.msra.mxu0 0.0
  %1436 = vmatprep.subr.mxu0 0.0
  %1437 = vmatpush1.xpose.msra.mxu0 0.0
  %1438 = vmatprep.subr.mxu0 0.0
  %1439 = vmatpush1.xpose.msra.mxu0 0.0
  %1440 = vmatprep.subr.mxu0 0.0
  %1441 = vmatpush1.xpose.msra.mxu0 0.0
  %1442 = vmatprep.subr.mxu0 0.0
  %1443 = vmatpush1.xpose.msra.mxu0 0.0
  %1444 = vmatprep.subr.mxu0 0.0
  %1445 = vmatpush1.xpose.msra.mxu0 0.0
  %1446 = vmatprep.subr.mxu0 0.0
  %1447 = vmatpush1.xpose.msra.mxu0 0.0
  %1448 = vmatprep.subr.mxu0 0.0
  %1449 = vmatpush1.xpose.msra.mxu0 %v1416
  %1450 = vmatprep.subr.mxu0 0.0
  %1451 = vmatpush2.xpose.msra.mxu0 0.0
  %1452 = vmatprep.subr.mxu0 0.0
  %1453 = vmatpush2.xpose.msra.mxu0 0.0
  %1454 = vmatprep.subr.mxu0 0.0
  %1455 = vmatpush2.xpose.msra.mxu0 0.0
  %1456 = vmatprep.subr.mxu0 0.0
  %1457 = vmatpush2.xpose.msra.mxu0 0.0
  %1458 = vmatprep.subr.mxu0 0.0
  %1459 = vmatpush2.xpose.msra.mxu0 0.0
  %1460 = vmatprep.subr.mxu0 0.0
  %1461 = vmatpush2.xpose.msra.mxu0 0.0
  %1462 = vmatprep.subr.mxu0 0.0
  %1463 = vmatpush2.xpose.msra.mxu0 0.0
  %1464 = vmatprep.subr.mxu0 0.0
  %1465 = vmatpush2.xpose.msra.mxu0 0.0
  %1466 = vmatprep.subr.mxu0 0.0
  %1467 = vmatpush2.xpose.msra.mxu0 0.0
  %1468 = vmatprep.subr.mxu0 0.0
  %1469 = vmatpush2.xpose.msra.mxu0 0.0
  %1470 = vmatprep.subr.mxu0 0.0
  %1471 = vmatpush2.xpose.msra.mxu0 0.0
  %1472 = vmatprep.subr.mxu0 0.0
  %1473 = vmatpush2.xpose.msra.mxu0 0.0
  %1474 = vmatprep.subr.mxu0 0.0
  %1475 = vmatpush2.xpose.msra.mxu0 0.0
  %1476 = vmatprep.subr.mxu0 0.0
  %1477 = vmatpush2.xpose.msra.mxu0 0.0
  %1478 = vmatprep.subr.mxu0 0.0
  %1479 = vmatpush2.xpose.msra.mxu0 0.0
  %1480 = vmatprep.subr.mxu0 0.0
  %1481 = vmatpush2.xpose.msra.mxu0 0.0
  %1482 = vmatprep.mubr.f32.mxu0 0.0
  %1483 = vmatmul.mubr.f32.gmra.mxu0 %v1414
  %v1484 = vpop.f32.mrf.mxu0
  %v1485 = vadd.f32 0.0, %v1484
  %v1486 = vpop.f32.mrf.mxu0
  %1487 = vdwg.mxu0
  %v1488 = vmul.f32 %v1407, 0.35355338
  %v1489 = vmul.f32 %v1485, 0.35355338
  %v1490 = vsel %vm209, %v1488, -inf
  %1491 = vmax.xlane.f32.xlu0 %v1490
  %v1492 = vpop.xlane.xlu0 %1491
  %v1493 = vsel %vm209, %v1489, -inf
  %1494 = vmax.xlane.f32.xlu0 %v1493
  %v1495 = vpop.xlane.xlu0 %1494
  %v1496 = vsub.f32 %v1488, %v1492
  %v1497 = vsub.f32 %v1489, %v1495
  %v1498 = vmul.f32 %v1496, 1.442695
  %v1499 = vpow.pop %v1498
  %v1500 = vmul.f32 %v1497, 1.442695
  %v1501 = vpow.pop %v1500
  %v1502 = vsel %vm209, %v1499, 0.0
  %1503 = vadd.xlane.f32.xlu0 %v1502
  %v1504 = vpop.xlane.xlu0 %1503
  %v1505 = vsel %vm209, %v1501, 0.0
  %1506 = vadd.xlane.f32.xlu0 %v1505
  %v1507 = vpop.xlane.xlu0 %1506
  %v1508 = vrcp.pop %v1504
  %v1509 = vrcp.pop %v1507
  %v1510 = vmul.f32 %v1499, %v1508
  %v1511 = vmul.f32 %v1501, %v1509
  %1512 = vrot.lane.b32.xlu0 %v496, 48
  %v1513 = vpop.permute.xlu0 %1512
  %v1516 = vsel %vm209, %v1510, 0
  %1518 = vmatprep.subr.mxu0 0.0
  %1519 = vmatpush1.msra.mxu0 0.0
  %1520 = vmatprep.subr.mxu0 0.0
  %1521 = vmatpush1.msra.mxu0 0.0
  %1522 = vmatprep.subr.mxu0 0.0
  %1523 = vmatpush1.msra.mxu0 0.0
  %1524 = vmatprep.subr.mxu0 0.0
  %1525 = vmatpush1.msra.mxu0 0.0
  %1526 = vmatprep.subr.mxu0 0.0
  %1527 = vmatpush1.msra.mxu0 0.0
  %1528 = vmatprep.subr.mxu0 0.0
  %1529 = vmatpush1.msra.mxu0 0.0
  %1530 = vmatprep.subr.mxu0 0.0
  %1531 = vmatpush1.msra.mxu0 0.0
  %1532 = vmatprep.subr.mxu0 0.0
  %1533 = vmatpush1.msra.mxu0 0.0
  %1534 = vmatprep.subr.mxu0 0.0
  %1535 = vmatpush1.msra.mxu0 0.0
  %1536 = vmatprep.subr.mxu0 0.0
  %1537 = vmatpush1.msra.mxu0 0.0
  %1538 = vmatprep.subr.mxu0 0.0
  %1539 = vmatpush1.msra.mxu0 0.0
  %1540 = vmatprep.subr.mxu0 0.0
  %1541 = vmatpush1.msra.mxu0 0.0
  %1542 = vmatprep.subr.mxu0 0.0
  %1543 = vmatpush1.msra.mxu0 0.0
  %1544 = vmatprep.subr.mxu0 0.0
  %1545 = vmatpush1.msra.mxu0 0.0
  %1546 = vmatprep.subr.mxu0 0.0
  %1547 = vmatpush1.msra.mxu0 0.0
  %1548 = vmatprep.subr.mxu0 0.0
  %1549 = vmatpush1.msra.mxu0 %v1513
  %1550 = vmatprep.subr.mxu0 0.0
  %1551 = vmatpush2.msra.mxu0 0.0
  %1552 = vmatprep.subr.mxu0 0.0
  %1553 = vmatpush2.msra.mxu0 0.0
  %1554 = vmatprep.subr.mxu0 0.0
  %1555 = vmatpush2.msra.mxu0 0.0
  %1556 = vmatprep.subr.mxu0 0.0
  %1557 = vmatpush2.msra.mxu0 0.0
  %1558 = vmatprep.subr.mxu0 0.0
  %1559 = vmatpush2.msra.mxu0 0.0
  %1560 = vmatprep.subr.mxu0 0.0
  %1561 = vmatpush2.msra.mxu0 0.0
  %1562 = vmatprep.subr.mxu0 0.0
  %1563 = vmatpush2.msra.mxu0 0.0
  %1564 = vmatprep.subr.mxu0 0.0
  %1565 = vmatpush2.msra.mxu0 0.0
  %1566 = vmatprep.subr.mxu0 0.0
  %1567 = vmatpush2.msra.mxu0 0.0
  %1568 = vmatprep.subr.mxu0 0.0
  %1569 = vmatpush2.msra.mxu0 0.0
  %1570 = vmatprep.subr.mxu0 0.0
  %1571 = vmatpush2.msra.mxu0 0.0
  %1572 = vmatprep.subr.mxu0 0.0
  %1573 = vmatpush2.msra.mxu0 0.0
  %1574 = vmatprep.subr.mxu0 0.0
  %1575 = vmatpush2.msra.mxu0 0.0
  %1576 = vmatprep.subr.mxu0 0.0
  %1577 = vmatpush2.msra.mxu0 0.0
  %1578 = vmatprep.subr.mxu0 0.0
  %1579 = vmatpush2.msra.mxu0 0.0
  %1580 = vmatprep.subr.mxu0 0.0
  %1581 = vmatpush2.msra.mxu0 0.0
  %1582 = vmatprep.mubr.f32.mxu0 0.0
  %1583 = vmatmul.mubr.f32.gmra.mxu0 %v1516
  %v1584 = vpop.f32.mrf.mxu0
  %v1585 = vadd.f32 0.0, %v1584
  %v1586 = vpop.f32.mrf.mxu0
  %1587 = vdwg.mxu0
  %1588 = vrot.lane.b32.xlu0 %v501, 48
  %v1589 = vpop.permute.xlu0 %1588
  %v1592 = vsel %vm209, %v1511, 0
  %1594 = vmatprep.subr.mxu0 0.0
  %1595 = vmatpush1.msra.mxu0 0.0
  %1596 = vmatprep.subr.mxu0 0.0
  %1597 = vmatpush1.msra.mxu0 0.0
  %1598 = vmatprep.subr.mxu0 0.0
  %1599 = vmatpush1.msra.mxu0 0.0
  %1600 = vmatprep.subr.mxu0 0.0
  %1601 = vmatpush1.msra.mxu0 0.0
  %1602 = vmatprep.subr.mxu0 0.0
  %1603 = vmatpush1.msra.mxu0 0.0
  %1604 = vmatprep.subr.mxu0 0.0
  %1605 = vmatpush1.msra.mxu0 0.0
  %1606 = vmatprep.subr.mxu0 0.0
  %1607 = vmatpush1.msra.mxu0 0.0
  %1608 = vmatprep.subr.mxu0 0.0
  %1609 = vmatpush1.msra.mxu0 0.0
  %1610 = vmatprep.subr.mxu0 0.0
  %1611 = vmatpush1.msra.mxu0 0.0
  %1612 = vmatprep.subr.mxu0 0.0
  %1613 = vmatpush1.msra.mxu0 0.0
  %1614 = vmatprep.subr.mxu0 0.0
  %1615 = vmatpush1.msra.mxu0 0.0
  %1616 = vmatprep.subr.mxu0 0.0
  %1617 = vmatpush1.msra.mxu0 0.0
  %1618 = vmatprep.subr.mxu0 0.0
  %1619 = vmatpush1.msra.mxu0 0.0
  %1620 = vmatprep.subr.mxu0 0.0
  %1621 = vmatpush1.msra.mxu0 0.0
  %1622 = vmatprep.subr.mxu0 0.0
  %1623 = vmatpush1.msra.mxu0 0.0
  %1624 = vmatprep.subr.mxu0 0.0
  %1625 = vmatpush1.msra.mxu0 %v1589
  %1626 = vmatprep.subr.mxu0 0.0
  %1627 = vmatpush2.msra.mxu0 0.0
  %1628 = vmatprep.subr.mxu0 0.0
  %1629 = vmatpush2.msra.mxu0 0.0
  %1630 = vmatprep.subr.mxu0 0.0
  %1631 = vmatpush2.msra.mxu0 0.0
  %1632 = vmatprep.subr.mxu0 0.0
  %1633 = vmatpush2.msra.mxu0 0.0
  %1634 = vmatprep.subr.mxu0 0.0
  %1635 = vmatpush2.msra.mxu0 0.0
  %1636 = vmatprep.subr.mxu0 0.0
  %1637 = vmatpush2.msra.mxu0 0.0
  %1638 = vmatprep.subr.mxu0 0.0
  %1639 = vmatpush2.msra.mxu0 0.0
  %1640 = vmatprep.subr.mxu0 0.0
  %1641 = vmatpush2.msra.mxu0 0.0
  %1642 = vmatprep.subr.mxu0 0.0
  %1643 = vmatpush2.msra.mxu0 0.0
  %1644 = vmatprep.subr.mxu0 0.0
  %1645 = vmatpush2.msra.mxu0 0.0
  %1646 = vmatprep.subr.mxu0 0.0
  %1647 = vmatpush2.msra.mxu0 0.0
  %1648 = vmatprep.subr.mxu0 0.0
  %1649 = vmatpush2.msra.mxu0 0.0
  %1650 = vmatprep.subr.mxu0 0.0
  %1651 = vmatpush2.msra.mxu0 0.0
  %1652 = vmatprep.subr.mxu0 0.0
  %1653 = vmatpush2.msra.mxu0 0.0
  %1654 = vmatprep.subr.mxu0 0.0
  %1655 = vmatpush2.msra.mxu0 0.0
  %1656 = vmatprep.subr.mxu0 0.0
  %1657 = vmatpush2.msra.mxu0 0.0
  %1658 = vmatprep.mubr.f32.mxu0 0.0
  %1659 = vmatmul.mubr.f32.gmra.mxu0 %v1592
  %v1660 = vpop.f32.mrf.mxu0
  %v1661 = vadd.f32 0.0, %v1660
  %v1662 = vpop.f32.mrf.mxu0
  %1663 = vdwg.mxu0
  %v1665 = vsel %vm209, %v1585, 0
  %v1668 = vsel %vm209, %v1661, 0
  %1670 = vmatprep.subr.mxu0 0.0
  %1671 = vmatpush1.msra.mxu0 0.0
  %1672 = vmatprep.subr.mxu0 0.0
  %1673 = vmatpush1.msra.mxu0 0.0
  %1674 = vmatprep.subr.mxu0 0.0
  %1675 = vmatpush1.msra.mxu0 0.0
  %1676 = vmatprep.subr.mxu0 0.0
  %1677 = vmatpush1.msra.mxu0 0.0
  %1678 = vmatprep.subr.mxu0 0.0
  %1679 = vmatpush1.msra.mxu0 0.0
  %1680 = vmatprep.subr.mxu0 0.0
  %1681 = vmatpush1.msra.mxu0 0.0
  %1682 = vmatprep.subr.mxu0 0.0
  %1683 = vmatpush1.msra.mxu0 0.0
  %1684 = vmatprep.subr.mxu0 0.0
  %1685 = vmatpush1.msra.mxu0 0.0
  %1686 = vmatprep.subr.mxu0 0.0
  %1687 = vmatpush1.msra.mxu0 0.0
  %1688 = vmatprep.subr.mxu0 0.0
  %1689 = vmatpush1.msra.mxu0 0.0
  %1690 = vmatprep.subr.mxu0 0.0
  %1691 = vmatpush1.msra.mxu0 0.0
  %1692 = vmatprep.subr.mxu0 0.0
  %1693 = vmatpush1.msra.mxu0 0.0
  %1694 = vmatprep.subr.mxu0 0.0
  %1695 = vmatpush1.msra.mxu0 0.0
  %1696 = vmatprep.subr.mxu0 0.0
  %1697 = vmatpush1.msra.mxu0 0.0
  %1698 = vmatprep.subr.mxu0 0.0
  %1699 = vmatpush1.msra.mxu0 0.0
  %1700 = vmatprep.subr.mxu0 0.0
  %1701 = vmatpush1.msra.mxu0 %v506
  %1702 = vmatprep.subr.mxu0 0.0
  %1703 = vmatpush2.msra.mxu0 0.0
  %1704 = vmatprep.subr.mxu0 0.0
  %1705 = vmatpush2.msra.mxu0 0.0
  %1706 = vmatprep.subr.mxu0 0.0
  %1707 = vmatpush2.msra.mxu0 0.0
  %1708 = vmatprep.subr.mxu0 0.0
  %1709 = vmatpush2.msra.mxu0 0.0
  %1710 = vmatprep.subr.mxu0 0.0
  %1711 = vmatpush2.msra.mxu0 0.0
  %1712 = vmatprep.subr.mxu0 0.0
  %1713 = vmatpush2.msra.mxu0 0.0
  %1714 = vmatprep.subr.mxu0 0.0
  %1715 = vmatpush2.msra.mxu0 0.0
  %1716 = vmatprep.subr.mxu0 0.0
  %1717 = vmatpush2.msra.mxu0 0.0
  %1718 = vmatprep.subr.mxu0 0.0
  %1719 = vmatpush2.msra.mxu0 0.0
  %1720 = vmatprep.subr.mxu0 0.0
  %1721 = vmatpush2.msra.mxu0 0.0
  %1722 = vmatprep.subr.mxu0 0.0
  %1723 = vmatpush2.msra.mxu0 0.0
  %1724 = vmatprep.subr.mxu0 0.0
  %1725 = vmatpush2.msra.mxu0 0.0
  %1726 = vmatprep.subr.mxu0 0.0
  %1727 = vmatpush2.msra.mxu0 0.0
  %1728 = vmatprep.subr.mxu0 0.0
  %1729 = vmatpush2.msra.mxu0 0.0
  %1730 = vmatprep.subr.mxu0 0.0
  %1731 = vmatpush2.msra.mxu0 0.0
  %1732 = vmatprep.subr.mxu0 0.0
  %1733 = vmatpush2.msra.mxu0 0.0
  %1734 = vmatprep.mubr.f32.mxu0 0.0
  %1735 = vmatmul.mubr.f32.gmra.mxu0 %v1665
  %v1736 = vpop.f32.mrf.mxu0
  %v1737 = vadd.f32 0.0, %v1736
  %v1738 = vpop.f32.mrf.mxu0
  %1739 = vmatprep.mubr.f32.mxu0 0.0
  %1740 = vmatmul.mubr.f32.gmra.mxu0 %v1668
  %v1741 = vpop.f32.mrf.mxu0
  %v1742 = vadd.f32 0.0, %v1741
  %v1743 = vpop.f32.mrf.mxu0
  %1744 = vdwg.mxu0
  %v1745 = vadd.f32 %v1324, %v1737
  %v1746 = vadd.f32 %v1329, %v1742
  %1747 = vrot.lane.b32.xlu0 %v496, 104
  %v1748 = vpop.permute.xlu0 %1747
  %1749 = vrot.lane.b32.xlu0 %v496, 72
  %v1750 = vpop.permute.xlu0 %1749
  %v1751 = vsel %vm209, %v1748, 0
  %v1753 = vsel %vm209, %v1750, 0
  %1755 = vmatprep.subr.mxu0 0.0
  %1756 = vmatpush1.xpose.msra.mxu0 0.0
  %1757 = vmatprep.subr.mxu0 0.0
  %1758 = vmatpush1.xpose.msra.mxu0 0.0
  %1759 = vmatprep.subr.mxu0 0.0
  %1760 = vmatpush1.xpose.msra.mxu0 0.0
  %1761 = vmatprep.subr.mxu0 0.0
  %1762 = vmatpush1.xpose.msra.mxu0 0.0
  %1763 = vmatprep.subr.mxu0 0.0
  %1764 = vmatpush1.xpose.msra.mxu0 0.0
  %1765 = vmatprep.subr.mxu0 0.0
  %1766 = vmatpush1.xpose.msra.mxu0 0.0
  %1767 = vmatprep.subr.mxu0 0.0
  %1768 = vmatpush1.xpose.msra.mxu0 0.0
  %1769 = vmatprep.subr.mxu0 0.0
  %1770 = vmatpush1.xpose.msra.mxu0 0.0
  %1771 = vmatprep.subr.mxu0 0.0
  %1772 = vmatpush1.xpose.msra.mxu0 0.0
  %1773 = vmatprep.subr.mxu0 0.0
  %1774 = vmatpush1.xpose.msra.mxu0 0.0
  %1775 = vmatprep.subr.mxu0 0.0
  %1776 = vmatpush1.xpose.msra.mxu0 0.0
  %1777 = vmatprep.subr.mxu0 0.0
  %1778 = vmatpush1.xpose.msra.mxu0 0.0
  %1779 = vmatprep.subr.mxu0 0.0
  %1780 = vmatpush1.xpose.msra.mxu0 0.0
  %1781 = vmatprep.subr.mxu0 0.0
  %1782 = vmatpush1.xpose.msra.mxu0 0.0
  %1783 = vmatprep.subr.mxu0 0.0
  %1784 = vmatpush1.xpose.msra.mxu0 0.0
  %1785 = vmatprep.subr.mxu0 0.0
  %1786 = vmatpush1.xpose.msra.mxu0 %v1753
  %1787 = vmatprep.subr.mxu0 0.0
  %1788 = vmatpush2.xpose.msra.mxu0 0.0
  %1789 = vmatprep.subr.mxu0 0.0
  %1790 = vmatpush2.xpose.msra.mxu0 0.0
  %1791 = vmatprep.subr.mxu0 0.0
  %1792 = vmatpush2.xpose.msra.mxu0 0.0
  %1793 = vmatprep.subr.mxu0 0.0
  %1794 = vmatpush2.xpose.msra.mxu0 0.0
  %1795 = vmatprep.subr.mxu0 0.0
  %1796 = vmatpush2.xpose.msra.mxu0 0.0
  %1797 = vmatprep.subr.mxu0 0.0
  %1798 = vmatpush2.xpose.msra.mxu0 0.0
  %1799 = vmatprep.subr.mxu0 0.0
  %1800 = vmatpush2.xpose.msra.mxu0 0.0
  %1801 = vmatprep.subr.mxu0 0.0
  %1802 = vmatpush2.xpose.msra.mxu0 0.0
  %1803 = vmatprep.subr.mxu0 0.0
  %1804 = vmatpush2.xpose.msra.mxu0 0.0
  %1805 = vmatprep.subr.mxu0 0.0
  %1806 = vmatpush2.xpose.msra.mxu0 0.0
  %1807 = vmatprep.subr.mxu0 0.0
  %1808 = vmatpush2.xpose.msra.mxu0 0.0
  %1809 = vmatprep.subr.mxu0 0.0
  %1810 = vmatpush2.xpose.msra.mxu0 0.0
  %1811 = vmatprep.subr.mxu0 0.0
  %1812 = vmatpush2.xpose.msra.mxu0 0.0
  %1813 = vmatprep.subr.mxu0 0.0
  %1814 = vmatpush2.xpose.msra.mxu0 0.0
  %1815 = vmatprep.subr.mxu0 0.0
  %1816 = vmatpush2.xpose.msra.mxu0 0.0
  %1817 = vmatprep.subr.mxu0 0.0
  %1818 = vmatpush2.xpose.msra.mxu0 0.0
  %1819 = vmatprep.mubr.f32.mxu0 0.0
  %1820 = vmatmul.mubr.f32.gmra.mxu0 %v1751
  %v1821 = vpop.f32.mrf.mxu0
  %v1822 = vadd.f32 0.0, %v1821
  %v1823 = vpop.f32.mrf.mxu0
  %1824 = vdwg.mxu0
  %1825 = vrot.lane.b32.xlu0 %v501, 104
  %v1826 = vpop.permute.xlu0 %1825
  %1827 = vrot.lane.b32.xlu0 %v501, 72
  %v1828 = vpop.permute.xlu0 %1827
  %v1829 = vsel %vm209, %v1826, 0
  %v1831 = vsel %vm209, %v1828, 0
  %1833 = vmatprep.subr.mxu0 0.0
  %1834 = vmatpush1.xpose.msra.mxu0 0.0
  %1835 = vmatprep.subr.mxu0 0.0
  %1836 = vmatpush1.xpose.msra.mxu0 0.0
  %1837 = vmatprep.subr.mxu0 0.0
  %1838 = vmatpush1.xpose.msra.mxu0 0.0
  %1839 = vmatprep.subr.mxu0 0.0
  %1840 = vmatpush1.xpose.msra.mxu0 0.0
  %1841 = vmatprep.subr.mxu0 0.0
  %1842 = vmatpush1.xpose.msra.mxu0 0.0
  %1843 = vmatprep.subr.mxu0 0.0
  %1844 = vmatpush1.xpose.msra.mxu0 0.0
  %1845 = vmatprep.subr.mxu0 0.0
  %1846 = vmatpush1.xpose.msra.mxu0 0.0
  %1847 = vmatprep.subr.mxu0 0.0
  %1848 = vmatpush1.xpose.msra.mxu0 0.0
  %1849 = vmatprep.subr.mxu0 0.0
  %1850 = vmatpush1.xpose.msra.mxu0 0.0
  %1851 = vmatprep.subr.mxu0 0.0
  %1852 = vmatpush1.xpose.msra.mxu0 0.0
  %1853 = vmatprep.subr.mxu0 0.0
  %1854 = vmatpush1.xpose.msra.mxu0 0.0
  %1855 = vmatprep.subr.mxu0 0.0
  %1856 = vmatpush1.xpose.msra.mxu0 0.0
  %1857 = vmatprep.subr.mxu0 0.0
  %1858 = vmatpush1.xpose.msra.mxu0 0.0
  %1859 = vmatprep.subr.mxu0 0.0
  %1860 = vmatpush1.xpose.msra.mxu0 0.0
  %1861 = vmatprep.subr.mxu0 0.0
  %1862 = vmatpush1.xpose.msra.mxu0 0.0
  %1863 = vmatprep.subr.mxu0 0.0
  %1864 = vmatpush1.xpose.msra.mxu0 %v1831
  %1865 = vmatprep.subr.mxu0 0.0
  %1866 = vmatpush2.xpose.msra.mxu0 0.0
  %1867 = vmatprep.subr.mxu0 0.0
  %1868 = vmatpush2.xpose.msra.mxu0 0.0
  %1869 = vmatprep.subr.mxu0 0.0
  %1870 = vmatpush2.xpose.msra.mxu0 0.0
  %1871 = vmatprep.subr.mxu0 0.0
  %1872 = vmatpush2.xpose.msra.mxu0 0.0
  %1873 = vmatprep.subr.mxu0 0.0
  %1874 = vmatpush2.xpose.msra.mxu0 0.0
  %1875 = vmatprep.subr.mxu0 0.0
  %1876 = vmatpush2.xpose.msra.mxu0 0.0
  %1877 = vmatprep.subr.mxu0 0.0
  %1878 = vmatpush2.xpose.msra.mxu0 0.0
  %1879 = vmatprep.subr.mxu0 0.0
  %1880 = vmatpush2.xpose.msra.mxu0 0.0
  %1881 = vmatprep.subr.mxu0 0.0
  %1882 = vmatpush2.xpose.msra.mxu0 0.0
  %1883 = vmatprep.subr.mxu0 0.0
  %1884 = vmatpush2.xpose.msra.mxu0 0.0
  %1885 = vmatprep.subr.mxu0 0.0
  %1886 = vmatpush2.xpose.msra.mxu0 0.0
  %1887 = vmatprep.subr.mxu0 0.0
  %1888 = vmatpush2.xpose.msra.mxu0 0.0
  %1889 = vmatprep.subr.mxu0 0.0
  %1890 = vmatpush2.xpose.msra.mxu0 0.0
  %1891 = vmatprep.subr.mxu0 0.0
  %1892 = vmatpush2.xpose.msra.mxu0 0.0
  %1893 = vmatprep.subr.mxu0 0.0
  %1894 = vmatpush2.xpose.msra.mxu0 0.0
  %1895 = vmatprep.subr.mxu0 0.0
  %1896 = vmatpush2.xpose.msra.mxu0 0.0
  %1897 = vmatprep.mubr.f32.mxu0 0.0
  %1898 = vmatmul.mubr.f32.gmra.mxu0 %v1829
  %v1899 = vpop.f32.mrf.mxu0
  %v1900 = vadd.f32 0.0, %v1899
  %v1901 = vpop.f32.mrf.mxu0
  %1902 = vdwg.mxu0
  %v1903 = vmul.f32 %v1822, 0.35355338
  %v1904 = vmul.f32 %v1900, 0.35355338
  %v1905 = vsel %vm209, %v1903, -inf
  %1906 = vmax.xlane.f32.xlu0 %v1905
  %v1907 = vpop.xlane.xlu0 %1906
  %v1908 = vsel %vm209, %v1904, -inf
  %1909 = vmax.xlane.f32.xlu0 %v1908
  %v1910 = vpop.xlane.xlu0 %1909
  %v1911 = vsub.f32 %v1903, %v1907
  %v1912 = vsub.f32 %v1904, %v1910
  %v1913 = vmul.f32 %v1911, 1.442695
  %v1914 = vpow.pop %v1913
  %v1915 = vmul.f32 %v1912, 1.442695
  %v1916 = vpow.pop %v1915
  %v1917 = vsel %vm209, %v1914, 0.0
  %1918 = vadd.xlane.f32.xlu0 %v1917
  %v1919 = vpop.xlane.xlu0 %1918
  %v1920 = vsel %vm209, %v1916, 0.0
  %1921 = vadd.xlane.f32.xlu0 %v1920
  %v1922 = vpop.xlane.xlu0 %1921
  %v1923 = vrcp.pop %v1919
  %v1924 = vrcp.pop %v1922
  %v1925 = vmul.f32 %v1914, %v1923
  %v1926 = vmul.f32 %v1916, %v1924
  %1927 = vrot.lane.b32.xlu0 %v496, 40
  %v1928 = vpop.permute.xlu0 %1927
  %v1931 = vsel %vm209, %v1925, 0
  %1933 = vmatprep.subr.mxu0 0.0
  %1934 = vmatpush1.msra.mxu0 0.0
  %1935 = vmatprep.subr.mxu0 0.0
  %1936 = vmatpush1.msra.mxu0 0.0
  %1937 = vmatprep.subr.mxu0 0.0
  %1938 = vmatpush1.msra.mxu0 0.0
  %1939 = vmatprep.subr.mxu0 0.0
  %1940 = vmatpush1.msra.mxu0 0.0
  %1941 = vmatprep.subr.mxu0 0.0
  %1942 = vmatpush1.msra.mxu0 0.0
  %1943 = vmatprep.subr.mxu0 0.0
  %1944 = vmatpush1.msra.mxu0 0.0
  %1945 = vmatprep.subr.mxu0 0.0
  %1946 = vmatpush1.msra.mxu0 0.0
  %1947 = vmatprep.subr.mxu0 0.0
  %1948 = vmatpush1.msra.mxu0 0.0
  %1949 = vmatprep.subr.mxu0 0.0
  %1950 = vmatpush1.msra.mxu0 0.0
  %1951 = vmatprep.subr.mxu0 0.0
  %1952 = vmatpush1.msra.mxu0 0.0
  %1953 = vmatprep.subr.mxu0 0.0
  %1954 = vmatpush1.msra.mxu0 0.0
  %1955 = vmatprep.subr.mxu0 0.0
  %1956 = vmatpush1.msra.mxu0 0.0
  %1957 = vmatprep.subr.mxu0 0.0
  %1958 = vmatpush1.msra.mxu0 0.0
  %1959 = vmatprep.subr.mxu0 0.0
  %1960 = vmatpush1.msra.mxu0 0.0
  %1961 = vmatprep.subr.mxu0 0.0
  %1962 = vmatpush1.msra.mxu0 0.0
  %1963 = vmatprep.subr.mxu0 0.0
  %1964 = vmatpush1.msra.mxu0 %v1928
  %1965 = vmatprep.subr.mxu0 0.0
  %1966 = vmatpush2.msra.mxu0 0.0
  %1967 = vmatprep.subr.mxu0 0.0
  %1968 = vmatpush2.msra.mxu0 0.0
  %1969 = vmatprep.subr.mxu0 0.0
  %1970 = vmatpush2.msra.mxu0 0.0
  %1971 = vmatprep.subr.mxu0 0.0
  %1972 = vmatpush2.msra.mxu0 0.0
  %1973 = vmatprep.subr.mxu0 0.0
  %1974 = vmatpush2.msra.mxu0 0.0
  %1975 = vmatprep.subr.mxu0 0.0
  %1976 = vmatpush2.msra.mxu0 0.0
  %1977 = vmatprep.subr.mxu0 0.0
  %1978 = vmatpush2.msra.mxu0 0.0
  %1979 = vmatprep.subr.mxu0 0.0
  %1980 = vmatpush2.msra.mxu0 0.0
  %1981 = vmatprep.subr.mxu0 0.0
  %1982 = vmatpush2.msra.mxu0 0.0
  %1983 = vmatprep.subr.mxu0 0.0
  %1984 = vmatpush2.msra.mxu0 0.0
  %1985 = vmatprep.subr.mxu0 0.0
  %1986 = vmatpush2.msra.mxu0 0.0
  %1987 = vmatprep.subr.mxu0 0.0
  %1988 = vmatpush2.msra.mxu0 0.0
  %1989 = vmatprep.subr.mxu0 0.0
  %1990 = vmatpush2.msra.mxu0 0.0
  %1991 = vmatprep.subr.mxu0 0.0
  %1992 = vmatpush2.msra.mxu0 0.0
  %1993 = vmatprep.subr.mxu0 0.0
  %1994 = vmatpush2.msra.mxu0 0.0
  %1995 = vmatprep.subr.mxu0 0.0
  %1996 = vmatpush2.msra.mxu0 0.0
  %1997 = vmatprep.mubr.f32.mxu0 0.0
  %1998 = vmatmul.mubr.f32.gmra.mxu0 %v1931
  %v1999 = vpop.f32.mrf.mxu0
  %v2000 = vadd.f32 0.0, %v1999
  %v2001 = vpop.f32.mrf.mxu0
  %2002 = vdwg.mxu0
  %2003 = vrot.lane.b32.xlu0 %v501, 40
  %v2004 = vpop.permute.xlu0 %2003
  %v2007 = vsel %vm209, %v1926, 0
  %2009 = vmatprep.subr.mxu0 0.0
  %2010 = vmatpush1.msra.mxu0 0.0
  %2011 = vmatprep.subr.mxu0 0.0
  %2012 = vmatpush1.msra.mxu0 0.0
  %2013 = vmatprep.subr.mxu0 0.0
  %2014 = vmatpush1.msra.mxu0 0.0
  %2015 = vmatprep.subr.mxu0 0.0
  %2016 = vmatpush1.msra.mxu0 0.0
  %2017 = vmatprep.subr.mxu0 0.0
  %2018 = vmatpush1.msra.mxu0 0.0
  %2019 = vmatprep.subr.mxu0 0.0
  %2020 = vmatpush1.msra.mxu0 0.0
  %2021 = vmatprep.subr.mxu0 0.0
  %2022 = vmatpush1.msra.mxu0 0.0
  %2023 = vmatprep.subr.mxu0 0.0
  %2024 = vmatpush1.msra.mxu0 0.0
  %2025 = vmatprep.subr.mxu0 0.0
  %2026 = vmatpush1.msra.mxu0 0.0
  %2027 = vmatprep.subr.mxu0 0.0
  %2028 = vmatpush1.msra.mxu0 0.0
  %2029 = vmatprep.subr.mxu0 0.0
  %2030 = vmatpush1.msra.mxu0 0.0
  %2031 = vmatprep.subr.mxu0 0.0
  %2032 = vmatpush1.msra.mxu0 0.0
  %2033 = vmatprep.subr.mxu0 0.0
  %2034 = vmatpush1.msra.mxu0 0.0
  %2035 = vmatprep.subr.mxu0 0.0
  %2036 = vmatpush1.msra.mxu0 0.0
  %2037 = vmatprep.subr.mxu0 0.0
  %2038 = vmatpush1.msra.mxu0 0.0
  %2039 = vmatprep.subr.mxu0 0.0
  %2040 = vmatpush1.msra.mxu0 %v2004
  %2041 = vmatprep.subr.mxu0 0.0
  %2042 = vmatpush2.msra.mxu0 0.0
  %2043 = vmatprep.subr.mxu0 0.0
  %2044 = vmatpush2.msra.mxu0 0.0
  %2045 = vmatprep.subr.mxu0 0.0
  %2046 = vmatpush2.msra.mxu0 0.0
  %2047 = vmatprep.subr.mxu0 0.0
  %2048 = vmatpush2.msra.mxu0 0.0
  %2049 = vmatprep.subr.mxu0 0.0
  %2050 = vmatpush2.msra.mxu0 0.0
  %2051 = vmatprep.subr.mxu0 0.0
  %2052 = vmatpush2.msra.mxu0 0.0
  %2053 = vmatprep.subr.mxu0 0.0
  %2054 = vmatpush2.msra.mxu0 0.0
  %2055 = vmatprep.subr.mxu0 0.0
  %2056 = vmatpush2.msra.mxu0 0.0
  %2057 = vmatprep.subr.mxu0 0.0
  %2058 = vmatpush2.msra.mxu0 0.0
  %2059 = vmatprep.subr.mxu0 0.0
  %2060 = vmatpush2.msra.mxu0 0.0
  %2061 = vmatprep.subr.mxu0 0.0
  %2062 = vmatpush2.msra.mxu0 0.0
  %2063 = vmatprep.subr.mxu0 0.0
  %2064 = vmatpush2.msra.mxu0 0.0
  %2065 = vmatprep.subr.mxu0 0.0
  %2066 = vmatpush2.msra.mxu0 0.0
  %2067 = vmatprep.subr.mxu0 0.0
  %2068 = vmatpush2.msra.mxu0 0.0
  %2069 = vmatprep.subr.mxu0 0.0
  %2070 = vmatpush2.msra.mxu0 0.0
  %2071 = vmatprep.subr.mxu0 0.0
  %2072 = vmatpush2.msra.mxu0 0.0
  %2073 = vmatprep.mubr.f32.mxu0 0.0
  %2074 = vmatmul.mubr.f32.gmra.mxu0 %v2007
  %v2075 = vpop.f32.mrf.mxu0
  %v2076 = vadd.f32 0.0, %v2075
  %v2077 = vpop.f32.mrf.mxu0
  %2078 = vdwg.mxu0
  %v2080 = vsel %vm209, %v2000, 0
  %v2083 = vsel %vm209, %v2076, 0
  %2085 = vmatprep.subr.mxu0 0.0
  %2086 = vmatpush1.msra.mxu0 0.0
  %2087 = vmatprep.subr.mxu0 0.0
  %2088 = vmatpush1.msra.mxu0 0.0
  %2089 = vmatprep.subr.mxu0 0.0
  %2090 = vmatpush1.msra.mxu0 0.0
  %2091 = vmatprep.subr.mxu0 0.0
  %2092 = vmatpush1.msra.mxu0 0.0
  %2093 = vmatprep.subr.mxu0 0.0
  %2094 = vmatpush1.msra.mxu0 0.0
  %2095 = vmatprep.subr.mxu0 0.0
  %2096 = vmatpush1.msra.mxu0 0.0
  %2097 = vmatprep.subr.mxu0 0.0
  %2098 = vmatpush1.msra.mxu0 0.0
  %2099 = vmatprep.subr.mxu0 0.0
  %2100 = vmatpush1.msra.mxu0 0.0
  %2101 = vmatprep.subr.mxu0 0.0
  %2102 = vmatpush1.msra.mxu0 0.0
  %2103 = vmatprep.subr.mxu0 0.0
  %2104 = vmatpush1.msra.mxu0 0.0
  %2105 = vmatprep.subr.mxu0 0.0
  %2106 = vmatpush1.msra.mxu0 0.0
  %2107 = vmatprep.subr.mxu0 0.0
  %2108 = vmatpush1.msra.mxu0 0.0
  %2109 = vmatprep.subr.mxu0 0.0
  %2110 = vmatpush1.msra.mxu0 0.0
  %2111 = vmatprep.subr.mxu0 0.0
  %2112 = vmatpush1.msra.mxu0 0.0
  %2113 = vmatprep.subr.mxu0 0.0
  %2114 = vmatpush1.msra.mxu0 0.0
  %2115 = vmatprep.subr.mxu0 0.0
  %2116 = vmatpush1.msra.mxu0 %v507
  %2117 = vmatprep.subr.mxu0 0.0
  %2118 = vmatpush2.msra.mxu0 0.0
  %2119 = vmatprep.subr.mxu0 0.0
  %2120 = vmatpush2.msra.mxu0 0.0
  %2121 = vmatprep.subr.mxu0 0.0
  %2122 = vmatpush2.msra.mxu0 0.0
  %2123 = vmatprep.subr.mxu0 0.0
  %2124 = vmatpush2.msra.mxu0 0.0
  %2125 = vmatprep.subr.mxu0 0.0
  %2126 = vmatpush2.msra.mxu0 0.0
  %2127 = vmatprep.subr.mxu0 0.0
  %2128 = vmatpush2.msra.mxu0 0.0
  %2129 = vmatprep.subr.mxu0 0.0
  %2130 = vmatpush2.msra.mxu0 0.0
  %2131 = vmatprep.subr.mxu0 0.0
  %2132 = vmatpush2.msra.mxu0 0.0
  %2133 = vmatprep.subr.mxu0 0.0
  %2134 = vmatpush2.msra.mxu0 0.0
  %2135 = vmatprep.subr.mxu0 0.0
  %2136 = vmatpush2.msra.mxu0 0.0
  %2137 = vmatprep.subr.mxu0 0.0
  %2138 = vmatpush2.msra.mxu0 0.0
  %2139 = vmatprep.subr.mxu0 0.0
  %2140 = vmatpush2.msra.mxu0 0.0
  %2141 = vmatprep.subr.mxu0 0.0
  %2142 = vmatpush2.msra.mxu0 0.0
  %2143 = vmatprep.subr.mxu0 0.0
  %2144 = vmatpush2.msra.mxu0 0.0
  %2145 = vmatprep.subr.mxu0 0.0
  %2146 = vmatpush2.msra.mxu0 0.0
  %2147 = vmatprep.subr.mxu0 0.0
  %2148 = vmatpush2.msra.mxu0 0.0
  %2149 = vmatprep.mubr.f32.mxu0 0.0
  %2150 = vmatmul.mubr.f32.gmra.mxu0 %v2080
  %v2151 = vpop.f32.mrf.mxu0
  %v2152 = vadd.f32 0.0, %v2151
  %v2153 = vpop.f32.mrf.mxu0
  %2154 = vmatprep.mubr.f32.mxu0 0.0
  %2155 = vmatmul.mubr.f32.gmra.mxu0 %v2083
  %v2156 = vpop.f32.mrf.mxu0
  %v2157 = vadd.f32 0.0, %v2156
  %v2158 = vpop.f32.mrf.mxu0
  %2159 = vdwg.mxu0
  %v2160 = vadd.f32 %v1745, %v2152
  %v2161 = vadd.f32 %v1746, %v2157
  %v2162 = vadd.f32 %v365, %v2160
  %v2163 = vadd.f32 %v370, %v2161
  %v2164 = vld [vmem:[%s67] sm:$0x1]
  %v2165 = vld [vmem:[%s65] sm:$0x1]
  %v2166 = vsel %vm375, %v2162, 0.0
  %2167 = vadd.xlane.f32.xlu0 %v2166
  %v2168 = vpop.xlane.xlu0 %2167
  %v2169 = vsel %vm375, %v2163, 0.0
  %2170 = vadd.xlane.f32.xlu0 %v2169
  %v2171 = vpop.xlane.xlu0 %2170
  %v2172 = vmul.f32 %v2168, %v382
  %v2173 = vmul.f32 %v2171, %v382
  %v2174 = vsub.f32 %v2162, %v2172
  %v2175 = vsub.f32 %v2163, %v2173
  %v2176 = vmul.f32 %v2174, %v2174
  %v2177 = vmul.f32 %v2175, %v2175
  %v2178 = vsel %vm375, %v2176, 0.0
  %2179 = vadd.xlane.f32.xlu0 %v2178
  %v2180 = vpop.xlane.xlu0 %2179
  %v2181 = vsel %vm375, %v2177, 0.0
  %2182 = vadd.xlane.f32.xlu0 %v2181
  %v2183 = vpop.xlane.xlu0 %2182
  %v2184 = vmul.f32 %v2180, %v382
  %v2185 = vmul.f32 %v2183, %v382
  %v2186 = vadd.f32 %v2184, 1e-05
  %v2187 = vadd.f32 %v2185, 1e-05
  %v2188 = vrsqrt.pop %v2186
  %v2189 = vrsqrt.pop %v2187
  %v2190 = vmul.f32 %v2174, %v2188
  %v2191 = vmul.f32 %v2175, %v2189
  %v2193 = vlaneseq
  %v2194 = vshrl.u32 %v2193, 7
  %v2195 = vsub.s32 0, %v2194
  %v2196 = vrot.slane %v2164, %v2195
  %v2198 = vmul.f32 %v2190, %v2196
  %v2199 = vmul.f32 %v2191, %v2196
  %v2201 = vlaneseq
  %v2202 = vshrl.u32 %v2201, 7
  %v2203 = vsub.s32 0, %v2202
  %v2204 = vrot.slane %v2165, %v2203
  %v2206 = vadd.f32 %v2198, %v2204
  %v2207 = vadd.f32 %v2199, %v2204
  %v2208 = vld [vmem:[%s57] sm:$0xff]
  %v2209 = vld [vmem:[%s57 + $0x8] sm:$0xff]
  %v2210 = vld [vmem:[%s57 + $0x10] sm:$0xff]
  %v2211 = vld [vmem:[%s57 + $0x18] sm:$0xff]
  %v2212 = vld [vmem:[%s53] sm:$0x1]
  %v2214 = vlaneseq
  %v2215 = vshrl.u32 %v2214, 7
  %v2216 = vsub.s32 0, %v2215
  %v2217 = vrot.slane %v2212, %v2216
  %v2220 = vsel %vm375, %v2206, 0
  %v2223 = vsel %vm375, %v2207, 0
  %2225 = vmatprep.subr.mxu0 0.0
  %2226 = vmatpush1.msra.mxu0 0.0
  %2227 = vmatprep.subr.mxu0 0.0
  %2228 = vmatpush1.msra.mxu0 0.0
  %2229 = vmatprep.subr.mxu0 0.0
  %2230 = vmatpush1.msra.mxu0 0.0
  %2231 = vmatprep.subr.mxu0 0.0
  %2232 = vmatpush1.msra.mxu0 0.0
  %2233 = vmatprep.subr.mxu0 0.0
  %2234 = vmatpush1.msra.mxu0 0.0
  %2235 = vmatprep.subr.mxu0 0.0
  %2236 = vmatpush1.msra.mxu0 0.0
  %2237 = vmatprep.subr.mxu0 0.0
  %2238 = vmatpush1.msra.mxu0 0.0
  %2239 = vmatprep.subr.mxu0 0.0
  %2240 = vmatpush1.msra.mxu0 0.0
  %2241 = vmatprep.subr.mxu0 0.0
  %2242 = vmatpush1.msra.mxu0 0.0
  %2243 = vmatprep.subr.mxu0 0.0
  %2244 = vmatpush1.msra.mxu0 0.0
  %2245 = vmatprep.subr.mxu0 0.0
  %2246 = vmatpush1.msra.mxu0 0.0
  %2247 = vmatprep.subr.mxu0 0.0
  %2248 = vmatpush1.msra.mxu0 0.0
  %2249 = vmatprep.subr.mxu0 0.0
  %2250 = vmatpush1.msra.mxu0 %v2211
  %2251 = vmatprep.subr.mxu0 0.0
  %2252 = vmatpush1.msra.mxu0 %v2210
  %2253 = vmatprep.subr.mxu0 0.0
  %2254 = vmatpush1.msra.mxu0 %v2209
  %2255 = vmatprep.subr.mxu0 0.0
  %2256 = vmatpush1.msra.mxu0 %v2208
  %2257 = vmatprep.subr.mxu0 0.0
  %2258 = vmatpush2.msra.mxu0 0.0
  %2259 = vmatprep.subr.mxu0 0.0
  %2260 = vmatpush2.msra.mxu0 0.0
  %2261 = vmatprep.subr.mxu0 0.0
  %2262 = vmatpush2.msra.mxu0 0.0
  %2263 = vmatprep.subr.mxu0 0.0
  %2264 = vmatpush2.msra.mxu0 0.0
  %2265 = vmatprep.subr.mxu0 0.0
  %2266 = vmatpush2.msra.mxu0 0.0
  %2267 = vmatprep.subr.mxu0 0.0
  %2268 = vmatpush2.msra.mxu0 0.0
  %2269 = vmatprep.subr.mxu0 0.0
  %2270 = vmatpush2.msra.mxu0 0.0
  %2271 = vmatprep.subr.mxu0 0.0
  %2272 = vmatpush2.msra.mxu0 0.0
  %2273 = vmatprep.subr.mxu0 0.0
  %2274 = vmatpush2.msra.mxu0 0.0
  %2275 = vmatprep.subr.mxu0 0.0
  %2276 = vmatpush2.msra.mxu0 0.0
  %2277 = vmatprep.subr.mxu0 0.0
  %2278 = vmatpush2.msra.mxu0 0.0
  %2279 = vmatprep.subr.mxu0 0.0
  %2280 = vmatpush2.msra.mxu0 0.0
  %2281 = vmatprep.subr.mxu0 0.0
  %2282 = vmatpush2.msra.mxu0 0.0
  %2283 = vmatprep.subr.mxu0 0.0
  %2284 = vmatpush2.msra.mxu0 0.0
  %2285 = vmatprep.subr.mxu0 0.0
  %2286 = vmatpush2.msra.mxu0 0.0
  %2287 = vmatprep.subr.mxu0 0.0
  %2288 = vmatpush2.msra.mxu0 0.0
  %2289 = vmatprep.mubr.f32.mxu0 0.0
  %2290 = vmatmul.mubr.f32.gmra.mxu0 %v2220
  %v2291 = vpop.f32.mrf.mxu0
  %v2292 = vadd.f32 %v2217, %v2291
  %v2293 = vpop.f32.mrf.mxu0
  %2294 = vmatprep.mubr.f32.mxu0 0.0
  %2295 = vmatmul.mubr.f32.gmra.mxu0 %v2223
  %v2296 = vpop.f32.mrf.mxu0
  %v2297 = vadd.f32 %v2217, %v2296
  %v2298 = vpop.f32.mrf.mxu0
  %2299 = vdwg.mxu0
  %v2300 = vmul.f32 %v2292, %v2292
  %v2301 = vmul.f32 %v2297, %v2297
  %v2302 = vmul.f32 %v2292, %v2300
  %v2303 = vmul.f32 %v2297, %v2301
  %v2304 = vmul.f32 %v2302, 0.044715
  %v2305 = vmul.f32 %v2303, 0.044715
  %v2306 = vadd.f32 %v2292, %v2304
  %v2307 = vadd.f32 %v2297, %v2305
  %v2308 = vmul.f32 %v2306, 0.7978846
  %v2309 = vmul.f32 %v2307, 0.7978846
  %v2310 = vtanh.pop %v2308
  %v2311 = vtanh.pop %v2309
  %v2312 = vadd.f32 %v2310, 1.0
  %v2313 = vadd.f32 %v2311, 1.0
  %v2314 = vmul.f32 %v2312, 0.5
  %v2315 = vmul.f32 %v2313, 0.5
  %v2316 = vmul.f32 %v2292, %v2314
  %v2317 = vmul.f32 %v2297, %v2315
  %v2318 = vld [vmem:[%s59] sm:$0xff]
  %v2319 = vld [vmem:[%s59 + $0x8] sm:$0xff]
  %v2320 = vld [vmem:[%s59 + $0x10] sm:$0xff]
  %v2321 = vld [vmem:[%s59 + $0x18] sm:$0xff]
  %v2322 = vld [vmem:[%s59 + $0x20] sm:$0xff]
  %v2323 = vld [vmem:[%s59 + $0x28] sm:$0xff]
  %v2324 = vld [vmem:[%s59 + $0x30] sm:$0xff]
  %v2325 = vld [vmem:[%s59 + $0x38] sm:$0xff]
  %v2326 = vld [vmem:[%s59 + $0x40] sm:$0xff]
  %v2327 = vld [vmem:[%s59 + $0x48] sm:$0xff]
  %v2328 = vld [vmem:[%s59 + $0x50] sm:$0xff]
  %v2329 = vld [vmem:[%s59 + $0x58] sm:$0xff]
  %v2330 = vld [vmem:[%s59 + $0x60] sm:$0xff]
  %v2331 = vld [vmem:[%s59 + $0x68] sm:$0xff]
  %v2332 = vld [vmem:[%s59 + $0x70] sm:$0xff]
  %v2333 = vld [vmem:[%s59 + $0x78] sm:$0xff]
  %2334 = vmatprep.subr.mxu0 0.0
  %2335 = vmatpush1.msra.mxu0 %v2333
  %2336 = vmatprep.subr.mxu0 0.0
  %2337 = vmatpush1.msra.mxu0 %v2332
  %2338 = vmatprep.subr.mxu0 0.0
  %2339 = vmatpush1.msra.mxu0 %v2331
  %2340 = vmatprep.subr.mxu0 0.0
  %2341 = vmatpush1.msra.mxu0 %v2330
  %2342 = vmatprep.subr.mxu0 0.0
  %2343 = vmatpush1.msra.mxu0 %v2329
  %2344 = vmatprep.subr.mxu0 0.0
  %2345 = vmatpush1.msra.mxu0 %v2328
  %2346 = vmatprep.subr.mxu0 0.0
  %2347 = vmatpush1.msra.mxu0 %v2327
  %2348 = vmatprep.subr.mxu0 0.0
  %2349 = vmatpush1.msra.mxu0 %v2326
  %2350 = vmatprep.subr.mxu0 0.0
  %2351 = vmatpush1.msra.mxu0 %v2325
  %2352 = vmatprep.subr.mxu0 0.0
  %2353 = vmatpush1.msra.mxu0 %v2324
  %2354 = vmatprep.subr.mxu0 0.0
  %2355 = vmatpush1.msra.mxu0 %v2323
  %2356 = vmatprep.subr.mxu0 0.0
  %2357 = vmatpush1.msra.mxu0 %v2322
  %2358 = vmatprep.subr.mxu0 0.0
  %2359 = vmatpush1.msra.mxu0 %v2321
  %2360 = vmatprep.subr.mxu0 0.0
  %2361 = vmatpush1.msra.mxu0 %v2320
  %2362 = vmatprep.subr.mxu0 0.0
  %2363 = vmatpush1.msra.mxu0 %v2319
  %2364 = vmatprep.subr.mxu0 0.0
  %2365 = vmatpush1.msra.mxu0 %v2318
  %2366 = vmatprep.subr.mxu0 0.0
  %2367 = vmatpush2.msra.mxu0 0.0
  %2368 = vmatprep.subr.mxu0 0.0
  %2369 = vmatpush2.msra.mxu0 0.0
  %2370 = vmatprep.subr.mxu0 0.0
  %2371 = vmatpush2.msra.mxu0 0.0
  %2372 = vmatprep.subr.mxu0 0.0
  %2373 = vmatpush2.msra.mxu0 0.0
  %2374 = vmatprep.subr.mxu0 0.0
  %2375 = vmatpush2.msra.mxu0 0.0
  %2376 = vmatprep.subr.mxu0 0.0
  %2377 = vmatpush2.msra.mxu0 0.0
  %2378 = vmatprep.subr.mxu0 0.0
  %2379 = vmatpush2.msra.mxu0 0.0
  %2380 = vmatprep.subr.mxu0 0.0
  %2381 = vmatpush2.msra.mxu0 0.0
  %2382 = vmatprep.subr.mxu0 0.0
  %2383 = vmatpush2.msra.mxu0 0.0
  %2384 = vmatprep.subr.mxu0 0.0
  %2385 = vmatpush2.msra.mxu0 0.0
  %2386 = vmatprep.subr.mxu0 0.0
  %2387 = vmatpush2.msra.mxu0 0.0
  %2388 = vmatprep.subr.mxu0 0.0
  %2389 = vmatpush2.msra.mxu0 0.0
  %2390 = vmatprep.subr.mxu0 0.0
  %2391 = vmatpush2.msra.mxu0 0.0
  %2392 = vmatprep.subr.mxu0 0.0
  %2393 = vmatpush2.msra.mxu0 0.0
  %2394 = vmatprep.subr.mxu0 0.0
  %2395 = vmatpush2.msra.mxu0 0.0
  %2396 = vmatprep.subr.mxu0 0.0
  %2397 = vmatpush2.msra.mxu0 0.0
  %2398 = vmatprep.mubr.f32.mxu0 0.0
  %2399 = vmatmul.mubr.f32.gmra.mxu0 %v2316
  %v2400 = vpop.f32.mrf.mxu0
  %v2401 = vadd.f32 0.0, %v2400
  %v2402 = vpop.f32.mrf.mxu0
  %2403 = vmatprep.mubr.f32.mxu0 0.0
  %2404 = vmatmul.mubr.f32.gmra.mxu0 %v2317
  %v2405 = vpop.f32.mrf.mxu0
  %v2406 = vadd.f32 0.0, %v2405
  %v2407 = vpop.f32.mrf.mxu0
  %2408 = vdwg.mxu0
  %v2409 = vadd.f32 %v2162, %v2401
  %v2410 = vadd.f32 %v2163, %v2406
  %v2411 = vld [vmem:[%s55] sm:$0x1]
  %v2413 = vlaneseq
  %v2414 = vshrl.u32 %v2413, 7
  %v2415 = vsub.s32 0, %v2414
  %v2416 = vrot.slane %v2411, %v2415
  %v2418 = vadd.f32 %v2409, %v2416
  %v2419 = vadd.f32 %v2410, %v2416
  %v2420 = vld [vmem:[%s75] sm:$0x1]
  %v2421 = vld [vmem:[%s73] sm:$0x1]
  %v2422 = vsel %vm375, %v2418, 0.0
  %2423 = vadd.xlane.f32.xlu0 %v2422
  %v2424 = vpop.xlane.xlu0 %2423
  %v2425 = vsel %vm375, %v2419, 0.0
  %2426 = vadd.xlane.f32.xlu0 %v2425
  %v2427 = vpop.xlane.xlu0 %2426
  %v2428 = vmul.f32 %v2424, %v382
  %v2429 = vmul.f32 %v2427, %v382
  %v2430 = vsub.f32 %v2418, %v2428
  %v2431 = vsub.f32 %v2419, %v2429
  %v2432 = vmul.f32 %v2430, %v2430
  %v2433 = vmul.f32 %v2431, %v2431
  %v2434 = vsel %vm375, %v2432, 0.0
  %2435 = vadd.xlane.f32.xlu0 %v2434
  %v2436 = vpop.xlane.xlu0 %2435
  %v2437 = vsel %vm375, %v2433, 0.0
  %2438 = vadd.xlane.f32.xlu0 %v2437
  %v2439 = vpop.xlane.xlu0 %2438
  %v2440 = vmul.f32 %v2436, %v382
  %v2441 = vmul.f32 %v2439, %v382
  %v2442 = vadd.f32 %v2440, 1e-05
  %v2443 = vadd.f32 %v2441, 1e-05
  %v2444 = vrsqrt.pop %v2442
  %v2445 = vrsqrt.pop %v2443
  %v2446 = vmul.f32 %v2430, %v2444
  %v2447 = vmul.f32 %v2431, %v2445
  %v2449 = vlaneseq
  %v2450 = vshrl.u32 %v2449, 7
  %v2451 = vsub.s32 0, %v2450
  %v2452 = vrot.slane %v2420, %v2451
  %v2454 = vmul.f32 %v2446, %v2452
  %v2455 = vmul.f32 %v2447, %v2452
  %v2457 = vlaneseq
  %v2458 = vshrl.u32 %v2457, 7
  %v2459 = vsub.s32 0, %v2458
  %v2460 = vrot.slane %v2421, %v2459
  %v2462 = vadd.f32 %v2454, %v2460
  %v2463 = vadd.f32 %v2455, %v2460
  %2464 = vset.pattern.permute.xlu0 0
  %2465 = vperm.xlu0 %2464, %v170
  %v2466 = vpop.permute.xlu0 %2465
  %2467 = vset.pattern.permute.xlu0 0
  %2468 = vperm.xlu0 %2467, %v171
  %v2469 = vpop.permute.xlu0 %2468
  %vm2470 = vcmp.eq.s32.totalorder %v175, %v2466
  %vm2471 = vcmp.eq.s32.totalorder %v175, %v2469
  %v2472 = vsel %vm2470, 1, 0
  %v2473 = vsel %vm2471, 1, 0
  %v2474 = vcvt.s32.f32 %v2472
  %v2475 = vcvt.s32.f32 %v2473
  %v2476 = vld [vmem:[%s51] sm:$0xff]
  %v2477 = vld [vmem:[%s51 + $0x8] sm:$0xff]
  %v2478 = vld [vmem:[%s51 + $0x10] sm:$0xff]
  %v2479 = vld [vmem:[%s51 + $0x18] sm:$0xff]
  %v2480 = vld [vmem:[%s51 + $0x20] sm:$0xff]
  %v2481 = vld [vmem:[%s51 + $0x28] sm:$0xff]
  %v2482 = vld [vmem:[%s51 + $0x30] sm:$0xff]
  %v2483 = vld [vmem:[%s51 + $0x38] sm:$0xff]
  %2484 = vset.pattern.permute.xlu0 0
  %2485 = vperm.xlu0 %2484, %v172
  %v2486 = vpop.permute.xlu0 %2485
  %2487 = vset.pattern.permute.xlu0 0
  %2488 = vperm.xlu0 %2487, %v173
  %v2489 = vpop.permute.xlu0 %2488
  %vm2490 = vcmp.eq.s32.totalorder %v175, %v2486
  %vm2491 = vcmp.eq.s32.totalorder %v175, %v2489
  %v2492 = vsel %vm2490, 1, 0
  %v2493 = vsel %vm2491, 1, 0
  %v2494 = vcvt.s32.f32 %v2492
  %v2495 = vcvt.s32.f32 %v2493
  %v2496 = vld [vmem:[%s45] sm:$0xff]
  %v2498 = vsel %vm209, %v2494, 0
  %v2501 = vsel %vm209, %v2495, 0
  %2503 = vmatprep.subr.mxu0 0.0
  %2504 = vmatpush1.msra.mxu0 0.0
  %2505 = vmatprep.subr.mxu0 0.0
  %2506 = vmatpush1.msra.mxu0 0.0
  %2507 = vmatprep.subr.mxu0 0.0
  %2508 = vmatpush1.msra.mxu0 0.0
  %2509 = vmatprep.subr.mxu0 0.0
  %2510 = vmatpush1.msra.mxu0 0.0
  %2511 = vmatprep.subr.mxu0 0.0
  %2512 = vmatpush1.msra.mxu0 0.0
  %2513 = vmatprep.subr.mxu0 0.0
  %2514 = vmatpush1.msra.mxu0 0.0
  %2515 = vmatprep.subr.mxu0 0.0
  %2516 = vmatpush1.msra.mxu0 0.0
  %2517 = vmatprep.subr.mxu0 0.0
  %2518 = vmatpush1.msra.mxu0 0.0
  %2519 = vmatprep.subr.mxu0 0.0
  %2520 = vmatpush1.msra.mxu0 0.0
  %2521 = vmatprep.subr.mxu0 0.0
  %2522 = vmatpush1.msra.mxu0 0.0
  %2523 = vmatprep.subr.mxu0 0.0
  %2524 = vmatpush1.msra.mxu0 0.0
  %2525 = vmatprep.subr.mxu0 0.0
  %2526 = vmatpush1.msra.mxu0 0.0
  %2527 = vmatprep.subr.mxu0 0.0
  %2528 = vmatpush1.msra.mxu0 0.0
  %2529 = vmatprep.subr.mxu0 0.0
  %2530 = vmatpush1.msra.mxu0 0.0
  %2531 = vmatprep.subr.mxu0 0.0
  %2532 = vmatpush1.msra.mxu0 0.0
  %2533 = vmatprep.subr.mxu0 0.0
  %2534 = vmatpush1.msra.mxu0 %v2496
  %2535 = vmatprep.subr.mxu0 0.0
  %2536 = vmatpush2.msra.mxu0 0.0
  %2537 = vmatprep.subr.mxu0 0.0
  %2538 = vmatpush2.msra.mxu0 0.0
  %2539 = vmatprep.subr.mxu0 0.0
  %2540 = vmatpush2.msra.mxu0 0.0
  %2541 = vmatprep.subr.mxu0 0.0
  %2542 = vmatpush2.msra.mxu0 0.0
  %2543 = vmatprep.subr.mxu0 0.0
  %2544 = vmatpush2.msra.mxu0 0.0
  %2545 = vmatprep.subr.mxu0 0.0
  %2546 = vmatpush2.msra.mxu0 0.0
  %2547 = vmatprep.subr.mxu0 0.0
  %2548 = vmatpush2.msra.mxu0 0.0
  %2549 = vmatprep.subr.mxu0 0.0
  %2550 = vmatpush2.msra.mxu0 0.0
  %2551 = vmatprep.subr.mxu0 0.0
  %2552 = vmatpush2.msra.mxu0 0.0
  %2553 = vmatprep.subr.mxu0 0.0
  %2554 = vmatpush2.msra.mxu0 0.0
  %2555 = vmatprep.subr.mxu0 0.0
  %2556 = vmatpush2.msra.mxu0 0.0
  %2557 = vmatprep.subr.mxu0 0.0
  %2558 = vmatpush2.msra.mxu0 0.0
  %2559 = vmatprep.subr.mxu0 0.0
  %2560 = vmatpush2.msra.mxu0 0.0
  %2561 = vmatprep.subr.mxu0 0.0
  %2562 = vmatpush2.msra.mxu0 0.0
  %2563 = vmatprep.subr.mxu0 0.0
  %2564 = vmatpush2.msra.mxu0 0.0
  %2565 = vmatprep.subr.mxu0 0.0
  %2566 = vmatpush2.msra.mxu0 0.0
  %2567 = vmatprep.mubr.f32.mxu0 0.0
  %2568 = vmatmul.mubr.f32.gmra.mxu0 %v2498
  %v2569 = vpop.f32.mrf.mxu0
  %v2570 = vadd.f32 0.0, %v2569
  %v2571 = vpop.f32.mrf.mxu0
  %2572 = vmatprep.mubr.f32.mxu0 0.0
  %2573 = vmatmul.mubr.f32.gmra.mxu0 %v2501
  %v2574 = vpop.f32.mrf.mxu0
  %v2575 = vadd.f32 0.0, %v2574
  %v2576 = vpop.f32.mrf.mxu0
  %2577 = vdwg.mxu0
  %v2579 = vsel %vm291, %v2474, 0
  %v2582 = vsel %vm291, %v2475, 0
  %2584 = vmatprep.subr.mxu0 0.0
  %2585 = vmatpush1.msra.mxu0 0.0
  %2586 = vmatprep.subr.mxu0 0.0
  %2587 = vmatpush1.msra.mxu0 0.0
  %2588 = vmatprep.subr.mxu0 0.0
  %2589 = vmatpush1.msra.mxu0 0.0
  %2590 = vmatprep.subr.mxu0 0.0
  %2591 = vmatpush1.msra.mxu0 0.0
  %2592 = vmatprep.subr.mxu0 0.0
  %2593 = vmatpush1.msra.mxu0 0.0
  %2594 = vmatprep.subr.mxu0 0.0
  %2595 = vmatpush1.msra.mxu0 0.0
  %2596 = vmatprep.subr.mxu0 0.0
  %2597 = vmatpush1.msra.mxu0 0.0
  %2598 = vmatprep.subr.mxu0 0.0
  %2599 = vmatpush1.msra.mxu0 0.0
  %2600 = vmatprep.subr.mxu0 0.0
  %2601 = vmatpush1.msra.mxu0 %v2483
  %2602 = vmatprep.subr.mxu0 0.0
  %2603 = vmatpush1.msra.mxu0 %v2482
  %2604 = vmatprep.subr.mxu0 0.0
  %2605 = vmatpush1.msra.mxu0 %v2481
  %2606 = vmatprep.subr.mxu0 0.0
  %2607 = vmatpush1.msra.mxu0 %v2480
  %2608 = vmatprep.subr.mxu0 0.0
  %2609 = vmatpush1.msra.mxu0 %v2479
  %2610 = vmatprep.subr.mxu0 0.0
  %2611 = vmatpush1.msra.mxu0 %v2478
  %2612 = vmatprep.subr.mxu0 0.0
  %2613 = vmatpush1.msra.mxu0 %v2477
  %2614 = vmatprep.subr.mxu0 0.0
  %2615 = vmatpush1.msra.mxu0 %v2476
  %2616 = vmatprep.subr.mxu0 0.0
  %2617 = vmatpush2.msra.mxu0 0.0
  %2618 = vmatprep.subr.mxu0 0.0
  %2619 = vmatpush2.msra.mxu0 0.0
  %2620 = vmatprep.subr.mxu0 0.0
  %2621 = vmatpush2.msra.mxu0 0.0
  %2622 = vmatprep.subr.mxu0 0.0
  %2623 = vmatpush2.msra.mxu0 0.0
  %2624 = vmatprep.subr.mxu0 0.0
  %2625 = vmatpush2.msra.mxu0 0.0
  %2626 = vmatprep.subr.mxu0 0.0
  %2627 = vmatpush2.msra.mxu0 0.0
  %2628 = vmatprep.subr.mxu0 0.0
  %2629 = vmatpush2.msra.mxu0 0.0
  %2630 = vmatprep.subr.mxu0 0.0
  %2631 = vmatpush2.msra.mxu0 0.0
  %2632 = vmatprep.subr.mxu0 0.0
  %2633 = vmatpush2.msra.mxu0 0.0
  %2634 = vmatprep.subr.mxu0 0.0
  %2635 = vmatpush2.msra.mxu0 0.0
  %2636 = vmatprep.subr.mxu0 0.0
  %2637 = vmatpush2.msra.mxu0 0.0
  %2638 = vmatprep.subr.mxu0 0.0
  %2639 = vmatpush2.msra.mxu0 0.0
  %2640 = vmatprep.subr.mxu0 0.0
  %2641 = vmatpush2.msra.mxu0 0.0
  %2642 = vmatprep.subr.mxu0 0.0
  %2643 = vmatpush2.msra.mxu0 0.0
  %2644 = vmatprep.subr.mxu0 0.0
  %2645 = vmatpush2.msra.mxu0 0.0
  %2646 = vmatprep.subr.mxu0 0.0
  %2647 = vmatpush2.msra.mxu0 0.0
  %2648 = vmatprep.mubr.f32.mxu0 0.0
  %2649 = vmatmul.mubr.f32.gmra.mxu0 %v2579
  %v2650 = vpop.f32.mrf.mxu0
  %v2651 = vadd.f32 %v2570, %v2650
  %v2652 = vpop.f32.mrf.mxu0
  %2653 = vmatprep.mubr.f32.mxu0 0.0
  %2654 = vmatmul.mubr.f32.gmra.mxu0 %v2582
  %v2655 = vpop.f32.mrf.mxu0
  %v2656 = vadd.f32 %v2575, %v2655
  %v2657 = vpop.f32.mrf.mxu0
  %2658 = vdwg.mxu0
  %v2659 = vld [vmem:[%s27] sm:$0x1]
  %v2660 = vld [vmem:[%s25] sm:$0x1]
  %v2661 = vsel %vm375, %v2651, 0.0
  %2662 = vadd.xlane.f32.xlu0 %v2661
  %v2663 = vpop.xlane.xlu0 %2662
  %v2664 = vsel %vm375, %v2656, 0.0
  %2665 = vadd.xlane.f32.xlu0 %v2664
  %v2666 = vpop.xlane.xlu0 %2665
  %v2667 = vmul.f32 %v2663, %v382
  %v2668 = vmul.f32 %v2666, %v382
  %v2669 = vsub.f32 %v2651, %v2667
  %v2670 = vsub.f32 %v2656, %v2668
  %v2671 = vmul.f32 %v2669, %v2669
  %v2672 = vmul.f32 %v2670, %v2670
  %v2673 = vsel %vm375, %v2671, 0.0
  %2674 = vadd.xlane.f32.xlu0 %v2673
  %v2675 = vpop.xlane.xlu0 %2674
  %v2676 = vsel %vm375, %v2672, 0.0
  %2677 = vadd.xlane.f32.xlu0 %v2676
  %v2678 = vpop.xlane.xlu0 %2677
  %v2679 = vmul.f32 %v2675, %v382
  %v2680 = vmul.f32 %v2678, %v382
  %v2681 = vadd.f32 %v2679, 1e-05
  %v2682 = vadd.f32 %v2680, 1e-05
  %v2683 = vrsqrt.pop %v2681
  %v2684 = vrsqrt.pop %v2682
  %v2685 = vmul.f32 %v2669, %v2683
  %v2686 = vmul.f32 %v2670, %v2684
  %v2688 = vlaneseq
  %v2689 = vshrl.u32 %v2688, 7
  %v2690 = vsub.s32 0, %v2689
  %v2691 = vrot.slane %v2659, %v2690
  %v2693 = vmul.f32 %v2685, %v2691
  %v2694 = vmul.f32 %v2686, %v2691
  %v2696 = vlaneseq
  %v2697 = vshrl.u32 %v2696, 7
  %v2698 = vsub.s32 0, %v2697
  %v2699 = vrot.slane %v2660, %v2698
  %v2701 = vadd.f32 %v2693, %v2699
  %v2702 = vadd.f32 %v2694, %v2699
  %v2703 = vld [vmem:[%s39] sm:$0xff]
  %v2704 = vld [vmem:[%s39 + $0x8] sm:$0xff]
  %v2705 = vld [vmem:[%s39 + $0x10] sm:$0xff]
  %v2706 = vld [vmem:[%s39 + $0x18] sm:$0xff]
  %v2708 = vsel %vm375, %v2701, 0
  %v2711 = vsel %vm375, %v2702, 0
  %2713 = vmatprep.subr.mxu0 0.0
  %2714 = vmatpush1.msra.mxu0 0.0
  %2715 = vmatprep.subr.mxu0 0.0
  %2716 = vmatpush1.msra.mxu0 0.0
  %2717 = vmatprep.subr.mxu0 0.0
  %2718 = vmatpush1.msra.mxu0 0.0
  %2719 = vmatprep.subr.mxu0 0.0
  %2720 = vmatpush1.msra.mxu0 0.0
  %2721 = vmatprep.subr.mxu0 0.0
  %2722 = vmatpush1.msra.mxu0 0.0
  %2723 = vmatprep.subr.mxu0 0.0
  %2724 = vmatpush1.msra.mxu0 0.0
  %2725 = vmatprep.subr.mxu0 0.0
  %2726 = vmatpush1.msra.mxu0 0.0
  %2727 = vmatprep.subr.mxu0 0.0
  %2728 = vmatpush1.msra.mxu0 0.0
  %2729 = vmatprep.subr.mxu0 0.0
  %2730 = vmatpush1.msra.mxu0 0.0
  %2731 = vmatprep.subr.mxu0 0.0
  %2732 = vmatpush1.msra.mxu0 0.0
  %2733 = vmatprep.subr.mxu0 0.0
  %2734 = vmatpush1.msra.mxu0 0.0
  %2735 = vmatprep.subr.mxu0 0.0
  %2736 = vmatpush1.msra.mxu0 0.0
  %2737 = vmatprep.subr.mxu0 0.0
  %2738 = vmatpush1.msra.mxu0 %v2706
  %2739 = vmatprep.subr.mxu0 0.0
  %2740 = vmatpush1.msra.mxu0 %v2705
  %2741 = vmatprep.subr.mxu0 0.0
  %2742 = vmatpush1.msra.mxu0 %v2704
  %2743 = vmatprep.subr.mxu0 0.0
  %2744 = vmatpush1.msra.mxu0 %v2703
  %2745 = vmatprep.subr.mxu0 0.0
  %2746 = vmatpush2.msra.mxu0 0.0
  %2747 = vmatprep.subr.mxu0 0.0
  %2748 = vmatpush2.msra.mxu0 0.0
  %2749 = vmatprep.subr.mxu0 0.0
  %2750 = vmatpush2.msra.mxu0 0.0
  %2751 = vmatprep.subr.mxu0 0.0
  %2752 = vmatpush2.msra.mxu0 0.0
  %2753 = vmatprep.subr.mxu0 0.0
  %2754 = vmatpush2.msra.mxu0 0.0
  %2755 = vmatprep.subr.mxu0 0.0
  %2756 = vmatpush2.msra.mxu0 0.0
  %2757 = vmatprep.subr.mxu0 0.0
  %2758 = vmatpush2.msra.mxu0 0.0
  %2759 = vmatprep.subr.mxu0 0.0
  %2760 = vmatpush2.msra.mxu0 0.0
  %2761 = vmatprep.subr.mxu0 0.0
  %2762 = vmatpush2.msra.mxu0 0.0
  %2763 = vmatprep.subr.mxu0 0.0
  %2764 = vmatpush2.msra.mxu0 0.0
  %2765 = vmatprep.subr.mxu0 0.0
  %2766 = vmatpush2.msra.mxu0 0.0
  %2767 = vmatprep.subr.mxu0 0.0
  %2768 = vmatpush2.msra.mxu0 0.0
  %2769 = vmatprep.subr.mxu0 0.0
  %2770 = vmatpush2.msra.mxu0 0.0
  %2771 = vmatprep.subr.mxu0 0.0
  %2772 = vmatpush2.msra.mxu0 0.0
  %2773 = vmatprep.subr.mxu0 0.0
  %2774 = vmatpush2.msra.mxu0 0.0
  %2775 = vmatprep.subr.mxu0 0.0
  %2776 = vmatpush2.msra.mxu0 0.0
  %2777 = vmatprep.mubr.f32.mxu0 0.0
  %2778 = vmatmul.mubr.f32.gmra.mxu0 %v2708
  %v2779 = vpop.f32.mrf.mxu0
  %v2780 = vadd.f32 0.0, %v2779
  %v2781 = vpop.f32.mrf.mxu0
  %2782 = vmatprep.mubr.f32.mxu0 0.0
  %2783 = vmatmul.mubr.f32.gmra.mxu0 %v2711
  %v2784 = vpop.f32.mrf.mxu0
  %v2785 = vadd.f32 0.0, %v2784
  %v2786 = vpop.f32.mrf.mxu0
  %2787 = vdwg.mxu0
  %v2788 = vld [vmem:[%s37] sm:$0xff]
  %v2789 = vld [vmem:[%s37 + $0x8] sm:$0xff]
  %v2790 = vld [vmem:[%s37 + $0x10] sm:$0xff]
  %v2791 = vld [vmem:[%s37 + $0x18] sm:$0xff]
  %v2792 = vlaneseq
  %v2793 = vshrl.u32 %v2792, 7
  %vm2794 = vcmp.le.s32.totalorder %v175, %v2793
  %v2795 = vsel %vm2794, 0.0, -1e+30
  %2797 = vrot.lane.b32.xlu0 %v2780, 96
  %v2798 = vpop.permute.xlu0 %2797
  %v2799 = vsel %vm209, %v2780, 0
  %v2801 = vsel %vm209, %v2798, 0
  %2803 = vmatprep.subr.mxu0 0.0
  %2804 = vmatpush1.xpose.msra.mxu0 0.0
  %2805 = vmatprep.subr.mxu0 0.0
  %2806 = vmatpush1.xpose.msra.mxu0 0.0
  %2807 = vmatprep.subr.mxu0 0.0
  %2808 = vmatpush1.xpose.msra.mxu0 0.0
  %2809 = vmatprep.subr.mxu0 0.0
  %2810 = vmatpush1.xpose.msra.mxu0 0.0
  %2811 = vmatprep.subr.mxu0 0.0
  %2812 = vmatpush1.xpose.msra.mxu0 0.0
  %2813 = vmatprep.subr.mxu0 0.0
  %2814 = vmatpush1.xpose.msra.mxu0 0.0
  %2815 = vmatprep.subr.mxu0 0.0
  %2816 = vmatpush1.xpose.msra.mxu0 0.0
  %2817 = vmatprep.subr.mxu0 0.0
  %2818 = vmatpush1.xpose.msra.mxu0 0.0
  %2819 = vmatprep.subr.mxu0 0.0
  %2820 = vmatpush1.xpose.msra.mxu0 0.0
  %2821 = vmatprep.subr.mxu0 0.0
  %2822 = vmatpush1.xpose.msra.mxu0 0.0
  %2823 = vmatprep.subr.mxu0 0.0
  %2824 = vmatpush1.xpose.msra.mxu0 0.0
  %2825 = vmatprep.subr.mxu0 0.0
  %2826 = vmatpush1.xpose.msra.mxu0 0.0
  %2827 = vmatprep.subr.mxu0 0.0
  %2828 = vmatpush1.xpose.msra.mxu0 0.0
  %2829 = vmatprep.subr.mxu0 0.0
  %2830 = vmatpush1.xpose.msra.mxu0 0.0
  %2831 = vmatprep.subr.mxu0 0.0
  %2832 = vmatpush1.xpose.msra.mxu0 0.0
  %2833 = vmatprep.subr.mxu0 0.0
  %2834 = vmatpush1.xpose.msra.mxu0 %v2801
  %2835 = vmatprep.subr.mxu0 0.0
  %2836 = vmatpush2.xpose.msra.mxu0 0.0
  %2837 = vmatprep.subr.mxu0 0.0
  %2838 = vmatpush2.xpose.msra.mxu0 0.0
  %2839 = vmatprep.subr.mxu0 0.0
  %2840 = vmatpush2.xpose.msra.mxu0 0.0
  %2841 = vmatprep.subr.mxu0 0.0
  %2842 = vmatpush2.xpose.msra.mxu0 0.0
  %2843 = vmatprep.subr.mxu0 0.0
  %2844 = vmatpush2.xpose.msra.mxu0 0.0
  %2845 = vmatprep.subr.mxu0 0.0
  %2846 = vmatpush2.xpose.msra.mxu0 0.0
  %2847 = vmatprep.subr.mxu0 0.0
  %2848 = vmatpush2.xpose.msra.mxu0 0.0
  %2849 = vmatprep.subr.mxu0 0.0
  %2850 = vmatpush2.xpose.msra.mxu0 0.0
  %2851 = vmatprep.subr.mxu0 0.0
  %2852 = vmatpush2.xpose.msra.mxu0 0.0
  %2853 = vmatprep.subr.mxu0 0.0
  %2854 = vmatpush2.xpose.msra.mxu0 0.0
  %2855 = vmatprep.subr.mxu0 0.0
  %2856 = vmatpush2.xpose.msra.mxu0 0.0
  %2857 = vmatprep.subr.mxu0 0.0
  %2858 = vmatpush2.xpose.msra.mxu0 0.0
  %2859 = vmatprep.subr.mxu0 0.0
  %2860 = vmatpush2.xpose.msra.mxu0 0.0
  %2861 = vmatprep.subr.mxu0 0.0
  %2862 = vmatpush2.xpose.msra.mxu0 0.0
  %2863 = vmatprep.subr.mxu0 0.0
  %2864 = vmatpush2.xpose.msra.mxu0 0.0
  %2865 = vmatprep.subr.mxu0 0.0
  %2866 = vmatpush2.xpose.msra.mxu0 0.0
  %2867 = vmatprep.mubr.f32.mxu0 0.0
  %2868 = vmatmul.mubr.f32.gmra.mxu0 %v2799
  %v2869 = vpop.f32.mrf.mxu0
  %v2870 = vadd.f32 0.0, %v2869
  %v2871 = vpop.f32.mrf.mxu0
  %2872 = vdwg.mxu0
  %2874 = vrot.lane.b32.xlu0 %v2785, 96
  %v2875 = vpop.permute.xlu0 %2874
  %v2876 = vsel %vm209, %v2785, 0
  %v2878 = vsel %vm209, %v2875, 0
  %2880 = vmatprep.subr.mxu0 0.0
  %2881 = vmatpush1.xpose.msra.mxu0 0.0
  %2882 = vmatprep.subr.mxu0 0.0
  %2883 = vmatpush1.xpose.msra.mxu0 0.0
  %2884 = vmatprep.subr.mxu0 0.0
  %2885 = vmatpush1.xpose.msra.mxu0 0.0
  %2886 = vmatprep.subr.mxu0 0.0
  %2887 = vmatpush1.xpose.msra.mxu0 0.0
  %2888 = vmatprep.subr.mxu0 0.0
  %2889 = vmatpush1.xpose.msra.mxu0 0.0
  %2890 = vmatprep.subr.mxu0 0.0
  %2891 = vmatpush1.xpose.msra.mxu0 0.0
  %2892 = vmatprep.subr.mxu0 0.0
  %2893 = vmatpush1.xpose.msra.mxu0 0.0
  %2894 = vmatprep.subr.mxu0 0.0
  %2895 = vmatpush1.xpose.msra.mxu0 0.0
  %2896 = vmatprep.subr.mxu0 0.0
  %2897 = vmatpush1.xpose.msra.mxu0 0.0
  %2898 = vmatprep.subr.mxu0 0.0
  %2899 = vmatpush1.xpose.msra.mxu0 0.0
  %2900 = vmatprep.subr.mxu0 0.0
  %2901 = vmatpush1.xpose.msra.mxu0 0.0
  %2902 = vmatprep.subr.mxu0 0.0
  %2903 = vmatpush1.xpose.msra.mxu0 0.0
  %2904 = vmatprep.subr.mxu0 0.0
  %2905 = vmatpush1.xpose.msra.mxu0 0.0
  %2906 = vmatprep.subr.mxu0 0.0
  %2907 = vmatpush1.xpose.msra.mxu0 0.0
  %2908 = vmatprep.subr.mxu0 0.0
  %2909 = vmatpush1.xpose.msra.mxu0 0.0
  %2910 = vmatprep.subr.mxu0 0.0
  %2911 = vmatpush1.xpose.msra.mxu0 %v2878
  %2912 = vmatprep.subr.mxu0 0.0
  %2913 = vmatpush2.xpose.msra.mxu0 0.0
  %2914 = vmatprep.subr.mxu0 0.0
  %2915 = vmatpush2.xpose.msra.mxu0 0.0
  %2916 = vmatprep.subr.mxu0 0.0
  %2917 = vmatpush2.xpose.msra.mxu0 0.0
  %2918 = vmatprep.subr.mxu0 0.0
  %2919 = vmatpush2.xpose.msra.mxu0 0.0
  %2920 = vmatprep.subr.mxu0 0.0
  %2921 = vmatpush2.xpose.msra.mxu0 0.0
  %2922 = vmatprep.subr.mxu0 0.0
  %2923 = vmatpush2.xpose.msra.mxu0 0.0
  %2924 = vmatprep.subr.mxu0 0.0
  %2925 = vmatpush2.xpose.msra.mxu0 0.0
  %2926 = vmatprep.subr.mxu0 0.0
  %2927 = vmatpush2.xpose.msra.mxu0 0.0
  %2928 = vmatprep.subr.mxu0 0.0
  %2929 = vmatpush2.xpose.msra.mxu0 0.0
  %2930 = vmatprep.subr.mxu0 0.0
  %2931 = vmatpush2.xpose.msra.mxu0 0.0
  %2932 = vmatprep.subr.mxu0 0.0
  %2933 = vmatpush2.xpose.msra.mxu0 0.0
  %2934 = vmatprep.subr.mxu0 0.0
  %2935 = vmatpush2.xpose.msra.mxu0 0.0
  %2936 = vmatprep.subr.mxu0 0.0
  %2937 = vmatpush2.xpose.msra.mxu0 0.0
  %2938 = vmatprep.subr.mxu0 0.0
  %2939 = vmatpush2.xpose.msra.mxu0 0.0
  %2940 = vmatprep.subr.mxu0 0.0
  %2941 = vmatpush2.xpose.msra.mxu0 0.0
  %2942 = vmatprep.subr.mxu0 0.0
  %2943 = vmatpush2.xpose.msra.mxu0 0.0
  %2944 = vmatprep.mubr.f32.mxu0 0.0
  %2945 = vmatmul.mubr.f32.gmra.mxu0 %v2876
  %v2946 = vpop.f32.mrf.mxu0
  %v2947 = vadd.f32 0.0, %v2946
  %v2948 = vpop.f32.mrf.mxu0
  %2949 = vdwg.mxu0
  %v2950 = vmul.f32 %v2870, 0.35355338
  %v2951 = vmul.f32 %v2947, 0.35355338
  %v2952 = vadd.f32 %v2950, %v2795
  %v2953 = vadd.f32 %v2951, %v2795
  %v2954 = vsel %vm209, %v2952, -inf
  %2955 = vmax.xlane.f32.xlu0 %v2954
  %v2956 = vpop.xlane.xlu0 %2955
  %v2957 = vsel %vm209, %v2953, -inf
  %2958 = vmax.xlane.f32.xlu0 %v2957
  %v2959 = vpop.xlane.xlu0 %2958
  %v2960 = vsub.f32 %v2952, %v2956
  %v2961 = vsub.f32 %v2953, %v2959
  %v2962 = vmul.f32 %v2960, 1.442695
  %v2963 = vpow.pop %v2962
  %v2964 = vmul.f32 %v2961, 1.442695
  %v2965 = vpow.pop %v2964
  %v2966 = vsel %vm209, %v2963, 0.0
  %2967 = vadd.xlane.f32.xlu0 %v2966
  %v2968 = vpop.xlane.xlu0 %2967
  %v2969 = vsel %vm209, %v2965, 0.0
  %2970 = vadd.xlane.f32.xlu0 %v2969
  %v2971 = vpop.xlane.xlu0 %2970
  %v2972 = vrcp.pop %v2968
  %v2973 = vrcp.pop %v2971
  %v2974 = vmul.f32 %v2963, %v2972
  %v2975 = vmul.f32 %v2965, %v2973
  %2976 = vrot.lane.b32.xlu0 %v2780, 64
  %v2977 = vpop.permute.xlu0 %2976
  %v2980 = vsel %vm209, %v2974, 0
  %2982 = vmatprep.subr.mxu0 0.0
  %2983 = vmatpush1.msra.mxu0 0.0
  %2984 = vmatprep.subr.mxu0 0.0
  %2985 = vmatpush1.msra.mxu0 0.0
  %2986 = vmatprep.subr.mxu0 0.0
  %2987 = vmatpush1.msra.mxu0 0.0
  %2988 = vmatprep.subr.mxu0 0.0
  %2989 = vmatpush1.msra.mxu0 0.0
  %2990 = vmatprep.subr.mxu0 0.0
  %2991 = vmatpush1.msra.mxu0 0.0
  %2992 = vmatprep.subr.mxu0 0.0
  %2993 = vmatpush1.msra.mxu0 0.0
  %2994 = vmatprep.subr.mxu0 0.0
  %2995 = vmatpush1.msra.mxu0 0.0
  %2996 = vmatprep.subr.mxu0 0.0
  %2997 = vmatpush1.msra.mxu0 0.0
  %2998 = vmatprep.subr.mxu0 0.0
  %2999 = vmatpush1.msra.mxu0 0.0
  %3000 = vmatprep.subr.mxu0 0.0
  %3001 = vmatpush1.msra.mxu0 0.0
  %3002 = vmatprep.subr.mxu0 0.0
  %3003 = vmatpush1.msra.mxu0 0.0
  %3004 = vmatprep.subr.mxu0 0.0
  %3005 = vmatpush1.msra.mxu0 0.0
  %3006 = vmatprep.subr.mxu0 0.0
  %3007 = vmatpush1.msra.mxu0 0.0
  %3008 = vmatprep.subr.mxu0 0.0
  %3009 = vmatpush1.msra.mxu0 0.0
  %3010 = vmatprep.subr.mxu0 0.0
  %3011 = vmatpush1.msra.mxu0 0.0
  %3012 = vmatprep.subr.mxu0 0.0
  %3013 = vmatpush1.msra.mxu0 %v2977
  %3014 = vmatprep.subr.mxu0 0.0
  %3015 = vmatpush2.msra.mxu0 0.0
  %3016 = vmatprep.subr.mxu0 0.0
  %3017 = vmatpush2.msra.mxu0 0.0
  %3018 = vmatprep.subr.mxu0 0.0
  %3019 = vmatpush2.msra.mxu0 0.0
  %3020 = vmatprep.subr.mxu0 0.0
  %3021 = vmatpush2.msra.mxu0 0.0
  %3022 = vmatprep.subr.mxu0 0.0
  %3023 = vmatpush2.msra.mxu0 0.0
  %3024 = vmatprep.subr.mxu0 0.0
  %3025 = vmatpush2.msra.mxu0 0.0
  %3026 = vmatprep.subr.mxu0 0.0
  %3027 = vmatpush2.msra.mxu0 0.0
  %3028 = vmatprep.subr.mxu0 0.0
  %3029 = vmatpush2.msra.mxu0 0.0
  %3030 = vmatprep.subr.mxu0 0.0
  %3031 = vmatpush2.msra.mxu0 0.0
  %3032 = vmatprep.subr.mxu0 0.0
  %3033 = vmatpush2.msra.mxu0 0.0
  %3034 = vmatprep.subr.mxu0 0.0
  %3035 = vmatpush2.msra.mxu0 0.0
  %3036 = vmatprep.subr.mxu0 0.0
  %3037 = vmatpush2.msra.mxu0 0.0
  %3038 = vmatprep.subr.mxu0 0.0
  %3039 = vmatpush2.msra.mxu0 0.0
  %3040 = vmatprep.subr.mxu0 0.0
  %3041 = vmatpush2.msra.mxu0 0.0
  %3042 = vmatprep.subr.mxu0 0.0
  %3043 = vmatpush2.msra.mxu0 0.0
  %3044 = vmatprep.subr.mxu0 0.0
  %3045 = vmatpush2.msra.mxu0 0.0
  %3046 = vmatprep.mubr.f32.mxu0 0.0
  %3047 = vmatmul.mubr.f32.gmra.mxu0 %v2980
  %v3048 = vpop.f32.mrf.mxu0
  %v3049 = vadd.f32 0.0, %v3048
  %v3050 = vpop.f32.mrf.mxu0
  %3051 = vdwg.mxu0
  %3052 = vrot.lane.b32.xlu0 %v2785, 64
  %v3053 = vpop.permute.xlu0 %3052
  %v3056 = vsel %vm209, %v2975, 0
  %3058 = vmatprep.subr.mxu0 0.0
  %3059 = vmatpush1.msra.mxu0 0.0
  %3060 = vmatprep.subr.mxu0 0.0
  %3061 = vmatpush1.msra.mxu0 0.0
  %3062 = vmatprep.subr.mxu0 0.0
  %3063 = vmatpush1.msra.mxu0 0.0
  %3064 = vmatprep.subr.mxu0 0.0
  %3065 = vmatpush1.msra.mxu0 0.0
  %3066 = vmatprep.subr.mxu0 0.0
  %3067 = vmatpush1.msra.mxu0 0.0
  %3068 = vmatprep.subr.mxu0 0.0
  %3069 = vmatpush1.msra.mxu0 0.0
  %3070 = vmatprep.subr.mxu0 0.0
  %3071 = vmatpush1.msra.mxu0 0.0
  %3072 = vmatprep.subr.mxu0 0.0
  %3073 = vmatpush1.msra.mxu0 0.0
  %3074 = vmatprep.subr.mxu0 0.0
  %3075 = vmatpush1.msra.mxu0 0.0
  %3076 = vmatprep.subr.mxu0 0.0
  %3077 = vmatpush1.msra.mxu0 0.0
  %3078 = vmatprep.subr.mxu0 0.0
  %3079 = vmatpush1.msra.mxu0 0.0
  %3080 = vmatprep.subr.mxu0 0.0
  %3081 = vmatpush1.msra.mxu0 0.0
  %3082 = vmatprep.subr.mxu0 0.0
  %3083 = vmatpush1.msra.mxu0 0.0
  %3084 = vmatprep.subr.mxu0 0.0
  %3085 = vmatpush1.msra.mxu0 0.0
  %3086 = vmatprep.subr.mxu0 0.0
  %3087 = vmatpush1.msra.mxu0 0.0
  %3088 = vmatprep.subr.mxu0 0.0
  %3089 = vmatpush1.msra.mxu0 %v3053
  %3090 = vmatprep.subr.mxu0 0.0
  %3091 = vmatpush2.msra.mxu0 0.0
  %3092 = vmatprep.subr.mxu0 0.0
  %3093 = vmatpush2.msra.mxu0 0.0
  %3094 = vmatprep.subr.mxu0 0.0
  %3095 = vmatpush2.msra.mxu0 0.0
  %3096 = vmatprep.subr.mxu0 0.0
  %3097 = vmatpush2.msra.mxu0 0.0
  %3098 = vmatprep.subr.mxu0 0.0
  %3099 = vmatpush2.msra.mxu0 0.0
  %3100 = vmatprep.subr.mxu0 0.0
  %3101 = vmatpush2.msra.mxu0 0.0
  %3102 = vmatprep.subr.mxu0 0.0
  %3103 = vmatpush2.msra.mxu0 0.0
  %3104 = vmatprep.subr.mxu0 0.0
  %3105 = vmatpush2.msra.mxu0 0.0
  %3106 = vmatprep.subr.mxu0 0.0
  %3107 = vmatpush2.msra.mxu0 0.0
  %3108 = vmatprep.subr.mxu0 0.0
  %3109 = vmatpush2.msra.mxu0 0.0
  %3110 = vmatprep.subr.mxu0 0.0
  %3111 = vmatpush2.msra.mxu0 0.0
  %3112 = vmatprep.subr.mxu0 0.0
  %3113 = vmatpush2.msra.mxu0 0.0
  %3114 = vmatprep.subr.mxu0 0.0
  %3115 = vmatpush2.msra.mxu0 0.0
  %3116 = vmatprep.subr.mxu0 0.0
  %3117 = vmatpush2.msra.mxu0 0.0
  %3118 = vmatprep.subr.mxu0 0.0
  %3119 = vmatpush2.msra.mxu0 0.0
  %3120 = vmatprep.subr.mxu0 0.0
  %3121 = vmatpush2.msra.mxu0 0.0
  %3122 = vmatprep.mubr.f32.mxu0 0.0
  %3123 = vmatmul.mubr.f32.gmra.mxu0 %v3056
  %v3124 = vpop.f32.mrf.mxu0
  %v3125 = vadd.f32 0.0, %v3124
  %v3126 = vpop.f32.mrf.mxu0
  %3127 = vdwg.mxu0
  %3128 = vrot.lane.b32.xlu0 %v2780, 120
  %v3129 = vpop.permute.xlu0 %3128
  %3130 = vrot.lane.b32.xlu0 %v2780, 88
  %v3131 = vpop.permute.xlu0 %3130
  %v3132 = vsel %vm209, %v3129, 0
  %v3134 = vsel %vm209, %v3131, 0
  %3136 = vmatprep.subr.mxu0 0.0
  %3137 = vmatpush1.xpose.msra.mxu0 0.0
  %3138 = vmatprep.subr.mxu0 0.0
  %3139 = vmatpush1.xpose.msra.mxu0 0.0
  %3140 = vmatprep.subr.mxu0 0.0
  %3141 = vmatpush1.xpose.msra.mxu0 0.0
  %3142 = vmatprep.subr.mxu0 0.0
  %3143 = vmatpush1.xpose.msra.mxu0 0.0
  %3144 = vmatprep.subr.mxu0 0.0
  %3145 = vmatpush1.xpose.msra.mxu0 0.0
  %3146 = vmatprep.subr.mxu0 0.0
  %3147 = vmatpush1.xpose.msra.mxu0 0.0
  %3148 = vmatprep.subr.mxu0 0.0
  %3149 = vmatpush1.xpose.msra.mxu0 0.0
  %3150 = vmatprep.subr.mxu0 0.0
  %3151 = vmatpush1.xpose.msra.mxu0 0.0
  %3152 = vmatprep.subr.mxu0 0.0
  %3153 = vmatpush1.xpose.msra.mxu0 0.0
  %3154 = vmatprep.subr.mxu0 0.0
  %3155 = vmatpush1.xpose.msra.mxu0 0.0
  %3156 = vmatprep.subr.mxu0 0.0
  %3157 = vmatpush1.xpose.msra.mxu0 0.0
  %3158 = vmatprep.subr.mxu0 0.0
  %3159 = vmatpush1.xpose.msra.mxu0 0.0
  %3160 = vmatprep.subr.mxu0 0.0
  %3161 = vmatpush1.xpose.msra.mxu0 0.0
  %3162 = vmatprep.subr.mxu0 0.0
  %3163 = vmatpush1.xpose.msra.mxu0 0.0
  %3164 = vmatprep.subr.mxu0 0.0
  %3165 = vmatpush1.xpose.msra.mxu0 0.0
  %3166 = vmatprep.subr.mxu0 0.0
  %3167 = vmatpush1.xpose.msra.mxu0 %v3134
  %3168 = vmatprep.subr.mxu0 0.0
  %3169 = vmatpush2.xpose.msra.mxu0 0.0
  %3170 = vmatprep.subr.mxu0 0.0
  %3171 = vmatpush2.xpose.msra.mxu0 0.0
  %3172 = vmatprep.subr.mxu0 0.0
  %3173 = vmatpush2.xpose.msra.mxu0 0.0
  %3174 = vmatprep.subr.mxu0 0.0
  %3175 = vmatpush2.xpose.msra.mxu0 0.0
  %3176 = vmatprep.subr.mxu0 0.0
  %3177 = vmatpush2.xpose.msra.mxu0 0.0
  %3178 = vmatprep.subr.mxu0 0.0
  %3179 = vmatpush2.xpose.msra.mxu0 0.0
  %3180 = vmatprep.subr.mxu0 0.0
  %3181 = vmatpush2.xpose.msra.mxu0 0.0
  %3182 = vmatprep.subr.mxu0 0.0
  %3183 = vmatpush2.xpose.msra.mxu0 0.0
  %3184 = vmatprep.subr.mxu0 0.0
  %3185 = vmatpush2.xpose.msra.mxu0 0.0
  %3186 = vmatprep.subr.mxu0 0.0
  %3187 = vmatpush2.xpose.msra.mxu0 0.0
  %3188 = vmatprep.subr.mxu0 0.0
  %3189 = vmatpush2.xpose.msra.mxu0 0.0
  %3190 = vmatprep.subr.mxu0 0.0
  %3191 = vmatpush2.xpose.msra.mxu0 0.0
  %3192 = vmatprep.subr.mxu0 0.0
  %3193 = vmatpush2.xpose.msra.mxu0 0.0
  %3194 = vmatprep.subr.mxu0 0.0
  %3195 = vmatpush2.xpose.msra.mxu0 0.0
  %3196 = vmatprep.subr.mxu0 0.0
  %3197 = vmatpush2.xpose.msra.mxu0 0.0
  %3198 = vmatprep.subr.mxu0 0.0
  %3199 = vmatpush2.xpose.msra.mxu0 0.0
  %3200 = vmatprep.mubr.f32.mxu0 0.0
  %3201 = vmatmul.mubr.f32.gmra.mxu0 %v3132
  %v3202 = vpop.f32.mrf.mxu0
  %v3203 = vadd.f32 0.0, %v3202
  %v3204 = vpop.f32.mrf.mxu0
  %3205 = vdwg.mxu0
  %3206 = vrot.lane.b32.xlu0 %v2785, 120
  %v3207 = vpop.permute.xlu0 %3206
  %3208 = vrot.lane.b32.xlu0 %v2785, 88
  %v3209 = vpop.permute.xlu0 %3208
  %v3210 = vsel %vm209, %v3207, 0
  %v3212 = vsel %vm209, %v3209, 0
  %3214 = vmatprep.subr.mxu0 0.0
  %3215 = vmatpush1.xpose.msra.mxu0 0.0
  %3216 = vmatprep.subr.mxu0 0.0
  %3217 = vmatpush1.xpose.msra.mxu0 0.0
  %3218 = vmatprep.subr.mxu0 0.0
  %3219 = vmatpush1.xpose.msra.mxu0 0.0
  %3220 = vmatprep.subr.mxu0 0.0
  %3221 = vmatpush1.xpose.msra.mxu0 0.0
  %3222 = vmatprep.subr.mxu0 0.0
  %3223 = vmatpush1.xpose.msra.mxu0 0.0
  %3224 = vmatprep.subr.mxu0 0.0
  %3225 = vmatpush1.xpose.msra.mxu0 0.0
  %3226 = vmatprep.subr.mxu0 0.0
  %3227 = vmatpush1.xpose.msra.mxu0 0.0
  %3228 = vmatprep.subr.mxu0 0.0
  %3229 = vmatpush1.xpose.msra.mxu0 0.0
  %3230 = vmatprep.subr.mxu0 0.0
  %3231 = vmatpush1.xpose.msra.mxu0 0.0
  %3232 = vmatprep.subr.mxu0 0.0
  %3233 = vmatpush1.xpose.msra.mxu0 0.0
  %3234 = vmatprep.subr.mxu0 0.0
  %3235 = vmatpush1.xpose.msra.mxu0 0.0
  %3236 = vmatprep.subr.mxu0 0.0
  %3237 = vmatpush1.xpose.msra.mxu0 0.0
  %3238 = vmatprep.subr.mxu0 0.0
  %3239 = vmatpush1.xpose.msra.mxu0 0.0
  %3240 = vmatprep.subr.mxu0 0.0
  %3241 = vmatpush1.xpose.msra.mxu0 0.0
  %3242 = vmatprep.subr.mxu0 0.0
  %3243 = vmatpush1.xpose.msra.mxu0 0.0
  %3244 = vmatprep.subr.mxu0 0.0
  %3245 = vmatpush1.xpose.msra.mxu0 %v3212
  %3246 = vmatprep.subr.mxu0 0.0
  %3247 = vmatpush2.xpose.msra.mxu0 0.0
  %3248 = vmatprep.subr.mxu0 0.0
  %3249 = vmatpush2.xpose.msra.mxu0 0.0
  %3250 = vmatprep.subr.mxu0 0.0
  %3251 = vmatpush2.xpose.msra.mxu0 0.0
  %3252 = vmatprep.subr.mxu0 0.0
  %3253 = vmatpush2.xpose.msra.mxu0 0.0
  %3254 = vmatprep.subr.mxu0 0.0
  %3255 = vmatpush2.xpose.msra.mxu0 0.0
  %3256 = vmatprep.subr.mxu0 0.0
  %3257 = vmatpush2.xpose.msra.mxu0 0.0
  %3258 = vmatprep.subr.mxu0 0.0
  %3259 = vmatpush2.xpose.msra.mxu0 0.0
  %3260 = vmatprep.subr.mxu0 0.0
  %3261 = vmatpush2.xpose.msra.mxu0 0.0
  %3262 = vmatprep.subr.mxu0 0.0
  %3263 = vmatpush2.xpose.msra.mxu0 0.0
  %3264 = vmatprep.subr.mxu0 0.0
  %3265 = vmatpush2.xpose.msra.mxu0 0.0
  %3266 = vmatprep.subr.mxu0 0.0
  %3267 = vmatpush2.xpose.msra.mxu0 0.0
  %3268 = vmatprep.subr.mxu0 0.0
  %3269 = vmatpush2.xpose.msra.mxu0 0.0
  %3270 = vmatprep.subr.mxu0 0.0
  %3271 = vmatpush2.xpose.msra.mxu0 0.0
  %3272 = vmatprep.subr.mxu0 0.0
  %3273 = vmatpush2.xpose.msra.mxu0 0.0
  %3274 = vmatprep.subr.mxu0 0.0
  %3275 = vmatpush2.xpose.msra.mxu0 0.0
  %3276 = vmatprep.subr.mxu0 0.0
  %3277 = vmatpush2.xpose.msra.mxu0 0.0
  %3278 = vmatprep.mubr.f32.mxu0 0.0
  %3279 = vmatmul.mubr.f32.gmra.mxu0 %v3210
  %v3280 = vpop.f32.mrf.mxu0
  %v3281 = vadd.f32 0.0, %v3280
  %v3282 = vpop.f32.mrf.mxu0
  %3283 = vdwg.mxu0
  %v3284 = vmul.f32 %v3203, 0.35355338
  %v3285 = vmul.f32 %v3281, 0.35355338
  %v3286 = vadd.f32 %v3284, %v2795
  %v3287 = vadd.f32 %v3285, %v2795
  %v3288 = vsel %vm209, %v3286, -inf
  %3289 = vmax.xlane.f32.xlu0 %v3288
  %v3290 = vpop.xlane.xlu0 %3289
  %v3291 = vsel %vm209, %v3287, -inf
  %3292 = vmax.xlane.f32.xlu0 %v3291
  %v3293 = vpop.xlane.xlu0 %3292
  %v3294 = vsub.f32 %v3286, %v3290
  %v3295 = vsub.f32 %v3287, %v3293
  %v3296 = vmul.f32 %v3294, 1.442695
  %v3297 = vpow.pop %v3296
  %v3298 = vmul.f32 %v3295, 1.442695
  %v3299 = vpow.pop %v3298
  %v3300 = vsel %vm209, %v3297, 0.0
  %3301 = vadd.xlane.f32.xlu0 %v3300
  %v3302 = vpop.xlane.xlu0 %3301
  %v3303 = vsel %vm209, %v3299, 0.0
  %3304 = vadd.xlane.f32.xlu0 %v3303
  %v3305 = vpop.xlane.xlu0 %3304
  %v3306 = vrcp.pop %v3302
  %v3307 = vrcp.pop %v3305
  %v3308 = vmul.f32 %v3297, %v3306
  %v3309 = vmul.f32 %v3299, %v3307
  %3310 = vrot.lane.b32.xlu0 %v2780, 56
  %v3311 = vpop.permute.xlu0 %3310
  %v3314 = vsel %vm209, %v3308, 0
  %3316 = vmatprep.subr.mxu0 0.0
  %3317 = vmatpush1.msra.mxu0 0.0
  %3318 = vmatprep.subr.mxu0 0.0
  %3319 = vmatpush1.msra.mxu0 0.0
  %3320 = vmatprep.subr.mxu0 0.0
  %3321 = vmatpush1.msra.mxu0 0.0
  %3322 = vmatprep.subr.mxu0 0.0
  %3323 = vmatpush1.msra.mxu0 0.0
  %3324 = vmatprep.subr.mxu0 0.0
  %3325 = vmatpush1.msra.mxu0 0.0
  %3326 = vmatprep.subr.mxu0 0.0
  %3327 = vmatpush1.msra.mxu0 0.0
  %3328 = vmatprep.subr.mxu0 0.0
  %3329 = vmatpush1.msra.mxu0 0.0
  %3330 = vmatprep.subr.mxu0 0.0
  %3331 = vmatpush1.msra.mxu0 0.0
  %3332 = vmatprep.subr.mxu0 0.0
  %3333 = vmatpush1.msra.mxu0 0.0
  %3334 = vmatprep.subr.mxu0 0.0
  %3335 = vmatpush1.msra.mxu0 0.0
  %3336 = vmatprep.subr.mxu0 0.0
  %3337 = vmatpush1.msra.mxu0 0.0
  %3338 = vmatprep.subr.mxu0 0.0
  %3339 = vmatpush1.msra.mxu0 0.0
  %3340 = vmatprep.subr.mxu0 0.0
  %3341 = vmatpush1.msra.mxu0 0.0
  %3342 = vmatprep.subr.mxu0 0.0
  %3343 = vmatpush1.msra.mxu0 0.0
  %3344 = vmatprep.subr.mxu0 0.0
  %3345 = vmatpush1.msra.mxu0 0.0
  %3346 = vmatprep.subr.mxu0 0.0
  %3347 = vmatpush1.msra.mxu0 %v3311
  %3348 = vmatprep.subr.mxu0 0.0
  %3349 = vmatpush2.msra.mxu0 0.0
  %3350 = vmatprep.subr.mxu0 0.0
  %3351 = vmatpush2.msra.mxu0 0.0
  %3352 = vmatprep.subr.mxu0 0.0
  %3353 = vmatpush2.msra.mxu0 0.0
  %3354 = vmatprep.subr.mxu0 0.0
  %3355 = vmatpush2.msra.mxu0 0.0
  %3356 = vmatprep.subr.mxu0 0.0
  %3357 = vmatpush2.msra.mxu0 0.0
  %3358 = vmatprep.subr.mxu0 0.0
  %3359 = vmatpush2.msra.mxu0 0.0
  %3360 = vmatprep.subr.mxu0 0.0
  %3361 = vmatpush2.msra.mxu0 0.0
  %3362 = vmatprep.subr.mxu0 0.0
  %3363 = vmatpush2.msra.mxu0 0.0
  %3364 = vmatprep.subr.mxu0 0.0
  %3365 = vmatpush2.msra.mxu0 0.0
  %3366 = vmatprep.subr.mxu0 0.0
  %3367 = vmatpush2.msra.mxu0 0.0
  %3368 = vmatprep.subr.mxu0 0.0
  %3369 = vmatpush2.msra.mxu0 0.0
  %3370 = vmatprep.subr.mxu0 0.0
  %3371 = vmatpush2.msra.mxu0 0.0
  %3372 = vmatprep.subr.mxu0 0.0
  %3373 = vmatpush2.msra.mxu0 0.0
  %3374 = vmatprep.subr.mxu0 0.0
  %3375 = vmatpush2.msra.mxu0 0.0
  %3376 = vmatprep.subr.mxu0 0.0
  %3377 = vmatpush2.msra.mxu0 0.0
  %3378 = vmatprep.subr.mxu0 0.0
  %3379 = vmatpush2.msra.mxu0 0.0
  %3380 = vmatprep.mubr.f32.mxu0 0.0
  %3381 = vmatmul.mubr.f32.gmra.mxu0 %v3314
  %v3382 = vpop.f32.mrf.mxu0
  %v3383 = vadd.f32 0.0, %v3382
  %v3384 = vpop.f32.mrf.mxu0
  %3385 = vdwg.mxu0
  %3386 = vrot.lane.b32.xlu0 %v2785, 56
  %v3387 = vpop.permute.xlu0 %3386
  %v3390 = vsel %vm209, %v3309, 0
  %3392 = vmatprep.subr.mxu0 0.0
  %3393 = vmatpush1.msra.mxu0 0.0
  %3394 = vmatprep.subr.mxu0 0.0
  %3395 = vmatpush1.msra.mxu0 0.0
  %3396 = vmatprep.subr.mxu0 0.0
  %3397 = vmatpush1.msra.mxu0 0.0
  %3398 = vmatprep.subr.mxu0 0.0
  %3399 = vmatpush1.msra.mxu0 0.0
  %3400 = vmatprep.subr.mxu0 0.0
  %3401 = vmatpush1.msra.mxu0 0.0
  %3402 = vmatprep.subr.mxu0 0.0
  %3403 = vmatpush1.msra.mxu0 0.0
  %3404 = vmatprep.subr.mxu0 0.0
  %3405 = vmatpush1.msra.mxu0 0.0
  %3406 = vmatprep.subr.mxu0 0.0
  %3407 = vmatpush1.msra.mxu0 0.0
  %3408 = vmatprep.subr.mxu0 0.0
  %3409 = vmatpush1.msra.mxu0 0.0
  %3410 = vmatprep.subr.mxu0 0.0
  %3411 = vmatpush1.msra.mxu0 0.0
  %3412 = vmatprep.subr.mxu0 0.0
  %3413 = vmatpush1.msra.mxu0 0.0
  %3414 = vmatprep.subr.mxu0 0.0
  %3415 = vmatpush1.msra.mxu0 0.0
  %3416 = vmatprep.subr.mxu0 0.0
  %3417 = vmatpush1.msra.mxu0 0.0
  %3418 = vmatprep.subr.mxu0 0.0
  %3419 = vmatpush1.msra.mxu0 0.0
  %3420 = vmatprep.subr.mxu0 0.0
  %3421 = vmatpush1.msra.mxu0 0.0
  %3422 = vmatprep.subr.mxu0 0.0
  %3423 = vmatpush1.msra.mxu0 %v3387
  %3424 = vmatprep.subr.mxu0 0.0
  %3425 = vmatpush2.msra.mxu0 0.0
  %3426 = vmatprep.subr.mxu0 0.0
  %3427 = vmatpush2.msra.mxu0 0.0
  %3428 = vmatprep.subr.mxu0 0.0
  %3429 = vmatpush2.msra.mxu0 0.0
  %3430 = vmatprep.subr.mxu0 0.0
  %3431 = vmatpush2.msra.mxu0 0.0
  %3432 = vmatprep.subr.mxu0 0.0
  %3433 = vmatpush2.msra.mxu0 0.0
  %3434 = vmatprep.subr.mxu0 0.0
  %3435 = vmatpush2.msra.mxu0 0.0
  %3436 = vmatprep.subr.mxu0 0.0
  %3437 = vmatpush2.msra.mxu0 0.0
  %3438 = vmatprep.subr.mxu0 0.0
  %3439 = vmatpush2.msra.mxu0 0.0
  %3440 = vmatprep.subr.mxu0 0.0
  %3441 = vmatpush2.msra.mxu0 0.0
  %3442 = vmatprep.subr.mxu0 0.0
  %3443 = vmatpush2.msra.mxu0 0.0
  %3444 = vmatprep.subr.mxu0 0.0
  %3445 = vmatpush2.msra.mxu0 0.0
  %3446 = vmatprep.subr.mxu0 0.0
  %3447 = vmatpush2.msra.mxu0 0.0
  %3448 = vmatprep.subr.mxu0 0.0
  %3449 = vmatpush2.msra.mxu0 0.0
  %3450 = vmatprep.subr.mxu0 0.0
  %3451 = vmatpush2.msra.mxu0 0.0
  %3452 = vmatprep.subr.mxu0 0.0
  %3453 = vmatpush2.msra.mxu0 0.0
  %3454 = vmatprep.subr.mxu0 0.0
  %3455 = vmatpush2.msra.mxu0 0.0
  %3456 = vmatprep.mubr.f32.mxu0 0.0
  %3457 = vmatmul.mubr.f32.gmra.mxu0 %v3390
  %v3458 = vpop.f32.mrf.mxu0
  %v3459 = vadd.f32 0.0, %v3458
  %v3460 = vpop.f32.mrf.mxu0
  %3461 = vdwg.mxu0
  %v3463 = vsel %vm209, %v3383, 0
  %v3466 = vsel %vm209, %v3459, 0
  %3468 = vmatprep.subr.mxu0 0.0
  %3469 = vmatpush1.msra.mxu0 0.0
  %3470 = vmatprep.subr.mxu0 0.0
  %3471 = vmatpush1.msra.mxu0 0.0
  %3472 = vmatprep.subr.mxu0 0.0
  %3473 = vmatpush1.msra.mxu0 0.0
  %3474 = vmatprep.subr.mxu0 0.0
  %3475 = vmatpush1.msra.mxu0 0.0
  %3476 = vmatprep.subr.mxu0 0.0
  %3477 = vmatpush1.msra.mxu0 0.0
  %3478 = vmatprep.subr.mxu0 0.0
  %3479 = vmatpush1.msra.mxu0 0.0
  %3480 = vmatprep.subr.mxu0 0.0
  %3481 = vmatpush1.msra.mxu0 0.0
  %3482 = vmatprep.subr.mxu0 0.0
  %3483 = vmatpush1.msra.mxu0 0.0
  %3484 = vmatprep.subr.mxu0 0.0
  %3485 = vmatpush1.msra.mxu0 0.0
  %3486 = vmatprep.subr.mxu0 0.0
  %3487 = vmatpush1.msra.mxu0 0.0
  %3488 = vmatprep.subr.mxu0 0.0
  %3489 = vmatpush1.msra.mxu0 0.0
  %3490 = vmatprep.subr.mxu0 0.0
  %3491 = vmatpush1.msra.mxu0 0.0
  %3492 = vmatprep.subr.mxu0 0.0
  %3493 = vmatpush1.msra.mxu0 0.0
  %3494 = vmatprep.subr.mxu0 0.0
  %3495 = vmatpush1.msra.mxu0 0.0
  %3496 = vmatprep.subr.mxu0 0.0
  %3497 = vmatpush1.msra.mxu0 0.0
  %3498 = vmatprep.subr.mxu0 0.0
  %3499 = vmatpush1.msra.mxu0 %v2789
  %3500 = vmatprep.subr.mxu0 0.0
  %3501 = vmatpush2.msra.mxu0 0.0
  %3502 = vmatprep.subr.mxu0 0.0
  %3503 = vmatpush2.msra.mxu0 0.0
  %3504 = vmatprep.subr.mxu0 0.0
  %3505 = vmatpush2.msra.mxu0 0.0
  %3506 = vmatprep.subr.mxu0 0.0
  %3507 = vmatpush2.msra.mxu0 0.0
  %3508 = vmatprep.subr.mxu0 0.0
  %3509 = vmatpush2.msra.mxu0 0.0
  %3510 = vmatprep.subr.mxu0 0.0
  %3511 = vmatpush2.msra.mxu0 0.0
  %3512 = vmatprep.subr.mxu0 0.0
  %3513 = vmatpush2.msra.mxu0 0.0
  %3514 = vmatprep.subr.mxu0 0.0
  %3515 = vmatpush2.msra.mxu0 0.0
  %3516 = vmatprep.subr.mxu0 0.0
  %3517 = vmatpush2.msra.mxu0 0.0
  %3518 = vmatprep.subr.mxu0 0.0
  %3519 = vmatpush2.msra.mxu0 0.0
  %3520 = vmatprep.subr.mxu0 0.0
  %3521 = vmatpush2.msra.mxu0 0.0
  %3522 = vmatprep.subr.mxu0 0.0
  %3523 = vmatpush2.msra.mxu0 0.0
  %3524 = vmatprep.subr.mxu0 0.0
  %3525 = vmatpush2.msra.mxu0 0.0
  %3526 = vmatprep.subr.mxu0 0.0
  %3527 = vmatpush2.msra.mxu0 0.0
  %3528 = vmatprep.subr.mxu0 0.0
  %3529 = vmatpush2.msra.mxu0 0.0
  %3530 = vmatprep.subr.mxu0 0.0
  %3531 = vmatpush2.msra.mxu0 0.0
  %3532 = vmatprep.mubr.f32.mxu0 0.0
  %3533 = vmatmul.mubr.f32.gmra.mxu0 %v3463
  %v3534 = vpop.f32.mrf.mxu0
  %v3535 = vadd.f32 0.0, %v3534
  %v3536 = vpop.f32.mrf.mxu0
  %3537 = vmatprep.mubr.f32.mxu0 0.0
  %3538 = vmatmul.mubr.f32.gmra.mxu0 %v3466
  %v3539 = vpop.f32.mrf.mxu0
  %v3540 = vadd.f32 0.0, %v3539
  %v3541 = vpop.f32.mrf.mxu0
  %3542 = vdwg.mxu0
  %v3544 = vsel %vm209, %v3049, 0
  %v3547 = vsel %vm209, %v3125, 0
  %3549 = vmatprep.subr.mxu0 0.0
  %3550 = vmatpush1.msra.mxu0 0.0
  %3551 = vmatprep.subr.mxu0 0.0
  %3552 = vmatpush1.msra.mxu0 0.0
  %3553 = vmatprep.subr.mxu0 0.0
  %3554 = vmatpush1.msra.mxu0 0.0
  %3555 = vmatprep.subr.mxu0 0.0
  %3556 = vmatpush1.msra.mxu0 0.0
  %3557 = vmatprep.subr.mxu0 0.0
  %3558 = vmatpush1.msra.mxu0 0.0
  %3559 = vmatprep.subr.mxu0 0.0
  %3560 = vmatpush1.msra.mxu0 0.0
  %3561 = vmatprep.subr.mxu0 0.0
  %3562 = vmatpush1.msra.mxu0 0.0
  %3563 = vmatprep.subr.mxu0 0.0
  %3564 = vmatpush1.msra.mxu0 0.0
  %3565 = vmatprep.subr.mxu0 0.0
  %3566 = vmatpush1.msra.mxu0 0.0
  %3567 = vmatprep.subr.mxu0 0.0
  %3568 = vmatpush1.msra.mxu0 0.0
  %3569 = vmatprep.subr.mxu0 0.0
  %3570 = vmatpush1.msra.mxu0 0.0
  %3571 = vmatprep.subr.mxu0 0.0
  %3572 = vmatpush1.msra.mxu0 0.0
  %3573 = vmatprep.subr.mxu0 0.0
  %3574 = vmatpush1.msra.mxu0 0.0
  %3575 = vmatprep.subr.mxu0 0.0
  %3576 = vmatpush1.msra.mxu0 0.0
  %3577 = vmatprep.subr.mxu0 0.0
  %3578 = vmatpush1.msra.mxu0 0.0
  %3579 = vmatprep.subr.mxu0 0.0
  %3580 = vmatpush1.msra.mxu0 %v2788
  %3581 = vmatprep.subr.mxu0 0.0
  %3582 = vmatpush2.msra.mxu0 0.0
  %3583 = vmatprep.subr.mxu0 0.0
  %3584 = vmatpush2.msra.mxu0 0.0
  %3585 = vmatprep.subr.mxu0 0.0
  %3586 = vmatpush2.msra.mxu0 0.0
  %3587 = vmatprep.subr.mxu0 0.0
  %3588 = vmatpush2.msra.mxu0 0.0
  %3589 = vmatprep.subr.mxu0 0.0
  %3590 = vmatpush2.msra.mxu0 0.0
  %3591 = vmatprep.subr.mxu0 0.0
  %3592 = vmatpush2.msra.mxu0 0.0
  %3593 = vmatprep.subr.mxu0 0.0
  %3594 = vmatpush2.msra.mxu0 0.0
  %3595 = vmatprep.subr.mxu0 0.0
  %3596 = vmatpush2.msra.mxu0 0.0
  %3597 = vmatprep.subr.mxu0 0.0
  %3598 = vmatpush2.msra.mxu0 0.0
  %3599 = vmatprep.subr.mxu0 0.0
  %3600 = vmatpush2.msra.mxu0 0.0
  %3601 = vmatprep.subr.mxu0 0.0
  %3602 = vmatpush2.msra.mxu0 0.0
  %3603 = vmatprep.subr.mxu0 0.0
  %3604 = vmatpush2.msra.mxu0 0.0
  %3605 = vmatprep.subr.mxu0 0.0
  %3606 = vmatpush2.msra.mxu0 0.0
  %3607 = vmatprep.subr.mxu0 0.0
  %3608 = vmatpush2.msra.mxu0 0.0
  %3609 = vmatprep.subr.mxu0 0.0
  %3610 = vmatpush2.msra.mxu0 0.0
  %3611 = vmatprep.subr.mxu0 0.0
  %3612 = vmatpush2.msra.mxu0 0.0
  %3613 = vmatprep.mubr.f32.mxu0 0.0
  %3614 = vmatmul.mubr.f32.gmra.mxu0 %v3544
  %v3615 = vpop.f32.mrf.mxu0
  %v3616 = vadd.f32 %v3535, %v3615
  %v3617 = vpop.f32.mrf.mxu0
  %3618 = vmatprep.mubr.f32.mxu0 0.0
  %3619 = vmatmul.mubr.f32.gmra.mxu0 %v3547
  %v3620 = vpop.f32.mrf.mxu0
  %v3621 = vadd.f32 %v3540, %v3620
  %v3622 = vpop.f32.mrf.mxu0
  %3623 = vdwg.mxu0
  %3624 = vrot.lane.b32.xlu0 %v2780, 112
  %v3625 = vpop.permute.xlu0 %3624
  %3626 = vrot.lane.b32.xlu0 %v2780, 80
  %v3627 = vpop.permute.xlu0 %3626
  %v3628 = vsel %vm209, %v3625, 0
  %v3630 = vsel %vm209, %v3627, 0
  %3632 = vmatprep.subr.mxu0 0.0
  %3633 = vmatpush1.xpose.msra.mxu0 0.0
  %3634 = vmatprep.subr.mxu0 0.0
  %3635 = vmatpush1.xpose.msra.mxu0 0.0
  %3636 = vmatprep.subr.mxu0 0.0
  %3637 = vmatpush1.xpose.msra.mxu0 0.0
  %3638 = vmatprep.subr.mxu0 0.0
  %3639 = vmatpush1.xpose.msra.mxu0 0.0
  %3640 = vmatprep.subr.mxu0 0.0
  %3641 = vmatpush1.xpose.msra.mxu0 0.0
  %3642 = vmatprep.subr.mxu0 0.0
  %3643 = vmatpush1.xpose.msra.mxu0 0.0
  %3644 = vmatprep.subr.mxu0 0.0
  %3645 = vmatpush1.xpose.msra.mxu0 0.0
  %3646 = vmatprep.subr.mxu0 0.0
  %3647 = vmatpush1.xpose.msra.mxu0 0.0
  %3648 = vmatprep.subr.mxu0 0.0
  %3649 = vmatpush1.xpose.msra.mxu0 0.0
  %3650 = vmatprep.subr.mxu0 0.0
  %3651 = vmatpush1.xpose.msra.mxu0 0.0
  %3652 = vmatprep.subr.mxu0 0.0
  %3653 = vmatpush1.xpose.msra.mxu0 0.0
  %3654 = vmatprep.subr.mxu0 0.0
  %3655 = vmatpush1.xpose.msra.mxu0 0.0
  %3656 = vmatprep.subr.mxu0 0.0
  %3657 = vmatpush1.xpose.msra.mxu0 0.0
  %3658 = vmatprep.subr.mxu0 0.0
  %3659 = vmatpush1.xpose.msra.mxu0 0.0
  %3660 = vmatprep.subr.mxu0 0.0
  %3661 = vmatpush1.xpose.msra.mxu0 0.0
  %3662 = vmatprep.subr.mxu0 0.0
  %3663 = vmatpush1.xpose.msra.mxu0 %v3630
  %3664 = vmatprep.subr.mxu0 0.0
  %3665 = vmatpush2.xpose.msra.mxu0 0.0
  %3666 = vmatprep.subr.mxu0 0.0
  %3667 = vmatpush2.xpose.msra.mxu0 0.0
  %3668 = vmatprep.subr.mxu0 0.0
  %3669 = vmatpush2.xpose.msra.mxu0 0.0
  %3670 = vmatprep.subr.mxu0 0.0
  %3671 = vmatpush2.xpose.msra.mxu0 0.0
  %3672 = vmatprep.subr.mxu0 0.0
  %3673 = vmatpush2.xpose.msra.mxu0 0.0
  %3674 = vmatprep.subr.mxu0 0.0
  %3675 = vmatpush2.xpose.msra.mxu0 0.0
  %3676 = vmatprep.subr.mxu0 0.0
  %3677 = vmatpush2.xpose.msra.mxu0 0.0
  %3678 = vmatprep.subr.mxu0 0.0
  %3679 = vmatpush2.xpose.msra.mxu0 0.0
  %3680 = vmatprep.subr.mxu0 0.0
  %3681 = vmatpush2.xpose.msra.mxu0 0.0
  %3682 = vmatprep.subr.mxu0 0.0
  %3683 = vmatpush2.xpose.msra.mxu0 0.0
  %3684 = vmatprep.subr.mxu0 0.0
  %3685 = vmatpush2.xpose.msra.mxu0 0.0
  %3686 = vmatprep.subr.mxu0 0.0
  %3687 = vmatpush2.xpose.msra.mxu0 0.0
  %3688 = vmatprep.subr.mxu0 0.0
  %3689 = vmatpush2.xpose.msra.mxu0 0.0
  %3690 = vmatprep.subr.mxu0 0.0
  %3691 = vmatpush2.xpose.msra.mxu0 0.0
  %3692 = vmatprep.subr.mxu0 0.0
  %3693 = vmatpush2.xpose.msra.mxu0 0.0
  %3694 = vmatprep.subr.mxu0 0.0
  %3695 = vmatpush2.xpose.msra.mxu0 0.0
  %3696 = vmatprep.mubr.f32.mxu0 0.0
  %3697 = vmatmul.mubr.f32.gmra.mxu0 %v3628
  %v3698 = vpop.f32.mrf.mxu0
  %v3699 = vadd.f32 0.0, %v3698
  %v3700 = vpop.f32.mrf.mxu0
  %3701 = vdwg.mxu0
  %3702 = vrot.lane.b32.xlu0 %v2785, 112
  %v3703 = vpop.permute.xlu0 %3702
  %3704 = vrot.lane.b32.xlu0 %v2785, 80
  %v3705 = vpop.permute.xlu0 %3704
  %v3706 = vsel %vm209, %v3703, 0
  %v3708 = vsel %vm209, %v3705, 0
  %3710 = vmatprep.subr.mxu0 0.0
  %3711 = vmatpush1.xpose.msra.mxu0 0.0
  %3712 = vmatprep.subr.mxu0 0.0
  %3713 = vmatpush1.xpose.msra.mxu0 0.0
  %3714 = vmatprep.subr.mxu0 0.0
  %3715 = vmatpush1.xpose.msra.mxu0 0.0
  %3716 = vmatprep.subr.mxu0 0.0
  %3717 = vmatpush1.xpose.msra.mxu0 0.0
  %3718 = vmatprep.subr.mxu0 0.0
  %3719 = vmatpush1.xpose.msra.mxu0 0.0
  %3720 = vmatprep.subr.mxu0 0.0
  %3721 = vmatpush1.xpose.msra.mxu0 0.0
  %3722 = vmatprep.subr.mxu0 0.0
  %3723 = vmatpush1.xpose.msra.mxu0 0.0
  %3724 = vmatprep.subr.mxu0 0.0
  %3725 = vmatpush1.xpose.msra.mxu0 0.0
  %3726 = vmatprep.subr.mxu0 0.0
  %3727 = vmatpush1.xpose.msra.mxu0 0.0
  %3728 = vmatprep.subr.mxu0 0.0
  %3729 = vmatpush1.xpose.msra.mxu0 0.0
  %3730 = vmatprep.subr.mxu0 0.0
  %3731 = vmatpush1.xpose.msra.mxu0 0.0
  %3732 = vmatprep.subr.mxu0 0.0
  %3733 = vmatpush1.xpose.msra.mxu0 0.0
  %3734 = vmatprep.subr.mxu0 0.0
  %3735 = vmatpush1.xpose.msra.mxu0 0.0
  %3736 = vmatprep.subr.mxu0 0.0
  %3737 = vmatpush1.xpose.msra.mxu0 0.0
  %3738 = vmatprep.subr.mxu0 0.0
  %3739 = vmatpush1.xpose.msra.mxu0 0.0
  %3740 = vmatprep.subr.mxu0 0.0
  %3741 = vmatpush1.xpose.msra.mxu0 %v3708
  %3742 = vmatprep.subr.mxu0 0.0
  %3743 = vmatpush2.xpose.msra.mxu0 0.0
  %3744 = vmatprep.subr.mxu0 0.0
  %3745 = vmatpush2.xpose.msra.mxu0 0.0
  %3746 = vmatprep.subr.mxu0 0.0
  %3747 = vmatpush2.xpose.msra.mxu0 0.0
  %3748 = vmatprep.subr.mxu0 0.0
  %3749 = vmatpush2.xpose.msra.mxu0 0.0
  %3750 = vmatprep.subr.mxu0 0.0
  %3751 = vmatpush2.xpose.msra.mxu0 0.0
  %3752 = vmatprep.subr.mxu0 0.0
  %3753 = vmatpush2.xpose.msra.mxu0 0.0
  %3754 = vmatprep.subr.mxu0 0.0
  %3755 = vmatpush2.xpose.msra.mxu0 0.0
  %3756 = vmatprep.subr.mxu0 0.0
  %3757 = vmatpush2.xpose.msra.mxu0 0.0
  %3758 = vmatprep.subr.mxu0 0.0
  %3759 = vmatpush2.xpose.msra.mxu0 0.0
  %3760 = vmatprep.subr.mxu0 0.0
  %3761 = vmatpush2.xpose.msra.mxu0 0.0
  %3762 = vmatprep.subr.mxu0 0.0
  %3763 = vmatpush2.xpose.msra.mxu0 0.0
  %3764 = vmatprep.subr.mxu0 0.0
  %3765 = vmatpush2.xpose.msra.mxu0 0.0
  %3766 = vmatprep.subr.mxu0 0.0
  %3767 = vmatpush2.xpose.msra.mxu0 0.0
  %3768 = vmatprep.subr.mxu0 0.0
  %3769 = vmatpush2.xpose.msra.mxu0 0.0
  %3770 = vmatprep.subr.mxu0 0.0
  %3771 = vmatpush2.xpose.msra.mxu0 0.0
  %3772 = vmatprep.subr.mxu0 0.0
  %3773 = vmatpush2.xpose.msra.mxu0 0.0
  %3774 = vmatprep.mubr.f32.mxu0 0.0
  %3775 = vmatmul.mubr.f32.gmra.mxu0 %v3706
  %v3776 = vpop.f32.mrf.mxu0
  %v3777 = vadd.f32 0.0, %v3776
  %v3778 = vpop.f32.mrf.mxu0
  %3779 = vdwg.mxu0
  %v3780 = vmul.f32 %v3699, 0.35355338
  %v3781 = vmul.f32 %v3777, 0.35355338
  %v3782 = vadd.f32 %v3780, %v2795
  %v3783 = vadd.f32 %v3781, %v2795
  %v3784 = vsel %vm209, %v3782, -inf
  %3785 = vmax.xlane.f32.xlu0 %v3784
  %v3786 = vpop.xlane.xlu0 %3785
  %v3787 = vsel %vm209, %v3783, -inf
  %3788 = vmax.xlane.f32.xlu0 %v3787
  %v3789 = vpop.xlane.xlu0 %3788
  %v3790 = vsub.f32 %v3782, %v3786
  %v3791 = vsub.f32 %v3783, %v3789
  %v3792 = vmul.f32 %v3790, 1.442695
  %v3793 = vpow.pop %v3792
  %v3794 = vmul.f32 %v3791, 1.442695
  %v3795 = vpow.pop %v3794
  %v3796 = vsel %vm209, %v3793, 0.0
  %3797 = vadd.xlane.f32.xlu0 %v3796
  %v3798 = vpop.xlane.xlu0 %3797
  %v3799 = vsel %vm209, %v3795, 0.0
  %3800 = vadd.xlane.f32.xlu0 %v3799
  %v3801 = vpop.xlane.xlu0 %3800
  %v3802 = vrcp.pop %v3798
  %v3803 = vrcp.pop %v3801
  %v3804 = vmul.f32 %v3793, %v3802
  %v3805 = vmul.f32 %v3795, %v3803
  %3806 = vrot.lane.b32.xlu0 %v2780, 48
  %v3807 = vpop.permute.xlu0 %3806
  %v3810 = vsel %vm209, %v3804, 0
  %3812 = vmatprep.subr.mxu0 0.0
  %3813 = vmatpush1.msra.mxu0 0.0
  %3814 = vmatprep.subr.mxu0 0.0
  %3815 = vmatpush1.msra.mxu0 0.0
  %3816 = vmatprep.subr.mxu0 0.0
  %3817 = vmatpush1.msra.mxu0 0.0
  %3818 = vmatprep.subr.mxu0 0.0
  %3819 = vmatpush1.msra.mxu0 0.0
  %3820 = vmatprep.subr.mxu0 0.0
  %3821 = vmatpush1.msra.mxu0 0.0
  %3822 = vmatprep.subr.mxu0 0.0
  %3823 = vmatpush1.msra.mxu0 0.0
  %3824 = vmatprep.subr.mxu0 0.0
  %3825 = vmatpush1.msra.mxu0 0.0
  %3826 = vmatprep.subr.mxu0 0.0
  %3827 = vmatpush1.msra.mxu0 0.0
  %3828 = vmatprep.subr.mxu0 0.0
  %3829 = vmatpush1.msra.mxu0 0.0
  %3830 = vmatprep.subr.mxu0 0.0
  %3831 = vmatpush1.msra.mxu0 0.0
  %3832 = vmatprep.subr.mxu0 0.0
  %3833 = vmatpush1.msra.mxu0 0.0
  %3834 = vmatprep.subr.mxu0 0.0
  %3835 = vmatpush1.msra.mxu0 0.0
  %3836 = vmatprep.subr.mxu0 0.0
  %3837 = vmatpush1.msra.mxu0 0.0
  %3838 = vmatprep.subr.mxu0 0.0
  %3839 = vmatpush1.msra.mxu0 0.0
  %3840 = vmatprep.subr.mxu0 0.0
  %3841 = vmatpush1.msra.mxu0 0.0
  %3842 = vmatprep.subr.mxu0 0.0
  %3843 = vmatpush1.msra.mxu0 %v3807
  %3844 = vmatprep.subr.mxu0 0.0
  %3845 = vmatpush2.msra.mxu0 0.0
  %3846 = vmatprep.subr.mxu0 0.0
  %3847 = vmatpush2.msra.mxu0 0.0
  %3848 = vmatprep.subr.mxu0 0.0
  %3849 = vmatpush2.msra.mxu0 0.0
  %3850 = vmatprep.subr.mxu0 0.0
  %3851 = vmatpush2.msra.mxu0 0.0
  %3852 = vmatprep.subr.mxu0 0.0
  %3853 = vmatpush2.msra.mxu0 0.0
  %3854 = vmatprep.subr.mxu0 0.0
  %3855 = vmatpush2.msra.mxu0 0.0
  %3856 = vmatprep.subr.mxu0 0.0
  %3857 = vmatpush2.msra.mxu0 0.0
  %3858 = vmatprep.subr.mxu0 0.0
  %3859 = vmatpush2.msra.mxu0 0.0
  %3860 = vmatprep.subr.mxu0 0.0
  %3861 = vmatpush2.msra.mxu0 0.0
  %3862 = vmatprep.subr.mxu0 0.0
  %3863 = vmatpush2.msra.mxu0 0.0
  %3864 = vmatprep.subr.mxu0 0.0
  %3865 = vmatpush2.msra.mxu0 0.0
  %3866 = vmatprep.subr.mxu0 0.0
  %3867 = vmatpush2.msra.mxu0 0.0
  %3868 = vmatprep.subr.mxu0 0.0
  %3869 = vmatpush2.msra.mxu0 0.0
  %3870 = vmatprep.subr.mxu0 0.0
  %3871 = vmatpush2.msra.mxu0 0.0
  %3872 = vmatprep.subr.mxu0 0.0
  %3873 = vmatpush2.msra.mxu0 0.0
  %3874 = vmatprep.subr.mxu0 0.0
  %3875 = vmatpush2.msra.mxu0 0.0
  %3876 = vmatprep.mubr.f32.mxu0 0.0
  %3877 = vmatmul.mubr.f32.gmra.mxu0 %v3810
  %v3878 = vpop.f32.mrf.mxu0
  %v3879 = vadd.f32 0.0, %v3878
  %v3880 = vpop.f32.mrf.mxu0
  %3881 = vdwg.mxu0
  %3882 = vrot.lane.b32.xlu0 %v2785, 48
  %v3883 = vpop.permute.xlu0 %3882
  %v3886 = vsel %vm209, %v3805, 0
  %3888 = vmatprep.subr.mxu0 0.0
  %3889 = vmatpush1.msra.mxu0 0.0
  %3890 = vmatprep.subr.mxu0 0.0
  %3891 = vmatpush1.msra.mxu0 0.0
  %3892 = vmatprep.subr.mxu0 0.0
  %3893 = vmatpush1.msra.mxu0 0.0
  %3894 = vmatprep.subr.mxu0 0.0
  %3895 = vmatpush1.msra.mxu0 0.0
  %3896 = vmatprep.subr.mxu0 0.0
  %3897 = vmatpush1.msra.mxu0 0.0
  %3898 = vmatprep.subr.mxu0 0.0
  %3899 = vmatpush1.msra.mxu0 0.0
  %3900 = vmatprep.subr.mxu0 0.0
  %3901 = vmatpush1.msra.mxu0 0.0
  %3902 = vmatprep.subr.mxu0 0.0
  %3903 = vmatpush1.msra.mxu0 0.0
  %3904 = vmatprep.subr.mxu0 0.0
  %3905 = vmatpush1.msra.mxu0 0.0
  %3906 = vmatprep.subr.mxu0 0.0
  %3907 = vmatpush1.msra.mxu0 0.0
  %3908 = vmatprep.subr.mxu0 0.0
  %3909 = vmatpush1.msra.mxu0 0.0
  %3910 = vmatprep.subr.mxu0 0.0
  %3911 = vmatpush1.msra.mxu0 0.0
  %3912 = vmatprep.subr.mxu0 0.0
  %3913 = vmatpush1.msra.mxu0 0.0
  %3914 = vmatprep.subr.mxu0 0.0
  %3915 = vmatpush1.msra.mxu0 0.0
  %3916 = vmatprep.subr.mxu0 0.0
  %3917 = vmatpush1.msra.mxu0 0.0
  %3918 = vmatprep.subr.mxu0 0.0
  %3919 = vmatpush1.msra.mxu0 %v3883
  %3920 = vmatprep.subr.mxu0 0.0
  %3921 = vmatpush2.msra.mxu0 0.0
  %3922 = vmatprep.subr.mxu0 0.0
  %3923 = vmatpush2.msra.mxu0 0.0
  %3924 = vmatprep.subr.mxu0 0.0
  %3925 = vmatpush2.msra.mxu0 0.0
  %3926 = vmatprep.subr.mxu0 0.0
  %3927 = vmatpush2.msra.mxu0 0.0
  %3928 = vmatprep.subr.mxu0 0.0
  %3929 = vmatpush2.msra.mxu0 0.0
  %3930 = vmatprep.subr.mxu0 0.0
  %3931 = vmatpush2.msra.mxu0 0.0
  %3932 = vmatprep.subr.mxu0 0.0
  %3933 = vmatpush2.msra.mxu0 0.0
  %3934 = vmatprep.subr.mxu0 0.0
  %3935 = vmatpush2.msra.mxu0 0.0
  %3936 = vmatprep.subr.mxu0 0.0
  %3937 = vmatpush2.msra.mxu0 0.0
  %3938 = vmatprep.subr.mxu0 0.0
  %3939 = vmatpush2.msra.mxu0 0.0
  %3940 = vmatprep.subr.mxu0 0.0
  %3941 = vmatpush2.msra.mxu0 0.0
  %3942 = vmatprep.subr.mxu0 0.0
  %3943 = vmatpush2.msra.mxu0 0.0
  %3944 = vmatprep.subr.mxu0 0.0
  %3945 = vmatpush2.msra.mxu0 0.0
  %3946 = vmatprep.subr.mxu0 0.0
  %3947 = vmatpush2.msra.mxu0 0.0
  %3948 = vmatprep.subr.mxu0 0.0
  %3949 = vmatpush2.msra.mxu0 0.0
  %3950 = vmatprep.subr.mxu0 0.0
  %3951 = vmatpush2.msra.mxu0 0.0
  %3952 = vmatprep.mubr.f32.mxu0 0.0
  %3953 = vmatmul.mubr.f32.gmra.mxu0 %v3886
  %v3954 = vpop.f32.mrf.mxu0
  %v3955 = vadd.f32 0.0, %v3954
  %v3956 = vpop.f32.mrf.mxu0
  %3957 = vdwg.mxu0
  %v3959 = vsel %vm209, %v3879, 0
  %v3962 = vsel %vm209, %v3955, 0
  %3964 = vmatprep.subr.mxu0 0.0
  %3965 = vmatpush1.msra.mxu0 0.0
  %3966 = vmatprep.subr.mxu0 0.0
  %3967 = vmatpush1.msra.mxu0 0.0
  %3968 = vmatprep.subr.mxu0 0.0
  %3969 = vmatpush1.msra.mxu0 0.0
  %3970 = vmatprep.subr.mxu0 0.0
  %3971 = vmatpush1.msra.mxu0 0.0
  %3972 = vmatprep.subr.mxu0 0.0
  %3973 = vmatpush1.msra.mxu0 0.0
  %3974 = vmatprep.subr.mxu0 0.0
  %3975 = vmatpush1.msra.mxu0 0.0
  %3976 = vmatprep.subr.mxu0 0.0
  %3977 = vmatpush1.msra.mxu0 0.0
  %3978 = vmatprep.subr.mxu0 0.0
  %3979 = vmatpush1.msra.mxu0 0.0
  %3980 = vmatprep.subr.mxu0 0.0
  %3981 = vmatpush1.msra.mxu0 0.0
  %3982 = vmatprep.subr.mxu0 0.0
  %3983 = vmatpush1.msra.mxu0 0.0
  %3984 = vmatprep.subr.mxu0 0.0
  %3985 = vmatpush1.msra.mxu0 0.0
  %3986 = vmatprep.subr.mxu0 0.0
  %3987 = vmatpush1.msra.mxu0 0.0
  %3988 = vmatprep.subr.mxu0 0.0
  %3989 = vmatpush1.msra.mxu0 0.0
  %3990 = vmatprep.subr.mxu0 0.0
  %3991 = vmatpush1.msra.mxu0 0.0
  %3992 = vmatprep.subr.mxu0 0.0
  %3993 = vmatpush1.msra.mxu0 0.0
  %3994 = vmatprep.subr.mxu0 0.0
  %3995 = vmatpush1.msra.mxu0 %v2790
  %3996 = vmatprep.subr.mxu0 0.0
  %3997 = vmatpush2.msra.mxu0 0.0
  %3998 = vmatprep.subr.mxu0 0.0
  %3999 = vmatpush2.msra.mxu0 0.0
  %4000 = vmatprep.subr.mxu0 0.0
  %4001 = vmatpush2.msra.mxu0 0.0
  %4002 = vmatprep.subr.mxu0 0.0
  %4003 = vmatpush2.msra.mxu0 0.0
  %4004 = vmatprep.subr.mxu0 0.0
  %4005 = vmatpush2.msra.mxu0 0.0
  %4006 = vmatprep.subr.mxu0 0.0
  %4007 = vmatpush2.msra.mxu0 0.0
  %4008 = vmatprep.subr.mxu0 0.0
  %4009 = vmatpush2.msra.mxu0 0.0
  %4010 = vmatprep.subr.mxu0 0.0
  %4011 = vmatpush2.msra.mxu0 0.0
  %4012 = vmatprep.subr.mxu0 0.0
  %4013 = vmatpush2.msra.mxu0 0.0
  %4014 = vmatprep.subr.mxu0 0.0
  %4015 = vmatpush2.msra.mxu0 0.0
  %4016 = vmatprep.subr.mxu0 0.0
  %4017 = vmatpush2.msra.mxu0 0.0
  %4018 = vmatprep.subr.mxu0 0.0
  %4019 = vmatpush2.msra.mxu0 0.0
  %4020 = vmatprep.subr.mxu0 0.0
  %4021 = vmatpush2.msra.mxu0 0.0
  %4022 = vmatprep.subr.mxu0 0.0
  %4023 = vmatpush2.msra.mxu0 0.0
  %4024 = vmatprep.subr.mxu0 0.0
  %4025 = vmatpush2.msra.mxu0 0.0
  %4026 = vmatprep.subr.mxu0 0.0
  %4027 = vmatpush2.msra.mxu0 0.0
  %4028 = vmatprep.mubr.f32.mxu0 0.0
  %4029 = vmatmul.mubr.f32.gmra.mxu0 %v3959
  %v4030 = vpop.f32.mrf.mxu0
  %v4031 = vadd.f32 0.0, %v4030
  %v4032 = vpop.f32.mrf.mxu0
  %4033 = vmatprep.mubr.f32.mxu0 0.0
  %4034 = vmatmul.mubr.f32.gmra.mxu0 %v3962
  %v4035 = vpop.f32.mrf.mxu0
  %v4036 = vadd.f32 0.0, %v4035
  %v4037 = vpop.f32.mrf.mxu0
  %4038 = vdwg.mxu0
  %v4039 = vadd.f32 %v3616, %v4031
  %v4040 = vadd.f32 %v3621, %v4036
  %4041 = vrot.lane.b32.xlu0 %v2780, 104
  %v4042 = vpop.permute.xlu0 %4041
  %4043 = vrot.lane.b32.xlu0 %v2780, 72
  %v4044 = vpop.permute.xlu0 %4043
  %v4045 = vsel %vm209, %v4042, 0
  %v4047 = vsel %vm209, %v4044, 0
  %4049 = vmatprep.subr.mxu0 0.0
  %4050 = vmatpush1.xpose.msra.mxu0 0.0
  %4051 = vmatprep.subr.mxu0 0.0
  %4052 = vmatpush1.xpose.msra.mxu0 0.0
  %4053 = vmatprep.subr.mxu0 0.0
  %4054 = vmatpush1.xpose.msra.mxu0 0.0
  %4055 = vmatprep.subr.mxu0 0.0
  %4056 = vmatpush1.xpose.msra.mxu0 0.0
  %4057 = vmatprep.subr.mxu0 0.0
  %4058 = vmatpush1.xpose.msra.mxu0 0.0
  %4059 = vmatprep.subr.mxu0 0.0
  %4060 = vmatpush1.xpose.msra.mxu0 0.0
  %4061 = vmatprep.subr.mxu0 0.0
  %4062 = vmatpush1.xpose.msra.mxu0 0.0
  %4063 = vmatprep.subr.mxu0 0.0
  %4064 = vmatpush1.xpose.msra.mxu0 0.0
  %4065 = vmatprep.subr.mxu0 0.0
  %4066 = vmatpush1.xpose.msra.mxu0 0.0
  %4067 = vmatprep.subr.mxu0 0.0
  %4068 = vmatpush1.xpose.msra.mxu0 0.0
  %4069 = vmatprep.subr.mxu0 0.0
  %4070 = vmatpush1.xpose.msra.mxu0 0.0
  %4071 = vmatprep.subr.mxu0 0.0
  %4072 = vmatpush1.xpose.msra.mxu0 0.0
  %4073 = vmatprep.subr.mxu0 0.0
  %4074 = vmatpush1.xpose.msra.mxu0 0.0
  %4075 = vmatprep.subr.mxu0 0.0
  %4076 = vmatpush1.xpose.msra.mxu0 0.0
  %4077 = vmatprep.subr.mxu0 0.0
  %4078 = vmatpush1.xpose.msra.mxu0 0.0
  %4079 = vmatprep.subr.mxu0 0.0
  %4080 = vmatpush1.xpose.msra.mxu0 %v4047
  %4081 = vmatprep.subr.mxu0 0.0
  %4082 = vmatpush2.xpose.msra.mxu0 0.0
  %4083 = vmatprep.subr.mxu0 0.0
  %4084 = vmatpush2.xpose.msra.mxu0 0.0
  %4085 = vmatprep.subr.mxu0 0.0
  %4086 = vmatpush2.xpose.msra.mxu0 0.0
  %4087 = vmatprep.subr.mxu0 0.0
  %4088 = vmatpush2.xpose.msra.mxu0 0.0
  %4089 = vmatprep.subr.mxu0 0.0
  %4090 = vmatpush2.xpose.msra.mxu0 0.0
  %4091 = vmatprep.subr.mxu0 0.0
  %4092 = vmatpush2.xpose.msra.mxu0 0.0
  %4093 = vmatprep.subr.mxu0 0.0
  %4094 = vmatpush2.xpose.msra.mxu0 0.0
  %4095 = vmatprep.subr.mxu0 0.0
  %4096 = vmatpush2.xpose.msra.mxu0 0.0
  %4097 = vmatprep.subr.mxu0 0.0
  %4098 = vmatpush2.xpose.msra.mxu0 0.0
  %4099 = vmatprep.subr.mxu0 0.0
  %4100 = vmatpush2.xpose.msra.mxu0 0.0
  %4101 = vmatprep.subr.mxu0 0.0
  %4102 = vmatpush2.xpose.msra.mxu0 0.0
  %4103 = vmatprep.subr.mxu0 0.0
  %4104 = vmatpush2.xpose.msra.mxu0 0.0
  %4105 = vmatprep.subr.mxu0 0.0
  %4106 = vmatpush2.xpose.msra.mxu0 0.0
  %4107 = vmatprep.subr.mxu0 0.0
  %4108 = vmatpush2.xpose.msra.mxu0 0.0
  %4109 = vmatprep.subr.mxu0 0.0
  %4110 = vmatpush2.xpose.msra.mxu0 0.0
  %4111 = vmatprep.subr.mxu0 0.0
  %4112 = vmatpush2.xpose.msra.mxu0 0.0
  %4113 = vmatprep.mubr.f32.mxu0 0.0
  %4114 = vmatmul.mubr.f32.gmra.mxu0 %v4045
  %v4115 = vpop.f32.mrf.mxu0
  %v4116 = vadd.f32 0.0, %v4115
  %v4117 = vpop.f32.mrf.mxu0
  %4118 = vdwg.mxu0
  %4119 = vrot.lane.b32.xlu0 %v2785, 104
  %v4120 = vpop.permute.xlu0 %4119
  %4121 = vrot.lane.b32.xlu0 %v2785, 72
  %v4122 = vpop.permute.xlu0 %4121
  %v4123 = vsel %vm209, %v4120, 0
  %v4125 = vsel %vm209, %v4122, 0
  %4127 = vmatprep.subr.mxu0 0.0
  %4128 = vmatpush1.xpose.msra.mxu0 0.0
  %4129 = vmatprep.subr.mxu0 0.0
  %4130 = vmatpush1.xpose.msra.mxu0 0.0
  %4131 = vmatprep.subr.mxu0 0.0
  %4132 = vmatpush1.xpose.msra.mxu0 0.0
  %4133 = vmatprep.subr.mxu0 0.0
  %4134 = vmatpush1.xpose.msra.mxu0 0.0
  %4135 = vmatprep.subr.mxu0 0.0
  %4136 = vmatpush1.xpose.msra.mxu0 0.0
  %4137 = vmatprep.subr.mxu0 0.0
  %4138 = vmatpush1.xpose.msra.mxu0 0.0
  %4139 = vmatprep.subr.mxu0 0.0
  %4140 = vmatpush1.xpose.msra.mxu0 0.0
  %4141 = vmatprep.subr.mxu0 0.0
  %4142 = vmatpush1.xpose.msra.mxu0 0.0
  %4143 = vmatprep.subr.mxu0 0.0
  %4144 = vmatpush1.xpose.msra.mxu0 0.0
  %4145 = vmatprep.subr.mxu0 0.0
  %4146 = vmatpush1.xpose.msra.mxu0 0.0
  %4147 = vmatprep.subr.mxu0 0.0
  %4148 = vmatpush1.xpose.msra.mxu0 0.0
  %4149 = vmatprep.subr.mxu0 0.0
  %4150 = vmatpush1.xpose.msra.mxu0 0.0
  %4151 = vmatprep.subr.mxu0 0.0
  %4152 = vmatpush1.xpose.msra.mxu0 0.0
  %4153 = vmatprep.subr.mxu0 0.0
  %4154 = vmatpush1.xpose.msra.mxu0 0.0
  %4155 = vmatprep.subr.mxu0 0.0
  %4156 = vmatpush1.xpose.msra.mxu0 0.0
  %4157 = vmatprep.subr.mxu0 0.0
  %4158 = vmatpush1.xpose.msra.mxu0 %v4125
  %4159 = vmatprep.subr.mxu0 0.0
  %4160 = vmatpush2.xpose.msra.mxu0 0.0
  %4161 = vmatprep.subr.mxu0 0.0
  %4162 = vmatpush2.xpose.msra.mxu0 0.0
  %4163 = vmatprep.subr.mxu0 0.0
  %4164 = vmatpush2.xpose.msra.mxu0 0.0
  %4165 = vmatprep.subr.mxu0 0.0
  %4166 = vmatpush2.xpose.msra.mxu0 0.0
  %4167 = vmatprep.subr.mxu0 0.0
  %4168 = vmatpush2.xpose.msra.mxu0 0.0
  %4169 = vmatprep.subr.mxu0 0.0
  %4170 = vmatpush2.xpose.msra.mxu0 0.0
  %4171 = vmatprep.subr.mxu0 0.0
  %4172 = vmatpush2.xpose.msra.mxu0 0.0
  %4173 = vmatprep.subr.mxu0 0.0
  %4174 = vmatpush2.xpose.msra.mxu0 0.0
  %4175 = vmatprep.subr.mxu0 0.0
  %4176 = vmatpush2.xpose.msra.mxu0 0.0
  %4177 = vmatprep.subr.mxu0 0.0
  %4178 = vmatpush2.xpose.msra.mxu0 0.0
  %4179 = vmatprep.subr.mxu0 0.0
  %4180 = vmatpush2.xpose.msra.mxu0 0.0
  %4181 = vmatprep.subr.mxu0 0.0
  %4182 = vmatpush2.xpose.msra.mxu0 0.0
  %4183 = vmatprep.subr.mxu0 0.0
  %4184 = vmatpush2.xpose.msra.mxu0 0.0
  %4185 = vmatprep.subr.mxu0 0.0
  %4186 = vmatpush2.xpose.msra.mxu0 0.0
  %4187 = vmatprep.subr.mxu0 0.0
  %4188 = vmatpush2.xpose.msra.mxu0 0.0
  %4189 = vmatprep.subr.mxu0 0.0
  %4190 = vmatpush2.xpose.msra.mxu0 0.0
  %4191 = vmatprep.mubr.f32.mxu0 0.0
  %4192 = vmatmul.mubr.f32.gmra.mxu0 %v4123
  %v4193 = vpop.f32.mrf.mxu0
  %v4194 = vadd.f32 0.0, %v4193
  %v4195 = vpop.f32.mrf.mxu0
  %4196 = vdwg.mxu0
  %v4197 = vmul.f32 %v4116, 0.35355338
  %v4198 = vmul.f32 %v4194, 0.35355338
  %v4199 = vadd.f32 %v4197, %v2795
  %v4200 = vadd.f32 %v4198, %v2795
  %v4201 = vsel %vm209, %v4199, -inf
  %4202 = vmax.xlane.f32.xlu0 %v4201
  %v4203 = vpop.xlane.xlu0 %4202
  %v4204 = vsel %vm209, %v4200, -inf
  %4205 = vmax.xlane.f32.xlu0 %v4204
  %v4206 = vpop.xlane.xlu0 %4205
  %v4207 = vsub.f32 %v4199, %v4203
  %v4208 = vsub.f32 %v4200, %v4206
  %v4209 = vmul.f32 %v4207, 1.442695
  %v4210 = vpow.pop %v4209
  %v4211 = vmul.f32 %v4208, 1.442695
  %v4212 = vpow.pop %v4211
  %v4213 = vsel %vm209, %v4210, 0.0
  %4214 = vadd.xlane.f32.xlu0 %v4213
  %v4215 = vpop.xlane.xlu0 %4214
  %v4216 = vsel %vm209, %v4212, 0.0
  %4217 = vadd.xlane.f32.xlu0 %v4216
  %v4218 = vpop.xlane.xlu0 %4217
  %v4219 = vrcp.pop %v4215
  %v4220 = vrcp.pop %v4218
  %v4221 = vmul.f32 %v4210, %v4219
  %v4222 = vmul.f32 %v4212, %v4220
  %4223 = vrot.lane.b32.xlu0 %v2780, 40
  %v4224 = vpop.permute.xlu0 %4223
  %v4227 = vsel %vm209, %v4221, 0
  %4229 = vmatprep.subr.mxu0 0.0
  %4230 = vmatpush1.msra.mxu0 0.0
  %4231 = vmatprep.subr.mxu0 0.0
  %4232 = vmatpush1.msra.mxu0 0.0
  %4233 = vmatprep.subr.mxu0 0.0
  %4234 = vmatpush1.msra.mxu0 0.0
  %4235 = vmatprep.subr.mxu0 0.0
  %4236 = vmatpush1.msra.mxu0 0.0
  %4237 = vmatprep.subr.mxu0 0.0
  %4238 = vmatpush1.msra.mxu0 0.0
  %4239 = vmatprep.subr.mxu0 0.0
  %4240 = vmatpush1.msra.mxu0 0.0
  %4241 = vmatprep.subr.mxu0 0.0
  %4242 = vmatpush1.msra.mxu0 0.0
  %4243 = vmatprep.subr.mxu0 0.0
  %4244 = vmatpush1.msra.mxu0 0.0
  %4245 = vmatprep.subr.mxu0 0.0
  %4246 = vmatpush1.msra.mxu0 0.0
  %4247 = vmatprep.subr.mxu0 0.0
  %4248 = vmatpush1.msra.mxu0 0.0
  %4249 = vmatprep.subr.mxu0 0.0
  %4250 = vmatpush1.msra.mxu0 0.0
  %4251 = vmatprep.subr.mxu0 0.0
  %4252 = vmatpush1.msra.mxu0 0.0
  %4253 = vmatprep.subr.mxu0 0.0
  %4254 = vmatpush1.msra.mxu0 0.0
  %4255 = vmatprep.subr.mxu0 0.0
  %4256 = vmatpush1.msra.mxu0 0.0
  %4257 = vmatprep.subr.mxu0 0.0
  %4258 = vmatpush1.msra.mxu0 0.0
  %4259 = vmatprep.subr.mxu0 0.0
  %4260 = vmatpush1.msra.mxu0 %v4224
  %4261 = vmatprep.subr.mxu0 0.0
  %4262 = vmatpush2.msra.mxu0 0.0
  %4263 = vmatprep.subr.mxu0 0.0
  %4264 = vmatpush2.msra.mxu0 0.0
  %4265 = vmatprep.subr.mxu0 0.0
  %4266 = vmatpush2.msra.mxu0 0.0
  %4267 = vmatprep.subr.mxu0 0.0
  %4268 = vmatpush2.msra.mxu0 0.0
  %4269 = vmatprep.subr.mxu0 0.0
  %4270 = vmatpush2.msra.mxu0 0.0
  %4271 = vmatprep.subr.mxu0 0.0
  %4272 = vmatpush2.msra.mxu0 0.0
  %4273 = vmatprep.subr.mxu0 0.0
  %4274 = vmatpush2.msra.mxu0 0.0
  %4275 = vmatprep.subr.mxu0 0.0
  %4276 = vmatpush2.msra.mxu0 0.0
  %4277 = vmatprep.subr.mxu0 0.0
  %4278 = vmatpush2.msra.mxu0 0.0
  %4279 = vmatprep.subr.mxu0 0.0
  %4280 = vmatpush2.msra.mxu0 0.0
  %4281 = vmatprep.subr.mxu0 0.0
  %4282 = vmatpush2.msra.mxu0 0.0
  %4283 = vmatprep.subr.mxu0 0.0
  %4284 = vmatpush2.msra.mxu0 0.0
  %4285 = vmatprep.subr.mxu0 0.0
  %4286 = vmatpush2.msra.mxu0 0.0
  %4287 = vmatprep.subr.mxu0 0.0
  %4288 = vmatpush2.msra.mxu0 0.0
  %4289 = vmatprep.subr.mxu0 0.0
  %4290 = vmatpush2.msra.mxu0 0.0
  %4291 = vmatprep.subr.mxu0 0.0
  %4292 = vmatpush2.msra.mxu0 0.0
  %4293 = vmatprep.mubr.f32.mxu0 0.0
  %4294 = vmatmul.mubr.f32.gmra.mxu0 %v4227
  %v4295 = vpop.f32.mrf.mxu0
  %v4296 = vadd.f32 0.0, %v4295
  %v4297 = vpop.f32.mrf.mxu0
  %4298 = vdwg.mxu0
  %4299 = vrot.lane.b32.xlu0 %v2785, 40
  %v4300 = vpop.permute.xlu0 %4299
  %v4303 = vsel %vm209, %v4222, 0
  %4305 = vmatprep.subr.mxu0 0.0
  %4306 = vmatpush1.msra.mxu0 0.0
  %4307 = vmatprep.subr.mxu0 0.0
  %4308 = vmatpush1.msra.mxu0 0.0
  %4309 = vmatprep.subr.mxu0 0.0
  %4310 = vmatpush1.msra.mxu0 0.0
  %4311 = vmatprep.subr.mxu0 0.0
  %4312 = vmatpush1.msra.mxu0 0.0
  %4313 = vmatprep.subr.mxu0 0.0
  %4314 = vmatpush1.msra.mxu0 0.0
  %4315 = vmatprep.subr.mxu0 0.0
  %4316 = vmatpush1.msra.mxu0 0.0
  %4317 = vmatprep.subr.mxu0 0.0
  %4318 = vmatpush1.msra.mxu0 0.0
  %4319 = vmatprep.subr.mxu0 0.0
  %4320 = vmatpush1.msra.mxu0 0.0
  %4321 = vmatprep.subr.mxu0 0.0
  %4322 = vmatpush1.msra.mxu0 0.0
  %4323 = vmatprep.subr.mxu0 0.0
  %4324 = vmatpush1.msra.mxu0 0.0
  %4325 = vmatprep.subr.mxu0 0.0
  %4326 = vmatpush1.msra.mxu0 0.0
  %4327 = vmatprep.subr.mxu0 0.0
  %4328 = vmatpush1.msra.mxu0 0.0
  %4329 = vmatprep.subr.mxu0 0.0
  %4330 = vmatpush1.msra.mxu0 0.0
  %4331 = vmatprep.subr.mxu0 0.0
  %4332 = vmatpush1.msra.mxu0 0.0
  %4333 = vmatprep.subr.mxu0 0.0
  %4334 = vmatpush1.msra.mxu0 0.0
  %4335 = vmatprep.subr.mxu0 0.0
  %4336 = vmatpush1.msra.mxu0 %v4300
  %4337 = vmatprep.subr.mxu0 0.0
  %4338 = vmatpush2.msra.mxu0 0.0
  %4339 = vmatprep.subr.mxu0 0.0
  %4340 = vmatpush2.msra.mxu0 0.0
  %4341 = vmatprep.subr.mxu0 0.0
  %4342 = vmatpush2.msra.mxu0 0.0
  %4343 = vmatprep.subr.mxu0 0.0
  %4344 = vmatpush2.msra.mxu0 0.0
  %4345 = vmatprep.subr.mxu0 0.0
  %4346 = vmatpush2.msra.mxu0 0.0
  %4347 = vmatprep.subr.mxu0 0.0
  %4348 = vmatpush2.msra.mxu0 0.0
  %4349 = vmatprep.subr.mxu0 0.0
  %4350 = vmatpush2.msra.mxu0 0.0
  %4351 = vmatprep.subr.mxu0 0.0
  %4352 = vmatpush2.msra.mxu0 0.0
  %4353 = vmatprep.subr.mxu0 0.0
  %4354 = vmatpush2.msra.mxu0 0.0
  %4355 = vmatprep.subr.mxu0 0.0
  %4356 = vmatpush2.msra.mxu0 0.0
  %4357 = vmatprep.subr.mxu0 0.0
  %4358 = vmatpush2.msra.mxu0 0.0
  %4359 = vmatprep.subr.mxu0 0.0
  %4360 = vmatpush2.msra.mxu0 0.0
  %4361 = vmatprep.subr.mxu0 0.0
  %4362 = vmatpush2.msra.mxu0 0.0
  %4363 = vmatprep.subr.mxu0 0.0
  %4364 = vmatpush2.msra.mxu0 0.0
  %4365 = vmatprep.subr.mxu0 0.0
  %4366 = vmatpush2.msra.mxu0 0.0
  %4367 = vmatprep.subr.mxu0 0.0
  %4368 = vmatpush2.msra.mxu0 0.0
  %4369 = vmatprep.mubr.f32.mxu0 0.0
  %4370 = vmatmul.mubr.f32.gmra.mxu0 %v4303
  %v4371 = vpop.f32.mrf.mxu0
  %v4372 = vadd.f32 0.0, %v4371
  %v4373 = vpop.f32.mrf.mxu0
  %4374 = vdwg.mxu0
  %v4376 = vsel %vm209, %v4296, 0
  %v4379 = vsel %vm209, %v4372, 0
  %4381 = vmatprep.subr.mxu0 0.0
  %4382 = vmatpush1.msra.mxu0 0.0
  %4383 = vmatprep.subr.mxu0 0.0
  %4384 = vmatpush1.msra.mxu0 0.0
  %4385 = vmatprep.subr.mxu0 0.0
  %4386 = vmatpush1.msra.mxu0 0.0
  %4387 = vmatprep.subr.mxu0 0.0
  %4388 = vmatpush1.msra.mxu0 0.0
  %4389 = vmatprep.subr.mxu0 0.0
  %4390 = vmatpush1.msra.mxu0 0.0
  %4391 = vmatprep.subr.mxu0 0.0
  %4392 = vmatpush1.msra.mxu0 0.0
  %4393 = vmatprep.subr.mxu0 0.0
  %4394 = vmatpush1.msra.mxu0 0.0
  %4395 = vmatprep.subr.mxu0 0.0
  %4396 = vmatpush1.msra.mxu0 0.0
  %4397 = vmatprep.subr.mxu0 0.0
  %4398 = vmatpush1.msra.mxu0 0.0
  %4399 = vmatprep.subr.mxu0 0.0
  %4400 = vmatpush1.msra.mxu0 0.0
  %4401 = vmatprep.subr.mxu0 0.0
  %4402 = vmatpush1.msra.mxu0 0.0
  %4403 = vmatprep.subr.mxu0 0.0
  %4404 = vmatpush1.msra.mxu0 0.0
  %4405 = vmatprep.subr.mxu0 0.0
  %4406 = vmatpush1.msra.mxu0 0.0
  %4407 = vmatprep.subr.mxu0 0.0
  %4408 = vmatpush1.msra.mxu0 0.0
  %4409 = vmatprep.subr.mxu0 0.0
  %4410 = vmatpush1.msra.mxu0 0.0
  %4411 = vmatprep.subr.mxu0 0.0
  %4412 = vmatpush1.msra.mxu0 %v2791
  %4413 = vmatprep.subr.mxu0 0.0
  %4414 = vmatpush2.msra.mxu0 0.0
  %4415 = vmatprep.subr.mxu0 0.0
  %4416 = vmatpush2.msra.mxu0 0.0
  %4417 = vmatprep.subr.mxu0 0.0
  %4418 = vmatpush2.msra.mxu0 0.0
  %4419 = vmatprep.subr.mxu0 0.0
  %4420 = vmatpush2.msra.mxu0 0.0
  %4421 = vmatprep.subr.mxu0 0.0
  %4422 = vmatpush2.msra.mxu0 0.0
  %4423 = vmatprep.subr.mxu0 0.0
  %4424 = vmatpush2.msra.mxu0 0.0
  %4425 = vmatprep.subr.mxu0 0.0
  %4426 = vmatpush2.msra.mxu0 0.0
  %4427 = vmatprep.subr.mxu0 0.0
  %4428 = vmatpush2.msra.mxu0 0.0
  %4429 = vmatprep.subr.mxu0 0.0
  %4430 = vmatpush2.msra.mxu0 0.0
  %4431 = vmatprep.subr.mxu0 0.0
  %4432 = vmatpush2.msra.mxu0 0.0
  %4433 = vmatprep.subr.mxu0 0.0
  %4434 = vmatpush2.msra.mxu0 0.0
  %4435 = vmatprep.subr.mxu0 0.0
  %4436 = vmatpush2.msra.mxu0 0.0
  %4437 = vmatprep.subr.mxu0 0.0
  %4438 = vmatpush2.msra.mxu0 0.0
  %4439 = vmatprep.subr.mxu0 0.0
  %4440 = vmatpush2.msra.mxu0 0.0
  %4441 = vmatprep.subr.mxu0 0.0
  %4442 = vmatpush2.msra.mxu0 0.0
  %4443 = vmatprep.subr.mxu0 0.0
  %4444 = vmatpush2.msra.mxu0 0.0
  %4445 = vmatprep.mubr.f32.mxu0 0.0
  %4446 = vmatmul.mubr.f32.gmra.mxu0 %v4376
  %v4447 = vpop.f32.mrf.mxu0
  %v4448 = vadd.f32 0.0, %v4447
  %v4449 = vpop.f32.mrf.mxu0
  %4450 = vmatprep.mubr.f32.mxu0 0.0
  %4451 = vmatmul.mubr.f32.gmra.mxu0 %v4379
  %v4452 = vpop.f32.mrf.mxu0
  %v4453 = vadd.f32 0.0, %v4452
  %v4454 = vpop.f32.mrf.mxu0
  %4455 = vdwg.mxu0
  %v4456 = vadd.f32 %v4039, %v4448
  %v4457 = vadd.f32 %v4040, %v4453
  %v4458 = vadd.f32 %v2651, %v4456
  %v4459 = vadd.f32 %v2656, %v4457
  %v4460 = vld [vmem:[%s35] sm:$0x1]
  %v4461 = vld [vmem:[%s33] sm:$0x1]
  %v4462 = vsel %vm375, %v4458, 0.0
  %4463 = vadd.xlane.f32.xlu0 %v4462
  %v4464 = vpop.xlane.xlu0 %4463
  %v4465 = vsel %vm375, %v4459, 0.0
  %4466 = vadd.xlane.f32.xlu0 %v4465
  %v4467 = vpop.xlane.xlu0 %4466
  %v4468 = vmul.f32 %v4464, %v382
  %v4469 = vmul.f32 %v4467, %v382
  %v4470 = vsub.f32 %v4458, %v4468
  %v4471 = vsub.f32 %v4459, %v4469
  %v4472 = vmul.f32 %v4470, %v4470
  %v4473 = vmul.f32 %v4471, %v4471
  %v4474 = vsel %vm375, %v4472, 0.0
  %4475 = vadd.xlane.f32.xlu0 %v4474
  %v4476 = vpop.xlane.xlu0 %4475
  %v4477 = vsel %vm375, %v4473, 0.0
  %4478 = vadd.xlane.f32.xlu0 %v4477
  %v4479 = vpop.xlane.xlu0 %4478
  %v4480 = vmul.f32 %v4476, %v382
  %v4481 = vmul.f32 %v4479, %v382
  %v4482 = vadd.f32 %v4480, 1e-05
  %v4483 = vadd.f32 %v4481, 1e-05
  %v4484 = vrsqrt.pop %v4482
  %v4485 = vrsqrt.pop %v4483
  %v4486 = vmul.f32 %v4470, %v4484
  %v4487 = vmul.f32 %v4471, %v4485
  %v4489 = vlaneseq
  %v4490 = vshrl.u32 %v4489, 7
  %v4491 = vsub.s32 0, %v4490
  %v4492 = vrot.slane %v4460, %v4491
  %v4494 = vmul.f32 %v4486, %v4492
  %v4495 = vmul.f32 %v4487, %v4492
  %v4497 = vlaneseq
  %v4498 = vshrl.u32 %v4497, 7
  %v4499 = vsub.s32 0, %v4498
  %v4500 = vrot.slane %v4461, %v4499
  %v4502 = vadd.f32 %v4494, %v4500
  %v4503 = vadd.f32 %v4495, %v4500
  %v4504 = vld [vmem:[%s15] sm:$0xff]
  %v4505 = vld [vmem:[%s15 + $0x8] sm:$0xff]
  %v4506 = vld [vmem:[%s15 + $0x10] sm:$0xff]
  %v4507 = vld [vmem:[%s15 + $0x18] sm:$0xff]
  %v4509 = vsel %vm375, %v4502, 0
  %v4512 = vsel %vm375, %v4503, 0
  %4514 = vmatprep.subr.mxu0 0.0
  %4515 = vmatpush1.msra.mxu0 0.0
  %4516 = vmatprep.subr.mxu0 0.0
  %4517 = vmatpush1.msra.mxu0 0.0
  %4518 = vmatprep.subr.mxu0 0.0
  %4519 = vmatpush1.msra.mxu0 0.0
  %4520 = vmatprep.subr.mxu0 0.0
  %4521 = vmatpush1.msra.mxu0 0.0
  %4522 = vmatprep.subr.mxu0 0.0
  %4523 = vmatpush1.msra.mxu0 0.0
  %4524 = vmatprep.subr.mxu0 0.0
  %4525 = vmatpush1.msra.mxu0 0.0
  %4526 = vmatprep.subr.mxu0 0.0
  %4527 = vmatpush1.msra.mxu0 0.0
  %4528 = vmatprep.subr.mxu0 0.0
  %4529 = vmatpush1.msra.mxu0 0.0
  %4530 = vmatprep.subr.mxu0 0.0
  %4531 = vmatpush1.msra.mxu0 0.0
  %4532 = vmatprep.subr.mxu0 0.0
  %4533 = vmatpush1.msra.mxu0 0.0
  %4534 = vmatprep.subr.mxu0 0.0
  %4535 = vmatpush1.msra.mxu0 0.0
  %4536 = vmatprep.subr.mxu0 0.0
  %4537 = vmatpush1.msra.mxu0 0.0
  %4538 = vmatprep.subr.mxu0 0.0
  %4539 = vmatpush1.msra.mxu0 %v4507
  %4540 = vmatprep.subr.mxu0 0.0
  %4541 = vmatpush1.msra.mxu0 %v4506
  %4542 = vmatprep.subr.mxu0 0.0
  %4543 = vmatpush1.msra.mxu0 %v4505
  %4544 = vmatprep.subr.mxu0 0.0
  %4545 = vmatpush1.msra.mxu0 %v4504
  %4546 = vmatprep.subr.mxu0 0.0
  %4547 = vmatpush2.msra.mxu0 0.0
  %4548 = vmatprep.subr.mxu0 0.0
  %4549 = vmatpush2.msra.mxu0 0.0
  %4550 = vmatprep.subr.mxu0 0.0
  %4551 = vmatpush2.msra.mxu0 0.0
  %4552 = vmatprep.subr.mxu0 0.0
  %4553 = vmatpush2.msra.mxu0 0.0
  %4554 = vmatprep.subr.mxu0 0.0
  %4555 = vmatpush2.msra.mxu0 0.0
  %4556 = vmatprep.subr.mxu0 0.0
  %4557 = vmatpush2.msra.mxu0 0.0
  %4558 = vmatprep.subr.mxu0 0.0
  %4559 = vmatpush2.msra.mxu0 0.0
  %4560 = vmatprep.subr.mxu0 0.0
  %4561 = vmatpush2.msra.mxu0 0.0
  %4562 = vmatprep.subr.mxu0 0.0
  %4563 = vmatpush2.msra.mxu0 0.0
  %4564 = vmatprep.subr.mxu0 0.0
  %4565 = vmatpush2.msra.mxu0 0.0
  %4566 = vmatprep.subr.mxu0 0.0
  %4567 = vmatpush2.msra.mxu0 0.0
  %4568 = vmatprep.subr.mxu0 0.0
  %4569 = vmatpush2.msra.mxu0 0.0
  %4570 = vmatprep.subr.mxu0 0.0
  %4571 = vmatpush2.msra.mxu0 0.0
  %4572 = vmatprep.subr.mxu0 0.0
  %4573 = vmatpush2.msra.mxu0 0.0
  %4574 = vmatprep.subr.mxu0 0.0
  %4575 = vmatpush2.msra.mxu0 0.0
  %4576 = vmatprep.subr.mxu0 0.0
  %4577 = vmatpush2.msra.mxu0 0.0
  %4578 = vmatprep.mubr.f32.mxu0 0.0
  %4579 = vmatmul.mubr.f32.gmra.mxu0 %v4509
  %v4580 = vpop.f32.mrf.mxu0
  %v4581 = vadd.f32 0.0, %v4580
  %v4582 = vpop.f32.mrf.mxu0
  %4583 = vmatprep.mubr.f32.mxu0 0.0
  %4584 = vmatmul.mubr.f32.gmra.mxu0 %v4512
  %v4585 = vpop.f32.mrf.mxu0
  %v4586 = vadd.f32 0.0, %v4585
  %v4587 = vpop.f32.mrf.mxu0
  %4588 = vdwg.mxu0
  %v4589 = vld [vmem:[%s11] sm:$0xff]
  %v4590 = vld [vmem:[%s11 + $0x8] sm:$0xff]
  %v4591 = vld [vmem:[%s11 + $0x10] sm:$0xff]
  %v4592 = vld [vmem:[%s11 + $0x18] sm:$0xff]
  %v4594 = vsel %vm375, %v2462, 0
  %v4597 = vsel %vm375, %v2463, 0
  %4599 = vmatprep.subr.mxu0 0.0
  %4600 = vmatpush1.msra.mxu0 0.0
  %4601 = vmatprep.subr.mxu0 0.0
  %4602 = vmatpush1.msra.mxu0 0.0
  %4603 = vmatprep.subr.mxu0 0.0
  %4604 = vmatpush1.msra.mxu0 0.0
  %4605 = vmatprep.subr.mxu0 0.0
  %4606 = vmatpush1.msra.mxu0 0.0
  %4607 = vmatprep.subr.mxu0 0.0
  %4608 = vmatpush1.msra.mxu0 0.0
  %4609 = vmatprep.subr.mxu0 0.0
  %4610 = vmatpush1.msra.mxu0 0.0
  %4611 = vmatprep.subr.mxu0 0.0
  %4612 = vmatpush1.msra.mxu0 0.0
  %4613 = vmatprep.subr.mxu0 0.0
  %4614 = vmatpush1.msra.mxu0 0.0
  %4615 = vmatprep.subr.mxu0 0.0
  %4616 = vmatpush1.msra.mxu0 0.0
  %4617 = vmatprep.subr.mxu0 0.0
  %4618 = vmatpush1.msra.mxu0 0.0
  %4619 = vmatprep.subr.mxu0 0.0
  %4620 = vmatpush1.msra.mxu0 0.0
  %4621 = vmatprep.subr.mxu0 0.0
  %4622 = vmatpush1.msra.mxu0 0.0
  %4623 = vmatprep.subr.mxu0 0.0
  %4624 = vmatpush1.msra.mxu0 %v4592
  %4625 = vmatprep.subr.mxu0 0.0
  %4626 = vmatpush1.msra.mxu0 %v4591
  %4627 = vmatprep.subr.mxu0 0.0
  %4628 = vmatpush1.msra.mxu0 %v4590
  %4629 = vmatprep.subr.mxu0 0.0
  %4630 = vmatpush1.msra.mxu0 %v4589
  %4631 = vmatprep.subr.mxu0 0.0
  %4632 = vmatpush2.msra.mxu0 0.0
  %4633 = vmatprep.subr.mxu0 0.0
  %4634 = vmatpush2.msra.mxu0 0.0
  %4635 = vmatprep.subr.mxu0 0.0
  %4636 = vmatpush2.msra.mxu0 0.0
  %4637 = vmatprep.subr.mxu0 0.0
  %4638 = vmatpush2.msra.mxu0 0.0
  %4639 = vmatprep.subr.mxu0 0.0
  %4640 = vmatpush2.msra.mxu0 0.0
  %4641 = vmatprep.subr.mxu0 0.0
  %4642 = vmatpush2.msra.mxu0 0.0
  %4643 = vmatprep.subr.mxu0 0.0
  %4644 = vmatpush2.msra.mxu0 0.0
  %4645 = vmatprep.subr.mxu0 0.0
  %4646 = vmatpush2.msra.mxu0 0.0
  %4647 = vmatprep.subr.mxu0 0.0
  %4648 = vmatpush2.msra.mxu0 0.0
  %4649 = vmatprep.subr.mxu0 0.0
  %4650 = vmatpush2.msra.mxu0 0.0
  %4651 = vmatprep.subr.mxu0 0.0
  %4652 = vmatpush2.msra.mxu0 0.0
  %4653 = vmatprep.subr.mxu0 0.0
  %4654 = vmatpush2.msra.mxu0 0.0
  %4655 = vmatprep.subr.mxu0 0.0
  %4656 = vmatpush2.msra.mxu0 0.0
  %4657 = vmatprep.subr.mxu0 0.0
  %4658 = vmatpush2.msra.mxu0 0.0
  %4659 = vmatprep.subr.mxu0 0.0
  %4660 = vmatpush2.msra.mxu0 0.0
  %4661 = vmatprep.subr.mxu0 0.0
  %4662 = vmatpush2.msra.mxu0 0.0
  %4663 = vmatprep.mubr.f32.mxu0 0.0
  %4664 = vmatmul.mubr.f32.gmra.mxu0 %v4594
  %v4665 = vpop.f32.mrf.mxu0
  %v4666 = vadd.f32 0.0, %v4665
  %v4667 = vpop.f32.mrf.mxu0
  %4668 = vmatprep.mubr.f32.mxu0 0.0
  %4669 = vmatmul.mubr.f32.gmra.mxu0 %v4597
  %v4670 = vpop.f32.mrf.mxu0
  %v4671 = vadd.f32 0.0, %v4670
  %v4672 = vpop.f32.mrf.mxu0
  %4673 = vdwg.mxu0
  %v4674 = vld [vmem:[%s13] sm:$0xff]
  %v4675 = vld [vmem:[%s13 + $0x8] sm:$0xff]
  %v4676 = vld [vmem:[%s13 + $0x10] sm:$0xff]
  %v4677 = vld [vmem:[%s13 + $0x18] sm:$0xff]
  %v4679 = vsel %vm209, %v4581, 0
  %v4682 = vsel %vm209, %v4666, 0
  %4684 = vmatprep.subr.mxu0 0.0
  %4685 = vmatpush1.xpose.msra.mxu0 0.0
  %4686 = vmatprep.subr.mxu0 0.0
  %4687 = vmatpush1.xpose.msra.mxu0 0.0
  %4688 = vmatprep.subr.mxu0 0.0
  %4689 = vmatpush1.xpose.msra.mxu0 0.0
  %4690 = vmatprep.subr.mxu0 0.0
  %4691 = vmatpush1.xpose.msra.mxu0 0.0
  %4692 = vmatprep.subr.mxu0 0.0
  %4693 = vmatpush1.xpose.msra.mxu0 0.0
  %4694 = vmatprep.subr.mxu0 0.0
  %4695 = vmatpush1.xpose.msra.mxu0 0.0
  %4696 = vmatprep.subr.mxu0 0.0
  %4697 = vmatpush1.xpose.msra.mxu0 0.0
  %4698 = vmatprep.subr.mxu0 0.0
  %4699 = vmatpush1.xpose.msra.mxu0 0.0
  %4700 = vmatprep.subr.mxu0 0.0
  %4701 = vmatpush1.xpose.msra.mxu0 0.0
  %4702 = vmatprep.subr.mxu0 0.0
  %4703 = vmatpush1.xpose.msra.mxu0 0.0
  %4704 = vmatprep.subr.mxu0 0.0
  %4705 = vmatpush1.xpose.msra.mxu0 0.0
  %4706 = vmatprep.subr.mxu0 0.0
  %4707 = vmatpush1.xpose.msra.mxu0 0.0
  %4708 = vmatprep.subr.mxu0 0.0
  %4709 = vmatpush1.xpose.msra.mxu0 0.0
  %4710 = vmatprep.subr.mxu0 0.0
  %4711 = vmatpush1.xpose.msra.mxu0 0.0
  %4712 = vmatprep.subr.mxu0 0.0
  %4713 = vmatpush1.xpose.msra.mxu0 0.0
  %4714 = vmatprep.subr.mxu0 0.0
  %4715 = vmatpush1.xpose.msra.mxu0 %v4682
  %4716 = vmatprep.subr.mxu0 0.0
  %4717 = vmatpush2.xpose.msra.mxu0 0.0
  %4718 = vmatprep.subr.mxu0 0.0
  %4719 = vmatpush2.xpose.msra.mxu0 0.0
  %4720 = vmatprep.subr.mxu0 0.0
  %4721 = vmatpush2.xpose.msra.mxu0 0.0
  %4722 = vmatprep.subr.mxu0 0.0
  %4723 = vmatpush2.xpose.msra.mxu0 0.0
  %4724 = vmatprep.subr.mxu0 0.0
  %4725 = vmatpush2.xpose.msra.mxu0 0.0
  %4726 = vmatprep.subr.mxu0 0.0
  %4727 = vmatpush2.xpose.msra.mxu0 0.0
  %4728 = vmatprep.subr.mxu0 0.0
  %4729 = vmatpush2.xpose.msra.mxu0 0.0
  %4730 = vmatprep.subr.mxu0 0.0
  %4731 = vmatpush2.xpose.msra.mxu0 0.0
  %4732 = vmatprep.subr.mxu0 0.0
  %4733 = vmatpush2.xpose.msra.mxu0 0.0
  %4734 = vmatprep.subr.mxu0 0.0
  %4735 = vmatpush2.xpose.msra.mxu0 0.0
  %4736 = vmatprep.subr.mxu0 0.0
  %4737 = vmatpush2.xpose.msra.mxu0 0.0
  %4738 = vmatprep.subr.mxu0 0.0
  %4739 = vmatpush2.xpose.msra.mxu0 0.0
  %4740 = vmatprep.subr.mxu0 0.0
  %4741 = vmatpush2.xpose.msra.mxu0 0.0
  %4742 = vmatprep.subr.mxu0 0.0
  %4743 = vmatpush2.xpose.msra.mxu0 0.0
  %4744 = vmatprep.subr.mxu0 0.0
  %4745 = vmatpush2.xpose.msra.mxu0 0.0
  %4746 = vmatprep.subr.mxu0 0.0
  %4747 = vmatpush2.xpose.msra.mxu0 0.0
  %4748 = vmatprep.mubr.f32.mxu0 0.0
  %4749 = vmatmul.mubr.f32.gmra.mxu0 %v4679
  %v4750 = vpop.f32.mrf.mxu0
  %v4751 = vadd.f32 0.0, %v4750
  %v4752 = vpop.f32.mrf.mxu0
  %4753 = vdwg.mxu0
  %v4755 = vsel %vm209, %v4586, 0
  %v4758 = vsel %vm209, %v4671, 0
  %4760 = vmatprep.subr.mxu0 0.0
  %4761 = vmatpush1.xpose.msra.mxu0 0.0
  %4762 = vmatprep.subr.mxu0 0.0
  %4763 = vmatpush1.xpose.msra.mxu0 0.0
  %4764 = vmatprep.subr.mxu0 0.0
  %4765 = vmatpush1.xpose.msra.mxu0 0.0
  %4766 = vmatprep.subr.mxu0 0.0
  %4767 = vmatpush1.xpose.msra.mxu0 0.0
  %4768 = vmatprep.subr.mxu0 0.0
  %4769 = vmatpush1.xpose.msra.mxu0 0.0
  %4770 = vmatprep.subr.mxu0 0.0
  %4771 = vmatpush1.xpose.msra.mxu0 0.0
  %4772 = vmatprep.subr.mxu0 0.0
  %4773 = vmatpush1.xpose.msra.mxu0 0.0
  %4774 = vmatprep.subr.mxu0 0.0
  %4775 = vmatpush1.xpose.msra.mxu0 0.0
  %4776 = vmatprep.subr.mxu0 0.0
  %4777 = vmatpush1.xpose.msra.mxu0 0.0
  %4778 = vmatprep.subr.mxu0 0.0
  %4779 = vmatpush1.xpose.msra.mxu0 0.0
  %4780 = vmatprep.subr.mxu0 0.0
  %4781 = vmatpush1.xpose.msra.mxu0 0.0
  %4782 = vmatprep.subr.mxu0 0.0
  %4783 = vmatpush1.xpose.msra.mxu0 0.0
  %4784 = vmatprep.subr.mxu0 0.0
  %4785 = vmatpush1.xpose.msra.mxu0 0.0
  %4786 = vmatprep.subr.mxu0 0.0
  %4787 = vmatpush1.xpose.msra.mxu0 0.0
  %4788 = vmatprep.subr.mxu0 0.0
  %4789 = vmatpush1.xpose.msra.mxu0 0.0
  %4790 = vmatprep.subr.mxu0 0.0
  %4791 = vmatpush1.xpose.msra.mxu0 %v4758
  %4792 = vmatprep.subr.mxu0 0.0
  %4793 = vmatpush2.xpose.msra.mxu0 0.0
  %4794 = vmatprep.subr.mxu0 0.0
  %4795 = vmatpush2.xpose.msra.mxu0 0.0
  %4796 = vmatprep.subr.mxu0 0.0
  %4797 = vmatpush2.xpose.msra.mxu0 0.0
  %4798 = vmatprep.subr.mxu0 0.0
  %4799 = vmatpush2.xpose.msra.mxu0 0.0
  %4800 = vmatprep.subr.mxu0 0.0
  %4801 = vmatpush2.xpose.msra.mxu0 0.0
  %4802 = vmatprep.subr.mxu0 0.0
  %4803 = vmatpush2.xpose.msra.mxu0 0.0
  %4804 = vmatprep.subr.mxu0 0.0
  %4805 = vmatpush2.xpose.msra.mxu0 0.0
  %4806 = vmatprep.subr.mxu0 0.0
  %4807 = vmatpush2.xpose.msra.mxu0 0.0
  %4808 = vmatprep.subr.mxu0 0.0
  %4809 = vmatpush2.xpose.msra.mxu0 0.0
  %4810 = vmatprep.subr.mxu0 0.0
  %4811 = vmatpush2.xpose.msra.mxu0 0.0
  %4812 = vmatprep.subr.mxu0 0.0
  %4813 = vmatpush2.xpose.msra.mxu0 0.0
  %4814 = vmatprep.subr.mxu0 0.0
  %4815 = vmatpush2.xpose.msra.mxu0 0.0
  %4816 = vmatprep.subr.mxu0 0.0
  %4817 = vmatpush2.xpose.msra.mxu0 0.0
  %4818 = vmatprep.subr.mxu0 0.0
  %4819 = vmatpush2.xpose.msra.mxu0 0.0
  %4820 = vmatprep.subr.mxu0 0.0
  %4821 = vmatpush2.xpose.msra.mxu0 0.0
  %4822 = vmatprep.subr.mxu0 0.0
  %4823 = vmatpush2.xpose.msra.mxu0 0.0
  %4824 = vmatprep.mubr.f32.mxu0 0.0
  %4825 = vmatmul.mubr.f32.gmra.mxu0 %v4755
  %v4826 = vpop.f32.mrf.mxu0
  %v4827 = vadd.f32 0.0, %v4826
  %v4828 = vpop.f32.mrf.mxu0
  %4829 = vdwg.mxu0
  %v4830 = vmul.f32 %v4751, 0.35355338
  %v4831 = vmul.f32 %v4827, 0.35355338
  %v4832 = vsel %vm209, %v4830, -inf
  %4833 = vmax.xlane.f32.xlu0 %v4832
  %v4834 = vpop.xlane.xlu0 %4833
  %v4835 = vsel %vm209, %v4831, -inf
  %4836 = vmax.xlane.f32.xlu0 %v4835
  %v4837 = vpop.xlane.xlu0 %4836
  %v4838 = vsub.f32 %v4830, %v4834
  %v4839 = vsub.f32 %v4831, %v4837
  %v4840 = vmul.f32 %v4838, 1.442695
  %v4841 = vpow.pop %v4840
  %v4842 = vmul.f32 %v4839, 1.442695
  %v4843 = vpow.pop %v4842
  %v4844 = vsel %vm209, %v4841, 0.0
  %4845 = vadd.xlane.f32.xlu0 %v4844
  %v4846 = vpop.xlane.xlu0 %4845
  %v4847 = vsel %vm209, %v4843, 0.0
  %4848 = vadd.xlane.f32.xlu0 %v4847
  %v4849 = vpop.xlane.xlu0 %4848
  %v4850 = vrcp.pop %v4846
  %v4851 = vrcp.pop %v4849
  %v4852 = vmul.f32 %v4841, %v4850
  %v4853 = vmul.f32 %v4843, %v4851
  %4854 = vrot.lane.b32.xlu0 %v4666, 96
  %v4855 = vpop.permute.xlu0 %4854
  %v4858 = vsel %vm209, %v4852, 0
  %4860 = vmatprep.subr.mxu0 0.0
  %4861 = vmatpush1.msra.mxu0 0.0
  %4862 = vmatprep.subr.mxu0 0.0
  %4863 = vmatpush1.msra.mxu0 0.0
  %4864 = vmatprep.subr.mxu0 0.0
  %4865 = vmatpush1.msra.mxu0 0.0
  %4866 = vmatprep.subr.mxu0 0.0
  %4867 = vmatpush1.msra.mxu0 0.0
  %4868 = vmatprep.subr.mxu0 0.0
  %4869 = vmatpush1.msra.mxu0 0.0
  %4870 = vmatprep.subr.mxu0 0.0
  %4871 = vmatpush1.msra.mxu0 0.0
  %4872 = vmatprep.subr.mxu0 0.0
  %4873 = vmatpush1.msra.mxu0 0.0
  %4874 = vmatprep.subr.mxu0 0.0
  %4875 = vmatpush1.msra.mxu0 0.0
  %4876 = vmatprep.subr.mxu0 0.0
  %4877 = vmatpush1.msra.mxu0 0.0
  %4878 = vmatprep.subr.mxu0 0.0
  %4879 = vmatpush1.msra.mxu0 0.0
  %4880 = vmatprep.subr.mxu0 0.0
  %4881 = vmatpush1.msra.mxu0 0.0
  %4882 = vmatprep.subr.mxu0 0.0
  %4883 = vmatpush1.msra.mxu0 0.0
  %4884 = vmatprep.subr.mxu0 0.0
  %4885 = vmatpush1.msra.mxu0 0.0
  %4886 = vmatprep.subr.mxu0 0.0
  %4887 = vmatpush1.msra.mxu0 0.0
  %4888 = vmatprep.subr.mxu0 0.0
  %4889 = vmatpush1.msra.mxu0 0.0
  %4890 = vmatprep.subr.mxu0 0.0
  %4891 = vmatpush1.msra.mxu0 %v4855
  %4892 = vmatprep.subr.mxu0 0.0
  %4893 = vmatpush2.msra.mxu0 0.0
  %4894 = vmatprep.subr.mxu0 0.0
  %4895 = vmatpush2.msra.mxu0 0.0
  %4896 = vmatprep.subr.mxu0 0.0
  %4897 = vmatpush2.msra.mxu0 0.0
  %4898 = vmatprep.subr.mxu0 0.0
  %4899 = vmatpush2.msra.mxu0 0.0
  %4900 = vmatprep.subr.mxu0 0.0
  %4901 = vmatpush2.msra.mxu0 0.0
  %4902 = vmatprep.subr.mxu0 0.0
  %4903 = vmatpush2.msra.mxu0 0.0
  %4904 = vmatprep.subr.mxu0 0.0
  %4905 = vmatpush2.msra.mxu0 0.0
  %4906 = vmatprep.subr.mxu0 0.0
  %4907 = vmatpush2.msra.mxu0 0.0
  %4908 = vmatprep.subr.mxu0 0.0
  %4909 = vmatpush2.msra.mxu0 0.0
  %4910 = vmatprep.subr.mxu0 0.0
  %4911 = vmatpush2.msra.mxu0 0.0
  %4912 = vmatprep.subr.mxu0 0.0
  %4913 = vmatpush2.msra.mxu0 0.0
  %4914 = vmatprep.subr.mxu0 0.0
  %4915 = vmatpush2.msra.mxu0 0.0
  %4916 = vmatprep.subr.mxu0 0.0
  %4917 = vmatpush2.msra.mxu0 0.0
  %4918 = vmatprep.subr.mxu0 0.0
  %4919 = vmatpush2.msra.mxu0 0.0
  %4920 = vmatprep.subr.mxu0 0.0
  %4921 = vmatpush2.msra.mxu0 0.0
  %4922 = vmatprep.subr.mxu0 0.0
  %4923 = vmatpush2.msra.mxu0 0.0
  %4924 = vmatprep.mubr.f32.mxu0 0.0
  %4925 = vmatmul.mubr.f32.gmra.mxu0 %v4858
  %v4926 = vpop.f32.mrf.mxu0
  %v4927 = vadd.f32 0.0, %v4926
  %v4928 = vpop.f32.mrf.mxu0
  %4929 = vdwg.mxu0
  %4930 = vrot.lane.b32.xlu0 %v4671, 96
  %v4931 = vpop.permute.xlu0 %4930
  %v4934 = vsel %vm209, %v4853, 0
  %4936 = vmatprep.subr.mxu0 0.0
  %4937 = vmatpush1.msra.mxu0 0.0
  %4938 = vmatprep.subr.mxu0 0.0
  %4939 = vmatpush1.msra.mxu0 0.0
  %4940 = vmatprep.subr.mxu0 0.0
  %4941 = vmatpush1.msra.mxu0 0.0
  %4942 = vmatprep.subr.mxu0 0.0
  %4943 = vmatpush1.msra.mxu0 0.0
  %4944 = vmatprep.subr.mxu0 0.0
  %4945 = vmatpush1.msra.mxu0 0.0
  %4946 = vmatprep.subr.mxu0 0.0
  %4947 = vmatpush1.msra.mxu0 0.0
  %4948 = vmatprep.subr.mxu0 0.0
  %4949 = vmatpush1.msra.mxu0 0.0
  %4950 = vmatprep.subr.mxu0 0.0
  %4951 = vmatpush1.msra.mxu0 0.0
  %4952 = vmatprep.subr.mxu0 0.0
  %4953 = vmatpush1.msra.mxu0 0.0
  %4954 = vmatprep.subr.mxu0 0.0
  %4955 = vmatpush1.msra.mxu0 0.0
  %4956 = vmatprep.subr.mxu0 0.0
  %4957 = vmatpush1.msra.mxu0 0.0
  %4958 = vmatprep.subr.mxu0 0.0
  %4959 = vmatpush1.msra.mxu0 0.0
  %4960 = vmatprep.subr.mxu0 0.0
  %4961 = vmatpush1.msra.mxu0 0.0
  %4962 = vmatprep.subr.mxu0 0.0
  %4963 = vmatpush1.msra.mxu0 0.0
  %4964 = vmatprep.subr.mxu0 0.0
  %4965 = vmatpush1.msra.mxu0 0.0
  %4966 = vmatprep.subr.mxu0 0.0
  %4967 = vmatpush1.msra.mxu0 %v4931
  %4968 = vmatprep.subr.mxu0 0.0
  %4969 = vmatpush2.msra.mxu0 0.0
  %4970 = vmatprep.subr.mxu0 0.0
  %4971 = vmatpush2.msra.mxu0 0.0
  %4972 = vmatprep.subr.mxu0 0.0
  %4973 = vmatpush2.msra.mxu0 0.0
  %4974 = vmatprep.subr.mxu0 0.0
  %4975 = vmatpush2.msra.mxu0 0.0
  %4976 = vmatprep.subr.mxu0 0.0
  %4977 = vmatpush2.msra.mxu0 0.0
  %4978 = vmatprep.subr.mxu0 0.0
  %4979 = vmatpush2.msra.mxu0 0.0
  %4980 = vmatprep.subr.mxu0 0.0
  %4981 = vmatpush2.msra.mxu0 0.0
  %4982 = vmatprep.subr.mxu0 0.0
  %4983 = vmatpush2.msra.mxu0 0.0
  %4984 = vmatprep.subr.mxu0 0.0
  %4985 = vmatpush2.msra.mxu0 0.0
  %4986 = vmatprep.subr.mxu0 0.0
  %4987 = vmatpush2.msra.mxu0 0.0
  %4988 = vmatprep.subr.mxu0 0.0
  %4989 = vmatpush2.msra.mxu0 0.0
  %4990 = vmatprep.subr.mxu0 0.0
  %4991 = vmatpush2.msra.mxu0 0.0
  %4992 = vmatprep.subr.mxu0 0.0
  %4993 = vmatpush2.msra.mxu0 0.0
  %4994 = vmatprep.subr.mxu0 0.0
  %4995 = vmatpush2.msra.mxu0 0.0
  %4996 = vmatprep.subr.mxu0 0.0
  %4997 = vmatpush2.msra.mxu0 0.0
  %4998 = vmatprep.subr.mxu0 0.0
  %4999 = vmatpush2.msra.mxu0 0.0
  %5000 = vmatprep.mubr.f32.mxu0 0.0
  %5001 = vmatmul.mubr.f32.gmra.mxu0 %v4934
  %v5002 = vpop.f32.mrf.mxu0
  %v5003 = vadd.f32 0.0, %v5002
  %v5004 = vpop.f32.mrf.mxu0
  %5005 = vdwg.mxu0
  %5006 = vrot.lane.b32.xlu0 %v4581, 120
  %v5007 = vpop.permute.xlu0 %5006
  %5008 = vrot.lane.b32.xlu0 %v4666, 120
  %v5009 = vpop.permute.xlu0 %5008
  %v5010 = vsel %vm209, %v5007, 0
  %v5012 = vsel %vm209, %v5009, 0
  %5014 = vmatprep.subr.mxu0 0.0
  %5015 = vmatpush1.xpose.msra.mxu0 0.0
  %5016 = vmatprep.subr.mxu0 0.0
  %5017 = vmatpush1.xpose.msra.mxu0 0.0
  %5018 = vmatprep.subr.mxu0 0.0
  %5019 = vmatpush1.xpose.msra.mxu0 0.0
  %5020 = vmatprep.subr.mxu0 0.0
  %5021 = vmatpush1.xpose.msra.mxu0 0.0
  %5022 = vmatprep.subr.mxu0 0.0
  %5023 = vmatpush1.xpose.msra.mxu0 0.0
  %5024 = vmatprep.subr.mxu0 0.0
  %5025 = vmatpush1.xpose.msra.mxu0 0.0
  %5026 = vmatprep.subr.mxu0 0.0
  %5027 = vmatpush1.xpose.msra.mxu0 0.0
  %5028 = vmatprep.subr.mxu0 0.0
  %5029 = vmatpush1.xpose.msra.mxu0 0.0
  %5030 = vmatprep.subr.mxu0 0.0
  %5031 = vmatpush1.xpose.msra.mxu0 0.0
  %5032 = vmatprep.subr.mxu0 0.0
  %5033 = vmatpush1.xpose.msra.mxu0 0.0
  %5034 = vmatprep.subr.mxu0 0.0
  %5035 = vmatpush1.xpose.msra.mxu0 0.0
  %5036 = vmatprep.subr.mxu0 0.0
  %5037 = vmatpush1.xpose.msra.mxu0 0.0
  %5038 = vmatprep.subr.mxu0 0.0
  %5039 = vmatpush1.xpose.msra.mxu0 0.0
  %5040 = vmatprep.subr.mxu0 0.0
  %5041 = vmatpush1.xpose.msra.mxu0 0.0
  %5042 = vmatprep.subr.mxu0 0.0
  %5043 = vmatpush1.xpose.msra.mxu0 0.0
  %5044 = vmatprep.subr.mxu0 0.0
  %5045 = vmatpush1.xpose.msra.mxu0 %v5012
  %5046 = vmatprep.subr.mxu0 0.0
  %5047 = vmatpush2.xpose.msra.mxu0 0.0
  %5048 = vmatprep.subr.mxu0 0.0
  %5049 = vmatpush2.xpose.msra.mxu0 0.0
  %5050 = vmatprep.subr.mxu0 0.0
  %5051 = vmatpush2.xpose.msra.mxu0 0.0
  %5052 = vmatprep.subr.mxu0 0.0
  %5053 = vmatpush2.xpose.msra.mxu0 0.0
  %5054 = vmatprep.subr.mxu0 0.0
  %5055 = vmatpush2.xpose.msra.mxu0 0.0
  %5056 = vmatprep.subr.mxu0 0.0
  %5057 = vmatpush2.xpose.msra.mxu0 0.0
  %5058 = vmatprep.subr.mxu0 0.0
  %5059 = vmatpush2.xpose.msra.mxu0 0.0
  %5060 = vmatprep.subr.mxu0 0.0
  %5061 = vmatpush2.xpose.msra.mxu0 0.0
  %5062 = vmatprep.subr.mxu0 0.0
  %5063 = vmatpush2.xpose.msra.mxu0 0.0
  %5064 = vmatprep.subr.mxu0 0.0
  %5065 = vmatpush2.xpose.msra.mxu0 0.0
  %5066 = vmatprep.subr.mxu0 0.0
  %5067 = vmatpush2.xpose.msra.mxu0 0.0
  %5068 = vmatprep.subr.mxu0 0.0
  %5069 = vmatpush2.xpose.msra.mxu0 0.0
  %5070 = vmatprep.subr.mxu0 0.0
  %5071 = vmatpush2.xpose.msra.mxu0 0.0
  %5072 = vmatprep.subr.mxu0 0.0
  %5073 = vmatpush2.xpose.msra.mxu0 0.0
  %5074 = vmatprep.subr.mxu0 0.0
  %5075 = vmatpush2.xpose.msra.mxu0 0.0
  %5076 = vmatprep.subr.mxu0 0.0
  %5077 = vmatpush2.xpose.msra.mxu0 0.0
  %5078 = vmatprep.mubr.f32.mxu0 0.0
  %5079 = vmatmul.mubr.f32.gmra.mxu0 %v5010
  %v5080 = vpop.f32.mrf.mxu0
  %v5081 = vadd.f32 0.0, %v5080
  %v5082 = vpop.f32.mrf.mxu0
  %5083 = vdwg.mxu0
  %5084 = vrot.lane.b32.xlu0 %v4586, 120
  %v5085 = vpop.permute.xlu0 %5084
  %5086 = vrot.lane.b32.xlu0 %v4671, 120
  %v5087 = vpop.permute.xlu0 %5086
  %v5088 = vsel %vm209, %v5085, 0
  %v5090 = vsel %vm209, %v5087, 0
  %5092 = vmatprep.subr.mxu0 0.0
  %5093 = vmatpush1.xpose.msra.mxu0 0.0
  %5094 = vmatprep.subr.mxu0 0.0
  %5095 = vmatpush1.xpose.msra.mxu0 0.0
  %5096 = vmatprep.subr.mxu0 0.0
  %5097 = vmatpush1.xpose.msra.mxu0 0.0
  %5098 = vmatprep.subr.mxu0 0.0
  %5099 = vmatpush1.xpose.msra.mxu0 0.0
  %5100 = vmatprep.subr.mxu0 0.0
  %5101 = vmatpush1.xpose.msra.mxu0 0.0
  %5102 = vmatprep.subr.mxu0 0.0
  %5103 = vmatpush1.xpose.msra.mxu0 0.0
  %5104 = vmatprep.subr.mxu0 0.0
  %5105 = vmatpush1.xpose.msra.mxu0 0.0
  %5106 = vmatprep.subr.mxu0 0.0
  %5107 = vmatpush1.xpose.msra.mxu0 0.0
  %5108 = vmatprep.subr.mxu0 0.0
  %5109 = vmatpush1.xpose.msra.mxu0 0.0
  %5110 = vmatprep.subr.mxu0 0.0
  %5111 = vmatpush1.xpose.msra.mxu0 0.0
  %5112 = vmatprep.subr.mxu0 0.0
  %5113 = vmatpush1.xpose.msra.mxu0 0.0
  %5114 = vmatprep.subr.mxu0 0.0
  %5115 = vmatpush1.xpose.msra.mxu0 0.0
  %5116 = vmatprep.subr.mxu0 0.0
  %5117 = vmatpush1.xpose.msra.mxu0 0.0
  %5118 = vmatprep.subr.mxu0 0.0
  %5119 = vmatpush1.xpose.msra.mxu0 0.0
  %5120 = vmatprep.subr.mxu0 0.0
  %5121 = vmatpush1.xpose.msra.mxu0 0.0
  %5122 = vmatprep.subr.mxu0 0.0
  %5123 = vmatpush1.xpose.msra.mxu0 %v5090
  %5124 = vmatprep.subr.mxu0 0.0
  %5125 = vmatpush2.xpose.msra.mxu0 0.0
  %5126 = vmatprep.subr.mxu0 0.0
  %5127 = vmatpush2.xpose.msra.mxu0 0.0
  %5128 = vmatprep.subr.mxu0 0.0
  %5129 = vmatpush2.xpose.msra.mxu0 0.0
  %5130 = vmatprep.subr.mxu0 0.0
  %5131 = vmatpush2.xpose.msra.mxu0 0.0
  %5132 = vmatprep.subr.mxu0 0.0
  %5133 = vmatpush2.xpose.msra.mxu0 0.0
  %5134 = vmatprep.subr.mxu0 0.0
  %5135 = vmatpush2.xpose.msra.mxu0 0.0
  %5136 = vmatprep.subr.mxu0 0.0
  %5137 = vmatpush2.xpose.msra.mxu0 0.0
  %5138 = vmatprep.subr.mxu0 0.0
  %5139 = vmatpush2.xpose.msra.mxu0 0.0
  %5140 = vmatprep.subr.mxu0 0.0
  %5141 = vmatpush2.xpose.msra.mxu0 0.0
  %5142 = vmatprep.subr.mxu0 0.0
  %5143 = vmatpush2.xpose.msra.mxu0 0.0
  %5144 = vmatprep.subr.mxu0 0.0
  %5145 = vmatpush2.xpose.msra.mxu0 0.0
  %5146 = vmatprep.subr.mxu0 0.0
  %5147 = vmatpush2.xpose.msra.mxu0 0.0
  %5148 = vmatprep.subr.mxu0 0.0
  %5149 = vmatpush2.xpose.msra.mxu0 0.0
  %5150 = vmatprep.subr.mxu0 0.0
  %5151 = vmatpush2.xpose.msra.mxu0 0.0
  %5152 = vmatprep.subr.mxu0 0.0
  %5153 = vmatpush2.xpose.msra.mxu0 0.0
  %5154 = vmatprep.subr.mxu0 0.0
  %5155 = vmatpush2.xpose.msra.mxu0 0.0
  %5156 = vmatprep.mubr.f32.mxu0 0.0
  %5157 = vmatmul.mubr.f32.gmra.mxu0 %v5088
  %v5158 = vpop.f32.mrf.mxu0
  %v5159 = vadd.f32 0.0, %v5158
  %v5160 = vpop.f32.mrf.mxu0
  %5161 = vdwg.mxu0
  %v5162 = vmul.f32 %v5081, 0.35355338
  %v5163 = vmul.f32 %v5159, 0.35355338
  %v5164 = vsel %vm209, %v5162, -inf
  %5165 = vmax.xlane.f32.xlu0 %v5164
  %v5166 = vpop.xlane.xlu0 %5165
  %v5167 = vsel %vm209, %v5163, -inf
  %5168 = vmax.xlane.f32.xlu0 %v5167
  %v5169 = vpop.xlane.xlu0 %5168
  %v5170 = vsub.f32 %v5162, %v5166
  %v5171 = vsub.f32 %v5163, %v5169
  %v5172 = vmul.f32 %v5170, 1.442695
  %v5173 = vpow.pop %v5172
  %v5174 = vmul.f32 %v5171, 1.442695
  %v5175 = vpow.pop %v5174
  %v5176 = vsel %vm209, %v5173, 0.0
  %5177 = vadd.xlane.f32.xlu0 %v5176
  %v5178 = vpop.xlane.xlu0 %5177
  %v5179 = vsel %vm209, %v5175, 0.0
  %5180 = vadd.xlane.f32.xlu0 %v5179
  %v5181 = vpop.xlane.xlu0 %5180
  %v5182 = vrcp.pop %v5178
  %v5183 = vrcp.pop %v5181
  %v5184 = vmul.f32 %v5173, %v5182
  %v5185 = vmul.f32 %v5175, %v5183
  %5186 = vrot.lane.b32.xlu0 %v4666, 88
  %v5187 = vpop.permute.xlu0 %5186
  %v5190 = vsel %vm209, %v5184, 0
  %5192 = vmatprep.subr.mxu0 0.0
  %5193 = vmatpush1.msra.mxu0 0.0
  %5194 = vmatprep.subr.mxu0 0.0
  %5195 = vmatpush1.msra.mxu0 0.0
  %5196 = vmatprep.subr.mxu0 0.0
  %5197 = vmatpush1.msra.mxu0 0.0
  %5198 = vmatprep.subr.mxu0 0.0
  %5199 = vmatpush1.msra.mxu0 0.0
  %5200 = vmatprep.subr.mxu0 0.0
  %5201 = vmatpush1.msra.mxu0 0.0
  %5202 = vmatprep.subr.mxu0 0.0
  %5203 = vmatpush1.msra.mxu0 0.0
  %5204 = vmatprep.subr.mxu0 0.0
  %5205 = vmatpush1.msra.mxu0 0.0
  %5206 = vmatprep.subr.mxu0 0.0
  %5207 = vmatpush1.msra.mxu0 0.0
  %5208 = vmatprep.subr.mxu0 0.0
  %5209 = vmatpush1.msra.mxu0 0.0
  %5210 = vmatprep.subr.mxu0 0.0
  %5211 = vmatpush1.msra.mxu0 0.0
  %5212 = vmatprep.subr.mxu0 0.0
  %5213 = vmatpush1.msra.mxu0 0.0
  %5214 = vmatprep.subr.mxu0 0.0
  %5215 = vmatpush1.msra.mxu0 0.0
  %5216 = vmatprep.subr.mxu0 0.0
  %5217 = vmatpush1.msra.mxu0 0.0
  %5218 = vmatprep.subr.mxu0 0.0
  %5219 = vmatpush1.msra.mxu0 0.0
  %5220 = vmatprep.subr.mxu0 0.0
  %5221 = vmatpush1.msra.mxu0 0.0
  %5222 = vmatprep.subr.mxu0 0.0
  %5223 = vmatpush1.msra.mxu0 %v5187
  %5224 = vmatprep.subr.mxu0 0.0
  %5225 = vmatpush2.msra.mxu0 0.0
  %5226 = vmatprep.subr.mxu0 0.0
  %5227 = vmatpush2.msra.mxu0 0.0
  %5228 = vmatprep.subr.mxu0 0.0
  %5229 = vmatpush2.msra.mxu0 0.0
  %5230 = vmatprep.subr.mxu0 0.0
  %5231 = vmatpush2.msra.mxu0 0.0
  %5232 = vmatprep.subr.mxu0 0.0
  %5233 = vmatpush2.msra.mxu0 0.0
  %5234 = vmatprep.subr.mxu0 0.0
  %5235 = vmatpush2.msra.mxu0 0.0
  %5236 = vmatprep.subr.mxu0 0.0
  %5237 = vmatpush2.msra.mxu0 0.0
  %5238 = vmatprep.subr.mxu0 0.0
  %5239 = vmatpush2.msra.mxu0 0.0
  %5240 = vmatprep.subr.mxu0 0.0
  %5241 = vmatpush2.msra.mxu0 0.0
  %5242 = vmatprep.subr.mxu0 0.0
  %5243 = vmatpush2.msra.mxu0 0.0
  %5244 = vmatprep.subr.mxu0 0.0
  %5245 = vmatpush2.msra.mxu0 0.0
  %5246 = vmatprep.subr.mxu0 0.0
  %5247 = vmatpush2.msra.mxu0 0.0
  %5248 = vmatprep.subr.mxu0 0.0
  %5249 = vmatpush2.msra.mxu0 0.0
  %5250 = vmatprep.subr.mxu0 0.0
  %5251 = vmatpush2.msra.mxu0 0.0
  %5252 = vmatprep.subr.mxu0 0.0
  %5253 = vmatpush2.msra.mxu0 0.0
  %5254 = vmatprep.subr.mxu0 0.0
  %5255 = vmatpush2.msra.mxu0 0.0
  %5256 = vmatprep.mubr.f32.mxu0 0.0
  %5257 = vmatmul.mubr.f32.gmra.mxu0 %v5190
  %v5258 = vpop.f32.mrf.mxu0
  %v5259 = vadd.f32 0.0, %v5258
  %v5260 = vpop.f32.mrf.mxu0
  %5261 = vdwg.mxu0
  %5262 = vrot.lane.b32.xlu0 %v4671, 88
  %v5263 = vpop.permute.xlu0 %5262
  %v5266 = vsel %vm209, %v5185, 0
  %5268 = vmatprep.subr.mxu0 0.0
  %5269 = vmatpush1.msra.mxu0 0.0
  %5270 = vmatprep.subr.mxu0 0.0
  %5271 = vmatpush1.msra.mxu0 0.0
  %5272 = vmatprep.subr.mxu0 0.0
  %5273 = vmatpush1.msra.mxu0 0.0
  %5274 = vmatprep.subr.mxu0 0.0
  %5275 = vmatpush1.msra.mxu0 0.0
  %5276 = vmatprep.subr.mxu0 0.0
  %5277 = vmatpush1.msra.mxu0 0.0
  %5278 = vmatprep.subr.mxu0 0.0
  %5279 = vmatpush1.msra.mxu0 0.0
  %5280 = vmatprep.subr.mxu0 0.0
  %5281 = vmatpush1.msra.mxu0 0.0
  %5282 = vmatprep.subr.mxu0 0.0
  %5283 = vmatpush1.msra.mxu0 0.0
  %5284 = vmatprep.subr.mxu0 0.0
  %5285 = vmatpush1.msra.mxu0 0.0
  %5286 = vmatprep.subr.mxu0 0.0
  %5287 = vmatpush1.msra.mxu0 0.0
  %5288 = vmatprep.subr.mxu0 0.0
  %5289 = vmatpush1.msra.mxu0 0.0
  %5290 = vmatprep.subr.mxu0 0.0
  %5291 = vmatpush1.msra.mxu0 0.0
  %5292 = vmatprep.subr.mxu0 0.0
  %5293 = vmatpush1.msra.mxu0 0.0
  %5294 = vmatprep.subr.mxu0 0.0
  %5295 = vmatpush1.msra.mxu0 0.0
  %5296 = vmatprep.subr.mxu0 0.0
  %5297 = vmatpush1.msra.mxu0 0.0
  %5298 = vmatprep.subr.mxu0 0.0
  %5299 = vmatpush1.msra.mxu0 %v5263
  %5300 = vmatprep.subr.mxu0 0.0
  %5301 = vmatpush2.msra.mxu0 0.0
  %5302 = vmatprep.subr.mxu0 0.0
  %5303 = vmatpush2.msra.mxu0 0.0
  %5304 = vmatprep.subr.mxu0 0.0
  %5305 = vmatpush2.msra.mxu0 0.0
  %5306 = vmatprep.subr.mxu0 0.0
  %5307 = vmatpush2.msra.mxu0 0.0
  %5308 = vmatprep.subr.mxu0 0.0
  %5309 = vmatpush2.msra.mxu0 0.0
  %5310 = vmatprep.subr.mxu0 0.0
  %5311 = vmatpush2.msra.mxu0 0.0
  %5312 = vmatprep.subr.mxu0 0.0
  %5313 = vmatpush2.msra.mxu0 0.0
  %5314 = vmatprep.subr.mxu0 0.0
  %5315 = vmatpush2.msra.mxu0 0.0
  %5316 = vmatprep.subr.mxu0 0.0
  %5317 = vmatpush2.msra.mxu0 0.0
  %5318 = vmatprep.subr.mxu0 0.0
  %5319 = vmatpush2.msra.mxu0 0.0
  %5320 = vmatprep.subr.mxu0 0.0
  %5321 = vmatpush2.msra.mxu0 0.0
  %5322 = vmatprep.subr.mxu0 0.0
  %5323 = vmatpush2.msra.mxu0 0.0
  %5324 = vmatprep.subr.mxu0 0.0
  %5325 = vmatpush2.msra.mxu0 0.0
  %5326 = vmatprep.subr.mxu0 0.0
  %5327 = vmatpush2.msra.mxu0 0.0
  %5328 = vmatprep.subr.mxu0 0.0
  %5329 = vmatpush2.msra.mxu0 0.0
  %5330 = vmatprep.subr.mxu0 0.0
  %5331 = vmatpush2.msra.mxu0 0.0
  %5332 = vmatprep.mubr.f32.mxu0 0.0
  %5333 = vmatmul.mubr.f32.gmra.mxu0 %v5266
  %v5334 = vpop.f32.mrf.mxu0
  %v5335 = vadd.f32 0.0, %v5334
  %v5336 = vpop.f32.mrf.mxu0
  %5337 = vdwg.mxu0
  %v5339 = vsel %vm209, %v5259, 0
  %v5342 = vsel %vm209, %v5335, 0
  %5344 = vmatprep.subr.mxu0 0.0
  %5345 = vmatpush1.msra.mxu0 0.0
  %5346 = vmatprep.subr.mxu0 0.0
  %5347 = vmatpush1.msra.mxu0 0.0
  %5348 = vmatprep.subr.mxu0 0.0
  %5349 = vmatpush1.msra.mxu0 0.0
  %5350 = vmatprep.subr.mxu0 0.0
  %5351 = vmatpush1.msra.mxu0 0.0
  %5352 = vmatprep.subr.mxu0 0.0
  %5353 = vmatpush1.msra.mxu0 0.0
  %5354 = vmatprep.subr.mxu0 0.0
  %5355 = vmatpush1.msra.mxu0 0.0
  %5356 = vmatprep.subr.mxu0 0.0
  %5357 = vmatpush1.msra.mxu0 0.0
  %5358 = vmatprep.subr.mxu0 0.0
  %5359 = vmatpush1.msra.mxu0 0.0
  %5360 = vmatprep.subr.mxu0 0.0
  %5361 = vmatpush1.msra.mxu0 0.0
  %5362 = vmatprep.subr.mxu0 0.0
  %5363 = vmatpush1.msra.mxu0 0.0
  %5364 = vmatprep.subr.mxu0 0.0
  %5365 = vmatpush1.msra.mxu0 0.0
  %5366 = vmatprep.subr.mxu0 0.0
  %5367 = vmatpush1.msra.mxu0 0.0
  %5368 = vmatprep.subr.mxu0 0.0
  %5369 = vmatpush1.msra.mxu0 0.0
  %5370 = vmatprep.subr.mxu0 0.0
  %5371 = vmatpush1.msra.mxu0 0.0
  %5372 = vmatprep.subr.mxu0 0.0
  %5373 = vmatpush1.msra.mxu0 0.0
  %5374 = vmatprep.subr.mxu0 0.0
  %5375 = vmatpush1.msra.mxu0 %v4675
  %5376 = vmatprep.subr.mxu0 0.0
  %5377 = vmatpush2.msra.mxu0 0.0
  %5378 = vmatprep.subr.mxu0 0.0
  %5379 = vmatpush2.msra.mxu0 0.0
  %5380 = vmatprep.subr.mxu0 0.0
  %5381 = vmatpush2.msra.mxu0 0.0
  %5382 = vmatprep.subr.mxu0 0.0
  %5383 = vmatpush2.msra.mxu0 0.0
  %5384 = vmatprep.subr.mxu0 0.0
  %5385 = vmatpush2.msra.mxu0 0.0
  %5386 = vmatprep.subr.mxu0 0.0
  %5387 = vmatpush2.msra.mxu0 0.0
  %5388 = vmatprep.subr.mxu0 0.0
  %5389 = vmatpush2.msra.mxu0 0.0
  %5390 = vmatprep.subr.mxu0 0.0
  %5391 = vmatpush2.msra.mxu0 0.0
  %5392 = vmatprep.subr.mxu0 0.0
  %5393 = vmatpush2.msra.mxu0 0.0
  %5394 = vmatprep.subr.mxu0 0.0
  %5395 = vmatpush2.msra.mxu0 0.0
  %5396 = vmatprep.subr.mxu0 0.0
  %5397 = vmatpush2.msra.mxu0 0.0
  %5398 = vmatprep.subr.mxu0 0.0
  %5399 = vmatpush2.msra.mxu0 0.0
  %5400 = vmatprep.subr.mxu0 0.0
  %5401 = vmatpush2.msra.mxu0 0.0
  %5402 = vmatprep.subr.mxu0 0.0
  %5403 = vmatpush2.msra.mxu0 0.0
  %5404 = vmatprep.subr.mxu0 0.0
  %5405 = vmatpush2.msra.mxu0 0.0
  %5406 = vmatprep.subr.mxu0 0.0
  %5407 = vmatpush2.msra.mxu0 0.0
  %5408 = vmatprep.mubr.f32.mxu0 0.0
  %5409 = vmatmul.mubr.f32.gmra.mxu0 %v5339
  %v5410 = vpop.f32.mrf.mxu0
  %v5411 = vadd.f32 0.0, %v5410
  %v5412 = vpop.f32.mrf.mxu0
  %5413 = vmatprep.mubr.f32.mxu0 0.0
  %5414 = vmatmul.mubr.f32.gmra.mxu0 %v5342
  %v5415 = vpop.f32.mrf.mxu0
  %v5416 = vadd.f32 0.0, %v5415
  %v5417 = vpop.f32.mrf.mxu0
  %5418 = vdwg.mxu0
  %v5420 = vsel %vm209, %v4927, 0
  %v5423 = vsel %vm209, %v5003, 0
  %5425 = vmatprep.subr.mxu0 0.0
  %5426 = vmatpush1.msra.mxu0 0.0
  %5427 = vmatprep.subr.mxu0 0.0
  %5428 = vmatpush1.msra.mxu0 0.0
  %5429 = vmatprep.subr.mxu0 0.0
  %5430 = vmatpush1.msra.mxu0 0.0
  %5431 = vmatprep.subr.mxu0 0.0
  %5432 = vmatpush1.msra.mxu0 0.0
  %5433 = vmatprep.subr.mxu0 0.0
  %5434 = vmatpush1.msra.mxu0 0.0
  %5435 = vmatprep.subr.mxu0 0.0
  %5436 = vmatpush1.msra.mxu0 0.0
  %5437 = vmatprep.subr.mxu0 0.0
  %5438 = vmatpush1.msra.mxu0 0.0
  %5439 = vmatprep.subr.mxu0 0.0
  %5440 = vmatpush1.msra.mxu0 0.0
  %5441 = vmatprep.subr.mxu0 0.0
  %5442 = vmatpush1.msra.mxu0 0.0
  %5443 = vmatprep.subr.mxu0 0.0
  %5444 = vmatpush1.msra.mxu0 0.0
  %5445 = vmatprep.subr.mxu0 0.0
  %5446 = vmatpush1.msra.mxu0 0.0
  %5447 = vmatprep.subr.mxu0 0.0
  %5448 = vmatpush1.msra.mxu0 0.0
  %5449 = vmatprep.subr.mxu0 0.0
  %5450 = vmatpush1.msra.mxu0 0.0
  %5451 = vmatprep.subr.mxu0 0.0
  %5452 = vmatpush1.msra.mxu0 0.0
  %5453 = vmatprep.subr.mxu0 0.0
  %5454 = vmatpush1.msra.mxu0 0.0
  %5455 = vmatprep.subr.mxu0 0.0
  %5456 = vmatpush1.msra.mxu0 %v4674
  %5457 = vmatprep.subr.mxu0 0.0
  %5458 = vmatpush2.msra.mxu0 0.0
  %5459 = vmatprep.subr.mxu0 0.0
  %5460 = vmatpush2.msra.mxu0 0.0
  %5461 = vmatprep.subr.mxu0 0.0
  %5462 = vmatpush2.msra.mxu0 0.0
  %5463 = vmatprep.subr.mxu0 0.0
  %5464 = vmatpush2.msra.mxu0 0.0
  %5465 = vmatprep.subr.mxu0 0.0
  %5466 = vmatpush2.msra.mxu0 0.0
  %5467 = vmatprep.subr.mxu0 0.0
  %5468 = vmatpush2.msra.mxu0 0.0
  %5469 = vmatprep.subr.mxu0 0.0
  %5470 = vmatpush2.msra.mxu0 0.0
  %5471 = vmatprep.subr.mxu0 0.0
  %5472 = vmatpush2.msra.mxu0 0.0
  %5473 = vmatprep.subr.mxu0 0.0
  %5474 = vmatpush2.msra.mxu0 0.0
  %5475 = vmatprep.subr.mxu0 0.0
  %5476 = vmatpush2.msra.mxu0 0.0
  %5477 = vmatprep.subr.mxu0 0.0
  %5478 = vmatpush2.msra.mxu0 0.0
  %5479 = vmatprep.subr.mxu0 0.0
  %5480 = vmatpush2.msra.mxu0 0.0
  %5481 = vmatprep.subr.mxu0 0.0
  %5482 = vmatpush2.msra.mxu0 0.0
  %5483 = vmatprep.subr.mxu0 0.0
  %5484 = vmatpush2.msra.mxu0 0.0
  %5485 = vmatprep.subr.mxu0 0.0
  %5486 = vmatpush2.msra.mxu0 0.0
  %5487 = vmatprep.subr.mxu0 0.0
  %5488 = vmatpush2.msra.mxu0 0.0
  %5489 = vmatprep.mubr.f32.mxu0 0.0
  %5490 = vmatmul.mubr.f32.gmra.mxu0 %v5420
  %v5491 = vpop.f32.mrf.mxu0
  %v5492 = vadd.f32 %v5411, %v5491
  %v5493 = vpop.f32.mrf.mxu0
  %5494 = vmatprep.mubr.f32.mxu0 0.0
  %5495 = vmatmul.mubr.f32.gmra.mxu0 %v5423
  %v5496 = vpop.f32.mrf.mxu0
  %v5497 = vadd.f32 %v5416, %v5496
  %v5498 = vpop.f32.mrf.mxu0
  %5499 = vdwg.mxu0
  %5500 = vrot.lane.b32.xlu0 %v4581, 112
  %v5501 = vpop.permute.xlu0 %5500
  %5502 = vrot.lane.b32.xlu0 %v4666, 112
  %v5503 = vpop.permute.xlu0 %5502
  %v5504 = vsel %vm209, %v5501, 0
  %v5506 = vsel %vm209, %v5503, 0
  %5508 = vmatprep.subr.mxu0 0.0
  %5509 = vmatpush1.xpose.msra.mxu0 0.0
  %5510 = vmatprep.subr.mxu0 0.0
  %5511 = vmatpush1.xpose.msra.mxu0 0.0
  %5512 = vmatprep.subr.mxu0 0.0
  %5513 = vmatpush1.xpose.msra.mxu0 0.0
  %5514 = vmatprep.subr.mxu0 0.0
  %5515 = vmatpush1.xpose.msra.mxu0 0.0
  %5516 = vmatprep.subr.mxu0 0.0
  %5517 = vmatpush1.xpose.msra.mxu0 0.0
  %5518 = vmatprep.subr.mxu0 0.0
  %5519 = vmatpush1.xpose.msra.mxu0 0.0
  %5520 = vmatprep.subr.mxu0 0.0
  %5521 = vmatpush1.xpose.msra.mxu0 0.0
  %5522 = vmatprep.subr.mxu0 0.0
  %5523 = vmatpush1.xpose.msra.mxu0 0.0
  %5524 = vmatprep.subr.mxu0 0.0
  %5525 = vmatpush1.xpose.msra.mxu0 0.0
  %5526 = vmatprep.subr.mxu0 0.0
  %5527 = vmatpush1.xpose.msra.mxu0 0.0
  %5528 = vmatprep.subr.mxu0 0.0
  %5529 = vmatpush1.xpose.msra.mxu0 0.0
  %5530 = vmatprep.subr.mxu0 0.0
  %5531 = vmatpush1.xpose.msra.mxu0 0.0
  %5532 = vmatprep.subr.mxu0 0.0
  %5533 = vmatpush1.xpose.msra.mxu0 0.0
  %5534 = vmatprep.subr.mxu0 0.0
  %5535 = vmatpush1.xpose.msra.mxu0 0.0
  %5536 = vmatprep.subr.mxu0 0.0
  %5537 = vmatpush1.xpose.msra.mxu0 0.0
  %5538 = vmatprep.subr.mxu0 0.0
  %5539 = vmatpush1.xpose.msra.mxu0 %v5506
  %5540 = vmatprep.subr.mxu0 0.0
  %5541 = vmatpush2.xpose.msra.mxu0 0.0
  %5542 = vmatprep.subr.mxu0 0.0
  %5543 = vmatpush2.xpose.msra.mxu0 0.0
  %5544 = vmatprep.subr.mxu0 0.0
  %5545 = vmatpush2.xpose.msra.mxu0 0.0
  %5546 = vmatprep.subr.mxu0 0.0
  %5547 = vmatpush2.xpose.msra.mxu0 0.0
  %5548 = vmatprep.subr.mxu0 0.0
  %5549 = vmatpush2.xpose.msra.mxu0 0.0
  %5550 = vmatprep.subr.mxu0 0.0
  %5551 = vmatpush2.xpose.msra.mxu0 0.0
  %5552 = vmatprep.subr.mxu0 0.0
  %5553 = vmatpush2.xpose.msra.mxu0 0.0
  %5554 = vmatprep.subr.mxu0 0.0
  %5555 = vmatpush2.xpose.msra.mxu0 0.0
  %5556 = vmatprep.subr.mxu0 0.0
  %5557 = vmatpush2.xpose.msra.mxu0 0.0
  %5558 = vmatprep.subr.mxu0 0.0
  %5559 = vmatpush2.xpose.msra.mxu0 0.0
  %5560 = vmatprep.subr.mxu0 0.0
  %5561 = vmatpush2.xpose.msra.mxu0 0.0
  %5562 = vmatprep.subr.mxu0 0.0
  %5563 = vmatpush2.xpose.msra.mxu0 0.0
  %5564 = vmatprep.subr.mxu0 0.0
  %5565 = vmatpush2.xpose.msra.mxu0 0.0
  %5566 = vmatprep.subr.mxu0 0.0
  %5567 = vmatpush2.xpose.msra.mxu0 0.0
  %5568 = vmatprep.subr.mxu0 0.0
  %5569 = vmatpush2.xpose.msra.mxu0 0.0
  %5570 = vmatprep.subr.mxu0 0.0
  %5571 = vmatpush2.xpose.msra.mxu0 0.0
  %5572 = vmatprep.mubr.f32.mxu0 0.0
  %5573 = vmatmul.mubr.f32.gmra.mxu0 %v5504
  %v5574 = vpop.f32.mrf.mxu0
  %v5575 = vadd.f32 0.0, %v5574
  %v5576 = vpop.f32.mrf.mxu0
  %5577 = vdwg.mxu0
  %5578 = vrot.lane.b32.xlu0 %v4586, 112
  %v5579 = vpop.permute.xlu0 %5578
  %5580 = vrot.lane.b32.xlu0 %v4671, 112
  %v5581 = vpop.permute.xlu0 %5580
  %v5582 = vsel %vm209, %v5579, 0
  %v5584 = vsel %vm209, %v5581, 0
  %5586 = vmatprep.subr.mxu0 0.0
  %5587 = vmatpush1.xpose.msra.mxu0 0.0
  %5588 = vmatprep.subr.mxu0 0.0
  %5589 = vmatpush1.xpose.msra.mxu0 0.0
  %5590 = vmatprep.subr.mxu0 0.0
  %5591 = vmatpush1.xpose.msra.mxu0 0.0
  %5592 = vmatprep.subr.mxu0 0.0
  %5593 = vmatpush1.xpose.msra.mxu0 0.0
  %5594 = vmatprep.subr.mxu0 0.0
  %5595 = vmatpush1.xpose.msra.mxu0 0.0
  %5596 = vmatprep.subr.mxu0 0.0
  %5597 = vmatpush1.xpose.msra.mxu0 0.0
  %5598 = vmatprep.subr.mxu0 0.0
  %5599 = vmatpush1.xpose.msra.mxu0 0.0
  %5600 = vmatprep.subr.mxu0 0.0
  %5601 = vmatpush1.xpose.msra.mxu0 0.0
  %5602 = vmatprep.subr.mxu0 0.0
  %5603 = vmatpush1.xpose.msra.mxu0 0.0
  %5604 = vmatprep.subr.mxu0 0.0
  %5605 = vmatpush1.xpose.msra.mxu0 0.0
  %5606 = vmatprep.subr.mxu0 0.0
  %5607 = vmatpush1.xpose.msra.mxu0 0.0
  %5608 = vmatprep.subr.mxu0 0.0
  %5609 = vmatpush1.xpose.msra.mxu0 0.0
  %5610 = vmatprep.subr.mxu0 0.0
  %5611 = vmatpush1.xpose.msra.mxu0 0.0
  %5612 = vmatprep.subr.mxu0 0.0
  %5613 = vmatpush1.xpose.msra.mxu0 0.0
  %5614 = vmatprep.subr.mxu0 0.0
  %5615 = vmatpush1.xpose.msra.mxu0 0.0
  %5616 = vmatprep.subr.mxu0 0.0
  %5617 = vmatpush1.xpose.msra.mxu0 %v5584
  %5618 = vmatprep.subr.mxu0 0.0
  %5619 = vmatpush2.xpose.msra.mxu0 0.0
  %5620 = vmatprep.subr.mxu0 0.0
  %5621 = vmatpush2.xpose.msra.mxu0 0.0
  %5622 = vmatprep.subr.mxu0 0.0
  %5623 = vmatpush2.xpose.msra.mxu0 0.0
  %5624 = vmatprep.subr.mxu0 0.0
  %5625 = vmatpush2.xpose.msra.mxu0 0.0
  %5626 = vmatprep.subr.mxu0 0.0
  %5627 = vmatpush2.xpose.msra.mxu0 0.0
  %5628 = vmatprep.subr.mxu0 0.0
  %5629 = vmatpush2.xpose.msra.mxu0 0.0
  %5630 = vmatprep.subr.mxu0 0.0
  %5631 = vmatpush2.xpose.msra.mxu0 0.0
  %5632 = vmatprep.subr.mxu0 0.0
  %5633 = vmatpush2.xpose.msra.mxu0 0.0
  %5634 = vmatprep.subr.mxu0 0.0
  %5635 = vmatpush2.xpose.msra.mxu0 0.0
  %5636 = vmatprep.subr.mxu0 0.0
  %5637 = vmatpush2.xpose.msra.mxu0 0.0
  %5638 = vmatprep.subr.mxu0 0.0
  %5639 = vmatpush2.xpose.msra.mxu0 0.0
  %5640 = vmatprep.subr.mxu0 0.0
  %5641 = vmatpush2.xpose.msra.mxu0 0.0
  %5642 = vmatprep.subr.mxu0 0.0
  %5643 = vmatpush2.xpose.msra.mxu0 0.0
  %5644 = vmatprep.subr.mxu0 0.0
  %5645 = vmatpush2.xpose.msra.mxu0 0.0
  %5646 = vmatprep.subr.mxu0 0.0
  %5647 = vmatpush2.xpose.msra.mxu0 0.0
  %5648 = vmatprep.subr.mxu0 0.0
  %5649 = vmatpush2.xpose.msra.mxu0 0.0
  %5650 = vmatprep.mubr.f32.mxu0 0.0
  %5651 = vmatmul.mubr.f32.gmra.mxu0 %v5582
  %v5652 = vpop.f32.mrf.mxu0
  %v5653 = vadd.f32 0.0, %v5652
  %v5654 = vpop.f32.mrf.mxu0
  %5655 = vdwg.mxu0
  %v5656 = vmul.f32 %v5575, 0.35355338
  %v5657 = vmul.f32 %v5653, 0.35355338
  %v5658 = vsel %vm209, %v5656, -inf
  %5659 = vmax.xlane.f32.xlu0 %v5658
  %v5660 = vpop.xlane.xlu0 %5659
  %v5661 = vsel %vm209, %v5657, -inf
  %5662 = vmax.xlane.f32.xlu0 %v5661
  %v5663 = vpop.xlane.xlu0 %5662
  %v5664 = vsub.f32 %v5656, %v5660
  %v5665 = vsub.f32 %v5657, %v5663
  %v5666 = vmul.f32 %v5664, 1.442695
  %v5667 = vpow.pop %v5666
  %v5668 = vmul.f32 %v5665, 1.442695
  %v5669 = vpow.pop %v5668
  %v5670 = vsel %vm209, %v5667, 0.0
  %5671 = vadd.xlane.f32.xlu0 %v5670
  %v5672 = vpop.xlane.xlu0 %5671
  %v5673 = vsel %vm209, %v5669, 0.0
  %5674 = vadd.xlane.f32.xlu0 %v5673
  %v5675 = vpop.xlane.xlu0 %5674
  %v5676 = vrcp.pop %v5672
  %v5677 = vrcp.pop %v5675
  %v5678 = vmul.f32 %v5667, %v5676
  %v5679 = vmul.f32 %v5669, %v5677
  %5680 = vrot.lane.b32.xlu0 %v4666, 80
  %v5681 = vpop.permute.xlu0 %5680
  %v5684 = vsel %vm209, %v5678, 0
  %5686 = vmatprep.subr.mxu0 0.0
  %5687 = vmatpush1.msra.mxu0 0.0
  %5688 = vmatprep.subr.mxu0 0.0
  %5689 = vmatpush1.msra.mxu0 0.0
  %5690 = vmatprep.subr.mxu0 0.0
  %5691 = vmatpush1.msra.mxu0 0.0
  %5692 = vmatprep.subr.mxu0 0.0
  %5693 = vmatpush1.msra.mxu0 0.0
  %5694 = vmatprep.subr.mxu0 0.0
  %5695 = vmatpush1.msra.mxu0 0.0
  %5696 = vmatprep.subr.mxu0 0.0
  %5697 = vmatpush1.msra.mxu0 0.0
  %5698 = vmatprep.subr.mxu0 0.0
  %5699 = vmatpush1.msra.mxu0 0.0
  %5700 = vmatprep.subr.mxu0 0.0
  %5701 = vmatpush1.msra.mxu0 0.0
  %5702 = vmatprep.subr.mxu0 0.0
  %5703 = vmatpush1.msra.mxu0 0.0
  %5704 = vmatprep.subr.mxu0 0.0
  %5705 = vmatpush1.msra.mxu0 0.0
  %5706 = vmatprep.subr.mxu0 0.0
  %5707 = vmatpush1.msra.mxu0 0.0
  %5708 = vmatprep.subr.mxu0 0.0
  %5709 = vmatpush1.msra.mxu0 0.0
  %5710 = vmatprep.subr.mxu0 0.0
  %5711 = vmatpush1.msra.mxu0 0.0
  %5712 = vmatprep.subr.mxu0 0.0
  %5713 = vmatpush1.msra.mxu0 0.0
  %5714 = vmatprep.subr.mxu0 0.0
  %5715 = vmatpush1.msra.mxu0 0.0
  %5716 = vmatprep.subr.mxu0 0.0
  %5717 = vmatpush1.msra.mxu0 %v5681
  %5718 = vmatprep.subr.mxu0 0.0
  %5719 = vmatpush2.msra.mxu0 0.0
  %5720 = vmatprep.subr.mxu0 0.0
  %5721 = vmatpush2.msra.mxu0 0.0
  %5722 = vmatprep.subr.mxu0 0.0
  %5723 = vmatpush2.msra.mxu0 0.0
  %5724 = vmatprep.subr.mxu0 0.0
  %5725 = vmatpush2.msra.mxu0 0.0
  %5726 = vmatprep.subr.mxu0 0.0
  %5727 = vmatpush2.msra.mxu0 0.0
  %5728 = vmatprep.subr.mxu0 0.0
  %5729 = vmatpush2.msra.mxu0 0.0
  %5730 = vmatprep.subr.mxu0 0.0
  %5731 = vmatpush2.msra.mxu0 0.0
  %5732 = vmatprep.subr.mxu0 0.0
  %5733 = vmatpush2.msra.mxu0 0.0
  %5734 = vmatprep.subr.mxu0 0.0
  %5735 = vmatpush2.msra.mxu0 0.0
  %5736 = vmatprep.subr.mxu0 0.0
  %5737 = vmatpush2.msra.mxu0 0.0
  %5738 = vmatprep.subr.mxu0 0.0
  %5739 = vmatpush2.msra.mxu0 0.0
  %5740 = vmatprep.subr.mxu0 0.0
  %5741 = vmatpush2.msra.mxu0 0.0
  %5742 = vmatprep.subr.mxu0 0.0
  %5743 = vmatpush2.msra.mxu0 0.0
  %5744 = vmatprep.subr.mxu0 0.0
  %5745 = vmatpush2.msra.mxu0 0.0
  %5746 = vmatprep.subr.mxu0 0.0
  %5747 = vmatpush2.msra.mxu0 0.0
  %5748 = vmatprep.subr.mxu0 0.0
  %5749 = vmatpush2.msra.mxu0 0.0
  %5750 = vmatprep.mubr.f32.mxu0 0.0
  %5751 = vmatmul.mubr.f32.gmra.mxu0 %v5684
  %v5752 = vpop.f32.mrf.mxu0
  %v5753 = vadd.f32 0.0, %v5752
  %v5754 = vpop.f32.mrf.mxu0
  %5755 = vdwg.mxu0
  %5756 = vrot.lane.b32.xlu0 %v4671, 80
  %v5757 = vpop.permute.xlu0 %5756
  %v5760 = vsel %vm209, %v5679, 0
  %5762 = vmatprep.subr.mxu0 0.0
  %5763 = vmatpush1.msra.mxu0 0.0
  %5764 = vmatprep.subr.mxu0 0.0
  %5765 = vmatpush1.msra.mxu0 0.0
  %5766 = vmatprep.subr.mxu0 0.0
  %5767 = vmatpush1.msra.mxu0 0.0
  %5768 = vmatprep.subr.mxu0 0.0
  %5769 = vmatpush1.msra.mxu0 0.0
  %5770 = vmatprep.subr.mxu0 0.0
  %5771 = vmatpush1.msra.mxu0 0.0
  %5772 = vmatprep.subr.mxu0 0.0
  %5773 = vmatpush1.msra.mxu0 0.0
  %5774 = vmatprep.subr.mxu0 0.0
  %5775 = vmatpush1.msra.mxu0 0.0
  %5776 = vmatprep.subr.mxu0 0.0
  %5777 = vmatpush1.msra.mxu0 0.0
  %5778 = vmatprep.subr.mxu0 0.0
  %5779 = vmatpush1.msra.mxu0 0.0
  %5780 = vmatprep.subr.mxu0 0.0
  %5781 = vmatpush1.msra.mxu0 0.0
  %5782 = vmatprep.subr.mxu0 0.0
  %5783 = vmatpush1.msra.mxu0 0.0
  %5784 = vmatprep.subr.mxu0 0.0
  %5785 = vmatpush1.msra.mxu0 0.0
  %5786 = vmatprep.subr.mxu0 0.0
  %5787 = vmatpush1.msra.mxu0 0.0
  %5788 = vmatprep.subr.mxu0 0.0
  %5789 = vmatpush1.msra.mxu0 0.0
  %5790 = vmatprep.subr.mxu0 0.0
  %5791 = vmatpush1.msra.mxu0 0.0
  %5792 = vmatprep.subr.mxu0 0.0
  %5793 = vmatpush1.msra.mxu0 %v5757
  %5794 = vmatprep.subr.mxu0 0.0
  %5795 = vmatpush2.msra.mxu0 0.0
  %5796 = vmatprep.subr.mxu0 0.0
  %5797 = vmatpush2.msra.mxu0 0.0
  %5798 = vmatprep.subr.mxu0 0.0
  %5799 = vmatpush2.msra.mxu0 0.0
  %5800 = vmatprep.subr.mxu0 0.0
  %5801 = vmatpush2.msra.mxu0 0.0
  %5802 = vmatprep.subr.mxu0 0.0
  %5803 = vmatpush2.msra.mxu0 0.0
  %5804 = vmatprep.subr.mxu0 0.0
  %5805 = vmatpush2.msra.mxu0 0.0
  %5806 = vmatprep.subr.mxu0 0.0
  %5807 = vmatpush2.msra.mxu0 0.0
  %5808 = vmatprep.subr.mxu0 0.0
  %5809 = vmatpush2.msra.mxu0 0.0
  %5810 = vmatprep.subr.mxu0 0.0
  %5811 = vmatpush2.msra.mxu0 0.0
  %5812 = vmatprep.subr.mxu0 0.0
  %5813 = vmatpush2.msra.mxu0 0.0
  %5814 = vmatprep.subr.mxu0 0.0
  %5815 = vmatpush2.msra.mxu0 0.0
  %5816 = vmatprep.subr.mxu0 0.0
  %5817 = vmatpush2.msra.mxu0 0.0
  %5818 = vmatprep.subr.mxu0 0.0
  %5819 = vmatpush2.msra.mxu0 0.0
  %5820 = vmatprep.subr.mxu0 0.0
  %5821 = vmatpush2.msra.mxu0 0.0
  %5822 = vmatprep.subr.mxu0 0.0
  %5823 = vmatpush2.msra.mxu0 0.0
  %5824 = vmatprep.subr.mxu0 0.0
  %5825 = vmatpush2.msra.mxu0 0.0
  %5826 = vmatprep.mubr.f32.mxu0 0.0
  %5827 = vmatmul.mubr.f32.gmra.mxu0 %v5760
  %v5828 = vpop.f32.mrf.mxu0
  %v5829 = vadd.f32 0.0, %v5828
  %v5830 = vpop.f32.mrf.mxu0
  %5831 = vdwg.mxu0
  %v5833 = vsel %vm209, %v5753, 0
  %v5836 = vsel %vm209, %v5829, 0
  %5838 = vmatprep.subr.mxu0 0.0
  %5839 = vmatpush1.msra.mxu0 0.0
  %5840 = vmatprep.subr.mxu0 0.0
  %5841 = vmatpush1.msra.mxu0 0.0
  %5842 = vmatprep.subr.mxu0 0.0
  %5843 = vmatpush1.msra.mxu0 0.0
  %5844 = vmatprep.subr.mxu0 0.0
  %5845 = vmatpush1.msra.mxu0 0.0
  %5846 = vmatprep.subr.mxu0 0.0
  %5847 = vmatpush1.msra.mxu0 0.0
  %5848 = vmatprep.subr.mxu0 0.0
  %5849 = vmatpush1.msra.mxu0 0.0
  %5850 = vmatprep.subr.mxu0 0.0
  %5851 = vmatpush1.msra.mxu0 0.0
  %5852 = vmatprep.subr.mxu0 0.0
  %5853 = vmatpush1.msra.mxu0 0.0
  %5854 = vmatprep.subr.mxu0 0.0
  %5855 = vmatpush1.msra.mxu0 0.0
  %5856 = vmatprep.subr.mxu0 0.0
  %5857 = vmatpush1.msra.mxu0 0.0
  %5858 = vmatprep.subr.mxu0 0.0
  %5859 = vmatpush1.msra.mxu0 0.0
  %5860 = vmatprep.subr.mxu0 0.0
  %5861 = vmatpush1.msra.mxu0 0.0
  %5862 = vmatprep.subr.mxu0 0.0
  %5863 = vmatpush1.msra.mxu0 0.0
  %5864 = vmatprep.subr.mxu0 0.0
  %5865 = vmatpush1.msra.mxu0 0.0
  %5866 = vmatprep.subr.mxu0 0.0
  %5867 = vmatpush1.msra.mxu0 0.0
  %5868 = vmatprep.subr.mxu0 0.0
  %5869 = vmatpush1.msra.mxu0 %v4676
  %5870 = vmatprep.subr.mxu0 0.0
  %5871 = vmatpush2.msra.mxu0 0.0
  %5872 = vmatprep.subr.mxu0 0.0
  %5873 = vmatpush2.msra.mxu0 0.0
  %5874 = vmatprep.subr.mxu0 0.0
  %5875 = vmatpush2.msra.mxu0 0.0
  %5876 = vmatprep.subr.mxu0 0.0
  %5877 = vmatpush2.msra.mxu0 0.0
  %5878 = vmatprep.subr.mxu0 0.0
  %5879 = vmatpush2.msra.mxu0 0.0
  %5880 = vmatprep.subr.mxu0 0.0
  %5881 = vmatpush2.msra.mxu0 0.0
  %5882 = vmatprep.subr.mxu0 0.0
  %5883 = vmatpush2.msra.mxu0 0.0
  %5884 = vmatprep.subr.mxu0 0.0
  %5885 = vmatpush2.msra.mxu0 0.0
  %5886 = vmatprep.subr.mxu0 0.0
  %5887 = vmatpush2.msra.mxu0 0.0
  %5888 = vmatprep.subr.mxu0 0.0
  %5889 = vmatpush2.msra.mxu0 0.0
  %5890 = vmatprep.subr.mxu0 0.0
  %5891 = vmatpush2.msra.mxu0 0.0
  %5892 = vmatprep.subr.mxu0 0.0
  %5893 = vmatpush2.msra.mxu0 0.0
  %5894 = vmatprep.subr.mxu0 0.0
  %5895 = vmatpush2.msra.mxu0 0.0
  %5896 = vmatprep.subr.mxu0 0.0
  %5897 = vmatpush2.msra.mxu0 0.0
  %5898 = vmatprep.subr.mxu0 0.0
  %5899 = vmatpush2.msra.mxu0 0.0
  %5900 = vmatprep.subr.mxu0 0.0
  %5901 = vmatpush2.msra.mxu0 0.0
  %5902 = vmatprep.mubr.f32.mxu0 0.0
  %5903 = vmatmul.mubr.f32.gmra.mxu0 %v5833
  %v5904 = vpop.f32.mrf.mxu0
  %v5905 = vadd.f32 0.0, %v5904
  %v5906 = vpop.f32.mrf.mxu0
  %5907 = vmatprep.mubr.f32.mxu0 0.0
  %5908 = vmatmul.mubr.f32.gmra.mxu0 %v5836
  %v5909 = vpop.f32.mrf.mxu0
  %v5910 = vadd.f32 0.0, %v5909
  %v5911 = vpop.f32.mrf.mxu0
  %5912 = vdwg.mxu0
  %v5913 = vadd.f32 %v5492, %v5905
  %v5914 = vadd.f32 %v5497, %v5910
  %5915 = vrot.lane.b32.xlu0 %v4581, 104
  %v5916 = vpop.permute.xlu0 %5915
  %5917 = vrot.lane.b32.xlu0 %v4666, 104
  %v5918 = vpop.permute.xlu0 %5917
  %v5919 = vsel %vm209, %v5916, 0
  %v5921 = vsel %vm209, %v5918, 0
  %5923 = vmatprep.subr.mxu0 0.0
  %5924 = vmatpush1.xpose.msra.mxu0 0.0
  %5925 = vmatprep.subr.mxu0 0.0
  %5926 = vmatpush1.xpose.msra.mxu0 0.0
  %5927 = vmatprep.subr.mxu0 0.0
  %5928 = vmatpush1.xpose.msra.mxu0 0.0
  %5929 = vmatprep.subr.mxu0 0.0
  %5930 = vmatpush1.xpose.msra.mxu0 0.0
  %5931 = vmatprep.subr.mxu0 0.0
  %5932 = vmatpush1.xpose.msra.mxu0 0.0
  %5933 = vmatprep.subr.mxu0 0.0
  %5934 = vmatpush1.xpose.msra.mxu0 0.0
  %5935 = vmatprep.subr.mxu0 0.0
  %5936 = vmatpush1.xpose.msra.mxu0 0.0
  %5937 = vmatprep.subr.mxu0 0.0
  %5938 = vmatpush1.xpose.msra.mxu0 0.0
  %5939 = vmatprep.subr.mxu0 0.0
  %5940 = vmatpush1.xpose.msra.mxu0 0.0
  %5941 = vmatprep.subr.mxu0 0.0
  %5942 = vmatpush1.xpose.msra.mxu0 0.0
  %5943 = vmatprep.subr.mxu0 0.0
  %5944 = vmatpush1.xpose.msra.mxu0 0.0
  %5945 = vmatprep.subr.mxu0 0.0
  %5946 = vmatpush1.xpose.msra.mxu0 0.0
  %5947 = vmatprep.subr.mxu0 0.0
  %5948 = vmatpush1.xpose.msra.mxu0 0.0
  %5949 = vmatprep.subr.mxu0 0.0
  %5950 = vmatpush1.xpose.msra.mxu0 0.0
  %5951 = vmatprep.subr.mxu0 0.0
  %5952 = vmatpush1.xpose.msra.mxu0 0.0
  %5953 = vmatprep.subr.mxu0 0.0
  %5954 = vmatpush1.xpose.msra.mxu0 %v5921
  %5955 = vmatprep.subr.mxu0 0.0
  %5956 = vmatpush2.xpose.msra.mxu0 0.0
  %5957 = vmatprep.subr.mxu0 0.0
  %5958 = vmatpush2.xpose.msra.mxu0 0.0
  %5959 = vmatprep.subr.mxu0 0.0
  %5960 = vmatpush2.xpose.msra.mxu0 0.0
  %5961 = vmatprep.subr.mxu0 0.0
  %5962 = vmatpush2.xpose.msra.mxu0 0.0
  %5963 = vmatprep.subr.mxu0 0.0
  %5964 = vmatpush2.xpose.msra.mxu0 0.0
  %5965 = vmatprep.subr.mxu0 0.0
  %5966 = vmatpush2.xpose.msra.mxu0 0.0
  %5967 = vmatprep.subr.mxu0 0.0
  %5968 = vmatpush2.xpose.msra.mxu0 0.0
  %5969 = vmatprep.subr.mxu0 0.0
  %5970 = vmatpush2.xpose.msra.mxu0 0.0
  %5971 = vmatprep.subr.mxu0 0.0
  %5972 = vmatpush2.xpose.msra.mxu0 0.0
  %5973 = vmatprep.subr.mxu0 0.0
  %5974 = vmatpush2.xpose.msra.mxu0 0.0
  %5975 = vmatprep.subr.mxu0 0.0
  %5976 = vmatpush2.xpose.msra.mxu0 0.0
  %5977 = vmatprep.subr.mxu0 0.0
  %5978 = vmatpush2.xpose.msra.mxu0 0.0
  %5979 = vmatprep.subr.mxu0 0.0
  %5980 = vmatpush2.xpose.msra.mxu0 0.0
  %5981 = vmatprep.subr.mxu0 0.0
  %5982 = vmatpush2.xpose.msra.mxu0 0.0
  %5983 = vmatprep.subr.mxu0 0.0
  %5984 = vmatpush2.xpose.msra.mxu0 0.0
  %5985 = vmatprep.subr.mxu0 0.0
  %5986 = vmatpush2.xpose.msra.mxu0 0.0
  %5987 = vmatprep.mubr.f32.mxu0 0.0
  %5988 = vmatmul.mubr.f32.gmra.mxu0 %v5919
  %v5989 = vpop.f32.mrf.mxu0
  %v5990 = vadd.f32 0.0, %v5989
  %v5991 = vpop.f32.mrf.mxu0
  %5992 = vdwg.mxu0
  %5993 = vrot.lane.b32.xlu0 %v4586, 104
  %v5994 = vpop.permute.xlu0 %5993
  %5995 = vrot.lane.b32.xlu0 %v4671, 104
  %v5996 = vpop.permute.xlu0 %5995
  %v5997 = vsel %vm209, %v5994, 0
  %v5999 = vsel %vm209, %v5996, 0
  %6001 = vmatprep.subr.mxu0 0.0
  %6002 = vmatpush1.xpose.msra.mxu0 0.0
  %6003 = vmatprep.subr.mxu0 0.0
  %6004 = vmatpush1.xpose.msra.mxu0 0.0
  %6005 = vmatprep.subr.mxu0 0.0
  %6006 = vmatpush1.xpose.msra.mxu0 0.0
  %6007 = vmatprep.subr.mxu0 0.0
  %6008 = vmatpush1.xpose.msra.mxu0 0.0
  %6009 = vmatprep.subr.mxu0 0.0
  %6010 = vmatpush1.xpose.msra.mxu0 0.0
  %6011 = vmatprep.subr.mxu0 0.0
  %6012 = vmatpush1.xpose.msra.mxu0 0.0
  %6013 = vmatprep.subr.mxu0 0.0
  %6014 = vmatpush1.xpose.msra.mxu0 0.0
  %6015 = vmatprep.subr.mxu0 0.0
  %6016 = vmatpush1.xpose.msra.mxu0 0.0
  %6017 = vmatprep.subr.mxu0 0.0
  %6018 = vmatpush1.xpose.msra.mxu0 0.0
  %6019 = vmatprep.subr.mxu0 0.0
  %6020 = vmatpush1.xpose.msra.mxu0 0.0
  %6021 = vmatprep.subr.mxu0 0.0
  %6022 = vmatpush1.xpose.msra.mxu0 0.0
  %6023 = vmatprep.subr.mxu0 0.0
  %6024 = vmatpush1.xpose.msra.mxu0 0.0
  %6025 = vmatprep.subr.mxu0 0.0
  %6026 = vmatpush1.xpose.msra.mxu0 0.0
  %6027 = vmatprep.subr.mxu0 0.0
  %6028 = vmatpush1.xpose.msra.mxu0 0.0
  %6029 = vmatprep.subr.mxu0 0.0
  %6030 = vmatpush1.xpose.msra.mxu0 0.0
  %6031 = vmatprep.subr.mxu0 0.0
  %6032 = vmatpush1.xpose.msra.mxu0 %v5999
  %6033 = vmatprep.subr.mxu0 0.0
  %6034 = vmatpush2.xpose.msra.mxu0 0.0
  %6035 = vmatprep.subr.mxu0 0.0
  %6036 = vmatpush2.xpose.msra.mxu0 0.0
  %6037 = vmatprep.subr.mxu0 0.0
  %6038 = vmatpush2.xpose.msra.mxu0 0.0
  %6039 = vmatprep.subr.mxu0 0.0
  %6040 = vmatpush2.xpose.msra.mxu0 0.0
  %6041 = vmatprep.subr.mxu0 0.0
  %6042 = vmatpush2.xpose.msra.mxu0 0.0
  %6043 = vmatprep.subr.mxu0 0.0
  %6044 = vmatpush2.xpose.msra.mxu0 0.0
  %6045 = vmatprep.subr.mxu0 0.0
  %6046 = vmatpush2.xpose.msra.mxu0 0.0
  %6047 = vmatprep.subr.mxu0 0.0
  %6048 = vmatpush2.xpose.msra.mxu0 0.0
  %6049 = vmatprep.subr.mxu0 0.0
  %6050 = vmatpush2.xpose.msra.mxu0 0.0
  %6051 = vmatprep.subr.mxu0 0.0
  %6052 = vmatpush2.xpose.msra.mxu0 0.0
  %6053 = vmatprep.subr.mxu0 0.0
  %6054 = vmatpush2.xpose.msra.mxu0 0.0
  %6055 = vmatprep.subr.mxu0 0.0
  %6056 = vmatpush2.xpose.msra.mxu0 0.0
  %6057 = vmatprep.subr.mxu0 0.0
  %6058 = vmatpush2.xpose.msra.mxu0 0.0
  %6059 = vmatprep.subr.mxu0 0.0
  %6060 = vmatpush2.xpose.msra.mxu0 0.0
  %6061 = vmatprep.subr.mxu0 0.0
  %6062 = vmatpush2.xpose.msra.mxu0 0.0
  %6063 = vmatprep.subr.mxu0 0.0
  %6064 = vmatpush2.xpose.msra.mxu0 0.0
  %6065 = vmatprep.mubr.f32.mxu0 0.0
  %6066 = vmatmul.mubr.f32.gmra.mxu0 %v5997
  %v6067 = vpop.f32.mrf.mxu0
  %v6068 = vadd.f32 0.0, %v6067
  %v6069 = vpop.f32.mrf.mxu0
  %6070 = vdwg.mxu0
  %v6071 = vmul.f32 %v5990, 0.35355338
  %v6072 = vmul.f32 %v6068, 0.35355338
  %v6073 = vsel %vm209, %v6071, -inf
  %6074 = vmax.xlane.f32.xlu0 %v6073
  %v6075 = vpop.xlane.xlu0 %6074
  %v6076 = vsel %vm209, %v6072, -inf
  %6077 = vmax.xlane.f32.xlu0 %v6076
  %v6078 = vpop.xlane.xlu0 %6077
  %v6079 = vsub.f32 %v6071, %v6075
  %v6080 = vsub.f32 %v6072, %v6078
  %v6081 = vmul.f32 %v6079, 1.442695
  %v6082 = vpow.pop %v6081
  %v6083 = vmul.f32 %v6080, 1.442695
  %v6084 = vpow.pop %v6083
  %v6085 = vsel %vm209, %v6082, 0.0
  %6086 = vadd.xlane.f32.xlu0 %v6085
  %v6087 = vpop.xlane.xlu0 %6086
  %v6088 = vsel %vm209, %v6084, 0.0
  %6089 = vadd.xlane.f32.xlu0 %v6088
  %v6090 = vpop.xlane.xlu0 %6089
  %v6091 = vrcp.pop %v6087
  %v6092 = vrcp.pop %v6090
  %v6093 = vmul.f32 %v6082, %v6091
  %v6094 = vmul.f32 %v6084, %v6092
  %6095 = vrot.lane.b32.xlu0 %v4666, 72
  %v6096 = vpop.permute.xlu0 %6095
  %v6099 = vsel %vm209, %v6093, 0
  %6101 = vmatprep.subr.mxu0 0.0
  %6102 = vmatpush1.msra.mxu0 0.0
  %6103 = vmatprep.subr.mxu0 0.0
  %6104 = vmatpush1.msra.mxu0 0.0
  %6105 = vmatprep.subr.mxu0 0.0
  %6106 = vmatpush1.msra.mxu0 0.0
  %6107 = vmatprep.subr.mxu0 0.0
  %6108 = vmatpush1.msra.mxu0 0.0
  %6109 = vmatprep.subr.mxu0 0.0
  %6110 = vmatpush1.msra.mxu0 0.0
  %6111 = vmatprep.subr.mxu0 0.0
  %6112 = vmatpush1.msra.mxu0 0.0
  %6113 = vmatprep.subr.mxu0 0.0
  %6114 = vmatpush1.msra.mxu0 0.0
  %6115 = vmatprep.subr.mxu0 0.0
  %6116 = vmatpush1.msra.mxu0 0.0
  %6117 = vmatprep.subr.mxu0 0.0
  %6118 = vmatpush1.msra.mxu0 0.0
  %6119 = vmatprep.subr.mxu0 0.0
  %6120 = vmatpush1.msra.mxu0 0.0
  %6121 = vmatprep.subr.mxu0 0.0
  %6122 = vmatpush1.msra.mxu0 0.0
  %6123 = vmatprep.subr.mxu0 0.0
  %6124 = vmatpush1.msra.mxu0 0.0
  %6125 = vmatprep.subr.mxu0 0.0
  %6126 = vmatpush1.msra.mxu0 0.0
  %6127 = vmatprep.subr.mxu0 0.0
  %6128 = vmatpush1.msra.mxu0 0.0
  %6129 = vmatprep.subr.mxu0 0.0
  %6130 = vmatpush1.msra.mxu0 0.0
  %6131 = vmatprep.subr.mxu0 0.0
  %6132 = vmatpush1.msra.mxu0 %v6096
  %6133 = vmatprep.subr.mxu0 0.0
  %6134 = vmatpush2.msra.mxu0 0.0
  %6135 = vmatprep.subr.mxu0 0.0
  %6136 = vmatpush2.msra.mxu0 0.0
  %6137 = vmatprep.subr.mxu0 0.0
  %6138 = vmatpush2.msra.mxu0 0.0
  %6139 = vmatprep.subr.mxu0 0.0
  %6140 = vmatpush2.msra.mxu0 0.0
  %6141 = vmatprep.subr.mxu0 0.0
  %6142 = vmatpush2.msra.mxu0 0.0
  %6143 = vmatprep.subr.mxu0 0.0
  %6144 = vmatpush2.msra.mxu0 0.0
  %6145 = vmatprep.subr.mxu0 0.0
  %6146 = vmatpush2.msra.mxu0 0.0
  %6147 = vmatprep.subr.mxu0 0.0
  %6148 = vmatpush2.msra.mxu0 0.0
  %6149 = vmatprep.subr.mxu0 0.0
  %6150 = vmatpush2.msra.mxu0 0.0
  %6151 = vmatprep.subr.mxu0 0.0
  %6152 = vmatpush2.msra.mxu0 0.0
  %6153 = vmatprep.subr.mxu0 0.0
  %6154 = vmatpush2.msra.mxu0 0.0
  %6155 = vmatprep.subr.mxu0 0.0
  %6156 = vmatpush2.msra.mxu0 0.0
  %6157 = vmatprep.subr.mxu0 0.0
  %6158 = vmatpush2.msra.mxu0 0.0
  %6159 = vmatprep.subr.mxu0 0.0
  %6160 = vmatpush2.msra.mxu0 0.0
  %6161 = vmatprep.subr.mxu0 0.0
  %6162 = vmatpush2.msra.mxu0 0.0
  %6163 = vmatprep.subr.mxu0 0.0
  %6164 = vmatpush2.msra.mxu0 0.0
  %6165 = vmatprep.mubr.f32.mxu0 0.0
  %6166 = vmatmul.mubr.f32.gmra.mxu0 %v6099
  %v6167 = vpop.f32.mrf.mxu0
  %v6168 = vadd.f32 0.0, %v6167
  %v6169 = vpop.f32.mrf.mxu0
  %6170 = vdwg.mxu0
  %6171 = vrot.lane.b32.xlu0 %v4671, 72
  %v6172 = vpop.permute.xlu0 %6171
  %v6175 = vsel %vm209, %v6094, 0
  %6177 = vmatprep.subr.mxu0 0.0
  %6178 = vmatpush1.msra.mxu0 0.0
  %6179 = vmatprep.subr.mxu0 0.0
  %6180 = vmatpush1.msra.mxu0 0.0
  %6181 = vmatprep.subr.mxu0 0.0
  %6182 = vmatpush1.msra.mxu0 0.0
  %6183 = vmatprep.subr.mxu0 0.0
  %6184 = vmatpush1.msra.mxu0 0.0
  %6185 = vmatprep.subr.mxu0 0.0
  %6186 = vmatpush1.msra.mxu0 0.0
  %6187 = vmatprep.subr.mxu0 0.0
  %6188 = vmatpush1.msra.mxu0 0.0
  %6189 = vmatprep.subr.mxu0 0.0
  %6190 = vmatpush1.msra.mxu0 0.0
  %6191 = vmatprep.subr.mxu0 0.0
  %6192 = vmatpush1.msra.mxu0 0.0
  %6193 = vmatprep.subr.mxu0 0.0
  %6194 = vmatpush1.msra.mxu0 0.0
  %6195 = vmatprep.subr.mxu0 0.0
  %6196 = vmatpush1.msra.mxu0 0.0
  %6197 = vmatprep.subr.mxu0 0.0
  %6198 = vmatpush1.msra.mxu0 0.0
  %6199 = vmatprep.subr.mxu0 0.0
  %6200 = vmatpush1.msra.mxu0 0.0
  %6201 = vmatprep.subr.mxu0 0.0
  %6202 = vmatpush1.msra.mxu0 0.0
  %6203 = vmatprep.subr.mxu0 0.0
  %6204 = vmatpush1.msra.mxu0 0.0
  %6205 = vmatprep.subr.mxu0 0.0
  %6206 = vmatpush1.msra.mxu0 0.0
  %6207 = vmatprep.subr.mxu0 0.0
  %6208 = vmatpush1.msra.mxu0 %v6172
  %6209 = vmatprep.subr.mxu0 0.0
  %6210 = vmatpush2.msra.mxu0 0.0
  %6211 = vmatprep.subr.mxu0 0.0
  %6212 = vmatpush2.msra.mxu0 0.0
  %6213 = vmatprep.subr.mxu0 0.0
  %6214 = vmatpush2.msra.mxu0 0.0
  %6215 = vmatprep.subr.mxu0 0.0
  %6216 = vmatpush2.msra.mxu0 0.0
  %6217 = vmatprep.subr.mxu0 0.0
  %6218 = vmatpush2.msra.mxu0 0.0
  %6219 = vmatprep.subr.mxu0 0.0
  %6220 = vmatpush2.msra.mxu0 0.0
  %6221 = vmatprep.subr.mxu0 0.0
  %6222 = vmatpush2.msra.mxu0 0.0
  %6223 = vmatprep.subr.mxu0 0.0
  %6224 = vmatpush2.msra.mxu0 0.0
  %6225 = vmatprep.subr.mxu0 0.0
  %6226 = vmatpush2.msra.mxu0 0.0
  %6227 = vmatprep.subr.mxu0 0.0
  %6228 = vmatpush2.msra.mxu0 0.0
  %6229 = vmatprep.subr.mxu0 0.0
  %6230 = vmatpush2.msra.mxu0 0.0
  %6231 = vmatprep.subr.mxu0 0.0
  %6232 = vmatpush2.msra.mxu0 0.0
  %6233 = vmatprep.subr.mxu0 0.0
  %6234 = vmatpush2.msra.mxu0 0.0
  %6235 = vmatprep.subr.mxu0 0.0
  %6236 = vmatpush2.msra.mxu0 0.0
  %6237 = vmatprep.subr.mxu0 0.0
  %6238 = vmatpush2.msra.mxu0 0.0
  %6239 = vmatprep.subr.mxu0 0.0
  %6240 = vmatpush2.msra.mxu0 0.0
  %6241 = vmatprep.mubr.f32.mxu0 0.0
  %6242 = vmatmul.mubr.f32.gmra.mxu0 %v6175
  %v6243 = vpop.f32.mrf.mxu0
  %v6244 = vadd.f32 0.0, %v6243
  %v6245 = vpop.f32.mrf.mxu0
  %6246 = vdwg.mxu0
  %v6248 = vsel %vm209, %v6168, 0
  %v6251 = vsel %vm209, %v6244, 0
  %6253 = vmatprep.subr.mxu0 0.0
  %6254 = vmatpush1.msra.mxu0 0.0
  %6255 = vmatprep.subr.mxu0 0.0
  %6256 = vmatpush1.msra.mxu0 0.0
  %6257 = vmatprep.subr.mxu0 0.0
  %6258 = vmatpush1.msra.mxu0 0.0
  %6259 = vmatprep.subr.mxu0 0.0
  %6260 = vmatpush1.msra.mxu0 0.0
  %6261 = vmatprep.subr.mxu0 0.0
  %6262 = vmatpush1.msra.mxu0 0.0
  %6263 = vmatprep.subr.mxu0 0.0
  %6264 = vmatpush1.msra.mxu0 0.0
  %6265 = vmatprep.subr.mxu0 0.0
  %6266 = vmatpush1.msra.mxu0 0.0
  %6267 = vmatprep.subr.mxu0 0.0
  %6268 = vmatpush1.msra.mxu0 0.0
  %6269 = vmatprep.subr.mxu0 0.0
  %6270 = vmatpush1.msra.mxu0 0.0
  %6271 = vmatprep.subr.mxu0 0.0
  %6272 = vmatpush1.msra.mxu0 0.0
  %6273 = vmatprep.subr.mxu0 0.0
  %6274 = vmatpush1.msra.mxu0 0.0
  %6275 = vmatprep.subr.mxu0 0.0
  %6276 = vmatpush1.msra.mxu0 0.0
  %6277 = vmatprep.subr.mxu0 0.0
  %6278 = vmatpush1.msra.mxu0 0.0
  %6279 = vmatprep.subr.mxu0 0.0
  %6280 = vmatpush1.msra.mxu0 0.0
  %6281 = vmatprep.subr.mxu0 0.0
  %6282 = vmatpush1.msra.mxu0 0.0
  %6283 = vmatprep.subr.mxu0 0.0
  %6284 = vmatpush1.msra.mxu0 %v4677
  %6285 = vmatprep.subr.mxu0 0.0
  %6286 = vmatpush2.msra.mxu0 0.0
  %6287 = vmatprep.subr.mxu0 0.0
  %6288 = vmatpush2.msra.mxu0 0.0
  %6289 = vmatprep.subr.mxu0 0.0
  %6290 = vmatpush2.msra.mxu0 0.0
  %6291 = vmatprep.subr.mxu0 0.0
  %6292 = vmatpush2.msra.mxu0 0.0
  %6293 = vmatprep.subr.mxu0 0.0
  %6294 = vmatpush2.msra.mxu0 0.0
  %6295 = vmatprep.subr.mxu0 0.0
  %6296 = vmatpush2.msra.mxu0 0.0
  %6297 = vmatprep.subr.mxu0 0.0
  %6298 = vmatpush2.msra.mxu0 0.0
  %6299 = vmatprep.subr.mxu0 0.0
  %6300 = vmatpush2.msra.mxu0 0.0
  %6301 = vmatprep.subr.mxu0 0.0
  %6302 = vmatpush2.msra.mxu0 0.0
  %6303 = vmatprep.subr.mxu0 0.0
  %6304 = vmatpush2.msra.mxu0 0.0
  %6305 = vmatprep.subr.mxu0 0.0
  %6306 = vmatpush2.msra.mxu0 0.0
  %6307 = vmatprep.subr.mxu0 0.0
  %6308 = vmatpush2.msra.mxu0 0.0
  %6309 = vmatprep.subr.mxu0 0.0
  %6310 = vmatpush2.msra.mxu0 0.0
  %6311 = vmatprep.subr.mxu0 0.0
  %6312 = vmatpush2.msra.mxu0 0.0
  %6313 = vmatprep.subr.mxu0 0.0
  %6314 = vmatpush2.msra.mxu0 0.0
  %6315 = vmatprep.subr.mxu0 0.0
  %6316 = vmatpush2.msra.mxu0 0.0
  %6317 = vmatprep.mubr.f32.mxu0 0.0
  %6318 = vmatmul.mubr.f32.gmra.mxu0 %v6248
  %v6319 = vpop.f32.mrf.mxu0
  %v6320 = vadd.f32 0.0, %v6319
  %v6321 = vpop.f32.mrf.mxu0
  %6322 = vmatprep.mubr.f32.mxu0 0.0
  %6323 = vmatmul.mubr.f32.gmra.mxu0 %v6251
  %v6324 = vpop.f32.mrf.mxu0
  %v6325 = vadd.f32 0.0, %v6324
  %v6326 = vpop.f32.mrf.mxu0
  %6327 = vdwg.mxu0
  %v6328 = vadd.f32 %v5913, %v6320
  %v6329 = vadd.f32 %v5914, %v6325
  %v6330 = vadd.f32 %v4458, %v6328
  %v6331 = vadd.f32 %v4459, %v6329
  %v6332 = vld [vmem:[%s31] sm:$0x1]
  %v6333 = vld [vmem:[%s29] sm:$0x1]
  %v6334 = vsel %vm375, %v6330, 0.0
  %6335 = vadd.xlane.f32.xlu0 %v6334
  %v6336 = vpop.xlane.xlu0 %6335
  %v6337 = vsel %vm375, %v6331, 0.0
  %6338 = vadd.xlane.f32.xlu0 %v6337
  %v6339 = vpop.xlane.xlu0 %6338
  %v6340 = vmul.f32 %v6336, %v382
  %v6341 = vmul.f32 %v6339, %v382
  %v6342 = vsub.f32 %v6330, %v6340
  %v6343 = vsub.f32 %v6331, %v6341
  %v6344 = vmul.f32 %v6342, %v6342
  %v6345 = vmul.f32 %v6343, %v6343
  %v6346 = vsel %vm375, %v6344, 0.0
  %6347 = vadd.xlane.f32.xlu0 %v6346
  %v6348 = vpop.xlane.xlu0 %6347
  %v6349 = vsel %vm375, %v6345, 0.0
  %6350 = vadd.xlane.f32.xlu0 %v6349
  %v6351 = vpop.xlane.xlu0 %6350
  %v6352 = vmul.f32 %v6348, %v382
  %v6353 = vmul.f32 %v6351, %v382
  %v6354 = vadd.f32 %v6352, 1e-05
  %v6355 = vadd.f32 %v6353, 1e-05
  %v6356 = vrsqrt.pop %v6354
  %v6357 = vrsqrt.pop %v6355
  %v6358 = vmul.f32 %v6342, %v6356
  %v6359 = vmul.f32 %v6343, %v6357
  %v6361 = vlaneseq
  %v6362 = vshrl.u32 %v6361, 7
  %v6363 = vsub.s32 0, %v6362
  %v6364 = vrot.slane %v6332, %v6363
  %v6366 = vmul.f32 %v6358, %v6364
  %v6367 = vmul.f32 %v6359, %v6364
  %v6369 = vlaneseq
  %v6370 = vshrl.u32 %v6369, 7
  %v6371 = vsub.s32 0, %v6370
  %v6372 = vrot.slane %v6333, %v6371
  %v6374 = vadd.f32 %v6366, %v6372
  %v6375 = vadd.f32 %v6367, %v6372
  %v6376 = vld [vmem:[%s21] sm:$0xff]
  %v6377 = vld [vmem:[%s21 + $0x8] sm:$0xff]
  %v6378 = vld [vmem:[%s21 + $0x10] sm:$0xff]
  %v6379 = vld [vmem:[%s21 + $0x18] sm:$0xff]
  %v6380 = vld [vmem:[%s17] sm:$0x1]
  %v6382 = vlaneseq
  %v6383 = vshrl.u32 %v6382, 7
  %v6384 = vsub.s32 0, %v6383
  %v6385 = vrot.slane %v6380, %v6384
  %v6388 = vsel %vm375, %v6374, 0
  %v6391 = vsel %vm375, %v6375, 0
  %6393 = vmatprep.subr.mxu0 0.0
  %6394 = vmatpush1.msra.mxu0 0.0
  %6395 = vmatprep.subr.mxu0 0.0
  %6396 = vmatpush1.msra.mxu0 0.0
  %6397 = vmatprep.subr.mxu0 0.0
  %6398 = vmatpush1.msra.mxu0 0.0
  %6399 = vmatprep.subr.mxu0 0.0
  %6400 = vmatpush1.msra.mxu0 0.0
  %6401 = vmatprep.subr.mxu0 0.0
  %6402 = vmatpush1.msra.mxu0 0.0
  %6403 = vmatprep.subr.mxu0 0.0
  %6404 = vmatpush1.msra.mxu0 0.0
  %6405 = vmatprep.subr.mxu0 0.0
  %6406 = vmatpush1.msra.mxu0 0.0
  %6407 = vmatprep.subr.mxu0 0.0
  %6408 = vmatpush1.msra.mxu0 0.0
  %6409 = vmatprep.subr.mxu0 0.0
  %6410 = vmatpush1.msra.mxu0 0.0
  %6411 = vmatprep.subr.mxu0 0.0
  %6412 = vmatpush1.msra.mxu0 0.0
  %6413 = vmatprep.subr.mxu0 0.0
  %6414 = vmatpush1.msra.mxu0 0.0
  %6415 = vmatprep.subr.mxu0 0.0
  %6416 = vmatpush1.msra.mxu0 0.0
  %6417 = vmatprep.subr.mxu0 0.0
  %6418 = vmatpush1.msra.mxu0 %v6379
  %6419 = vmatprep.subr.mxu0 0.0
  %6420 = vmatpush1.msra.mxu0 %v6378
  %6421 = vmatprep.subr.mxu0 0.0
  %6422 = vmatpush1.msra.mxu0 %v6377
  %6423 = vmatprep.subr.mxu0 0.0
  %6424 = vmatpush1.msra.mxu0 %v6376
  %6425 = vmatprep.subr.mxu0 0.0
  %6426 = vmatpush2.msra.mxu0 0.0
  %6427 = vmatprep.subr.mxu0 0.0
  %6428 = vmatpush2.msra.mxu0 0.0
  %6429 = vmatprep.subr.mxu0 0.0
  %6430 = vmatpush2.msra.mxu0 0.0
  %6431 = vmatprep.subr.mxu0 0.0
  %6432 = vmatpush2.msra.mxu0 0.0
  %6433 = vmatprep.subr.mxu0 0.0
  %6434 = vmatpush2.msra.mxu0 0.0
  %6435 = vmatprep.subr.mxu0 0.0
  %6436 = vmatpush2.msra.mxu0 0.0
  %6437 = vmatprep.subr.mxu0 0.0
  %6438 = vmatpush2.msra.mxu0 0.0
  %6439 = vmatprep.subr.mxu0 0.0
  %6440 = vmatpush2.msra.mxu0 0.0
  %6441 = vmatprep.subr.mxu0 0.0
  %6442 = vmatpush2.msra.mxu0 0.0
  %6443 = vmatprep.subr.mxu0 0.0
  %6444 = vmatpush2.msra.mxu0 0.0
  %6445 = vmatprep.subr.mxu0 0.0
  %6446 = vmatpush2.msra.mxu0 0.0
  %6447 = vmatprep.subr.mxu0 0.0
  %6448 = vmatpush2.msra.mxu0 0.0
  %6449 = vmatprep.subr.mxu0 0.0
  %6450 = vmatpush2.msra.mxu0 0.0
  %6451 = vmatprep.subr.mxu0 0.0
  %6452 = vmatpush2.msra.mxu0 0.0
  %6453 = vmatprep.subr.mxu0 0.0
  %6454 = vmatpush2.msra.mxu0 0.0
  %6455 = vmatprep.subr.mxu0 0.0
  %6456 = vmatpush2.msra.mxu0 0.0
  %6457 = vmatprep.mubr.f32.mxu0 0.0
  %6458 = vmatmul.mubr.f32.gmra.mxu0 %v6388
  %v6459 = vpop.f32.mrf.mxu0
  %v6460 = vadd.f32 %v6385, %v6459
  %v6461 = vpop.f32.mrf.mxu0
  %6462 = vmatprep.mubr.f32.mxu0 0.0
  %6463 = vmatmul.mubr.f32.gmra.mxu0 %v6391
  %v6464 = vpop.f32.mrf.mxu0
  %v6465 = vadd.f32 %v6385, %v6464
  %v6466 = vpop.f32.mrf.mxu0
  %6467 = vdwg.mxu0
  %v6468 = vmul.f32 %v6460, %v6460
  %v6469 = vmul.f32 %v6465, %v6465
  %v6470 = vmul.f32 %v6460, %v6468
  %v6471 = vmul.f32 %v6465, %v6469
  %v6472 = vmul.f32 %v6470, 0.044715
  %v6473 = vmul.f32 %v6471, 0.044715
  %v6474 = vadd.f32 %v6460, %v6472
  %v6475 = vadd.f32 %v6465, %v6473
  %v6476 = vmul.f32 %v6474, 0.7978846
  %v6477 = vmul.f32 %v6475, 0.7978846
  %v6478 = vtanh.pop %v6476
  %v6479 = vtanh.pop %v6477
  %v6480 = vadd.f32 %v6478, 1.0
  %v6481 = vadd.f32 %v6479, 1.0
  %v6482 = vmul.f32 %v6480, 0.5
  %v6483 = vmul.f32 %v6481, 0.5
  %v6484 = vmul.f32 %v6460, %v6482
  %v6485 = vmul.f32 %v6465, %v6483
  %v6486 = vld [vmem:[%s23] sm:$0xff]
  %v6487 = vld [vmem:[%s23 + $0x8] sm:$0xff]
  %v6488 = vld [vmem:[%s23 + $0x10] sm:$0xff]
  %v6489 = vld [vmem:[%s23 + $0x18] sm:$0xff]
  %v6490 = vld [vmem:[%s23 + $0x20] sm:$0xff]
  %v6491 = vld [vmem:[%s23 + $0x28] sm:$0xff]
  %v6492 = vld [vmem:[%s23 + $0x30] sm:$0xff]
  %v6493 = vld [vmem:[%s23 + $0x38] sm:$0xff]
  %v6494 = vld [vmem:[%s23 + $0x40] sm:$0xff]
  %v6495 = vld [vmem:[%s23 + $0x48] sm:$0xff]
  %v6496 = vld [vmem:[%s23 + $0x50] sm:$0xff]
  %v6497 = vld [vmem:[%s23 + $0x58] sm:$0xff]
  %v6498 = vld [vmem:[%s23 + $0x60] sm:$0xff]
  %v6499 = vld [vmem:[%s23 + $0x68] sm:$0xff]
  %v6500 = vld [vmem:[%s23 + $0x70] sm:$0xff]
  %v6501 = vld [vmem:[%s23 + $0x78] sm:$0xff]
  %6502 = vmatprep.subr.mxu0 0.0
  %6503 = vmatpush1.msra.mxu0 %v6501
  %6504 = vmatprep.subr.mxu0 0.0
  %6505 = vmatpush1.msra.mxu0 %v6500
  %6506 = vmatprep.subr.mxu0 0.0
  %6507 = vmatpush1.msra.mxu0 %v6499
  %6508 = vmatprep.subr.mxu0 0.0
  %6509 = vmatpush1.msra.mxu0 %v6498
  %6510 = vmatprep.subr.mxu0 0.0
  %6511 = vmatpush1.msra.mxu0 %v6497
  %6512 = vmatprep.subr.mxu0 0.0
  %6513 = vmatpush1.msra.mxu0 %v6496
  %6514 = vmatprep.subr.mxu0 0.0
  %6515 = vmatpush1.msra.mxu0 %v6495
  %6516 = vmatprep.subr.mxu0 0.0
  %6517 = vmatpush1.msra.mxu0 %v6494
  %6518 = vmatprep.subr.mxu0 0.0
  %6519 = vmatpush1.msra.mxu0 %v6493
  %6520 = vmatprep.subr.mxu0 0.0
  %6521 = vmatpush1.msra.mxu0 %v6492
  %6522 = vmatprep.subr.mxu0 0.0
  %6523 = vmatpush1.msra.mxu0 %v6491
  %6524 = vmatprep.subr.mxu0 0.0
  %6525 = vmatpush1.msra.mxu0 %v6490
  %6526 = vmatprep.subr.mxu0 0.0
  %6527 = vmatpush1.msra.mxu0 %v6489
  %6528 = vmatprep.subr.mxu0 0.0
  %6529 = vmatpush1.msra.mxu0 %v6488
  %6530 = vmatprep.subr.mxu0 0.0
  %6531 = vmatpush1.msra.mxu0 %v6487
  %6532 = vmatprep.subr.mxu0 0.0
  %6533 = vmatpush1.msra.mxu0 %v6486
  %6534 = vmatprep.subr.mxu0 0.0
  %6535 = vmatpush2.msra.mxu0 0.0
  %6536 = vmatprep.subr.mxu0 0.0
  %6537 = vmatpush2.msra.mxu0 0.0
  %6538 = vmatprep.subr.mxu0 0.0
  %6539 = vmatpush2.msra.mxu0 0.0
  %6540 = vmatprep.subr.mxu0 0.0
  %6541 = vmatpush2.msra.mxu0 0.0
  %6542 = vmatprep.subr.mxu0 0.0
  %6543 = vmatpush2.msra.mxu0 0.0
  %6544 = vmatprep.subr.mxu0 0.0
  %6545 = vmatpush2.msra.mxu0 0.0
  %6546 = vmatprep.subr.mxu0 0.0
  %6547 = vmatpush2.msra.mxu0 0.0
  %6548 = vmatprep.subr.mxu0 0.0
  %6549 = vmatpush2.msra.mxu0 0.0
  %6550 = vmatprep.subr.mxu0 0.0
  %6551 = vmatpush2.msra.mxu0 0.0
  %6552 = vmatprep.subr.mxu0 0.0
  %6553 = vmatpush2.msra.mxu0 0.0
  %6554 = vmatprep.subr.mxu0 0.0
  %6555 = vmatpush2.msra.mxu0 0.0
  %6556 = vmatprep.subr.mxu0 0.0
  %6557 = vmatpush2.msra.mxu0 0.0
  %6558 = vmatprep.subr.mxu0 0.0
  %6559 = vmatpush2.msra.mxu0 0.0
  %6560 = vmatprep.subr.mxu0 0.0
  %6561 = vmatpush2.msra.mxu0 0.0
  %6562 = vmatprep.subr.mxu0 0.0
  %6563 = vmatpush2.msra.mxu0 0.0
  %6564 = vmatprep.subr.mxu0 0.0
  %6565 = vmatpush2.msra.mxu0 0.0
  %6566 = vmatprep.mubr.f32.mxu0 0.0
  %6567 = vmatmul.mubr.f32.gmra.mxu0 %v6484
  %v6568 = vpop.f32.mrf.mxu0
  %v6569 = vadd.f32 0.0, %v6568
  %v6570 = vpop.f32.mrf.mxu0
  %6571 = vmatprep.mubr.f32.mxu0 0.0
  %6572 = vmatmul.mubr.f32.gmra.mxu0 %v6485
  %v6573 = vpop.f32.mrf.mxu0
  %v6574 = vadd.f32 0.0, %v6573
  %v6575 = vpop.f32.mrf.mxu0
  %6576 = vdwg.mxu0
  %v6577 = vadd.f32 %v6330, %v6569
  %v6578 = vadd.f32 %v6331, %v6574
  %v6579 = vld [vmem:[%s19] sm:$0x1]
  %v6581 = vlaneseq
  %v6582 = vshrl.u32 %v6581, 7
  %v6583 = vsub.s32 0, %v6582
  %v6584 = vrot.slane %v6579, %v6583
  %v6586 = vadd.f32 %v6577, %v6584
  %v6587 = vadd.f32 %v6578, %v6584
  %v6588 = vld [vmem:[%s43] sm:$0x1]
  %v6589 = vld [vmem:[%s41] sm:$0x1]
  %v6590 = vsel %vm375, %v6586, 0.0
  %6591 = vadd.xlane.f32.xlu0 %v6590
  %v6592 = vpop.xlane.xlu0 %6591
  %v6593 = vsel %vm375, %v6587, 0.0
  %6594 = vadd.xlane.f32.xlu0 %v6593
  %v6595 = vpop.xlane.xlu0 %6594
  %v6596 = vmul.f32 %v6592, %v382
  %v6597 = vmul.f32 %v6595, %v382
  %v6598 = vsub.f32 %v6586, %v6596
  %v6599 = vsub.f32 %v6587, %v6597
  %v6600 = vmul.f32 %v6598, %v6598
  %v6601 = vmul.f32 %v6599, %v6599
  %v6602 = vsel %vm375, %v6600, 0.0
  %6603 = vadd.xlane.f32.xlu0 %v6602
  %v6604 = vpop.xlane.xlu0 %6603
  %v6605 = vsel %vm375, %v6601, 0.0
  %6606 = vadd.xlane.f32.xlu0 %v6605
  %v6607 = vpop.xlane.xlu0 %6606
  %v6608 = vmul.f32 %v6604, %v382
  %v6609 = vmul.f32 %v6607, %v382
  %v6610 = vadd.f32 %v6608, 1e-05
  %v6611 = vadd.f32 %v6609, 1e-05
  %v6612 = vrsqrt.pop %v6610
  %v6613 = vrsqrt.pop %v6611
  %v6614 = vmul.f32 %v6598, %v6612
  %v6615 = vmul.f32 %v6599, %v6613
  %v6617 = vlaneseq
  %v6618 = vshrl.u32 %v6617, 7
  %v6619 = vsub.s32 0, %v6618
  %v6620 = vrot.slane %v6588, %v6619
  %v6622 = vmul.f32 %v6614, %v6620
  %v6623 = vmul.f32 %v6615, %v6620
  %v6625 = vlaneseq
  %v6626 = vshrl.u32 %v6625, 7
  %v6627 = vsub.s32 0, %v6626
  %v6628 = vrot.slane %v6589, %v6627
  %v6630 = vadd.f32 %v6622, %v6628
  %v6631 = vadd.f32 %v6623, %v6628
  %v6632 = vld [vmem:[%s49] sm:$0xff]
  %v6633 = vld [vmem:[%s49 + $0x8] sm:$0xff]
  %v6634 = vld [vmem:[%s49 + $0x10] sm:$0xff]
  %v6635 = vld [vmem:[%s49 + $0x18] sm:$0xff]
  %v6636 = vld [vmem:[%s47] sm:$0x1]
  %v6638 = vlaneseq
  %v6639 = vshrl.u32 %v6638, 7
  %v6640 = vsub.s32 0, %v6639
  %v6641 = vrot.slane %v6636, %v6640
  %v6644 = vsel %vm375, %v6630, 0
  %v6647 = vsel %vm375, %v6631, 0
  %6649 = vmatprep.subr.mxu0 0.0
  %6650 = vmatpush1.msra.mxu0 0.0
  %6651 = vmatprep.subr.mxu0 0.0
  %6652 = vmatpush1.msra.mxu0 0.0
  %6653 = vmatprep.subr.mxu0 0.0
  %6654 = vmatpush1.msra.mxu0 0.0
  %6655 = vmatprep.subr.mxu0 0.0
  %6656 = vmatpush1.msra.mxu0 0.0
  %6657 = vmatprep.subr.mxu0 0.0
  %6658 = vmatpush1.msra.mxu0 0.0
  %6659 = vmatprep.subr.mxu0 0.0
  %6660 = vmatpush1.msra.mxu0 0.0
  %6661 = vmatprep.subr.mxu0 0.0
  %6662 = vmatpush1.msra.mxu0 0.0
  %6663 = vmatprep.subr.mxu0 0.0
  %6664 = vmatpush1.msra.mxu0 0.0
  %6665 = vmatprep.subr.mxu0 0.0
  %6666 = vmatpush1.msra.mxu0 0.0
  %6667 = vmatprep.subr.mxu0 0.0
  %6668 = vmatpush1.msra.mxu0 0.0
  %6669 = vmatprep.subr.mxu0 0.0
  %6670 = vmatpush1.msra.mxu0 0.0
  %6671 = vmatprep.subr.mxu0 0.0
  %6672 = vmatpush1.msra.mxu0 0.0
  %6673 = vmatprep.subr.mxu0 0.0
  %6674 = vmatpush1.msra.mxu0 %v6635
  %6675 = vmatprep.subr.mxu0 0.0
  %6676 = vmatpush1.msra.mxu0 %v6634
  %6677 = vmatprep.subr.mxu0 0.0
  %6678 = vmatpush1.msra.mxu0 %v6633
  %6679 = vmatprep.subr.mxu0 0.0
  %6680 = vmatpush1.msra.mxu0 %v6632
  %6681 = vmatprep.subr.mxu0 0.0
  %6682 = vmatpush2.msra.mxu0 0.0
  %6683 = vmatprep.subr.mxu0 0.0
  %6684 = vmatpush2.msra.mxu0 0.0
  %6685 = vmatprep.subr.mxu0 0.0
  %6686 = vmatpush2.msra.mxu0 0.0
  %6687 = vmatprep.subr.mxu0 0.0
  %6688 = vmatpush2.msra.mxu0 0.0
  %6689 = vmatprep.subr.mxu0 0.0
  %6690 = vmatpush2.msra.mxu0 0.0
  %6691 = vmatprep.subr.mxu0 0.0
  %6692 = vmatpush2.msra.mxu0 0.0
  %6693 = vmatprep.subr.mxu0 0.0
  %6694 = vmatpush2.msra.mxu0 0.0
  %6695 = vmatprep.subr.mxu0 0.0
  %6696 = vmatpush2.msra.mxu0 0.0
  %6697 = vmatprep.subr.mxu0 0.0
  %6698 = vmatpush2.msra.mxu0 0.0
  %6699 = vmatprep.subr.mxu0 0.0
  %6700 = vmatpush2.msra.mxu0 0.0
  %6701 = vmatprep.subr.mxu0 0.0
  %6702 = vmatpush2.msra.mxu0 0.0
  %6703 = vmatprep.subr.mxu0 0.0
  %6704 = vmatpush2.msra.mxu0 0.0
  %6705 = vmatprep.subr.mxu0 0.0
  %6706 = vmatpush2.msra.mxu0 0.0
  %6707 = vmatprep.subr.mxu0 0.0
  %6708 = vmatpush2.msra.mxu0 0.0
  %6709 = vmatprep.subr.mxu0 0.0
  %6710 = vmatpush2.msra.mxu0 0.0
  %6711 = vmatprep.subr.mxu0 0.0
  %6712 = vmatpush2.msra.mxu0 0.0
  %6713 = vmatprep.mubr.f32.mxu0 0.0
  %6714 = vmatmul.mubr.f32.gmra.mxu0 %v6644
  %v6715 = vpop.f32.mrf.mxu0
  %v6716 = vadd.f32 %v6641, %v6715
  %v6717 = vpop.f32.mrf.mxu0
  %6718 = vmatprep.mubr.f32.mxu0 0.0
  %6719 = vmatmul.mubr.f32.gmra.mxu0 %v6647
  %v6720 = vpop.f32.mrf.mxu0
  %v6721 = vadd.f32 %v6641, %v6720
  %v6722 = vpop.f32.mrf.mxu0
  %6723 = vdwg.mxu0
  %v6724 = vld [vmem:[%s9] sm:$0xff]
  %v6725 = vld [vmem:[%s9 + $0x8] sm:$0xff]
  %v6726 = vsel %vm291, %v6716, -inf
  %6727 = vmax.xlane.f32.xlu0 %v6726
  %v6728 = vpop.xlane.xlu0 %6727
  %v6729 = vsel %vm291, %v6721, -inf
  %6730 = vmax.xlane.f32.xlu0 %v6729
  %v6731 = vpop.xlane.xlu0 %6730
  %v6732 = vsub.f32 %v6716, %v6728
  %v6733 = vsub.f32 %v6721, %v6731
  %v6734 = vmul.f32 %v6732, 1.442695
  %v6735 = vpow.pop %v6734
  %v6736 = vmul.f32 %v6733, 1.442695
  %v6737 = vpow.pop %v6736
  %v6738 = vsel %vm291, %v6735, 0.0
  %6739 = vadd.xlane.f32.xlu0 %v6738
  %v6740 = vpop.xlane.xlu0 %6739
  %v6741 = vsel %vm291, %v6737, 0.0
  %6742 = vadd.xlane.f32.xlu0 %v6741
  %v6743 = vpop.xlane.xlu0 %6742
  %v6744 = vlog2.pop %v6740
  %v6745 = vmul.f32 %v6744, 0.6931472
  %v6746 = vlog2.pop %v6743
  %v6747 = vmul.f32 %v6746, 0.6931472
  %v6748 = vadd.f32 %v6728, %v6745
  %v6749 = vadd.f32 %v6731, %v6747
  %6750 = vset.pattern.permute.xlu0 0
  %6751 = vperm.xlu0 %6750, %v6724
  %v6752 = vpop.permute.xlu0 %6751
  %6753 = vset.pattern.permute.xlu0 0
  %6754 = vperm.xlu0 %6753, %v6725
  %v6755 = vpop.permute.xlu0 %6754
  %vm6756 = vcmp.eq.s32.totalorder %v175, %v6752
  %vm6757 = vcmp.eq.s32.totalorder %v175, %v6755
  %v6758 = vsel %vm6756, %v6716, 0.0
  %v6759 = vsel %vm6757, %v6721, 0.0
  %v6760 = vsel %vm291, %v6758, 0.0
  %6761 = vadd.xlane.f32.xlu0 %v6760
  %v6762 = vpop.xlane.xlu0 %6761
  %v6763 = vsel %vm291, %v6759, 0.0
  %6764 = vadd.xlane.f32.xlu0 %v6763
  %v6765 = vpop.xlane.xlu0 %6764
  %v6766 = vsub.f32 %v6748, %v6762
  %v6767 = vsub.f32 %v6749, %v6765
  %vm6768 = vcmp.ne.s32.totalorder %v6724, 0
  %vm6769 = vcmp.ne.s32.totalorder %v6725, 0
  %v6770 = vsel %vm6768, 1, 0
  %v6771 = vsel %vm6769, 1, 0
  %v6772 = vcvt.s32.f32 %v6770
  %v6773 = vcvt.s32.f32 %v6771
  %v6774 = vmul.f32 %v6766, %v6772
  %v6775 = vmul.f32 %v6767, %v6773
  %vm6776 = vcmask 7168
  %v6777 = vsel %vm6776, %v6774, 0.0
  %v6778 = vsel %vm6776, %v6775, 0.0
  %v6779 = vadd.f32 %v6777, %v6778
  %v6780 = vrot.slane %v6779, 4
  %v6781 = vadd.f32 %v6779, %v6780
  %v6782 = vrot.slane %v6781, 2
  %v6783 = vadd.f32 %v6781, %v6782
  %v6784 = vrot.slane %v6783, 1
  %v6785 = vadd.f32 %v6783, %v6784
  %v6786 = vsel %vm6776, %v6772, 0.0
  %v6787 = vsel %vm6776, %v6773, 0.0
  %v6788 = vadd.f32 %v6786, %v6787
  %v6789 = vrot.slane %v6788, 4
  %v6790 = vadd.f32 %v6788, %v6789
  %v6791 = vrot.slane %v6790, 2
  %v6792 = vadd.f32 %v6790, %v6791
  %v6793 = vrot.slane %v6792, 1
  %v6794 = vadd.f32 %v6792, %v6793
  %v6795 = vmax.f32 %v6794, 1.0
  %v6796 = vrcp.pop %v6795
  %v6797 = vmul.f32 %v6785, %v6796
  %6799 = vset.pattern.permute.xlu0 0
  %6800 = vperm.xlu0 %6799, %v6797
  %v6801 = vpop.permute.xlu0 %6800
  %6803 = vst [vmem:[%s81] sm:$0xff] %v6801
  // Predicated region
  $region162: #{_lambda_.1} parent=0 // pred_check
    _
  $region163: #{_lambda_.1} parent=0 // pred_check_branch
    %6805 = sbr.rel (0) target = $region165
  $region164: #{_lambda_.1} parent=0 // pred_region
    _
  $region165: #{_lambda_.1} parent=0 // pred_fallthru
    _
  // Predicated region
  $region166: #{_lambda_.1} parent=0 // pred_check
    _
  $region167: #{_lambda_.1} parent=0 // pred_check_branch
    %6807 = sbr.rel (0) target = $region169
  $region168: #{_lambda_.1} parent=0 // pred_region
    _
  $region169: #{_lambda_.1} parent=0 // pred_fallthru
    _

</llo_original>
